<compile_context>
chip_gen: v5e
topology: v5e:2x2
jax: 0.10.0
libtpu: 0.0.40
codegen_flags: <defaults>
</compile_context>

<pallas_src>
import math

import numpy as np
import jax
import jax.numpy as jnp
from jax.experimental import pallas as pl
from jax.experimental.pallas import tpu as pltpu

# ----------------------------- config ---------------------------------------
B = 4                       # batch
B_BLK = 2                   # images per grid step (weight-DMA amortization / MXU fill)
IN_CH = 3                   # conv in_channels=3 (fixed by the module)
IMG = 64                    # args.image_size (small)
PATCH = 16                  # patch_size
GS = IMG // PATCH           # patches per side (4)
NUM_PATCHES = GS * GS       # 16
SEQ = NUM_PATCHES + 1       # +cls token -> 17
SEQ_PAD = 24                # padded to a multiple of 8 sublanes
D = 256                     # vit_embed_dim stand-in (768 in real model)
HEADS = 4
HEAD_DIM = D // HEADS
MLP = 2 * D                 # mlp hidden (3072 in real model)
OUT_DIM = 512               # resnet101_output_dim stand-in (2048 in real model)
LAYERS = 2                  # encoder depth (12 in real model)
POOLED = (GS // 2) * (GS // 2)
CPP = IN_CH * PATCH * PATCH  # flattened patch length (768)
EPS = 1e-6                   # torchvision ViT LayerNorm eps
M_BLK = B_BLK * SEQ_PAD      # matmul M dimension per grid step (48)
ROWS_OUT = B_BLK * (POOLED + 1)


# ----------------------------- kernel helpers --------------------------------
def _layer_norm(x, w, b):
    # f32 math (v5e VPU/EUP have no bf16 path).
    mu = jnp.mean(x, axis=-1, keepdims=True)
    var = jnp.mean(jnp.square(x - mu), axis=-1, keepdims=True)
    return (x - mu) * jax.lax.rsqrt(var + EPS) * w + b


# ----------------------------- fused ViT encoder kernel ----------------------
def _vit_encoder_kernel(
    patch_ref, convw_ref, bias_ref,
    ln1w_ref, ln1b_ref, wqkv_ref, bqkv_ref, wo_ref, bo_ref,
    ln2w_ref, ln2b_ref, w1_ref, b1_ref, w2_ref, b2_ref,
    lnfw_ref, lnfb_ref, pool_ref, fcw_ref, fcb_ref,
    o_ref, x_vmem, qkv_vmem,
):
    l = pl.program_id(1)

    # --- layer 0: patchify (Conv2d k=stride=PATCH == patch matmul) ------------
    # patch_ref rows are already laid out as [cls(=0) | patches | pad(=0)] per
    # image, so one matmul + the precomputed bias slab (cls token, pos emb, conv
    # bias) builds the whole padded token slab in a single full-tile store.
    @pl.when(l == 0)
    def _():
        x_vmem[...] = (
            jnp.dot(patch_ref[...], convw_ref[...],
                    preferred_element_type=jnp.float32)
            + bias_ref[...]
        )

    x = x_vmem[...]                               # (M_BLK, D) f32, VMEM-resident

    # --- pre-LN multi-head self-attention (dropout = identity in eval) --------
    h = _layer_norm(x, ln1w_ref[...], ln1b_ref[...])
    qkv_vmem[...] = (
        jnp.dot(h.astype(jnp.bfloat16), wqkv_ref[...],
                preferred_element_type=jnp.float32)
        + bqkv_ref[...]
    )                                             # (M_BLK, 3*D) f32 in VMEM

    kmask = jax.lax.broadcasted_iota(jnp.int32, (SEQ_PAD, SEQ_PAD), 1) < SEQ
    scale = 1.0 / math.sqrt(HEAD_DIM)

    # Attention is block-diagonal over the batch block: small static loop over
    # images, heads.  Output projection is fused per head and accumulated
    # directly into the token slab (residual add included).
    for b in range(B_BLK):
        r0 = b * SEQ_PAD
        for hd in range(HEADS):
            lo = hd * HEAD_DIM
            qh = qkv_vmem[r0:r0 + SEQ_PAD, lo:lo + HEAD_DIM] * scale
            kh = qkv_vmem[r0:r0 + SEQ_PAD, D + lo:D + lo + HEAD_DIM]
            vh = qkv_vmem[r0:r0 + SEQ_PAD, 2 * D + lo:2 * D + lo + HEAD_DIM]
            # NT matmul: contraction on the head dim, no explicit kh.T transpose.
            s = jax.lax.dot_general(
                qh.astype(jnp.bfloat16), kh.astype(jnp.bfloat16),
                dimension_numbers=(((1,), (1,)), ((), ())),
                preferred_element_type=jnp.float32)          # (SEQ_PAD, SEQ_PAD)
            s = jnp.where(kmask, s, -1e30)                   # mask padded keys
            s = s - jnp.max(s, axis=-1, keepdims=True)
            p = jnp.exp(s)
            p = p * pl.reciprocal(jnp.sum(p, axis=-1, keepdims=True), approx=True)
            ho = jnp.dot(p.astype(jnp.bfloat16), vh.astype(jnp.bfloat16),
                         preferred_element_type=jnp.float32)  # (SEQ_PAD, HEAD_DIM)
            # fused output projection slice + residual accumulation into VMEM
            x_vmem[r0:r0 + SEQ_PAD, :] = x_vmem[r0:r0 + SEQ_PAD, :] + jnp.dot(
                ho.astype(jnp.bfloat16), wo_ref[lo:lo + HEAD_DIM, :],
                preferred_element_type=jnp.float32)

    x = x_vmem[...] + bo_ref[...]                 # out-proj bias (once per row)
    x_vmem[...] = x

    # --- pre-LN MLP ------------------------------------------------------------
    h2 = _layer_norm(x, ln2w_ref[...], ln2b_ref[...])
    # TODO(synk): torch nn.GELU() default is exact erf-GELU; tanh approximation here.
    m = jax.nn.gelu(
        jnp.dot(h2.astype(jnp.bfloat16), w1_ref[...],
                preferred_element_type=jnp.float32) + b1_ref[...],
        approximate=True)
    x = x + jnp.dot(m.astype(jnp.bfloat16), w2_ref[...],
                    preferred_element_type=jnp.float32) + b2_ref[...]
    x_vmem[...] = x                               # carry tokens to the next layer

    # --- last layer: final LN + block-diag (2x2 avg-pool | cls pick) + fc head --
    @pl.when(l == LAYERS - 1)
    def _():
        y = _layer_norm(x, lnfw_ref[...], lnfb_ref[...])      # (M_BLK, D)
        # pool_ref is block-diagonal over the B_BLK images; row 0 of each block
        # picks the cls token, rows 1.. are 0.25-weighted 2x2 patch-grid averages.
        pooled = jnp.dot(pool_ref[...], y,
                         preferred_element_type=jnp.float32)  # (ROWS_OUT, D)
        out = (
            jnp.dot(pooled.astype(jnp.bfloat16), fcw_ref[...],
                    preferred_element_type=jnp.float32)
            + fcb_ref[...]
        )                                                     # (ROWS_OUT, OUT_DIM)
        o_ref[...] = out.astype(o_ref.dtype)


# ----------------------------- constant pooling matrix ------------------------
def _build_pool_cls_matrix():
    p_img = np.zeros((POOLED + 1, SEQ_PAD), np.float32)
    p_img[0, 0] = 1.0                              # cls / global-feature row
    r = 1
    for i in range(GS // 2):
        for j in range(GS // 2):
            for di in range(2):
                for dj in range(2):
                    p_img[r, 1 + (2 * i + di) * GS + (2 * j + dj)] = 0.25
            r += 1
    p_full = np.zeros((ROWS_OUT, M_BLK), np.float32)   # block-diag over the batch block
    for b in range(B_BLK):
        p_full[b * (POOLED + 1):(b + 1) * (POOLED + 1),
               b * SEQ_PAD:(b + 1) * SEQ_PAD] = p_img
    return jnp.asarray(p_full)


# ----------------------------- parameters ------------------------------------
def init_params(key):
    ks = jax.random.split(key, 8)

    def nrm(k, shape, scale=0.02, dtype=jnp.float32):
        return (scale * jax.random.normal(k, shape, dtype=jnp.float32)).astype(dtype)

    # NOTE: when porting real torch Conv2d weights, reshape (D, C, P, P) -> (C*P*P, D)
    # in exactly (C, ph, pw) order to match the patch flattening below.
    return {
        "conv_w": nrm(ks[0], (CPP, D), dtype=jnp.bfloat16),
        "conv_b": jnp.zeros((D,), jnp.float32),
        "cls_token": jnp.zeros((1, 1, D), jnp.float32),   # nn.Parameter(torch.zeros)
        "pos_emb": nrm(ks[1], (1, SEQ, D)),
        "fc_w": nrm(ks[2], (D, OUT_DIM), dtype=jnp.bfloat16),
        "fc_b": jnp.zeros((OUT_DIM,), jnp.float32),
        "ln_f_w": jnp.ones((1, D), jnp.float32),
        "ln_f_b": jnp.zeros((1, D), jnp.float32),
        # per-layer weights stacked along a leading LAYERS axis (streamed per layer)
        "ln1_w": jnp.ones((LAYERS, 1, D), jnp.float32),
        "ln1_b": jnp.zeros((LAYERS, 1, D), jnp.float32),
        "w_qkv": nrm(ks[3], (LAYERS, D, 3 * D), dtype=jnp.bfloat16),
        "b_qkv": jnp.zeros((LAYERS, 1, 3 * D), jnp.float32),
        "w_o": nrm(ks[4], (LAYERS, D, D), dtype=jnp.bfloat16),
        "b_o": jnp.zeros((LAYERS, 1, D), jnp.float32),
        "ln2_w": jnp.ones((LAYERS, 1, D), jnp.float32),
        "ln2_b": jnp.zeros((LAYERS, 1, D), jnp.float32),
        "w_1": nrm(ks[5], (LAYERS, D, MLP), dtype=jnp.bfloat16),
        "b_1": jnp.zeros((LAYERS, 1, MLP), jnp.float32),
        "w_2": nrm(ks[6], (LAYERS, MLP, D), dtype=jnp.bfloat16),
        "b_2": jnp.zeros((LAYERS, 1, D), jnp.float32),
    }


# ----------------------------- forward ---------------------------------------
def vit_encoder_forward(x, params):
    """x: (B, 3, IMG, IMG) float32 (NCHW). Returns (patch_features, global_features)."""
    Bn = x.shape[0]
    assert Bn % B_BLK == 0, "batch must be a multiple of B_BLK"
    nblk = Bn // B_BLK

    # Patch extraction: Conv2d(k=stride=PATCH) == non-overlapping patch matmul.
    patches = x.reshape(Bn, IN_CH, GS, PATCH, GS, PATCH)
    patches = patches.transpose(0, 2, 4, 1, 3, 5).reshape(Bn, NUM_PATCHES, CPP)

    # Pre-pad to the token layout (row 0 = cls slot, rows SEQ.. = pad, both zero)
    # and pre-cast to bf16 so the kernel does a single full-slab matmul + store.
    patch_slab = jnp.zeros((Bn, SEQ_PAD, CPP), jnp.bfloat16)
    patch_slab = patch_slab.at[:, 1:SEQ, :].set(patches.astype(jnp.bfloat16))
    patch_slab = patch_slab.reshape(nblk, M_BLK, CPP)

    # Bias slab: row0 = cls_token + pos_emb[0]; rows 1..SEQ-1 = conv_b + pos_emb[1:];
    # padded rows 0 (parameter prep, folded into the patchify matmul epilogue).
    cls_pos = params["cls_token"].reshape(1, D) + params["pos_emb"][0, 0:1, :]
    patch_bias = params["conv_b"][None, :] + params["pos_emb"][0, 1:SEQ, :]
    bias_img = jnp.zeros((SEQ_PAD, D), jnp.float32)
    bias_img = bias_img.at[0:1, :].set(cls_pos)
    bias_img = bias_img.at[1:SEQ, :].set(patch_bias)
    bias_slab = jnp.tile(bias_img, (B_BLK, 1))            # (M_BLK, D)

    pool_mat = _build_pool_cls_matrix()

    def full_spec(shape):
        return pl.BlockSpec(shape, lambda bb, l, _n=None: (0,) * len(shape))

    def layer_spec(trailing):
        return pl.BlockSpec((None,) + trailing, lambda bb, l: (l, 0, 0))

    out = pl.pallas_call(
        _vit_encoder_kernel,
        out_shape=jax.ShapeDtypeStruct((nblk, ROWS_OUT, OUT_DIM), jnp.float32),
        grid=(nblk, LAYERS),
        in_specs=[
            pl.BlockSpec((None, M_BLK, CPP), lambda bb, l: (bb, 0, 0)),  # patches (bf16)
            full_spec((CPP, D)),                      # conv weight (bf16)
            full_spec((M_BLK, D)),                    # cls/pos/conv-bias slab (f32)
            layer_spec((1, D)), layer_spec((1, D)),            # ln1 w, b
            layer_spec((D, 3 * D)), layer_spec((1, 3 * D)),    # qkv w, b
            layer_spec((D, D)), layer_spec((1, D)),            # out-proj w, b
            layer_spec((1, D)), layer_spec((1, D)),            # ln2 w, b
            layer_spec((D, MLP)), layer_spec((1, MLP)),        # mlp w1, b1
            layer_spec((MLP, D)), layer_spec((1, D)),          # mlp w2, b2
            full_spec((1, D)), full_spec((1, D)),              # final LN w, b
            full_spec((ROWS_OUT, M_BLK)),                      # block-diag pool/cls matrix
            full_spec((D, OUT_DIM)), full_spec((1, OUT_DIM)),  # fc w, b
        ],
        out_specs=pl.BlockSpec((None, ROWS_OUT, OUT_DIM), lambda bb, l: (bb, 0, 0)),
        scratch_shapes=[
            pltpu.VMEM((M_BLK, D), jnp.float32),       # token slab (carried over layers)
            pltpu.VMEM((M_BLK, 3 * D), jnp.float32),   # qkv scratch (ref-sliced per head)
        ],
        compiler_params=pltpu.CompilerParams(
            dimension_semantics=("parallel", "arbitrary"),
            vmem_limit_bytes=48 * 1024 * 1024,
        ),
    )(
        patch_slab, params["conv_w"], bias_slab,
        params["ln1_w"], params["ln1_b"], params["w_qkv"], params["b_qkv"],
        params["w_o"], params["b_o"], params["ln2_w"], params["ln2_b"],
        params["w_1"], params["b_1"], params["w_2"], params["b_2"],
        params["ln_f_w"], params["ln_f_b"], pool_mat,
        params["fc_w"], params["fc_b"].reshape(1, OUT_DIM),
    )

    # TODO(synk): classification_logits = self.model(x) (full pretrained vit_b_16
    # incl. classification head) is computed but never returned in the torch
    # forward; omitted here.
    out = out.reshape(Bn, POOLED + 1, OUT_DIM)
    global_features = out[:, 0]     # cls-token feature through fc_layer  (B, OUT_DIM)
    patch_features = out[:, 1:]     # pooled patch grid through fc_layer  (B, POOLED, OUT_DIM)
    return patch_features, global_features


# ----------------------------- main -------------------------------------------
if __name__ == "__main__":
    key = jax.random.PRNGKey(0)
    pkey, xkey = jax.random.split(key)
    params = init_params(pkey)
    x = jax.random.normal(xkey, (B, IN_CH, IMG, IMG), dtype=jnp.float32)

    fwd = jax.jit(vit_encoder_forward)
    patch_features, global_features = fwd(x, params)
    jax.block_until_ready((patch_features, global_features))

    assert patch_features.shape == (B, POOLED, OUT_DIM), patch_features.shape
    assert global_features.shape == (B, OUT_DIM), global_features.shape
    assert bool(jnp.all(jnp.isfinite(patch_features)))
    assert bool(jnp.all(jnp.isfinite(global_features)))
    print("KERNEL_OK")
</pallas_src>

<mosaic_0001>
module attributes {stable_mosaic.version = 11 : i64} {
  func.func @_vit_encoder_kernel(%arg0: i32, %arg1: i32, %arg2: memref<1x48x768xbf16, #tpu.memory_space<vmem>>, %arg3: memref<768x256xbf16, #tpu.memory_space<vmem>>, %arg4: memref<48x256xf32, #tpu.memory_space<vmem>>, %arg5: memref<1x1x256xf32, #tpu.memory_space<vmem>>, %arg6: memref<1x1x256xf32, #tpu.memory_space<vmem>>, %arg7: memref<1x256x768xbf16, #tpu.memory_space<vmem>>, %arg8: memref<1x1x768xf32, #tpu.memory_space<vmem>>, %arg9: memref<1x256x256xbf16, #tpu.memory_space<vmem>>, %arg10: memref<1x1x256xf32, #tpu.memory_space<vmem>>, %arg11: memref<1x1x256xf32, #tpu.memory_space<vmem>>, %arg12: memref<1x1x256xf32, #tpu.memory_space<vmem>>, %arg13: memref<1x256x512xbf16, #tpu.memory_space<vmem>>, %arg14: memref<1x1x512xf32, #tpu.memory_space<vmem>>, %arg15: memref<1x512x256xbf16, #tpu.memory_space<vmem>>, %arg16: memref<1x1x256xf32, #tpu.memory_space<vmem>>, %arg17: memref<1x256xf32, #tpu.memory_space<vmem>>, %arg18: memref<1x256xf32, #tpu.memory_space<vmem>>, %arg19: memref<10x48xf32, #tpu.memory_space<vmem>>, %arg20: memref<256x512xbf16, #tpu.memory_space<vmem>>, %arg21: memref<1x512xf32, #tpu.memory_space<vmem>>, %arg22: memref<1x10x512xf32, #tpu.memory_space<vmem>>, %arg23: memref<48x256xf32, #tpu.memory_space<vmem>>, %arg24: memref<48x768xf32, #tpu.memory_space<vmem>>) attributes {dimension_semantics = [#tpu.dimension_semantics<parallel>, #tpu.dimension_semantics<arbitrary>], iteration_bounds = array<i64: 2, 2>, scalar_prefetch = 0 : i64, scratch_operands = 2 : i64, tpu.core_type = #tpu.core_type<tc>, window_params = [{transform_indices = @transform_0, window_bounds = array<i64: 1, 48, 768>}, {pipeline_mode = #tpu.pipeline_mode<synchronous>, transform_indices = @transform_1, window_bounds = array<i64: 768, 256>}, {pipeline_mode = #tpu.pipeline_mode<synchronous>, transform_indices = @transform_2, window_bounds = array<i64: 48, 256>}, {transform_indices = @transform_3, window_bounds = array<i64: 1, 1, 256>}, {transform_indices = @transform_4, window_bounds = array<i64: 1, 1, 256>}, {transform_indices = @transform_5, window_bounds = array<i64: 1, 256, 768>}, {transform_indices = @transform_6, window_bounds = array<i64: 1, 1, 768>}, {transform_indices = @transform_7, window_bounds = array<i64: 1, 256, 256>}, {transform_indices = @transform_8, window_bounds = array<i64: 1, 1, 256>}, {transform_indices = @transform_9, window_bounds = array<i64: 1, 1, 256>}, {transform_indices = @transform_10, window_bounds = array<i64: 1, 1, 256>}, {transform_indices = @transform_11, window_bounds = array<i64: 1, 256, 512>}, {transform_indices = @transform_12, window_bounds = array<i64: 1, 1, 512>}, {transform_indices = @transform_13, window_bounds = array<i64: 1, 512, 256>}, {transform_indices = @transform_14, window_bounds = array<i64: 1, 1, 256>}, {pipeline_mode = #tpu.pipeline_mode<synchronous>, transform_indices = @transform_15, window_bounds = array<i64: 1, 256>}, {pipeline_mode = #tpu.pipeline_mode<synchronous>, transform_indices = @transform_16, window_bounds = array<i64: 1, 256>}, {pipeline_mode = #tpu.pipeline_mode<synchronous>, transform_indices = @transform_17, window_bounds = array<i64: 10, 48>}, {pipeline_mode = #tpu.pipeline_mode<synchronous>, transform_indices = @transform_18, window_bounds = array<i64: 256, 512>}, {pipeline_mode = #tpu.pipeline_mode<synchronous>, transform_indices = @transform_19, window_bounds = array<i64: 1, 512>}, {transform_indices = @transform_20, window_bounds = array<i64: 1, 10, 512>}]} {
    %c0_i32 = arith.constant 0 : i32
    %0 = arith.cmpi eq, %arg1, %c0_i32 : i32
    %1 = arith.extui %0 : i1 to i32
    %c0_i32_0 = arith.constant 0 : i32
    %2 = arith.cmpi ne, %1, %c0_i32_0 : i32
    scf.if %2 {
      %c0_208 = arith.constant 0 : index
      %c0_209 = arith.constant 0 : index
      %c0_210 = arith.constant 0 : index
      %348 = vector.load %arg2[%c0_208, %c0_209, %c0_210] : memref<1x48x768xbf16, #tpu.memory_space<vmem>>, vector<1x48x768xbf16>
      %349 = vector.shape_cast %348 : vector<1x48x768xbf16> to vector<48x768xbf16>
      %c0_211 = arith.constant 0 : index
      %c0_212 = arith.constant 0 : index
      %350 = vector.load %arg3[%c0_211, %c0_212] : memref<768x256xbf16, #tpu.memory_space<vmem>>, vector<768x256xbf16>
      %cst_213 = arith.constant dense<0.000000e+00> : vector<48x256xf32>
      %351 = tpu.matmul %349, %350, %cst_213 {dimension_numbers = #tpu.dot_dimension_numbers<[1], [0], [0], [1], [0, 0, 1, 1], [], []>} : vector<48x768xbf16>, vector<768x256xbf16>, vector<48x256xf32> -> vector<48x256xf32>
      %c0_214 = arith.constant 0 : index
      %c0_215 = arith.constant 0 : index
      %352 = vector.load %arg4[%c0_214, %c0_215] : memref<48x256xf32, #tpu.memory_space<vmem>>, vector<48x256xf32>
      %353 = arith.addf %351, %352 : vector<48x256xf32>
      %c0_216 = arith.constant 0 : index
      %c0_217 = arith.constant 0 : index
      %354 = vector.load %arg23[%c0_216, %c0_217] : memref<48x256xf32, #tpu.memory_space<vmem>>, vector<48x256xf32>
      tpu.vector_store %arg23[%c0_216, %c0_217], %353 {strides = array<i32>} : memref<48x256xf32, #tpu.memory_space<vmem>>, vector<48x256xf32>,
    } else {
    }
    %c0 = arith.constant 0 : index
    %c0_1 = arith.constant 0 : index
    %3 = vector.load %arg23[%c0, %c0_1] : memref<48x256xf32, #tpu.memory_space<vmem>>, vector<48x256xf32>
    %c0_2 = arith.constant 0 : index
    %c0_3 = arith.constant 0 : index
    %c0_4 = arith.constant 0 : index
    %4 = vector.load %arg5[%c0_2, %c0_3, %c0_4] : memref<1x1x256xf32, #tpu.memory_space<vmem>>, vector<1x1x256xf32>
    %5 = vector.shape_cast %4 : vector<1x1x256xf32> to vector<1x256xf32>
    %c0_5 = arith.constant 0 : index
    %c0_6 = arith.constant 0 : index
    %c0_7 = arith.constant 0 : index
    %6 = vector.load %arg6[%c0_5, %c0_6, %c0_7] : memref<1x1x256xf32, #tpu.memory_space<vmem>>, vector<1x1x256xf32>
    %7 = vector.shape_cast %6 : vector<1x1x256xf32> to vector<1x256xf32>
    %cst = arith.constant dense<0.000000e+00> : vector<48xf32>
    %8 = vector.multi_reduction <add>, %3, %cst [1] : vector<48x256xf32> to vector<48xf32>
    %9 = vector.shape_cast %8 : vector<48xf32> to vector<48x1xf32>
    %cst_8 = arith.constant 2.560000e+02 : f32
    %10 = vector.broadcast %cst_8 : f32 to vector<48x1xf32>
    %11 = arith.divf %9, %10 : vector<48x1xf32>
    %12 = vector.broadcast %11 : vector<48x1xf32> to vector<48x256xf32>
    %13 = arith.subf %3, %12 : vector<48x256xf32>
    %14 = arith.mulf %13, %13 : vector<48x256xf32>
    %cst_9 = arith.constant dense<0.000000e+00> : vector<48xf32>
    %15 = vector.multi_reduction <add>, %14, %cst_9 [1] : vector<48x256xf32> to vector<48xf32>
    %16 = vector.shape_cast %15 : vector<48xf32> to vector<48x1xf32>
    %cst_10 = arith.constant 2.560000e+02 : f32
    %17 = vector.broadcast %cst_10 : f32 to vector<48x1xf32>
    %18 = arith.divf %16, %17 : vector<48x1xf32>
    %19 = vector.broadcast %11 : vector<48x1xf32> to vector<48x256xf32>
    %20 = arith.subf %3, %19 : vector<48x256xf32>
    %cst_11 = arith.constant 9.99999997E-7 : f32
    %21 = vector.broadcast %cst_11 : f32 to vector<48x1xf32>
    %22 = arith.addf %18, %21 : vector<48x1xf32>
    %23 = math.rsqrt %22 : vector<48x1xf32>
    %24 = vector.broadcast %23 : vector<48x1xf32> to vector<48x256xf32>
    %25 = arith.mulf %20, %24 : vector<48x256xf32>
    %26 = vector.broadcast %5 : vector<1x256xf32> to vector<48x256xf32>
    %27 = arith.mulf %25, %26 : vector<48x256xf32>
    %28 = vector.broadcast %7 : vector<1x256xf32> to vector<48x256xf32>
    %29 = arith.addf %27, %28 : vector<48x256xf32>
    %30 = arith.truncf %29 : vector<48x256xf32> to vector<48x256xbf16>
    %c0_12 = arith.constant 0 : index
    %c0_13 = arith.constant 0 : index
    %c0_14 = arith.constant 0 : index
    %31 = vector.load %arg7[%c0_12, %c0_13, %c0_14] : memref<1x256x768xbf16, #tpu.memory_space<vmem>>, vector<1x256x768xbf16>
    %32 = vector.shape_cast %31 : vector<1x256x768xbf16> to vector<256x768xbf16>
    %cst_15 = arith.constant dense<0.000000e+00> : vector<48x768xf32>
    %33 = tpu.matmul %30, %32, %cst_15 {dimension_numbers = #tpu.dot_dimension_numbers<[1], [0], [0], [1], [0, 0, 1, 1], [], []>} : vector<48x256xbf16>, vector<256x768xbf16>, vector<48x768xf32> -> vector<48x768xf32>
    %c0_16 = arith.constant 0 : index
    %c0_17 = arith.constant 0 : index
    %c0_18 = arith.constant 0 : index
    %34 = vector.load %arg8[%c0_16, %c0_17, %c0_18] : memref<1x1x768xf32, #tpu.memory_space<vmem>>, vector<1x1x768xf32>
    %35 = vector.shape_cast %34 : vector<1x1x768xf32> to vector<1x768xf32>
    %36 = vector.broadcast %35 : vector<1x768xf32> to vector<48x768xf32>
    %37 = arith.addf %33, %36 : vector<48x768xf32>
    %c0_19 = arith.constant 0 : index
    %c0_20 = arith.constant 0 : index
    %38 = vector.load %arg24[%c0_19, %c0_20] : memref<48x768xf32, #tpu.memory_space<vmem>>, vector<48x768xf32>
    tpu.vector_store %arg24[%c0_19, %c0_20], %37 {strides = array<i32>} : memref<48x768xf32, #tpu.memory_space<vmem>>, vector<48x768xf32>,
    %39 = tpu.iota {dimensions = array<i32: 1>} : vector<24x24xi32>
    %c17_i32 = arith.constant 17 : i32
    %40 = vector.broadcast %c17_i32 : i32 to vector<24x24xi32>
    %41 = arith.cmpi slt, %39, %40 : vector<24x24xi32>
    %c0_21 = arith.constant 0 : index
    %c0_22 = arith.constant 0 : index
    %42 = vector.load %arg24[%c0_21, %c0_22] : memref<48x768xf32, #tpu.memory_space<vmem>>, vector<24x64xf32>
    %cst_23 = arith.constant 1.250000e-01 : f32
    %43 = vector.broadcast %cst_23 : f32 to vector<24x64xf32>
    %44 = arith.mulf %42, %43 : vector<24x64xf32>
    %c0_24 = arith.constant 0 : index
    %c256 = arith.constant 256 : index
    %45 = vector.load %arg24[%c0_24, %c256] : memref<48x768xf32, #tpu.memory_space<vmem>>, vector<24x64xf32>
    %c0_25 = arith.constant 0 : index
    %c512 = arith.constant 512 : index
    %46 = vector.load %arg24[%c0_25, %c512] : memref<48x768xf32, #tpu.memory_space<vmem>>, vector<24x64xf32>
    %47 = arith.truncf %44 : vector<24x64xf32> to vector<24x64xbf16>
    %48 = arith.truncf %45 : vector<24x64xf32> to vector<24x64xbf16>
    %cst_26 = arith.constant dense<0.000000e+00> : vector<24x24xf32>
    %49 = tpu.matmul %47, %48, %cst_26 {dimension_numbers = #tpu.dot_dimension_numbers<[1], [1], [0], [0], [0, 0, 1, 0], [], []>} : vector<24x64xbf16>, vector<24x64xbf16>, vector<24x24xf32> -> vector<24x24xf32>
    %cst_27 = arith.constant -1.000000e+30 : f32
    %50 = vector.broadcast %cst_27 : f32 to vector<24x24xf32>
    %51 = arith.select %41, %49, %50 : vector<24x24xi1>, vector<24x24xf32>
    %cst_28 = arith.constant dense<0xFF800000> : vector<24xf32>
    %52 = vector.multi_reduction <maximumf>, %51, %cst_28 [1] : vector<24x24xf32> to vector<24xf32>
    %53 = vector.shape_cast %52 : vector<24xf32> to vector<24x1xf32>
    %54 = vector.broadcast %53 : vector<24x1xf32> to vector<24x24xf32>
    %55 = arith.subf %51, %54 : vector<24x24xf32>
    %56 = math.exp %55 : vector<24x24xf32>
    %cst_29 = arith.constant dense<0.000000e+00> : vector<24xf32>
    %57 = vector.multi_reduction <add>, %56, %cst_29 [1] : vector<24x24xf32> to vector<24xf32>
    %58 = vector.shape_cast %57 : vector<24xf32> to vector<24x1xf32>
    %59 = tpu.reciprocal %58 {approx = true} : vector<24x1xf32> -> vector<24x1xf32>
    %60 = vector.broadcast %59 : vector<24x1xf32> to vector<24x24xf32>
    %61 = arith.mulf %56, %60 : vector<24x24xf32>
    %62 = arith.truncf %61 : vector<24x24xf32> to vector<24x24xbf16>
    %63 = arith.truncf %46 : vector<24x64xf32> to vector<24x64xbf16>
    %cst_30 = arith.constant dense<0.000000e+00> : vector<24x64xf32>
    %64 = tpu.matmul %62, %63, %cst_30 {dimension_numbers = #tpu.dot_dimension_numbers<[1], [0], [0], [1], [0, 0, 1, 1], [], []>} : vector<24x24xbf16>, vector<24x64xbf16>, vector<24x64xf32> -> vector<24x64xf32>
    %c0_31 = arith.constant 0 : index
    %c0_32 = arith.constant 0 : index
    %65 = vector.load %arg23[%c0_31, %c0_32] : memref<48x256xf32, #tpu.memory_space<vmem>>, vector<24x256xf32>
    %66 = arith.truncf %64 : vector<24x64xf32> to vector<24x64xbf16>
    %c0_33 = arith.constant 0 : index
    %c0_34 = arith.constant 0 : index
    %c0_35 = arith.constant 0 : index
    %67 = vector.load %arg9[%c0_33, %c0_34, %c0_35] : memref<1x256x256xbf16, #tpu.memory_space<vmem>>, vector<1x64x256xbf16>
    %68 = vector.shape_cast %67 : vector<1x64x256xbf16> to vector<64x256xbf16>
    %cst_36 = arith.constant dense<0.000000e+00> : vector<24x256xf32>
    %69 = tpu.matmul %66, %68, %cst_36 {dimension_numbers = #tpu.dot_dimension_numbers<[1], [0], [0], [1], [0, 0, 1, 1], [], []>} : vector<24x64xbf16>, vector<64x256xbf16>, vector<24x256xf32> -> vector<24x256xf32>
    %70 = arith.addf %65, %69 : vector<24x256xf32>
    %c0_37 = arith.constant 0 : index
    %c0_38 = arith.constant 0 : index
    %71 = vector.load %arg23[%c0_37, %c0_38] : memref<48x256xf32, #tpu.memory_space<vmem>>, vector<24x256xf32>
    tpu.vector_store %arg23[%c0_37, %c0_38], %70 {strides = array<i32>} : memref<48x256xf32, #tpu.memory_space<vmem>>, vector<24x256xf32>,
    %c0_39 = arith.constant 0 : index
    %c64 = arith.constant 64 : index
    %72 = vector.load %arg24[%c0_39, %c64] : memref<48x768xf32, #tpu.memory_space<vmem>>, vector<24x64xf32>
    %cst_40 = arith.constant 1.250000e-01 : f32
    %73 = vector.broadcast %cst_40 : f32 to vector<24x64xf32>
    %74 = arith.mulf %72, %73 : vector<24x64xf32>
    %c0_41 = arith.constant 0 : index
    %c320 = arith.constant 320 : index
    %75 = vector.load %arg24[%c0_41, %c320] : memref<48x768xf32, #tpu.memory_space<vmem>>, vector<24x64xf32>
    %c0_42 = arith.constant 0 : index
    %c576 = arith.constant 576 : index
    %76 = vector.load %arg24[%c0_42, %c576] : memref<48x768xf32, #tpu.memory_space<vmem>>, vector<24x64xf32>
    %77 = arith.truncf %74 : vector<24x64xf32> to vector<24x64xbf16>
    %78 = arith.truncf %75 : vector<24x64xf32> to vector<24x64xbf16>
    %cst_43 = arith.constant dense<0.000000e+00> : vector<24x24xf32>
    %79 = tpu.matmul %77, %78, %cst_43 {dimension_numbers = #tpu.dot_dimension_numbers<[1], [1], [0], [0], [0, 0, 1, 0], [], []>} : vector<24x64xbf16>, vector<24x64xbf16>, vector<24x24xf32> -> vector<24x24xf32>
    %cst_44 = arith.constant -1.000000e+30 : f32
    %80 = vector.broadcast %cst_44 : f32 to vector<24x24xf32>
    %81 = arith.select %41, %79, %80 : vector<24x24xi1>, vector<24x24xf32>
    %cst_45 = arith.constant dense<0xFF800000> : vector<24xf32>
    %82 = vector.multi_reduction <maximumf>, %81, %cst_45 [1] : vector<24x24xf32> to vector<24xf32>
    %83 = vector.shape_cast %82 : vector<24xf32> to vector<24x1xf32>
    %84 = vector.broadcast %83 : vector<24x1xf32> to vector<24x24xf32>
    %85 = arith.subf %81, %84 : vector<24x24xf32>
    %86 = math.exp %85 : vector<24x24xf32>
    %cst_46 = arith.constant dense<0.000000e+00> : vector<24xf32>
    %87 = vector.multi_reduction <add>, %86, %cst_46 [1] : vector<24x24xf32> to vector<24xf32>
    %88 = vector.shape_cast %87 : vector<24xf32> to vector<24x1xf32>
    %89 = tpu.reciprocal %88 {approx = true} : vector<24x1xf32> -> vector<24x1xf32>
    %90 = vector.broadcast %89 : vector<24x1xf32> to vector<24x24xf32>
    %91 = arith.mulf %86, %90 : vector<24x24xf32>
    %92 = arith.truncf %91 : vector<24x24xf32> to vector<24x24xbf16>
    %93 = arith.truncf %76 : vector<24x64xf32> to vector<24x64xbf16>
    %cst_47 = arith.constant dense<0.000000e+00> : vector<24x64xf32>
    %94 = tpu.matmul %92, %93, %cst_47 {dimension_numbers = #tpu.dot_dimension_numbers<[1], [0], [0], [1], [0, 0, 1, 1], [], []>} : vector<24x24xbf16>, vector<24x64xbf16>, vector<24x64xf32> -> vector<24x64xf32>
    %c0_48 = arith.constant 0 : index
    %c0_49 = arith.constant 0 : index
    %95 = vector.load %arg23[%c0_48, %c0_49] : memref<48x256xf32, #tpu.memory_space<vmem>>, vector<24x256xf32>
    %96 = arith.truncf %94 : vector<24x64xf32> to vector<24x64xbf16>
    %c0_50 = arith.constant 0 : index
    %c64_51 = arith.constant 64 : index
    %c0_52 = arith.constant 0 : index
    %97 = vector.load %arg9[%c0_50, %c64_51, %c0_52] : memref<1x256x256xbf16, #tpu.memory_space<vmem>>, vector<1x64x256xbf16>
    %98 = vector.shape_cast %97 : vector<1x64x256xbf16> to vector<64x256xbf16>
    %cst_53 = arith.constant dense<0.000000e+00> : vector<24x256xf32>
    %99 = tpu.matmul %96, %98, %cst_53 {dimension_numbers = #tpu.dot_dimension_numbers<[1], [0], [0], [1], [0, 0, 1, 1], [], []>} : vector<24x64xbf16>, vector<64x256xbf16>, vector<24x256xf32> -> vector<24x256xf32>
    %100 = arith.addf %95, %99 : vector<24x256xf32>
    %c0_54 = arith.constant 0 : index
    %c0_55 = arith.constant 0 : index
    %101 = vector.load %arg23[%c0_54, %c0_55] : memref<48x256xf32, #tpu.memory_space<vmem>>, vector<24x256xf32>
    tpu.vector_store %arg23[%c0_54, %c0_55], %100 {strides = array<i32>} : memref<48x256xf32, #tpu.memory_space<vmem>>, vector<24x256xf32>,
    %c0_56 = arith.constant 0 : index
    %c128 = arith.constant 128 : index
    %102 = vector.load %arg24[%c0_56, %c128] : memref<48x768xf32, #tpu.memory_space<vmem>>, vector<24x64xf32>
    %cst_57 = arith.constant 1.250000e-01 : f32
    %103 = vector.broadcast %cst_57 : f32 to vector<24x64xf32>
    %104 = arith.mulf %102, %103 : vector<24x64xf32>
    %c0_58 = arith.constant 0 : index
    %c384 = arith.constant 384 : index
    %105 = vector.load %arg24[%c0_58, %c384] : memref<48x768xf32, #tpu.memory_space<vmem>>, vector<24x64xf32>
    %c0_59 = arith.constant 0 : index
    %c640 = arith.constant 640 : index
    %106 = vector.load %arg24[%c0_59, %c640] : memref<48x768xf32, #tpu.memory_space<vmem>>, vector<24x64xf32>
    %107 = arith.truncf %104 : vector<24x64xf32> to vector<24x64xbf16>
    %108 = arith.truncf %105 : vector<24x64xf32> to vector<24x64xbf16>
    %cst_60 = arith.constant dense<0.000000e+00> : vector<24x24xf32>
    %109 = tpu.matmul %107, %108, %cst_60 {dimension_numbers = #tpu.dot_dimension_numbers<[1], [1], [0], [0], [0, 0, 1, 0], [], []>} : vector<24x64xbf16>, vector<24x64xbf16>, vector<24x24xf32> -> vector<24x24xf32>
    %cst_61 = arith.constant -1.000000e+30 : f32
    %110 = vector.broadcast %cst_61 : f32 to vector<24x24xf32>
    %111 = arith.select %41, %109, %110 : vector<24x24xi1>, vector<24x24xf32>
    %cst_62 = arith.constant dense<0xFF800000> : vector<24xf32>
    %112 = vector.multi_reduction <maximumf>, %111, %cst_62 [1] : vector<24x24xf32> to vector<24xf32>
    %113 = vector.shape_cast %112 : vector<24xf32> to vector<24x1xf32>
    %114 = vector.broadcast %113 : vector<24x1xf32> to vector<24x24xf32>
    %115 = arith.subf %111, %114 : vector<24x24xf32>
    %116 = math.exp %115 : vector<24x24xf32>
    %cst_63 = arith.constant dense<0.000000e+00> : vector<24xf32>
    %117 = vector.multi_reduction <add>, %116, %cst_63 [1] : vector<24x24xf32> to vector<24xf32>
    %118 = vector.shape_cast %117 : vector<24xf32> to vector<24x1xf32>
    %119 = tpu.reciprocal %118 {approx = true} : vector<24x1xf32> -> vector<24x1xf32>
    %120 = vector.broadcast %119 : vector<24x1xf32> to vector<24x24xf32>
    %121 = arith.mulf %116, %120 : vector<24x24xf32>
    %122 = arith.truncf %121 : vector<24x24xf32> to vector<24x24xbf16>
    %123 = arith.truncf %106 : vector<24x64xf32> to vector<24x64xbf16>
    %cst_64 = arith.constant dense<0.000000e+00> : vector<24x64xf32>
    %124 = tpu.matmul %122, %123, %cst_64 {dimension_numbers = #tpu.dot_dimension_numbers<[1], [0], [0], [1], [0, 0, 1, 1], [], []>} : vector<24x24xbf16>, vector<24x64xbf16>, vector<24x64xf32> -> vector<24x64xf32>
    %c0_65 = arith.constant 0 : index
    %c0_66 = arith.constant 0 : index
    %125 = vector.load %arg23[%c0_65, %c0_66] : memref<48x256xf32, #tpu.memory_space<vmem>>, vector<24x256xf32>
    %126 = arith.truncf %124 : vector<24x64xf32> to vector<24x64xbf16>
    %c0_67 = arith.constant 0 : index
    %c128_68 = arith.constant 128 : index
    %c0_69 = arith.constant 0 : index
    %127 = vector.load %arg9[%c0_67, %c128_68, %c0_69] : memref<1x256x256xbf16, #tpu.memory_space<vmem>>, vector<1x64x256xbf16>
    %128 = vector.shape_cast %127 : vector<1x64x256xbf16> to vector<64x256xbf16>
    %cst_70 = arith.constant dense<0.000000e+00> : vector<24x256xf32>
    %129 = tpu.matmul %126, %128, %cst_70 {dimension_numbers = #tpu.dot_dimension_numbers<[1], [0], [0], [1], [0, 0, 1, 1], [], []>} : vector<24x64xbf16>, vector<64x256xbf16>, vector<24x256xf32> -> vector<24x256xf32>
    %130 = arith.addf %125, %129 : vector<24x256xf32>
    %c0_71 = arith.constant 0 : index
    %c0_72 = arith.constant 0 : index
    %131 = vector.load %arg23[%c0_71, %c0_72] : memref<48x256xf32, #tpu.memory_space<vmem>>, vector<24x256xf32>
    tpu.vector_store %arg23[%c0_71, %c0_72], %130 {strides = array<i32>} : memref<48x256xf32, #tpu.memory_space<vmem>>, vector<24x256xf32>,
    %c0_73 = arith.constant 0 : index
    %c192 = arith.constant 192 : index
    %132 = vector.load %arg24[%c0_73, %c192] : memref<48x768xf32, #tpu.memory_space<vmem>>, vector<24x64xf32>
    %cst_74 = arith.constant 1.250000e-01 : f32
    %133 = vector.broadcast %cst_74 : f32 to vector<24x64xf32>
    %134 = arith.mulf %132, %133 : vector<24x64xf32>
    %c0_75 = arith.constant 0 : index
    %c448 = arith.constant 448 : index
    %135 = vector.load %arg24[%c0_75, %c448] : memref<48x768xf32, #tpu.memory_space<vmem>>, vector<24x64xf32>
    %c0_76 = arith.constant 0 : index
    %c704 = arith.constant 704 : index
    %136 = vector.load %arg24[%c0_76, %c704] : memref<48x768xf32, #tpu.memory_space<vmem>>, vector<24x64xf32>
    %137 = arith.truncf %134 : vector<24x64xf32> to vector<24x64xbf16>
    %138 = arith.truncf %135 : vector<24x64xf32> to vector<24x64xbf16>
    %cst_77 = arith.constant dense<0.000000e+00> : vector<24x24xf32>
    %139 = tpu.matmul %137, %138, %cst_77 {dimension_numbers = #tpu.dot_dimension_numbers<[1], [1], [0], [0], [0, 0, 1, 0], [], []>} : vector<24x64xbf16>, vector<24x64xbf16>, vector<24x24xf32> -> vector<24x24xf32>
    %cst_78 = arith.constant -1.000000e+30 : f32
    %140 = vector.broadcast %cst_78 : f32 to vector<24x24xf32>
    %141 = arith.select %41, %139, %140 : vector<24x24xi1>, vector<24x24xf32>
    %cst_79 = arith.constant dense<0xFF800000> : vector<24xf32>
    %142 = vector.multi_reduction <maximumf>, %141, %cst_79 [1] : vector<24x24xf32> to vector<24xf32>
    %143 = vector.shape_cast %142 : vector<24xf32> to vector<24x1xf32>
    %144 = vector.broadcast %143 : vector<24x1xf32> to vector<24x24xf32>
    %145 = arith.subf %141, %144 : vector<24x24xf32>
    %146 = math.exp %145 : vector<24x24xf32>
    %cst_80 = arith.constant dense<0.000000e+00> : vector<24xf32>
    %147 = vector.multi_reduction <add>, %146, %cst_80 [1] : vector<24x24xf32> to vector<24xf32>
    %148 = vector.shape_cast %147 : vector<24xf32> to vector<24x1xf32>
    %149 = tpu.reciprocal %148 {approx = true} : vector<24x1xf32> -> vector<24x1xf32>
    %150 = vector.broadcast %149 : vector<24x1xf32> to vector<24x24xf32>
    %151 = arith.mulf %146, %150 : vector<24x24xf32>
    %152 = arith.truncf %151 : vector<24x24xf32> to vector<24x24xbf16>
    %153 = arith.truncf %136 : vector<24x64xf32> to vector<24x64xbf16>
    %cst_81 = arith.constant dense<0.000000e+00> : vector<24x64xf32>
    %154 = tpu.matmul %152, %153, %cst_81 {dimension_numbers = #tpu.dot_dimension_numbers<[1], [0], [0], [1], [0, 0, 1, 1], [], []>} : vector<24x24xbf16>, vector<24x64xbf16>, vector<24x64xf32> -> vector<24x64xf32>
    %c0_82 = arith.constant 0 : index
    %c0_83 = arith.constant 0 : index
    %155 = vector.load %arg23[%c0_82, %c0_83] : memref<48x256xf32, #tpu.memory_space<vmem>>, vector<24x256xf32>
    %156 = arith.truncf %154 : vector<24x64xf32> to vector<24x64xbf16>
    %c0_84 = arith.constant 0 : index
    %c192_85 = arith.constant 192 : index
    %c0_86 = arith.constant 0 : index
    %157 = vector.load %arg9[%c0_84, %c192_85, %c0_86] : memref<1x256x256xbf16, #tpu.memory_space<vmem>>, vector<1x64x256xbf16>
    %158 = vector.shape_cast %157 : vector<1x64x256xbf16> to vector<64x256xbf16>
    %cst_87 = arith.constant dense<0.000000e+00> : vector<24x256xf32>
    %159 = tpu.matmul %156, %158, %cst_87 {dimension_numbers = #tpu.dot_dimension_numbers<[1], [0], [0], [1], [0, 0, 1, 1], [], []>} : vector<24x64xbf16>, vector<64x256xbf16>, vector<24x256xf32> -> vector<24x256xf32>
    %160 = arith.addf %155, %159 : vector<24x256xf32>
    %c0_88 = arith.constant 0 : index
    %c0_89 = arith.constant 0 : index
    %161 = vector.load %arg23[%c0_88, %c0_89] : memref<48x256xf32, #tpu.memory_space<vmem>>, vector<24x256xf32>
    tpu.vector_store %arg23[%c0_88, %c0_89], %160 {strides = array<i32>} : memref<48x256xf32, #tpu.memory_space<vmem>>, vector<24x256xf32>,
    %c24 = arith.constant 24 : index
    %c0_90 = arith.constant 0 : index
    %162 = vector.load %arg24[%c24, %c0_90] : memref<48x768xf32, #tpu.memory_space<vmem>>, vector<24x64xf32>
    %cst_91 = arith.constant 1.250000e-01 : f32
    %163 = vector.broadcast %cst_91 : f32 to vector<24x64xf32>
    %164 = arith.mulf %162, %163 : vector<24x64xf32>
    %c24_92 = arith.constant 24 : index
    %c256_93 = arith.constant 256 : index
    %165 = vector.load %arg24[%c24_92, %c256_93] : memref<48x768xf32, #tpu.memory_space<vmem>>, vector<24x64xf32>
    %c24_94 = arith.constant 24 : index
    %c512_95 = arith.constant 512 : index
    %166 = vector.load %arg24[%c24_94, %c512_95] : memref<48x768xf32, #tpu.memory_space<vmem>>, vector<24x64xf32>
    %167 = arith.truncf %164 : vector<24x64xf32> to vector<24x64xbf16>
    %168 = arith.truncf %165 : vector<24x64xf32> to vector<24x64xbf16>
    %cst_96 = arith.constant dense<0.000000e+00> : vector<24x24xf32>
    %169 = tpu.matmul %167, %168, %cst_96 {dimension_numbers = #tpu.dot_dimension_numbers<[1], [1], [0], [0], [0, 0, 1, 0], [], []>} : vector<24x64xbf16>, vector<24x64xbf16>, vector<24x24xf32> -> vector<24x24xf32>
    %cst_97 = arith.constant -1.000000e+30 : f32
    %170 = vector.broadcast %cst_97 : f32 to vector<24x24xf32>
    %171 = arith.select %41, %169, %170 : vector<24x24xi1>, vector<24x24xf32>
    %cst_98 = arith.constant dense<0xFF800000> : vector<24xf32>
    %172 = vector.multi_reduction <maximumf>, %171, %cst_98 [1] : vector<24x24xf32> to vector<24xf32>
    %173 = vector.shape_cast %172 : vector<24xf32> to vector<24x1xf32>
    %174 = vector.broadcast %173 : vector<24x1xf32> to vector<24x24xf32>
    %175 = arith.subf %171, %174 : vector<24x24xf32>
    %176 = math.exp %175 : vector<24x24xf32>
    %cst_99 = arith.constant dense<0.000000e+00> : vector<24xf32>
    %177 = vector.multi_reduction <add>, %176, %cst_99 [1] : vector<24x24xf32> to vector<24xf32>
    %178 = vector.shape_cast %177 : vector<24xf32> to vector<24x1xf32>
    %179 = tpu.reciprocal %178 {approx = true} : vector<24x1xf32> -> vector<24x1xf32>
    %180 = vector.broadcast %179 : vector<24x1xf32> to vector<24x24xf32>
    %181 = arith.mulf %176, %180 : vector<24x24xf32>
    %182 = arith.truncf %181 : vector<24x24xf32> to vector<24x24xbf16>
    %183 = arith.truncf %166 : vector<24x64xf32> to vector<24x64xbf16>
    %cst_100 = arith.constant dense<0.000000e+00> : vector<24x64xf32>
    %184 = tpu.matmul %182, %183, %cst_100 {dimension_numbers = #tpu.dot_dimension_numbers<[1], [0], [0], [1], [0, 0, 1, 1], [], []>} : vector<24x24xbf16>, vector<24x64xbf16>, vector<24x64xf32> -> vector<24x64xf32>
    %c24_101 = arith.constant 24 : index
    %c0_102 = arith.constant 0 : index
    %185 = vector.load %arg23[%c24_101, %c0_102] : memref<48x256xf32, #tpu.memory_space<vmem>>, vector<24x256xf32>
    %186 = arith.truncf %184 : vector<24x64xf32> to vector<24x64xbf16>
    %c0_103 = arith.constant 0 : index
    %c0_104 = arith.constant 0 : index
    %c0_105 = arith.constant 0 : index
    %187 = vector.load %arg9[%c0_103, %c0_104, %c0_105] : memref<1x256x256xbf16, #tpu.memory_space<vmem>>, vector<1x64x256xbf16>
    %188 = vector.shape_cast %187 : vector<1x64x256xbf16> to vector<64x256xbf16>
    %cst_106 = arith.constant dense<0.000000e+00> : vector<24x256xf32>
    %189 = tpu.matmul %186, %188, %cst_106 {dimension_numbers = #tpu.dot_dimension_numbers<[1], [0], [0], [1], [0, 0, 1, 1], [], []>} : vector<24x64xbf16>, vector<64x256xbf16>, vector<24x256xf32> -> vector<24x256xf32>
    %190 = arith.addf %185, %189 : vector<24x256xf32>
    %c24_107 = arith.constant 24 : index
    %c0_108 = arith.constant 0 : index
    %191 = vector.load %arg23[%c24_107, %c0_108] : memref<48x256xf32, #tpu.memory_space<vmem>>, vector<24x256xf32>
    tpu.vector_store %arg23[%c24_107, %c0_108], %190 {strides = array<i32>} : memref<48x256xf32, #tpu.memory_space<vmem>>, vector<24x256xf32>,
    %c24_109 = arith.constant 24 : index
    %c64_110 = arith.constant 64 : index
    %192 = vector.load %arg24[%c24_109, %c64_110] : memref<48x768xf32, #tpu.memory_space<vmem>>, vector<24x64xf32>
    %cst_111 = arith.constant 1.250000e-01 : f32
    %193 = vector.broadcast %cst_111 : f32 to vector<24x64xf32>
    %194 = arith.mulf %192, %193 : vector<24x64xf32>
    %c24_112 = arith.constant 24 : index
    %c320_113 = arith.constant 320 : index
    %195 = vector.load %arg24[%c24_112, %c320_113] : memref<48x768xf32, #tpu.memory_space<vmem>>, vector<24x64xf32>
    %c24_114 = arith.constant 24 : index
    %c576_115 = arith.constant 576 : index
    %196 = vector.load %arg24[%c24_114, %c576_115] : memref<48x768xf32, #tpu.memory_space<vmem>>, vector<24x64xf32>
    %197 = arith.truncf %194 : vector<24x64xf32> to vector<24x64xbf16>
    %198 = arith.truncf %195 : vector<24x64xf32> to vector<24x64xbf16>
    %cst_116 = arith.constant dense<0.000000e+00> : vector<24x24xf32>
    %199 = tpu.matmul %197, %198, %cst_116 {dimension_numbers = #tpu.dot_dimension_numbers<[1], [1], [0], [0], [0, 0, 1, 0], [], []>} : vector<24x64xbf16>, vector<24x64xbf16>, vector<24x24xf32> -> vector<24x24xf32>
    %cst_117 = arith.constant -1.000000e+30 : f32
    %200 = vector.broadcast %cst_117 : f32 to vector<24x24xf32>
    %201 = arith.select %41, %199, %200 : vector<24x24xi1>, vector<24x24xf32>
    %cst_118 = arith.constant dense<0xFF800000> : vector<24xf32>
    %202 = vector.multi_reduction <maximumf>, %201, %cst_118 [1] : vector<24x24xf32> to vector<24xf32>
    %203 = vector.shape_cast %202 : vector<24xf32> to vector<24x1xf32>
    %204 = vector.broadcast %203 : vector<24x1xf32> to vector<24x24xf32>
    %205 = arith.subf %201, %204 : vector<24x24xf32>
    %206 = math.exp %205 : vector<24x24xf32>
    %cst_119 = arith.constant dense<0.000000e+00> : vector<24xf32>
    %207 = vector.multi_reduction <add>, %206, %cst_119 [1] : vector<24x24xf32> to vector<24xf32>
    %208 = vector.shape_cast %207 : vector<24xf32> to vector<24x1xf32>
    %209 = tpu.reciprocal %208 {approx = true} : vector<24x1xf32> -> vector<24x1xf32>
    %210 = vector.broadcast %209 : vector<24x1xf32> to vector<24x24xf32>
    %211 = arith.mulf %206, %210 : vector<24x24xf32>
    %212 = arith.truncf %211 : vector<24x24xf32> to vector<24x24xbf16>
    %213 = arith.truncf %196 : vector<24x64xf32> to vector<24x64xbf16>
    %cst_120 = arith.constant dense<0.000000e+00> : vector<24x64xf32>
    %214 = tpu.matmul %212, %213, %cst_120 {dimension_numbers = #tpu.dot_dimension_numbers<[1], [0], [0], [1], [0, 0, 1, 1], [], []>} : vector<24x24xbf16>, vector<24x64xbf16>, vector<24x64xf32> -> vector<24x64xf32>
    %c24_121 = arith.constant 24 : index
    %c0_122 = arith.constant 0 : index
    %215 = vector.load %arg23[%c24_121, %c0_122] : memref<48x256xf32, #tpu.memory_space<vmem>>, vector<24x256xf32>
    %216 = arith.truncf %214 : vector<24x64xf32> to vector<24x64xbf16>
    %c0_123 = arith.constant 0 : index
    %c64_124 = arith.constant 64 : index
    %c0_125 = arith.constant 0 : index
    %217 = vector.load %arg9[%c0_123, %c64_124, %c0_125] : memref<1x256x256xbf16, #tpu.memory_space<vmem>>, vector<1x64x256xbf16>
    %218 = vector.shape_cast %217 : vector<1x64x256xbf16> to vector<64x256xbf16>
    %cst_126 = arith.constant dense<0.000000e+00> : vector<24x256xf32>
    %219 = tpu.matmul %216, %218, %cst_126 {dimension_numbers = #tpu.dot_dimension_numbers<[1], [0], [0], [1], [0, 0, 1, 1], [], []>} : vector<24x64xbf16>, vector<64x256xbf16>, vector<24x256xf32> -> vector<24x256xf32>
    %220 = arith.addf %215, %219 : vector<24x256xf32>
    %c24_127 = arith.constant 24 : index
    %c0_128 = arith.constant 0 : index
    %221 = vector.load %arg23[%c24_127, %c0_128] : memref<48x256xf32, #tpu.memory_space<vmem>>, vector<24x256xf32>
    tpu.vector_store %arg23[%c24_127, %c0_128], %220 {strides = array<i32>} : memref<48x256xf32, #tpu.memory_space<vmem>>, vector<24x256xf32>,
    %c24_129 = arith.constant 24 : index
    %c128_130 = arith.constant 128 : index
    %222 = vector.load %arg24[%c24_129, %c128_130] : memref<48x768xf32, #tpu.memory_space<vmem>>, vector<24x64xf32>
    %cst_131 = arith.constant 1.250000e-01 : f32
    %223 = vector.broadcast %cst_131 : f32 to vector<24x64xf32>
    %224 = arith.mulf %222, %223 : vector<24x64xf32>
    %c24_132 = arith.constant 24 : index
    %c384_133 = arith.constant 384 : index
    %225 = vector.load %arg24[%c24_132, %c384_133] : memref<48x768xf32, #tpu.memory_space<vmem>>, vector<24x64xf32>
    %c24_134 = arith.constant 24 : index
    %c640_135 = arith.constant 640 : index
    %226 = vector.load %arg24[%c24_134, %c640_135] : memref<48x768xf32, #tpu.memory_space<vmem>>, vector<24x64xf32>
    %227 = arith.truncf %224 : vector<24x64xf32> to vector<24x64xbf16>
    %228 = arith.truncf %225 : vector<24x64xf32> to vector<24x64xbf16>
    %cst_136 = arith.constant dense<0.000000e+00> : vector<24x24xf32>
    %229 = tpu.matmul %227, %228, %cst_136 {dimension_numbers = #tpu.dot_dimension_numbers<[1], [1], [0], [0], [0, 0, 1, 0], [], []>} : vector<24x64xbf16>, vector<24x64xbf16>, vector<24x24xf32> -> vector<24x24xf32>
    %cst_137 = arith.constant -1.000000e+30 : f32
    %230 = vector.broadcast %cst_137 : f32 to vector<24x24xf32>
    %231 = arith.select %41, %229, %230 : vector<24x24xi1>, vector<24x24xf32>
    %cst_138 = arith.constant dense<0xFF800000> : vector<24xf32>
    %232 = vector.multi_reduction <maximumf>, %231, %cst_138 [1] : vector<24x24xf32> to vector<24xf32>
    %233 = vector.shape_cast %232 : vector<24xf32> to vector<24x1xf32>
    %234 = vector.broadcast %233 : vector<24x1xf32> to vector<24x24xf32>
    %235 = arith.subf %231, %234 : vector<24x24xf32>
    %236 = math.exp %235 : vector<24x24xf32>
    %cst_139 = arith.constant dense<0.000000e+00> : vector<24xf32>
    %237 = vector.multi_reduction <add>, %236, %cst_139 [1] : vector<24x24xf32> to vector<24xf32>
    %238 = vector.shape_cast %237 : vector<24xf32> to vector<24x1xf32>
    %239 = tpu.reciprocal %238 {approx = true} : vector<24x1xf32> -> vector<24x1xf32>
    %240 = vector.broadcast %239 : vector<24x1xf32> to vector<24x24xf32>
    %241 = arith.mulf %236, %240 : vector<24x24xf32>
    %242 = arith.truncf %241 : vector<24x24xf32> to vector<24x24xbf16>
    %243 = arith.truncf %226 : vector<24x64xf32> to vector<24x64xbf16>
    %cst_140 = arith.constant dense<0.000000e+00> : vector<24x64xf32>
    %244 = tpu.matmul %242, %243, %cst_140 {dimension_numbers = #tpu.dot_dimension_numbers<[1], [0], [0], [1], [0, 0, 1, 1], [], []>} : vector<24x24xbf16>, vector<24x64xbf16>, vector<24x64xf32> -> vector<24x64xf32>
    %c24_141 = arith.constant 24 : index
    %c0_142 = arith.constant 0 : index
    %245 = vector.load %arg23[%c24_141, %c0_142] : memref<48x256xf32, #tpu.memory_space<vmem>>, vector<24x256xf32>
    %246 = arith.truncf %244 : vector<24x64xf32> to vector<24x64xbf16>
    %c0_143 = arith.constant 0 : index
    %c128_144 = arith.constant 128 : index
    %c0_145 = arith.constant 0 : index
    %247 = vector.load %arg9[%c0_143, %c128_144, %c0_145] : memref<1x256x256xbf16, #tpu.memory_space<vmem>>, vector<1x64x256xbf16>
    %248 = vector.shape_cast %247 : vector<1x64x256xbf16> to vector<64x256xbf16>
    %cst_146 = arith.constant dense<0.000000e+00> : vector<24x256xf32>
    %249 = tpu.matmul %246, %248, %cst_146 {dimension_numbers = #tpu.dot_dimension_numbers<[1], [0], [0], [1], [0, 0, 1, 1], [], []>} : vector<24x64xbf16>, vector<64x256xbf16>, vector<24x256xf32> -> vector<24x256xf32>
    %250 = arith.addf %245, %249 : vector<24x256xf32>
    %c24_147 = arith.constant 24 : index
    %c0_148 = arith.constant 0 : index
    %251 = vector.load %arg23[%c24_147, %c0_148] : memref<48x256xf32, #tpu.memory_space<vmem>>, vector<24x256xf32>
    tpu.vector_store %arg23[%c24_147, %c0_148], %250 {strides = array<i32>} : memref<48x256xf32, #tpu.memory_space<vmem>>, vector<24x256xf32>,
    %c24_149 = arith.constant 24 : index
    %c192_150 = arith.constant 192 : index
    %252 = vector.load %arg24[%c24_149, %c192_150] : memref<48x768xf32, #tpu.memory_space<vmem>>, vector<24x64xf32>
    %cst_151 = arith.constant 1.250000e-01 : f32
    %253 = vector.broadcast %cst_151 : f32 to vector<24x64xf32>
    %254 = arith.mulf %252, %253 : vector<24x64xf32>
    %c24_152 = arith.constant 24 : index
    %c448_153 = arith.constant 448 : index
    %255 = vector.load %arg24[%c24_152, %c448_153] : memref<48x768xf32, #tpu.memory_space<vmem>>, vector<24x64xf32>
    %c24_154 = arith.constant 24 : index
    %c704_155 = arith.constant 704 : index
    %256 = vector.load %arg24[%c24_154, %c704_155] : memref<48x768xf32, #tpu.memory_space<vmem>>, vector<24x64xf32>
    %257 = arith.truncf %254 : vector<24x64xf32> to vector<24x64xbf16>
    %258 = arith.truncf %255 : vector<24x64xf32> to vector<24x64xbf16>
    %cst_156 = arith.constant dense<0.000000e+00> : vector<24x24xf32>
    %259 = tpu.matmul %257, %258, %cst_156 {dimension_numbers = #tpu.dot_dimension_numbers<[1], [1], [0], [0], [0, 0, 1, 0], [], []>} : vector<24x64xbf16>, vector<24x64xbf16>, vector<24x24xf32> -> vector<24x24xf32>
    %cst_157 = arith.constant -1.000000e+30 : f32
    %260 = vector.broadcast %cst_157 : f32 to vector<24x24xf32>
    %261 = arith.select %41, %259, %260 : vector<24x24xi1>, vector<24x24xf32>
    %cst_158 = arith.constant dense<0xFF800000> : vector<24xf32>
    %262 = vector.multi_reduction <maximumf>, %261, %cst_158 [1] : vector<24x24xf32> to vector<24xf32>
    %263 = vector.shape_cast %262 : vector<24xf32> to vector<24x1xf32>
    %264 = vector.broadcast %263 : vector<24x1xf32> to vector<24x24xf32>
    %265 = arith.subf %261, %264 : vector<24x24xf32>
    %266 = math.exp %265 : vector<24x24xf32>
    %cst_159 = arith.constant dense<0.000000e+00> : vector<24xf32>
    %267 = vector.multi_reduction <add>, %266, %cst_159 [1] : vector<24x24xf32> to vector<24xf32>
    %268 = vector.shape_cast %267 : vector<24xf32> to vector<24x1xf32>
    %269 = tpu.reciprocal %268 {approx = true} : vector<24x1xf32> -> vector<24x1xf32>
    %270 = vector.broadcast %269 : vector<24x1xf32> to vector<24x24xf32>
    %271 = arith.mulf %266, %270 : vector<24x24xf32>
    %272 = arith.truncf %271 : vector<24x24xf32> to vector<24x24xbf16>
    %273 = arith.truncf %256 : vector<24x64xf32> to vector<24x64xbf16>
    %cst_160 = arith.constant dense<0.000000e+00> : vector<24x64xf32>
    %274 = tpu.matmul %272, %273, %cst_160 {dimension_numbers = #tpu.dot_dimension_numbers<[1], [0], [0], [1], [0, 0, 1, 1], [], []>} : vector<24x24xbf16>, vector<24x64xbf16>, vector<24x64xf32> -> vector<24x64xf32>
    %c24_161 = arith.constant 24 : index
    %c0_162 = arith.constant 0 : index
    %275 = vector.load %arg23[%c24_161, %c0_162] : memref<48x256xf32, #tpu.memory_space<vmem>>, vector<24x256xf32>
    %276 = arith.truncf %274 : vector<24x64xf32> to vector<24x64xbf16>
    %c0_163 = arith.constant 0 : index
    %c192_164 = arith.constant 192 : index
    %c0_165 = arith.constant 0 : index
    %277 = vector.load %arg9[%c0_163, %c192_164, %c0_165] : memref<1x256x256xbf16, #tpu.memory_space<vmem>>, vector<1x64x256xbf16>
    %278 = vector.shape_cast %277 : vector<1x64x256xbf16> to vector<64x256xbf16>
    %cst_166 = arith.constant dense<0.000000e+00> : vector<24x256xf32>
    %279 = tpu.matmul %276, %278, %cst_166 {dimension_numbers = #tpu.dot_dimension_numbers<[1], [0], [0], [1], [0, 0, 1, 1], [], []>} : vector<24x64xbf16>, vector<64x256xbf16>, vector<24x256xf32> -> vector<24x256xf32>
    %280 = arith.addf %275, %279 : vector<24x256xf32>
    %c24_167 = arith.constant 24 : index
    %c0_168 = arith.constant 0 : index
    %281 = vector.load %arg23[%c24_167, %c0_168] : memref<48x256xf32, #tpu.memory_space<vmem>>, vector<24x256xf32>
    tpu.vector_store %arg23[%c24_167, %c0_168], %280 {strides = array<i32>} : memref<48x256xf32, #tpu.memory_space<vmem>>, vector<24x256xf32>,
    %c0_169 = arith.constant 0 : index
    %c0_170 = arith.constant 0 : index
    %282 = vector.load %arg23[%c0_169, %c0_170] : memref<48x256xf32, #tpu.memory_space<vmem>>, vector<48x256xf32>
    %c0_171 = arith.constant 0 : index
    %c0_172 = arith.constant 0 : index
    %c0_173 = arith.constant 0 : index
    %283 = vector.load %arg10[%c0_171, %c0_172, %c0_173] : memref<1x1x256xf32, #tpu.memory_space<vmem>>, vector<1x1x256xf32>
    %284 = vector.shape_cast %283 : vector<1x1x256xf32> to vector<1x256xf32>
    %285 = vector.broadcast %284 : vector<1x256xf32> to vector<48x256xf32>
    %286 = arith.addf %282, %285 : vector<48x256xf32>
    %c0_174 = arith.constant 0 : index
    %c0_175 = arith.constant 0 : index
    %287 = vector.load %arg23[%c0_174, %c0_175] : memref<48x256xf32, #tpu.memory_space<vmem>>, vector<48x256xf32>
    tpu.vector_store %arg23[%c0_174, %c0_175], %286 {strides = array<i32>} : memref<48x256xf32, #tpu.memory_space<vmem>>, vector<48x256xf32>,
    %c0_176 = arith.constant 0 : index
    %c0_177 = arith.constant 0 : index
    %c0_178 = arith.constant 0 : index
    %288 = vector.load %arg11[%c0_176, %c0_177, %c0_178] : memref<1x1x256xf32, #tpu.memory_space<vmem>>, vector<1x1x256xf32>
    %289 = vector.shape_cast %288 : vector<1x1x256xf32> to vector<1x256xf32>
    %c0_179 = arith.constant 0 : index
    %c0_180 = arith.constant 0 : index
    %c0_181 = arith.constant 0 : index
    %290 = vector.load %arg12[%c0_179, %c0_180, %c0_181] : memref<1x1x256xf32, #tpu.memory_space<vmem>>, vector<1x1x256xf32>
    %291 = vector.shape_cast %290 : vector<1x1x256xf32> to vector<1x256xf32>
    %cst_182 = arith.constant dense<0.000000e+00> : vector<48xf32>
    %292 = vector.multi_reduction <add>, %286, %cst_182 [1] : vector<48x256xf32> to vector<48xf32>
    %293 = vector.shape_cast %292 : vector<48xf32> to vector<48x1xf32>
    %cst_183 = arith.constant 2.560000e+02 : f32
    %294 = vector.broadcast %cst_183 : f32 to vector<48x1xf32>
    %295 = arith.divf %293, %294 : vector<48x1xf32>
    %296 = vector.broadcast %295 : vector<48x1xf32> to vector<48x256xf32>
    %297 = arith.subf %286, %296 : vector<48x256xf32>
    %298 = arith.mulf %297, %297 : vector<48x256xf32>
    %cst_184 = arith.constant dense<0.000000e+00> : vector<48xf32>
    %299 = vector.multi_reduction <add>, %298, %cst_184 [1] : vector<48x256xf32> to vector<48xf32>
    %300 = vector.shape_cast %299 : vector<48xf32> to vector<48x1xf32>
    %cst_185 = arith.constant 2.560000e+02 : f32
    %301 = vector.broadcast %cst_185 : f32 to vector<48x1xf32>
    %302 = arith.divf %300, %301 : vector<48x1xf32>
    %303 = vector.broadcast %295 : vector<48x1xf32> to vector<48x256xf32>
    %304 = arith.subf %286, %303 : vector<48x256xf32>
    %cst_186 = arith.constant 9.99999997E-7 : f32
    %305 = vector.broadcast %cst_186 : f32 to vector<48x1xf32>
    %306 = arith.addf %302, %305 : vector<48x1xf32>
    %307 = math.rsqrt %306 : vector<48x1xf32>
    %308 = vector.broadcast %307 : vector<48x1xf32> to vector<48x256xf32>
    %309 = arith.mulf %304, %308 : vector<48x256xf32>
    %310 = vector.broadcast %289 : vector<1x256xf32> to vector<48x256xf32>
    %311 = arith.mulf %309, %310 : vector<48x256xf32>
    %312 = vector.broadcast %291 : vector<1x256xf32> to vector<48x256xf32>
    %313 = arith.addf %311, %312 : vector<48x256xf32>
    %314 = arith.truncf %313 : vector<48x256xf32> to vector<48x256xbf16>
    %c0_187 = arith.constant 0 : index
    %c0_188 = arith.constant 0 : index
    %c0_189 = arith.constant 0 : index
    %315 = vector.load %arg13[%c0_187, %c0_188, %c0_189] : memref<1x256x512xbf16, #tpu.memory_space<vmem>>, vector<1x256x512xbf16>
    %316 = vector.shape_cast %315 : vector<1x256x512xbf16> to vector<256x512xbf16>
    %cst_190 = arith.constant dense<0.000000e+00> : vector<48x512xf32>
    %317 = tpu.matmul %314, %316, %cst_190 {dimension_numbers = #tpu.dot_dimension_numbers<[1], [0], [0], [1], [0, 0, 1, 1], [], []>} : vector<48x256xbf16>, vector<256x512xbf16>, vector<48x512xf32> -> vector<48x512xf32>
    %c0_191 = arith.constant 0 : index
    %c0_192 = arith.constant 0 : index
    %c0_193 = arith.constant 0 : index
    %318 = vector.load %arg14[%c0_191, %c0_192, %c0_193] : memref<1x1x512xf32, #tpu.memory_space<vmem>>, vector<1x1x512xf32>
    %319 = vector.shape_cast %318 : vector<1x1x512xf32> to vector<1x512xf32>
    %320 = vector.broadcast %319 : vector<1x512xf32> to vector<48x512xf32>
    %321 = arith.addf %317, %320 : vector<48x512xf32>
    %322 = arith.mulf %321, %321 : vector<48x512xf32>
    %323 = arith.mulf %321, %322 : vector<48x512xf32>
    %cst_194 = arith.constant 4.471500e-02 : f32
    %324 = vector.broadcast %cst_194 : f32 to vector<48x512xf32>
    %325 = arith.mulf %324, %323 : vector<48x512xf32>
    %326 = arith.addf %321, %325 : vector<48x512xf32>
    %cst_195 = arith.constant 0.797884583 : f32
    %327 = vector.broadcast %cst_195 : f32 to vector<48x512xf32>
    %328 = arith.mulf %327, %326 : vector<48x512xf32>
    %329 = math.tanh %328 : vector<48x512xf32>
    %cst_196 = arith.constant 1.000000e+00 : f32
    %330 = vector.broadcast %cst_196 : f32 to vector<48x512xf32>
    %331 = arith.addf %330, %329 : vector<48x512xf32>
    %cst_197 = arith.constant 5.000000e-01 : f32
    %332 = vector.broadcast %cst_197 : f32 to vector<48x512xf32>
    %333 = arith.mulf %332, %331 : vector<48x512xf32>
    %334 = arith.mulf %321, %333 : vector<48x512xf32>
    %335 = arith.truncf %334 : vector<48x512xf32> to vector<48x512xbf16>
    %c0_198 = arith.constant 0 : index
    %c0_199 = arith.constant 0 : index
    %c0_200 = arith.constant 0 : index
    %336 = vector.load %arg15[%c0_198, %c0_199, %c0_200] : memref<1x512x256xbf16, #tpu.memory_space<vmem>>, vector<1x512x256xbf16>
    %337 = vector.shape_cast %336 : vector<1x512x256xbf16> to vector<512x256xbf16>
    %cst_201 = arith.constant dense<0.000000e+00> : vector<48x256xf32>
    %338 = tpu.matmul %335, %337, %cst_201 {dimension_numbers = #tpu.dot_dimension_numbers<[1], [0], [0], [1], [0, 0, 1, 1], [], []>} : vector<48x512xbf16>, vector<512x256xbf16>, vector<48x256xf32> -> vector<48x256xf32>
    %339 = arith.addf %286, %338 : vector<48x256xf32>
    %c0_202 = arith.constant 0 : index
    %c0_203 = arith.constant 0 : index
    %c0_204 = arith.constant 0 : index
    %340 = vector.load %arg16[%c0_202, %c0_203, %c0_204] : memref<1x1x256xf32, #tpu.memory_space<vmem>>, vector<1x1x256xf32>
    %341 = vector.shape_cast %340 : vector<1x1x256xf32> to vector<1x256xf32>
    %342 = vector.broadcast %341 : vector<1x256xf32> to vector<48x256xf32>
    %343 = arith.addf %339, %342 : vector<48x256xf32>
    %c0_205 = arith.constant 0 : index
    %c0_206 = arith.constant 0 : index
    %344 = vector.load %arg23[%c0_205, %c0_206] : memref<48x256xf32, #tpu.memory_space<vmem>>, vector<48x256xf32>
    tpu.vector_store %arg23[%c0_205, %c0_206], %343 {strides = array<i32>} : memref<48x256xf32, #tpu.memory_space<vmem>>, vector<48x256xf32>,
    %c1_i32 = arith.constant 1 : i32
    %345 = arith.cmpi eq, %arg1, %c1_i32 : i32
    %346 = arith.extui %345 : i1 to i32
    %c0_i32_207 = arith.constant 0 : i32
    %347 = arith.cmpi ne, %346, %c0_i32_207 : i32
    scf.if %347 {
      %c0_208 = arith.constant 0 : index
      %c0_209 = arith.constant 0 : index
      %348 = vector.load %arg17[%c0_208, %c0_209] : memref<1x256xf32, #tpu.memory_space<vmem>>, vector<1x256xf32>
      %c0_210 = arith.constant 0 : index
      %c0_211 = arith.constant 0 : index
      %349 = vector.load %arg18[%c0_210, %c0_211] : memref<1x256xf32, #tpu.memory_space<vmem>>, vector<1x256xf32>
      %cst_212 = arith.constant dense<0.000000e+00> : vector<48xf32>
      %350 = vector.multi_reduction <add>, %343, %cst_212 [1] : vector<48x256xf32> to vector<48xf32>
      %351 = vector.shape_cast %350 : vector<48xf32> to vector<48x1xf32>
      %cst_213 = arith.constant 2.560000e+02 : f32
      %352 = vector.broadcast %cst_213 : f32 to vector<48x1xf32>
      %353 = arith.divf %351, %352 : vector<48x1xf32>
      %354 = vector.broadcast %353 : vector<48x1xf32> to vector<48x256xf32>
      %355 = arith.subf %343, %354 : vector<48x256xf32>
      %356 = arith.mulf %355, %355 : vector<48x256xf32>
      %cst_214 = arith.constant dense<0.000000e+00> : vector<48xf32>
      %357 = vector.multi_reduction <add>, %356, %cst_214 [1] : vector<48x256xf32> to vector<48xf32>
      %358 = vector.shape_cast %357 : vector<48xf32> to vector<48x1xf32>
      %cst_215 = arith.constant 2.560000e+02 : f32
      %359 = vector.broadcast %cst_215 : f32 to vector<48x1xf32>
      %360 = arith.divf %358, %359 : vector<48x1xf32>
      %361 = vector.broadcast %353 : vector<48x1xf32> to vector<48x256xf32>
      %362 = arith.subf %343, %361 : vector<48x256xf32>
      %cst_216 = arith.constant 9.99999997E-7 : f32
      %363 = vector.broadcast %cst_216 : f32 to vector<48x1xf32>
      %364 = arith.addf %360, %363 : vector<48x1xf32>
      %365 = math.rsqrt %364 : vector<48x1xf32>
      %366 = vector.broadcast %365 : vector<48x1xf32> to vector<48x256xf32>
      %367 = arith.mulf %362, %366 : vector<48x256xf32>
      %368 = vector.broadcast %348 : vector<1x256xf32> to vector<48x256xf32>
      %369 = arith.mulf %367, %368 : vector<48x256xf32>
      %370 = vector.broadcast %349 : vector<1x256xf32> to vector<48x256xf32>
      %371 = arith.addf %369, %370 : vector<48x256xf32>
      %c0_217 = arith.constant 0 : index
      %c0_218 = arith.constant 0 : index
      %372 = vector.load %arg19[%c0_217, %c0_218] : memref<10x48xf32, #tpu.memory_space<vmem>>, vector<10x48xf32>
      %cst_219 = arith.constant dense<0.000000e+00> : vector<10x256xf32>
      %373 = tpu.matmul %372, %371, %cst_219 {dimension_numbers = #tpu.dot_dimension_numbers<[1], [0], [0], [1], [0, 0, 1, 1], [], []>} : vector<10x48xf32>, vector<48x256xf32>, vector<10x256xf32> -> vector<10x256xf32>
      %374 = arith.truncf %373 : vector<10x256xf32> to vector<10x256xbf16>
      %c0_220 = arith.constant 0 : index
      %c0_221 = arith.constant 0 : index
      %375 = vector.load %arg20[%c0_220, %c0_221] : memref<256x512xbf16, #tpu.memory_space<vmem>>, vector<256x512xbf16>
      %cst_222 = arith.constant dense<0.000000e+00> : vector<10x512xf32>
      %376 = tpu.matmul %374, %375, %cst_222 {dimension_numbers = #tpu.dot_dimension_numbers<[1], [0], [0], [1], [0, 0, 1, 1], [], []>} : vector<10x256xbf16>, vector<256x512xbf16>, vector<10x512xf32> -> vector<10x512xf32>
      %c0_223 = arith.constant 0 : index
      %c0_224 = arith.constant 0 : index
      %377 = vector.load %arg21[%c0_223, %c0_224] : memref<1x512xf32, #tpu.memory_space<vmem>>, vector<1x512xf32>
      %378 = vector.broadcast %377 : vector<1x512xf32> to vector<10x512xf32>
      %379 = arith.addf %376, %378 : vector<10x512xf32>
      %c0_225 = arith.constant 0 : index
      %c0_226 = arith.constant 0 : index
      %c0_227 = arith.constant 0 : index
      %380 = vector.load %arg22[%c0_225, %c0_226, %c0_227] : memref<1x10x512xf32, #tpu.memory_space<vmem>>, vector<1x10x512xf32>
      %381 = vector.shape_cast %380 : vector<1x10x512xf32> to vector<10x512xf32>
      %382 = vector.shape_cast %379 : vector<10x512xf32> to vector<1x10x512xf32>
      tpu.vector_store %arg22[%c0_225, %c0_226, %c0_227], %382 {strides = array<i32>} : memref<1x10x512xf32, #tpu.memory_space<vmem>>, vector<1x10x512xf32>,
    } else {
    }
    return
  }
  func.func @transform_0(%arg0: i32, %arg1: i32) -> (i32, i32, i32) {
    %c0_i32 = arith.constant 0 : i32
    %c0_i32_0 = arith.constant 0 : i32
    %c0_i32_1 = arith.constant 0 : i32
    return %arg0, %c0_i32, %c0_i32_0 : i32, i32, i32
  }
  func.func @transform_1(%arg0: i32, %arg1: i32) -> (i32, i32) {
    %c0_i32 = arith.constant 0 : i32
    %c0_i32_0 = arith.constant 0 : i32
    %c0_i32_1 = arith.constant 0 : i32
    return %c0_i32, %c0_i32_0 : i32, i32
  }
  func.func @transform_2(%arg0: i32, %arg1: i32) -> (i32, i32) {
    %c0_i32 = arith.constant 0 : i32
    %c0_i32_0 = arith.constant 0 : i32
    %c0_i32_1 = arith.constant 0 : i32
    return %c0_i32, %c0_i32_0 : i32, i32
  }
  func.func @transform_3(%arg0: i32, %arg1: i32) -> (i32, i32, i32) {
    %c0_i32 = arith.constant 0 : i32
    %c0_i32_0 = arith.constant 0 : i32
    %c0_i32_1 = arith.constant 0 : i32
    return %arg1, %c0_i32, %c0_i32_0 : i32, i32, i32
  }
  func.func @transform_4(%arg0: i32, %arg1: i32) -> (i32, i32, i32) {
    %c0_i32 = arith.constant 0 : i32
    %c0_i32_0 = arith.constant 0 : i32
    %c0_i32_1 = arith.constant 0 : i32
    return %arg1, %c0_i32, %c0_i32_0 : i32, i32, i32
  }
  func.func @transform_5(%arg0: i32, %arg1: i32) -> (i32, i32, i32) {
    %c0_i32 = arith.constant 0 : i32
    %c0_i32_0 = arith.constant 0 : i32
    %c0_i32_1 = arith.constant 0 : i32
    return %arg1, %c0_i32, %c0_i32_0 : i32, i32, i32
  }
  func.func @transform_6(%arg0: i32, %arg1: i32) -> (i32, i32, i32) {
    %c0_i32 = arith.constant 0 : i32
    %c0_i32_0 = arith.constant 0 : i32
    %c0_i32_1 = arith.constant 0 : i32
    return %arg1, %c0_i32, %c0_i32_0 : i32, i32, i32
  }
  func.func @transform_7(%arg0: i32, %arg1: i32) -> (i32, i32, i32) {
    %c0_i32 = arith.constant 0 : i32
    %c0_i32_0 = arith.constant 0 : i32
    %c0_i32_1 = arith.constant 0 : i32
    return %arg1, %c0_i32, %c0_i32_0 : i32, i32, i32
  }
  func.func @transform_8(%arg0: i32, %arg1: i32) -> (i32, i32, i32) {
    %c0_i32 = arith.constant 0 : i32
    %c0_i32_0 = arith.constant 0 : i32
    %c0_i32_1 = arith.constant 0 : i32
    return %arg1, %c0_i32, %c0_i32_0 : i32, i32, i32
  }
  func.func @transform_9(%arg0: i32, %arg1: i32) -> (i32, i32, i32) {
    %c0_i32 = arith.constant 0 : i32
    %c0_i32_0 = arith.constant 0 : i32
    %c0_i32_1 = arith.constant 0 : i32
    return %arg1, %c0_i32, %c0_i32_0 : i32, i32, i32
  }
  func.func @transform_10(%arg0: i32, %arg1: i32) -> (i32, i32, i32) {
    %c0_i32 = arith.constant 0 : i32
    %c0_i32_0 = arith.constant 0 : i32
    %c0_i32_1 = arith.constant 0 : i32
    return %arg1, %c0_i32, %c0_i32_0 : i32, i32, i32
  }
  func.func @transform_11(%arg0: i32, %arg1: i32) -> (i32, i32, i32) {
    %c0_i32 = arith.constant 0 : i32
    %c0_i32_0 = arith.constant 0 : i32
    %c0_i32_1 = arith.constant 0 : i32
    return %arg1, %c0_i32, %c0_i32_0 : i32, i32, i32
  }
  func.func @transform_12(%arg0: i32, %arg1: i32) -> (i32, i32, i32) {
    %c0_i32 = arith.constant 0 : i32
    %c0_i32_0 = arith.constant 0 : i32
    %c0_i32_1 = arith.constant 0 : i32
    return %arg1, %c0_i32, %c0_i32_0 : i32, i32, i32
  }
  func.func @transform_13(%arg0: i32, %arg1: i32) -> (i32, i32, i32) {
    %c0_i32 = arith.constant 0 : i32
    %c0_i32_0 = arith.constant 0 : i32
    %c0_i32_1 = arith.constant 0 : i32
    return %arg1, %c0_i32, %c0_i32_0 : i32, i32, i32
  }
  func.func @transform_14(%arg0: i32, %arg1: i32) -> (i32, i32, i32) {
    %c0_i32 = arith.constant 0 : i32
    %c0_i32_0 = arith.constant 0 : i32
    %c0_i32_1 = arith.constant 0 : i32
    return %arg1, %c0_i32, %c0_i32_0 : i32, i32, i32
  }
  func.func @transform_15(%arg0: i32, %arg1: i32) -> (i32, i32) {
    %c0_i32 = arith.constant 0 : i32
    %c0_i32_0 = arith.constant 0 : i32
    %c0_i32_1 = arith.constant 0 : i32
    return %c0_i32, %c0_i32_0 : i32, i32
  }
  func.func @transform_16(%arg0: i32, %arg1: i32) -> (i32, i32) {
    %c0_i32 = arith.constant 0 : i32
    %c0_i32_0 = arith.constant 0 : i32
    %c0_i32_1 = arith.constant 0 : i32
    return %c0_i32, %c0_i32_0 : i32, i32
  }
  func.func @transform_17(%arg0: i32, %arg1: i32) -> (i32, i32) {
    %c0_i32 = arith.constant 0 : i32
    %c0_i32_0 = arith.constant 0 : i32
    %c0_i32_1 = arith.constant 0 : i32
    return %c0_i32, %c0_i32_0 : i32, i32
  }
  func.func @transform_18(%arg0: i32, %arg1: i32) -> (i32, i32) {
    %c0_i32 = arith.constant 0 : i32
    %c0_i32_0 = arith.constant 0 : i32
    %c0_i32_1 = arith.constant 0 : i32
    return %c0_i32, %c0_i32_0 : i32, i32
  }
  func.func @transform_19(%arg0: i32, %arg1: i32) -> (i32, i32) {
    %c0_i32 = arith.constant 0 : i32
    %c0_i32_0 = arith.constant 0 : i32
    %c0_i32_1 = arith.constant 0 : i32
    return %c0_i32, %c0_i32_0 : i32, i32
  }
  func.func @transform_20(%arg0: i32, %arg1: i32) -> (i32, i32, i32) {
    %c0_i32 = arith.constant 0 : i32
    %c0_i32_0 = arith.constant 0 : i32
    %c0_i32_1 = arith.constant 0 : i32
    return %arg0, %c0_i32, %c0_i32_0 : i32, i32, i32
  }
}

</mosaic_0001>

<llo_original>
// kernel: vit_encoder_forward.1
$region0: #{vit_encoder_forward.1}
  #allocation0 [shape = 'u32[]', space=smem, size = 0x4, offset = 0x4, fixed_abs, tag = 'smem constant byte address 0x4 - core index']
  #allocation1 [shape = 'u32[72,128]{1,0:T(1,128)}', space=vmem, size = 0x9000, scoped, tag = 'internal scratch']
  #allocation2 [shape = 'f32[48,256]{1,0:T(8,128)}', space=vmem, size = 0xc000, scoped, tag = 'scratch operand']
  #allocation3 [shape = 'f32[48,768]{1,0:T(8,128)}', space=vmem, size = 0x24000, scoped, tag = 'scratch operand']
  %s0 = inlined_call_operand.vmem [shape: bf16[2,48,768], index: 0, kind: input, shape index: {}]
  %s1 = inlined_call_operand.vmem [shape: bf16[768,256], index: 1, kind: input, shape index: {}]
  %s2 = inlined_call_operand.vmem [shape: f32[48,256], index: 2, kind: input, shape index: {}]
  %s3 = inlined_call_operand.vmem [shape: f32[2,1,256], index: 3, kind: input, shape index: {}]
  %s4 = inlined_call_operand.vmem [shape: f32[2,1,256], index: 4, kind: input, shape index: {}]
  %s5 = inlined_call_operand.vmem [shape: bf16[2,256,768], index: 5, kind: input, shape index: {}]
  %s6 = inlined_call_operand.vmem [shape: f32[2,1,768], index: 6, kind: input, shape index: {}]
  %s7 = inlined_call_operand.vmem [shape: bf16[2,256,256], index: 7, kind: input, shape index: {}]
  %s8 = inlined_call_operand.vmem [shape: f32[2,1,256], index: 8, kind: input, shape index: {}]
  %s9 = inlined_call_operand.vmem [shape: f32[2,1,256], index: 9, kind: input, shape index: {}]
  %s10 = inlined_call_operand.vmem [shape: f32[2,1,256], index: 10, kind: input, shape index: {}]
  %s11 = inlined_call_operand.vmem [shape: bf16[2,256,512], index: 11, kind: input, shape index: {}]
  %s12 = inlined_call_operand.vmem [shape: f32[2,1,512], index: 12, kind: input, shape index: {}]
  %s13 = inlined_call_operand.vmem [shape: bf16[2,512,256], index: 13, kind: input, shape index: {}]
  %s14 = inlined_call_operand.vmem [shape: f32[2,1,256], index: 14, kind: input, shape index: {}]
  %s15 = inlined_call_operand.vmem [shape: f32[1,256], index: 15, kind: input, shape index: {}]
  %s16 = inlined_call_operand.vmem [shape: f32[1,256], index: 16, kind: input, shape index: {}]
  %s17 = inlined_call_operand.vmem [shape: f32[10,48], index: 17, kind: input, shape index: {}]
  %s18 = inlined_call_operand.vmem [shape: bf16[256,512], index: 18, kind: input, shape index: {}]
  %s19 = inlined_call_operand.vmem [shape: f32[1,512], index: 19, kind: input, shape index: {}]
  %s20 = inlined_call_operand.vmem [shape: f32[2,10,512], index: 20, kind: output, shape index: {}]
  %s21 = sld [smem:[#allocation0]]
  $region121: #{vit_encoder_forward.1} parent=0
    _
  %s23 = ssub.s32 1, %s21
  %s24 = scalar_select 0, %s23, %s21
  loop: start=0, step=1, limit=6
  $region2: #{vit_encoder_forward.1} parent=0 // loop_pre_header
    _
  $region3: #{vit_encoder_forward.1} parent=0 // loop_header
    %s26 = sphi 0, %s30
    %p27 = scmp.ge.s32.totalorder %s26, 6
    %s33 = sphi 0, %s45
    %s34 = sphi 0, %s41
    %s35 = sphi 0, %s33
    %s36 = sphi 0, %s34
    %s37 = sphi 0, %s35
    %s38 = sphi 0, %s36
    %s48 = sphi 0, %s50
    %s51 = sphi 0, %s48
    %s52 = sphi 0, %s51
    %s68 = sphi 0, %s52
    %s72 = sphi 0, %s72
    %s74 = sphi 0, %s72
    %s75 = sphi 0, %s74
    %s89 = sphi 0, %s75
    %s93 = sphi 0, %s93
    %s95 = sphi 0, %s93
    %s96 = sphi 0, %s95
    %s110 = sphi 0, %s96
    %s116 = sphi 0, %s118
    %s119 = sphi 0, %s116
    %s120 = sphi 0, %s119
    %s136 = sphi 0, %s120
    %s142 = sphi 0, %s144
    %s145 = sphi 0, %s142
    %s146 = sphi 0, %s145
    %s162 = sphi 0, %s146
    %s168 = sphi 0, %s170
    %s171 = sphi 0, %s168
    %s172 = sphi 0, %s171
    %s188 = sphi 0, %s172
    %s194 = sphi 0, %s196
    %s197 = sphi 0, %s194
    %s198 = sphi 0, %s197
    %s214 = sphi 0, %s198
    %s220 = sphi 0, %s222
    %s223 = sphi 0, %s220
    %s224 = sphi 0, %s223
    %s240 = sphi 0, %s224
    %s246 = sphi 0, %s248
    %s249 = sphi 0, %s246
    %s250 = sphi 0, %s249
    %s266 = sphi 0, %s250
    %s272 = sphi 0, %s274
    %s275 = sphi 0, %s272
    %s276 = sphi 0, %s275
    %s292 = sphi 0, %s276
    %s298 = sphi 0, %s300
    %s301 = sphi 0, %s298
    %s302 = sphi 0, %s301
    %s318 = sphi 0, %s302
    %s324 = sphi 0, %s326
    %s327 = sphi 0, %s324
    %s328 = sphi 0, %s327
    %s344 = sphi 0, %s328
    %s350 = sphi 0, %s352
    %s353 = sphi 0, %s350
    %s354 = sphi 0, %s353
    %s370 = sphi 0, %s354
    %s376 = sphi 0, %s378
    %s379 = sphi 0, %s376
    %s380 = sphi 0, %s379
    %s396 = sphi 0, %s380
    %s402 = sphi 0, %s404
    %s405 = sphi 0, %s402
    %s406 = sphi 0, %s405
    %s422 = sphi 0, %s406
    %s426 = sphi 0, %s426
    %s428 = sphi 0, %s426
    %s429 = sphi 0, %s428
    %s443 = sphi 0, %s429
    %s447 = sphi 0, %s447
    %s449 = sphi 0, %s447
    %s450 = sphi 0, %s449
    %s464 = sphi 0, %s450
    %s468 = sphi 0, %s468
    %s470 = sphi 0, %s468
    %s471 = sphi 0, %s470
    %s485 = sphi 0, %s471
    %s489 = sphi 0, %s489
    %s491 = sphi 0, %s489
    %s492 = sphi 0, %s491
    %s506 = sphi 0, %s492
    %s510 = sphi 0, %s510
    %s512 = sphi 0, %s510
    %s513 = sphi 0, %s512
    %s527 = sphi 0, %s513
    %s533 = sphi 0, %s535
    %s536 = sphi 0, %s533
    %s537 = sphi 0, %s536
    %s553 = sphi 0, %s537
  $region4: #{vit_encoder_forward.1} parent=0 // loop_header_branch
    %29 = sbr.rel (%p27) target = $region8
  $region5: #{vit_encoder_forward.1} parent=0 // loop_body
    %s31 = ssub.s32 %s26, 1
    %s32 = ssub.s32 %s26, 2
    %s39 = sadd.s32 1, %s34
    %p40 = scmp.ge.s32.totalorder %s39, 2
    %s41 = scalar_select %p40, 0, %s39
    %s42 = sadd.s32 1, %s33
    %s43 = scalar_select %p40, %s42, %s33
    %p44 = scmp.ge.s32.totalorder %s43, 2
    %s45 = scalar_select %p44, 0, %s43
    %s46 = ssub.s32 %s33, %s45
    %p47 = scmp.eq.s32.totalorder %s46, 0
    %s49 = sadd.s32 %s48, 1
    %s50 = scalar_select %p47, %s48, %s49
    %p53 = pneg %p47
    %p54 = scmp.eq.s32.totalorder %s26, 3
    %p55 = por %p53, %p54
    %p56 = scmp.ne.s32.totalorder %s48, %s51
    %p57 = scmp.eq.s32.totalorder %s26, 0
    %p58 = por %p56, %p57
    %p59 = scmp.ne.s32.totalorder %s48, %s51
    %p60 = scmp.eq.s32.totalorder %s31, 3
    %p61 = por %p59, %p60
    %p62 = scmp.ne.s32.totalorder %s51, %s52
    %p63 = scmp.eq.s32.totalorder %s31, 0
    %p64 = por %p62, %p63
    %p65 = scmp.ne.s32.totalorder %s51, %s52
    %p66 = scmp.eq.s32.totalorder %s32, 3
    %p67 = por %p65, %p66
    %p69 = scmp.ne.s32.totalorder %s52, %s68
    %p70 = scmp.eq.s32.totalorder %s32, 0
    %p71 = por %p69, %p70
    %s73 = sadd.s32 %s72, 1
    %p76 = scmp.eq.s32.totalorder %s26, 3
    %p77 = scmp.ne.s32.totalorder %s72, %s74
    %p78 = scmp.eq.s32.totalorder %s26, 0
    %p79 = por %p77, %p78
    %p80 = scmp.ne.s32.totalorder %s72, %s74
    %p81 = scmp.eq.s32.totalorder %s31, 3
    %p82 = por %p80, %p81
    %p83 = scmp.ne.s32.totalorder %s74, %s75
    %p84 = scmp.eq.s32.totalorder %s31, 0
    %p85 = por %p83, %p84
    %p86 = scmp.ne.s32.totalorder %s74, %s75
    %p87 = scmp.eq.s32.totalorder %s32, 3
    %p88 = por %p86, %p87
    %p90 = scmp.ne.s32.totalorder %s75, %s89
    %p91 = scmp.eq.s32.totalorder %s32, 0
    %p92 = por %p90, %p91
    %s94 = sadd.s32 %s93, 1
    %p97 = scmp.eq.s32.totalorder %s26, 3
    %p98 = scmp.ne.s32.totalorder %s93, %s95
    %p99 = scmp.eq.s32.totalorder %s26, 0
    %p100 = por %p98, %p99
    %p101 = scmp.ne.s32.totalorder %s93, %s95
    %p102 = scmp.eq.s32.totalorder %s31, 3
    %p103 = por %p101, %p102
    %p104 = scmp.ne.s32.totalorder %s95, %s96
    %p105 = scmp.eq.s32.totalorder %s31, 0
    %p106 = por %p104, %p105
    %p107 = scmp.ne.s32.totalorder %s95, %s96
    %p108 = scmp.eq.s32.totalorder %s32, 3
    %p109 = por %p107, %p108
    %p111 = scmp.ne.s32.totalorder %s96, %s110
    %p112 = scmp.eq.s32.totalorder %s32, 0
    %p113 = por %p111, %p112
    %s114 = ssub.s32 %s34, %s41
    %p115 = scmp.eq.s32.totalorder %s114, 0
    %s117 = sadd.s32 %s116, 1
    %s118 = scalar_select %p115, %s116, %s117
    %p121 = pneg %p115
    %p122 = scmp.eq.s32.totalorder %s26, 3
    %p123 = por %p121, %p122
    %p124 = scmp.ne.s32.totalorder %s116, %s119
    %p125 = scmp.eq.s32.totalorder %s26, 0
    %p126 = por %p124, %p125
    %p127 = scmp.ne.s32.totalorder %s116, %s119
    %p128 = scmp.eq.s32.totalorder %s31, 3
    %p129 = por %p127, %p128
    %p130 = scmp.ne.s32.totalorder %s119, %s120
    %p131 = scmp.eq.s32.totalorder %s31, 0
    %p132 = por %p130, %p131
    %p133 = scmp.ne.s32.totalorder %s119, %s120
    %p134 = scmp.eq.s32.totalorder %s32, 3
    %p135 = por %p133, %p134
    %p137 = scmp.ne.s32.totalorder %s120, %s136
    %p138 = scmp.eq.s32.totalorder %s32, 0
    %p139 = por %p137, %p138
    %s140 = ssub.s32 %s34, %s41
    %p141 = scmp.eq.s32.totalorder %s140, 0
    %s143 = sadd.s32 %s142, 1
    %s144 = scalar_select %p141, %s142, %s143
    %p147 = pneg %p141
    %p148 = scmp.eq.s32.totalorder %s26, 3
    %p149 = por %p147, %p148
    %p150 = scmp.ne.s32.totalorder %s142, %s145
    %p151 = scmp.eq.s32.totalorder %s26, 0
    %p152 = por %p150, %p151
    %p153 = scmp.ne.s32.totalorder %s142, %s145
    %p154 = scmp.eq.s32.totalorder %s31, 3
    %p155 = por %p153, %p154
    %p156 = scmp.ne.s32.totalorder %s145, %s146
    %p157 = scmp.eq.s32.totalorder %s31, 0
    %p158 = por %p156, %p157
    %p159 = scmp.ne.s32.totalorder %s145, %s146
    %p160 = scmp.eq.s32.totalorder %s32, 3
    %p161 = por %p159, %p160
    %p163 = scmp.ne.s32.totalorder %s146, %s162
    %p164 = scmp.eq.s32.totalorder %s32, 0
    %p165 = por %p163, %p164
    %s166 = ssub.s32 %s34, %s41
    %p167 = scmp.eq.s32.totalorder %s166, 0
    %s169 = sadd.s32 %s168, 1
    %s170 = scalar_select %p167, %s168, %s169
    %p173 = pneg %p167
    %p174 = scmp.eq.s32.totalorder %s26, 3
    %p175 = por %p173, %p174
    %p176 = scmp.ne.s32.totalorder %s168, %s171
    %p177 = scmp.eq.s32.totalorder %s26, 0
    %p178 = por %p176, %p177
    %p179 = scmp.ne.s32.totalorder %s168, %s171
    %p180 = scmp.eq.s32.totalorder %s31, 3
    %p181 = por %p179, %p180
    %p182 = scmp.ne.s32.totalorder %s171, %s172
    %p183 = scmp.eq.s32.totalorder %s31, 0
    %p184 = por %p182, %p183
    %p185 = scmp.ne.s32.totalorder %s171, %s172
    %p186 = scmp.eq.s32.totalorder %s32, 3
    %p187 = por %p185, %p186
    %p189 = scmp.ne.s32.totalorder %s172, %s188
    %p190 = scmp.eq.s32.totalorder %s32, 0
    %p191 = por %p189, %p190
    %s192 = ssub.s32 %s34, %s41
    %p193 = scmp.eq.s32.totalorder %s192, 0
    %s195 = sadd.s32 %s194, 1
    %s196 = scalar_select %p193, %s194, %s195
    %p199 = pneg %p193
    %p200 = scmp.eq.s32.totalorder %s26, 3
    %p201 = por %p199, %p200
    %p202 = scmp.ne.s32.totalorder %s194, %s197
    %p203 = scmp.eq.s32.totalorder %s26, 0
    %p204 = por %p202, %p203
    %p205 = scmp.ne.s32.totalorder %s194, %s197
    %p206 = scmp.eq.s32.totalorder %s31, 3
    %p207 = por %p205, %p206
    %p208 = scmp.ne.s32.totalorder %s197, %s198
    %p209 = scmp.eq.s32.totalorder %s31, 0
    %p210 = por %p208, %p209
    %p211 = scmp.ne.s32.totalorder %s197, %s198
    %p212 = scmp.eq.s32.totalorder %s32, 3
    %p213 = por %p211, %p212
    %p215 = scmp.ne.s32.totalorder %s198, %s214
    %p216 = scmp.eq.s32.totalorder %s32, 0
    %p217 = por %p215, %p216
    %s218 = ssub.s32 %s34, %s41
    %p219 = scmp.eq.s32.totalorder %s218, 0
    %s221 = sadd.s32 %s220, 1
    %s222 = scalar_select %p219, %s220, %s221
    %p225 = pneg %p219
    %p226 = scmp.eq.s32.totalorder %s26, 3
    %p227 = por %p225, %p226
    %p228 = scmp.ne.s32.totalorder %s220, %s223
    %p229 = scmp.eq.s32.totalorder %s26, 0
    %p230 = por %p228, %p229
    %p231 = scmp.ne.s32.totalorder %s220, %s223
    %p232 = scmp.eq.s32.totalorder %s31, 3
    %p233 = por %p231, %p232
    %p234 = scmp.ne.s32.totalorder %s223, %s224
    %p235 = scmp.eq.s32.totalorder %s31, 0
    %p236 = por %p234, %p235
    %p237 = scmp.ne.s32.totalorder %s223, %s224
    %p238 = scmp.eq.s32.totalorder %s32, 3
    %p239 = por %p237, %p238
    %p241 = scmp.ne.s32.totalorder %s224, %s240
    %p242 = scmp.eq.s32.totalorder %s32, 0
    %p243 = por %p241, %p242
    %s244 = ssub.s32 %s34, %s41
    %p245 = scmp.eq.s32.totalorder %s244, 0
    %s247 = sadd.s32 %s246, 1
    %s248 = scalar_select %p245, %s246, %s247
    %p251 = pneg %p245
    %p252 = scmp.eq.s32.totalorder %s26, 3
    %p253 = por %p251, %p252
    %p254 = scmp.ne.s32.totalorder %s246, %s249
    %p255 = scmp.eq.s32.totalorder %s26, 0
    %p256 = por %p254, %p255
    %p257 = scmp.ne.s32.totalorder %s246, %s249
    %p258 = scmp.eq.s32.totalorder %s31, 3
    %p259 = por %p257, %p258
    %p260 = scmp.ne.s32.totalorder %s249, %s250
    %p261 = scmp.eq.s32.totalorder %s31, 0
    %p262 = por %p260, %p261
    %p263 = scmp.ne.s32.totalorder %s249, %s250
    %p264 = scmp.eq.s32.totalorder %s32, 3
    %p265 = por %p263, %p264
    %p267 = scmp.ne.s32.totalorder %s250, %s266
    %p268 = scmp.eq.s32.totalorder %s32, 0
    %p269 = por %p267, %p268
    %s270 = ssub.s32 %s34, %s41
    %p271 = scmp.eq.s32.totalorder %s270, 0
    %s273 = sadd.s32 %s272, 1
    %s274 = scalar_select %p271, %s272, %s273
    %p277 = pneg %p271
    %p278 = scmp.eq.s32.totalorder %s26, 3
    %p279 = por %p277, %p278
    %p280 = scmp.ne.s32.totalorder %s272, %s275
    %p281 = scmp.eq.s32.totalorder %s26, 0
    %p282 = por %p280, %p281
    %p283 = scmp.ne.s32.totalorder %s272, %s275
    %p284 = scmp.eq.s32.totalorder %s31, 3
    %p285 = por %p283, %p284
    %p286 = scmp.ne.s32.totalorder %s275, %s276
    %p287 = scmp.eq.s32.totalorder %s31, 0
    %p288 = por %p286, %p287
    %p289 = scmp.ne.s32.totalorder %s275, %s276
    %p290 = scmp.eq.s32.totalorder %s32, 3
    %p291 = por %p289, %p290
    %p293 = scmp.ne.s32.totalorder %s276, %s292
    %p294 = scmp.eq.s32.totalorder %s32, 0
    %p295 = por %p293, %p294
    %s296 = ssub.s32 %s34, %s41
    %p297 = scmp.eq.s32.totalorder %s296, 0
    %s299 = sadd.s32 %s298, 1
    %s300 = scalar_select %p297, %s298, %s299
    %p303 = pneg %p297
    %p304 = scmp.eq.s32.totalorder %s26, 3
    %p305 = por %p303, %p304
    %p306 = scmp.ne.s32.totalorder %s298, %s301
    %p307 = scmp.eq.s32.totalorder %s26, 0
    %p308 = por %p306, %p307
    %p309 = scmp.ne.s32.totalorder %s298, %s301
    %p310 = scmp.eq.s32.totalorder %s31, 3
    %p311 = por %p309, %p310
    %p312 = scmp.ne.s32.totalorder %s301, %s302
    %p313 = scmp.eq.s32.totalorder %s31, 0
    %p314 = por %p312, %p313
    %p315 = scmp.ne.s32.totalorder %s301, %s302
    %p316 = scmp.eq.s32.totalorder %s32, 3
    %p317 = por %p315, %p316
    %p319 = scmp.ne.s32.totalorder %s302, %s318
    %p320 = scmp.eq.s32.totalorder %s32, 0
    %p321 = por %p319, %p320
    %s322 = ssub.s32 %s34, %s41
    %p323 = scmp.eq.s32.totalorder %s322, 0
    %s325 = sadd.s32 %s324, 1
    %s326 = scalar_select %p323, %s324, %s325
    %p329 = pneg %p323
    %p330 = scmp.eq.s32.totalorder %s26, 3
    %p331 = por %p329, %p330
    %p332 = scmp.ne.s32.totalorder %s324, %s327
    %p333 = scmp.eq.s32.totalorder %s26, 0
    %p334 = por %p332, %p333
    %p335 = scmp.ne.s32.totalorder %s324, %s327
    %p336 = scmp.eq.s32.totalorder %s31, 3
    %p337 = por %p335, %p336
    %p338 = scmp.ne.s32.totalorder %s327, %s328
    %p339 = scmp.eq.s32.totalorder %s31, 0
    %p340 = por %p338, %p339
    %p341 = scmp.ne.s32.totalorder %s327, %s328
    %p342 = scmp.eq.s32.totalorder %s32, 3
    %p343 = por %p341, %p342
    %p345 = scmp.ne.s32.totalorder %s328, %s344
    %p346 = scmp.eq.s32.totalorder %s32, 0
    %p347 = por %p345, %p346
    %s348 = ssub.s32 %s34, %s41
    %p349 = scmp.eq.s32.totalorder %s348, 0
    %s351 = sadd.s32 %s350, 1
    %s352 = scalar_select %p349, %s350, %s351
    %p355 = pneg %p349
    %p356 = scmp.eq.s32.totalorder %s26, 3
    %p357 = por %p355, %p356
    %p358 = scmp.ne.s32.totalorder %s350, %s353
    %p359 = scmp.eq.s32.totalorder %s26, 0
    %p360 = por %p358, %p359
    %p361 = scmp.ne.s32.totalorder %s350, %s353
    %p362 = scmp.eq.s32.totalorder %s31, 3
    %p363 = por %p361, %p362
    %p364 = scmp.ne.s32.totalorder %s353, %s354
    %p365 = scmp.eq.s32.totalorder %s31, 0
    %p366 = por %p364, %p365
    %p367 = scmp.ne.s32.totalorder %s353, %s354
    %p368 = scmp.eq.s32.totalorder %s32, 3
    %p369 = por %p367, %p368
    %p371 = scmp.ne.s32.totalorder %s354, %s370
    %p372 = scmp.eq.s32.totalorder %s32, 0
    %p373 = por %p371, %p372
    %s374 = ssub.s32 %s34, %s41
    %p375 = scmp.eq.s32.totalorder %s374, 0
    %s377 = sadd.s32 %s376, 1
    %s378 = scalar_select %p375, %s376, %s377
    %p381 = pneg %p375
    %p382 = scmp.eq.s32.totalorder %s26, 3
    %p383 = por %p381, %p382
    %p384 = scmp.ne.s32.totalorder %s376, %s379
    %p385 = scmp.eq.s32.totalorder %s26, 0
    %p386 = por %p384, %p385
    %p387 = scmp.ne.s32.totalorder %s376, %s379
    %p388 = scmp.eq.s32.totalorder %s31, 3
    %p389 = por %p387, %p388
    %p390 = scmp.ne.s32.totalorder %s379, %s380
    %p391 = scmp.eq.s32.totalorder %s31, 0
    %p392 = por %p390, %p391
    %p393 = scmp.ne.s32.totalorder %s379, %s380
    %p394 = scmp.eq.s32.totalorder %s32, 3
    %p395 = por %p393, %p394
    %p397 = scmp.ne.s32.totalorder %s380, %s396
    %p398 = scmp.eq.s32.totalorder %s32, 0
    %p399 = por %p397, %p398
    %s400 = ssub.s32 %s34, %s41
    %p401 = scmp.eq.s32.totalorder %s400, 0
    %s403 = sadd.s32 %s402, 1
    %s404 = scalar_select %p401, %s402, %s403
    %p407 = pneg %p401
    %p408 = scmp.eq.s32.totalorder %s26, 3
    %p409 = por %p407, %p408
    %p410 = scmp.ne.s32.totalorder %s402, %s405
    %p411 = scmp.eq.s32.totalorder %s26, 0
    %p412 = por %p410, %p411
    %p413 = scmp.ne.s32.totalorder %s402, %s405
    %p414 = scmp.eq.s32.totalorder %s31, 3
    %p415 = por %p413, %p414
    %p416 = scmp.ne.s32.totalorder %s405, %s406
    %p417 = scmp.eq.s32.totalorder %s31, 0
    %p418 = por %p416, %p417
    %p419 = scmp.ne.s32.totalorder %s405, %s406
    %p420 = scmp.eq.s32.totalorder %s32, 3
    %p421 = por %p419, %p420
    %p423 = scmp.ne.s32.totalorder %s406, %s422
    %p424 = scmp.eq.s32.totalorder %s32, 0
    %p425 = por %p423, %p424
    %s427 = sadd.s32 %s426, 1
    %p430 = scmp.eq.s32.totalorder %s26, 3
    %p431 = scmp.ne.s32.totalorder %s426, %s428
    %p432 = scmp.eq.s32.totalorder %s26, 0
    %p433 = por %p431, %p432
    %p434 = scmp.ne.s32.totalorder %s426, %s428
    %p435 = scmp.eq.s32.totalorder %s31, 3
    %p436 = por %p434, %p435
    %p437 = scmp.ne.s32.totalorder %s428, %s429
    %p438 = scmp.eq.s32.totalorder %s31, 0
    %p439 = por %p437, %p438
    %p440 = scmp.ne.s32.totalorder %s428, %s429
    %p441 = scmp.eq.s32.totalorder %s32, 3
    %p442 = por %p440, %p441
    %p444 = scmp.ne.s32.totalorder %s429, %s443
    %p445 = scmp.eq.s32.totalorder %s32, 0
    %p446 = por %p444, %p445
    %s448 = sadd.s32 %s447, 1
    %p451 = scmp.eq.s32.totalorder %s26, 3
    %p452 = scmp.ne.s32.totalorder %s447, %s449
    %p453 = scmp.eq.s32.totalorder %s26, 0
    %p454 = por %p452, %p453
    %p455 = scmp.ne.s32.totalorder %s447, %s449
    %p456 = scmp.eq.s32.totalorder %s31, 3
    %p457 = por %p455, %p456
    %p458 = scmp.ne.s32.totalorder %s449, %s450
    %p459 = scmp.eq.s32.totalorder %s31, 0
    %p460 = por %p458, %p459
    %p461 = scmp.ne.s32.totalorder %s449, %s450
    %p462 = scmp.eq.s32.totalorder %s32, 3
    %p463 = por %p461, %p462
    %p465 = scmp.ne.s32.totalorder %s450, %s464
    %p466 = scmp.eq.s32.totalorder %s32, 0
    %p467 = por %p465, %p466
    %s469 = sadd.s32 %s468, 1
    %p472 = scmp.eq.s32.totalorder %s26, 3
    %p473 = scmp.ne.s32.totalorder %s468, %s470
    %p474 = scmp.eq.s32.totalorder %s26, 0
    %p475 = por %p473, %p474
    %p476 = scmp.ne.s32.totalorder %s468, %s470
    %p477 = scmp.eq.s32.totalorder %s31, 3
    %p478 = por %p476, %p477
    %p479 = scmp.ne.s32.totalorder %s470, %s471
    %p480 = scmp.eq.s32.totalorder %s31, 0
    %p481 = por %p479, %p480
    %p482 = scmp.ne.s32.totalorder %s470, %s471
    %p483 = scmp.eq.s32.totalorder %s32, 3
    %p484 = por %p482, %p483
    %p486 = scmp.ne.s32.totalorder %s471, %s485
    %p487 = scmp.eq.s32.totalorder %s32, 0
    %p488 = por %p486, %p487
    %s490 = sadd.s32 %s489, 1
    %p493 = scmp.eq.s32.totalorder %s26, 3
    %p494 = scmp.ne.s32.totalorder %s489, %s491
    %p495 = scmp.eq.s32.totalorder %s26, 0
    %p496 = por %p494, %p495
    %p497 = scmp.ne.s32.totalorder %s489, %s491
    %p498 = scmp.eq.s32.totalorder %s31, 3
    %p499 = por %p497, %p498
    %p500 = scmp.ne.s32.totalorder %s491, %s492
    %p501 = scmp.eq.s32.totalorder %s31, 0
    %p502 = por %p500, %p501
    %p503 = scmp.ne.s32.totalorder %s491, %s492
    %p504 = scmp.eq.s32.totalorder %s32, 3
    %p505 = por %p503, %p504
    %p507 = scmp.ne.s32.totalorder %s492, %s506
    %p508 = scmp.eq.s32.totalorder %s32, 0
    %p509 = por %p507, %p508
    %s511 = sadd.s32 %s510, 1
    %p514 = scmp.eq.s32.totalorder %s26, 3
    %p515 = scmp.ne.s32.totalorder %s510, %s512
    %p516 = scmp.eq.s32.totalorder %s26, 0
    %p517 = por %p515, %p516
    %p518 = scmp.ne.s32.totalorder %s510, %s512
    %p519 = scmp.eq.s32.totalorder %s31, 3
    %p520 = por %p518, %p519
    %p521 = scmp.ne.s32.totalorder %s512, %s513
    %p522 = scmp.eq.s32.totalorder %s31, 0
    %p523 = por %p521, %p522
    %p524 = scmp.ne.s32.totalorder %s512, %s513
    %p525 = scmp.eq.s32.totalorder %s32, 3
    %p526 = por %p524, %p525
    %p528 = scmp.ne.s32.totalorder %s513, %s527
    %p529 = scmp.eq.s32.totalorder %s32, 0
    %p530 = por %p528, %p529
    %s531 = ssub.s32 %s33, %s45
    %p532 = scmp.eq.s32.totalorder %s531, 0
    %s534 = sadd.s32 %s533, 1
    %s535 = scalar_select %p532, %s533, %s534
    %p538 = pneg %p532
    %p539 = scmp.eq.s32.totalorder %s26, 3
    %p540 = por %p538, %p539
    %p541 = scmp.ne.s32.totalorder %s533, %s536
    %p542 = scmp.eq.s32.totalorder %s26, 0
    %p543 = por %p541, %p542
    %p544 = scmp.ne.s32.totalorder %s533, %s536
    %p545 = scmp.eq.s32.totalorder %s31, 3
    %p546 = por %p544, %p545
    %p547 = scmp.ne.s32.totalorder %s536, %s537
    %p548 = scmp.eq.s32.totalorder %s31, 0
    %p549 = por %p547, %p548
    %p550 = scmp.ne.s32.totalorder %s536, %s537
    %p551 = scmp.eq.s32.totalorder %s32, 3
    %p552 = por %p550, %p551
    %p554 = scmp.ne.s32.totalorder %s537, %s553
    %p555 = scmp.eq.s32.totalorder %s32, 0
    %p556 = por %p554, %p555
    %p557 = scmp.le.s32.totalorder 1, %s26
    %p558 = scmp.lt.s32.totalorder %s26, 5
    %p559 = pnand %p557, %p558
    %p560 = pneg %p559
    // Predicated region
    $region9: #{vit_encoder_forward.1} parent=5 // pred_check
      _
    $region10: #{vit_encoder_forward.1} parent=5 // pred_check_branch
      %562 = sbr.rel (%p559) target = $region12
    $region11: #{vit_encoder_forward.1} parent=5 // pred_region
      %s563 = ssub.s32 %s26, 1
      // Predicated region
      $region13: #{vit_encoder_forward.1} parent=11 // pred_check
        %p564 = pneg %p85
      $region14: #{vit_encoder_forward.1} parent=11 // pred_check_branch
        %566 = sbr.rel (%p564) target = $region16
      $region15: #{vit_encoder_forward.1} parent=11 // pred_region
        _
      $region16: #{vit_encoder_forward.1} parent=11 // pred_fallthru
        _
      // Predicated region
      $region17: #{vit_encoder_forward.1} parent=11 // pred_check
        %p567 = pneg %p106
      $region18: #{vit_encoder_forward.1} parent=11 // pred_check_branch
        %569 = sbr.rel (%p567) target = $region20
      $region19: #{vit_encoder_forward.1} parent=11 // pred_region
        _
      $region20: #{vit_encoder_forward.1} parent=11 // pred_fallthru
        _
      // Predicated region
      $region21: #{vit_encoder_forward.1} parent=11 // pred_check
        %p570 = pneg %p439
      $region22: #{vit_encoder_forward.1} parent=11 // pred_check_branch
        %572 = sbr.rel (%p570) target = $region24
      $region23: #{vit_encoder_forward.1} parent=11 // pred_region
        _
      $region24: #{vit_encoder_forward.1} parent=11 // pred_fallthru
        _
      // Predicated region
      $region25: #{vit_encoder_forward.1} parent=11 // pred_check
        %p573 = pneg %p460
      $region26: #{vit_encoder_forward.1} parent=11 // pred_check_branch
        %575 = sbr.rel (%p573) target = $region28
      $region27: #{vit_encoder_forward.1} parent=11 // pred_region
        _
      $region28: #{vit_encoder_forward.1} parent=11 // pred_fallthru
        _
      // Predicated region
      $region29: #{vit_encoder_forward.1} parent=11 // pred_check
        %p576 = pneg %p481
      $region30: #{vit_encoder_forward.1} parent=11 // pred_check_branch
        %578 = sbr.rel (%p576) target = $region32
      $region31: #{vit_encoder_forward.1} parent=11 // pred_region
        _
      $region32: #{vit_encoder_forward.1} parent=11 // pred_fallthru
        _
      // Predicated region
      $region33: #{vit_encoder_forward.1} parent=11 // pred_check
        %p579 = pneg %p502
      $region34: #{vit_encoder_forward.1} parent=11 // pred_check_branch
        %581 = sbr.rel (%p579) target = $region36
      $region35: #{vit_encoder_forward.1} parent=11 // pred_region
        _
      $region36: #{vit_encoder_forward.1} parent=11 // pred_fallthru
        _
      // Predicated region
      $region37: #{vit_encoder_forward.1} parent=11 // pred_check
        %p582 = pneg %p523
      $region38: #{vit_encoder_forward.1} parent=11 // pred_check_branch
        %584 = sbr.rel (%p582) target = $region40
      $region39: #{vit_encoder_forward.1} parent=11 // pred_region
        _
      $region40: #{vit_encoder_forward.1} parent=11 // pred_fallthru
        _
    $region12: #{vit_encoder_forward.1} parent=5 // pred_fallthru
      _
    %p585 = scmp.lt.s32.totalorder %s26, 4
    // Predicated region
    $region41: #{vit_encoder_forward.1} parent=5 // pred_check
      %p586 = pneg %p585
    $region42: #{vit_encoder_forward.1} parent=5 // pred_check_branch
      %588 = sbr.rel (%p586) target = $region44
    $region43: #{vit_encoder_forward.1} parent=5 // pred_region
      // Predicated region
      $region45: #{vit_encoder_forward.1} parent=43 // pred_check
        %p589 = pneg %p58
      $region46: #{vit_encoder_forward.1} parent=43 // pred_check_branch
        %591 = sbr.rel (%p589) target = $region48
      $region47: #{vit_encoder_forward.1} parent=43 // pred_region
        %p592 = scmp.lt.s32.totalorder %s33, 1
        %s593 = scalar_select %p592, %s33, 1
        %s594 = smul.addr %s593, 36
        %s595 = smul.addr %s594, 4
        %s596 = scalar_lea.vmem %s0, %s595
      $region48: #{vit_encoder_forward.1} parent=43 // pred_fallthru
        _
      // Predicated region
      $region49: #{vit_encoder_forward.1} parent=43 // pred_check
        %p597 = pneg %p126
      $region50: #{vit_encoder_forward.1} parent=43 // pred_check_branch
        %599 = sbr.rel (%p597) target = $region52
      $region51: #{vit_encoder_forward.1} parent=43 // pred_region
        %p600 = scmp.lt.s32.totalorder %s34, 1
        %s601 = scalar_select %p600, %s34, 1
        %s602 = smul.addr %s601, 2
        %s603 = scalar_lea.vmem %s3, %s602
      $region52: #{vit_encoder_forward.1} parent=43 // pred_fallthru
        _
      // Predicated region
      $region53: #{vit_encoder_forward.1} parent=43 // pred_check
        %p604 = pneg %p152
      $region54: #{vit_encoder_forward.1} parent=43 // pred_check_branch
        %606 = sbr.rel (%p604) target = $region56
      $region55: #{vit_encoder_forward.1} parent=43 // pred_region
        %p607 = scmp.lt.s32.totalorder %s34, 1
        %s608 = scalar_select %p607, %s34, 1
        %s609 = smul.addr %s608, 2
        %s610 = scalar_lea.vmem %s4, %s609
      $region56: #{vit_encoder_forward.1} parent=43 // pred_fallthru
        _
      // Predicated region
      $region57: #{vit_encoder_forward.1} parent=43 // pred_check
        %p611 = pneg %p178
      $region58: #{vit_encoder_forward.1} parent=43 // pred_check_branch
        %613 = sbr.rel (%p611) target = $region60
      $region59: #{vit_encoder_forward.1} parent=43 // pred_region
        %p614 = scmp.lt.s32.totalorder %s34, 1
        %s615 = scalar_select %p614, %s34, 1
        %s616 = smul.addr %s615, 192
        %s617 = smul.addr %s616, 4
        %s618 = scalar_lea.vmem %s5, %s617
      $region60: #{vit_encoder_forward.1} parent=43 // pred_fallthru
        _
      // Predicated region
      $region61: #{vit_encoder_forward.1} parent=43 // pred_check
        %p619 = pneg %p204
      $region62: #{vit_encoder_forward.1} parent=43 // pred_check_branch
        %621 = sbr.rel (%p619) target = $region64
      $region63: #{vit_encoder_forward.1} parent=43 // pred_region
        %p622 = scmp.lt.s32.totalorder %s34, 1
        %s623 = scalar_select %p622, %s34, 1
        %s624 = smul.addr %s623, 6
        %s625 = scalar_lea.vmem %s6, %s624
      $region64: #{vit_encoder_forward.1} parent=43 // pred_fallthru
        _
      // Predicated region
      $region65: #{vit_encoder_forward.1} parent=43 // pred_check
        %p626 = pneg %p230
      $region66: #{vit_encoder_forward.1} parent=43 // pred_check_branch
        %628 = sbr.rel (%p626) target = $region68
      $region67: #{vit_encoder_forward.1} parent=43 // pred_region
        %p629 = scmp.lt.s32.totalorder %s34, 1
        %s630 = scalar_select %p629, %s34, 1
        %s631 = smul.addr %s630, 64
        %s632 = smul.addr %s631, 4
        %s633 = scalar_lea.vmem %s7, %s632
      $region68: #{vit_encoder_forward.1} parent=43 // pred_fallthru
        _
      // Predicated region
      $region69: #{vit_encoder_forward.1} parent=43 // pred_check
        %p634 = pneg %p256
      $region70: #{vit_encoder_forward.1} parent=43 // pred_check_branch
        %636 = sbr.rel (%p634) target = $region72
      $region71: #{vit_encoder_forward.1} parent=43 // pred_region
        %p637 = scmp.lt.s32.totalorder %s34, 1
        %s638 = scalar_select %p637, %s34, 1
        %s639 = smul.addr %s638, 2
        %s640 = scalar_lea.vmem %s8, %s639
      $region72: #{vit_encoder_forward.1} parent=43 // pred_fallthru
        _
      // Predicated region
      $region73: #{vit_encoder_forward.1} parent=43 // pred_check
        %p641 = pneg %p282
      $region74: #{vit_encoder_forward.1} parent=43 // pred_check_branch
        %643 = sbr.rel (%p641) target = $region76
      $region75: #{vit_encoder_forward.1} parent=43 // pred_region
        %p644 = scmp.lt.s32.totalorder %s34, 1
        %s645 = scalar_select %p644, %s34, 1
        %s646 = smul.addr %s645, 2
        %s647 = scalar_lea.vmem %s9, %s646
      $region76: #{vit_encoder_forward.1} parent=43 // pred_fallthru
        _
      // Predicated region
      $region77: #{vit_encoder_forward.1} parent=43 // pred_check
        %p648 = pneg %p308
      $region78: #{vit_encoder_forward.1} parent=43 // pred_check_branch
        %650 = sbr.rel (%p648) target = $region80
      $region79: #{vit_encoder_forward.1} parent=43 // pred_region
        %p651 = scmp.lt.s32.totalorder %s34, 1
        %s652 = scalar_select %p651, %s34, 1
        %s653 = smul.addr %s652, 2
        %s654 = scalar_lea.vmem %s10, %s653
      $region80: #{vit_encoder_forward.1} parent=43 // pred_fallthru
        _
      // Predicated region
      $region81: #{vit_encoder_forward.1} parent=43 // pred_check
        %p655 = pneg %p334
      $region82: #{vit_encoder_forward.1} parent=43 // pred_check_branch
        %657 = sbr.rel (%p655) target = $region84
      $region83: #{vit_encoder_forward.1} parent=43 // pred_region
        %p658 = scmp.lt.s32.totalorder %s34, 1
        %s659 = scalar_select %p658, %s34, 1
        %s660 = smul.addr %s659, 128
        %s661 = smul.addr %s660, 4
        %s662 = scalar_lea.vmem %s11, %s661
      $region84: #{vit_encoder_forward.1} parent=43 // pred_fallthru
        _
      // Predicated region
      $region85: #{vit_encoder_forward.1} parent=43 // pred_check
        %p663 = pneg %p360
      $region86: #{vit_encoder_forward.1} parent=43 // pred_check_branch
        %665 = sbr.rel (%p663) target = $region88
      $region87: #{vit_encoder_forward.1} parent=43 // pred_region
        %p666 = scmp.lt.s32.totalorder %s34, 1
        %s667 = scalar_select %p666, %s34, 1
        %s668 = smul.addr %s667, 4
        %s669 = scalar_lea.vmem %s12, %s668
      $region88: #{vit_encoder_forward.1} parent=43 // pred_fallthru
        _
      // Predicated region
      $region89: #{vit_encoder_forward.1} parent=43 // pred_check
        %p670 = pneg %p386
      $region90: #{vit_encoder_forward.1} parent=43 // pred_check_branch
        %672 = sbr.rel (%p670) target = $region92
      $region91: #{vit_encoder_forward.1} parent=43 // pred_region
        %p673 = scmp.lt.s32.totalorder %s34, 1
        %s674 = scalar_select %p673, %s34, 1
        %s675 = smul.addr %s674, 128
        %s676 = smul.addr %s675, 4
        %s677 = scalar_lea.vmem %s13, %s676
      $region92: #{vit_encoder_forward.1} parent=43 // pred_fallthru
        _
      // Predicated region
      $region93: #{vit_encoder_forward.1} parent=43 // pred_check
        %p678 = pneg %p412
      $region94: #{vit_encoder_forward.1} parent=43 // pred_check_branch
        %680 = sbr.rel (%p678) target = $region96
      $region95: #{vit_encoder_forward.1} parent=43 // pred_region
        %p681 = scmp.lt.s32.totalorder %s34, 1
        %s682 = scalar_select %p681, %s34, 1
        %s683 = smul.addr %s682, 2
        %s684 = scalar_lea.vmem %s14, %s683
      $region96: #{vit_encoder_forward.1} parent=43 // pred_fallthru
        _
    $region44: #{vit_encoder_forward.1} parent=5 // pred_fallthru
      _
    %p685 = scmp.le.s32.totalorder 1, %s26
    %p686 = scmp.lt.s32.totalorder %s26, 5
    %p687 = pnand %p685, %p686
    %p688 = pneg %p687
    // Predicated region
    $region97: #{vit_encoder_forward.1} parent=5 // pred_check
      _
    $region98: #{vit_encoder_forward.1} parent=5 // pred_check_branch
      %690 = sbr.rel (%p687) target = $region100
    $region99: #{vit_encoder_forward.1} parent=5 // pred_region
      %s691 = ssub.s32 %s26, 1
      %p692 = scmp.lt.s32.totalorder %s35, 1
      %s693 = scalar_select %p692, %s35, 1
      %s694 = smul.addr %s693, 36
      %s695 = smul.addr %s694, 4
      %s696 = scalar_lea.vmem %s0, %s695
      %p697 = pneg %p64
      %p698 = pneg %p61
      %p699 = pneg %p85
      %p700 = pneg %p82
      %p701 = pneg %p106
      %p702 = pneg %p103
      %p703 = scmp.lt.s32.totalorder %s36, 1
      %s704 = scalar_select %p703, %s36, 1
      %s705 = smul.addr %s704, 2
      %s706 = scalar_lea.vmem %s3, %s705
      %p707 = pneg %p132
      %p708 = pneg %p129
      %p709 = scmp.lt.s32.totalorder %s36, 1
      %s710 = scalar_select %p709, %s36, 1
      %s711 = smul.addr %s710, 2
      %s712 = scalar_lea.vmem %s4, %s711
      %p713 = pneg %p158
      %p714 = pneg %p155
      %p715 = scmp.lt.s32.totalorder %s36, 1
      %s716 = scalar_select %p715, %s36, 1
      %s717 = smul.addr %s716, 192
      %s718 = smul.addr %s717, 4
      %s719 = scalar_lea.vmem %s5, %s718
      %p720 = pneg %p184
      %p721 = pneg %p181
      %p722 = scmp.lt.s32.totalorder %s36, 1
      %s723 = scalar_select %p722, %s36, 1
      %s724 = smul.addr %s723, 6
      %s725 = scalar_lea.vmem %s6, %s724
      %p726 = pneg %p210
      %p727 = pneg %p207
      %p728 = scmp.lt.s32.totalorder %s36, 1
      %s729 = scalar_select %p728, %s36, 1
      %s730 = smul.addr %s729, 64
      %s731 = smul.addr %s730, 4
      %s732 = scalar_lea.vmem %s7, %s731
      %p733 = pneg %p236
      %p734 = pneg %p233
      %p735 = scmp.lt.s32.totalorder %s36, 1
      %s736 = scalar_select %p735, %s36, 1
      %s737 = smul.addr %s736, 2
      %s738 = scalar_lea.vmem %s8, %s737
      %p739 = pneg %p262
      %p740 = pneg %p259
      %p741 = scmp.lt.s32.totalorder %s36, 1
      %s742 = scalar_select %p741, %s36, 1
      %s743 = smul.addr %s742, 2
      %s744 = scalar_lea.vmem %s9, %s743
      %p745 = pneg %p288
      %p746 = pneg %p285
      %p747 = scmp.lt.s32.totalorder %s36, 1
      %s748 = scalar_select %p747, %s36, 1
      %s749 = smul.addr %s748, 2
      %s750 = scalar_lea.vmem %s10, %s749
      %p751 = pneg %p314
      %p752 = pneg %p311
      %p753 = scmp.lt.s32.totalorder %s36, 1
      %s754 = scalar_select %p753, %s36, 1
      %s755 = smul.addr %s754, 128
      %s756 = smul.addr %s755, 4
      %s757 = scalar_lea.vmem %s11, %s756
      %p758 = pneg %p340
      %p759 = pneg %p337
      %p760 = scmp.lt.s32.totalorder %s36, 1
      %s761 = scalar_select %p760, %s36, 1
      %s762 = smul.addr %s761, 4
      %s763 = scalar_lea.vmem %s12, %s762
      %p764 = pneg %p366
      %p765 = pneg %p363
      %p766 = scmp.lt.s32.totalorder %s36, 1
      %s767 = scalar_select %p766, %s36, 1
      %s768 = smul.addr %s767, 128
      %s769 = smul.addr %s768, 4
      %s770 = scalar_lea.vmem %s13, %s769
      %p771 = pneg %p392
      %p772 = pneg %p389
      %p773 = scmp.lt.s32.totalorder %s36, 1
      %s774 = scalar_select %p773, %s36, 1
      %s775 = smul.addr %s774, 2
      %s776 = scalar_lea.vmem %s14, %s775
      %p777 = pneg %p418
      %p778 = pneg %p415
      %p779 = pneg %p439
      %p780 = pneg %p436
      %p781 = pneg %p460
      %p782 = pneg %p457
      %p783 = pneg %p481
      %p784 = pneg %p478
      %p785 = pneg %p502
      %p786 = pneg %p499
      %p787 = pneg %p523
      %p788 = pneg %p520
      %p789 = pneg %p549
      %p790 = pneg %p546
      %p791 = scmp.lt.s32.totalorder %s35, 1
      %s792 = scalar_select %p791, %s35, 1
      %s793 = smul.addr %s792, 8
      %s794 = smul.addr %s793, 8
      %s795 = scalar_lea.vmem %s20, %s794
      %p796 = scmp.lt.s32.totalorder %s35, 1
      %s797 = scalar_select %p796, %s35, 1
      %s798 = smul.addr %s797, 36
      %s799 = smul.addr %s798, 4
      %s800 = scalar_lea.vmem %s0, %s799
      %p801 = scmp.lt.s32.totalorder %s36, 1
      %s802 = scalar_select %p801, %s36, 1
      %s803 = smul.addr %s802, 2
      %s804 = scalar_lea.vmem %s3, %s803
      %p805 = scmp.lt.s32.totalorder %s36, 1
      %s806 = scalar_select %p805, %s36, 1
      %s807 = smul.addr %s806, 2
      %s808 = scalar_lea.vmem %s4, %s807
      %p809 = scmp.lt.s32.totalorder %s36, 1
      %s810 = scalar_select %p809, %s36, 1
      %s811 = smul.addr %s810, 192
      %s812 = smul.addr %s811, 4
      %s813 = scalar_lea.vmem %s5, %s812
      %p814 = scmp.lt.s32.totalorder %s36, 1
      %s815 = scalar_select %p814, %s36, 1
      %s816 = smul.addr %s815, 6
      %s817 = scalar_lea.vmem %s6, %s816
      %p818 = scmp.lt.s32.totalorder %s36, 1
      %s819 = scalar_select %p818, %s36, 1
      %s820 = smul.addr %s819, 64
      %s821 = smul.addr %s820, 4
      %s822 = scalar_lea.vmem %s7, %s821
      %p823 = scmp.lt.s32.totalorder %s36, 1
      %s824 = scalar_select %p823, %s36, 1
      %s825 = smul.addr %s824, 2
      %s826 = scalar_lea.vmem %s8, %s825
      %p827 = scmp.lt.s32.totalorder %s36, 1
      %s828 = scalar_select %p827, %s36, 1
      %s829 = smul.addr %s828, 2
      %s830 = scalar_lea.vmem %s9, %s829
      %p831 = scmp.lt.s32.totalorder %s36, 1
      %s832 = scalar_select %p831, %s36, 1
      %s833 = smul.addr %s832, 2
      %s834 = scalar_lea.vmem %s10, %s833
      %p835 = scmp.lt.s32.totalorder %s36, 1
      %s836 = scalar_select %p835, %s36, 1
      %s837 = smul.addr %s836, 128
      %s838 = smul.addr %s837, 4
      %s839 = scalar_lea.vmem %s11, %s838
      %p840 = scmp.lt.s32.totalorder %s36, 1
      %s841 = scalar_select %p840, %s36, 1
      %s842 = smul.addr %s841, 4
      %s843 = scalar_lea.vmem %s12, %s842
      %p844 = scmp.lt.s32.totalorder %s36, 1
      %s845 = scalar_select %p844, %s36, 1
      %s846 = smul.addr %s845, 128
      %s847 = smul.addr %s846, 4
      %s848 = scalar_lea.vmem %s13, %s847
      %p849 = scmp.lt.s32.totalorder %s36, 1
      %s850 = scalar_select %p849, %s36, 1
      %s851 = smul.addr %s850, 2
      %s852 = scalar_lea.vmem %s14, %s851
      %p853 = scmp.lt.s32.totalorder %s35, 1
      %s854 = scalar_select %p853, %s35, 1
      %s855 = smul.addr %s854, 8
      %s856 = smul.addr %s855, 8
      %s857 = scalar_lea.vmem %s20, %s856
      %p859 = scmp.eq.s32.totalorder %s36, 0
      // Predicated region
      $region101: #{vit_encoder_forward.1} parent=99 // pred_check
        %p860 = pneg %p859
      $region102: #{vit_encoder_forward.1} parent=99 // pred_check_branch
        %862 = sbr.rel (%p860) target = $region104
      $region103: #{vit_encoder_forward.1} parent=99 // pred_region
        %v863 = vld [vmem:[%s800] sm:$0xff]
        %v864 = vld [vmem:[%s800 + $0x8] sm:$0xff]
        %v865 = vld [vmem:[%s800 + $0x10] sm:$0xff]
        %v866 = vld [vmem:[%s800 + $0x18] sm:$0xff]
        %v867 = vld [vmem:[%s800 + $0x20] sm:$0xff]
        %v868 = vld [vmem:[%s800 + $0x28] sm:$0xff]
        %v869 = vld [vmem:[%s800 + $0x30] sm:$0xff]
        %v870 = vld [vmem:[%s800 + $0x38] sm:$0xff]
        %v871 = vld [vmem:[%s800 + $0x40] sm:$0xff]
        %v872 = vld [vmem:[%s800 + $0x48] sm:$0xff]
        %v873 = vld [vmem:[%s800 + $0x50] sm:$0xff]
        %v874 = vld [vmem:[%s800 + $0x58] sm:$0xff]
        %v875 = vld [vmem:[%s800 + $0x60] sm:$0xff]
        %v876 = vld [vmem:[%s800 + $0x68] sm:$0xff]
        %v877 = vld [vmem:[%s800 + $0x70] sm:$0xff]
        %v878 = vld [vmem:[%s800 + $0x78] sm:$0xff]
        %v879 = vld [vmem:[%s800 + $0x80] sm:$0xff]
        %v880 = vld [vmem:[%s800 + $0x88] sm:$0xff]
        %v881 = vld [vmem:[%s1] sm:$0xff]
        %v882 = vld [vmem:[%s1 + $0x8] sm:$0xff]
        %v883 = vld [vmem:[%s1 + $0x10] sm:$0xff]
        %v884 = vld [vmem:[%s1 + $0x18] sm:$0xff]
        %v885 = vld [vmem:[%s1 + $0x20] sm:$0xff]
        %v886 = vld [vmem:[%s1 + $0x28] sm:$0xff]
        %v887 = vld [vmem:[%s1 + $0x30] sm:$0xff]
        %v888 = vld [vmem:[%s1 + $0x38] sm:$0xff]
        %v889 = vld [vmem:[%s1 + $0x40] sm:$0xff]
        %v890 = vld [vmem:[%s1 + $0x48] sm:$0xff]
        %v891 = vld [vmem:[%s1 + $0x50] sm:$0xff]
        %v892 = vld [vmem:[%s1 + $0x58] sm:$0xff]
        %v893 = vld [vmem:[%s1 + $0x60] sm:$0xff]
        %v894 = vld [vmem:[%s1 + $0x68] sm:$0xff]
        %v895 = vld [vmem:[%s1 + $0x70] sm:$0xff]
        %v896 = vld [vmem:[%s1 + $0x78] sm:$0xff]
        %v897 = vld [vmem:[%s1 + $0x80] sm:$0xff]
        %v898 = vld [vmem:[%s1 + $0x88] sm:$0xff]
        %v899 = vld [vmem:[%s1 + $0x90] sm:$0xff]
        %v900 = vld [vmem:[%s1 + $0x98] sm:$0xff]
        %v901 = vld [vmem:[%s1 + $0xa0] sm:$0xff]
        %v902 = vld [vmem:[%s1 + $0xa8] sm:$0xff]
        %v903 = vld [vmem:[%s1 + $0xb0] sm:$0xff]
        %v904 = vld [vmem:[%s1 + $0xb8] sm:$0xff]
        %v905 = vld [vmem:[%s1 + $0xc0] sm:$0xff]
        %v906 = vld [vmem:[%s1 + $0xc8] sm:$0xff]
        %v907 = vld [vmem:[%s1 + $0xd0] sm:$0xff]
        %v908 = vld [vmem:[%s1 + $0xd8] sm:$0xff]
        %v909 = vld [vmem:[%s1 + $0xe0] sm:$0xff]
        %v910 = vld [vmem:[%s1 + $0xe8] sm:$0xff]
        %v911 = vld [vmem:[%s1 + $0xf0] sm:$0xff]
        %v912 = vld [vmem:[%s1 + $0xf8] sm:$0xff]
        %v913 = vld [vmem:[%s1 + $0x100] sm:$0xff]
        %v914 = vld [vmem:[%s1 + $0x108] sm:$0xff]
        %v915 = vld [vmem:[%s1 + $0x110] sm:$0xff]
        %v916 = vld [vmem:[%s1 + $0x118] sm:$0xff]
        %v917 = vld [vmem:[%s1 + $0x120] sm:$0xff]
        %v918 = vld [vmem:[%s1 + $0x128] sm:$0xff]
        %v919 = vld [vmem:[%s1 + $0x130] sm:$0xff]
        %v920 = vld [vmem:[%s1 + $0x138] sm:$0xff]
        %v921 = vld [vmem:[%s1 + $0x140] sm:$0xff]
        %v922 = vld [vmem:[%s1 + $0x148] sm:$0xff]
        %v923 = vld [vmem:[%s1 + $0x150] sm:$0xff]
        %v924 = vld [vmem:[%s1 + $0x158] sm:$0xff]
        %v925 = vld [vmem:[%s1 + $0x160] sm:$0xff]
        %v926 = vld [vmem:[%s1 + $0x168] sm:$0xff]
        %v927 = vld [vmem:[%s1 + $0x170] sm:$0xff]
        %v928 = vld [vmem:[%s1 + $0x178] sm:$0xff]
        %v929 = vld [vmem:[%s1 + $0x180] sm:$0xff]
        %v930 = vld [vmem:[%s1 + $0x188] sm:$0xff]
        %v931 = vld [vmem:[%s1 + $0x190] sm:$0xff]
        %v932 = vld [vmem:[%s1 + $0x198] sm:$0xff]
        %v933 = vld [vmem:[%s1 + $0x1a0] sm:$0xff]
        %v934 = vld [vmem:[%s1 + $0x1a8] sm:$0xff]
        %v935 = vld [vmem:[%s1 + $0x1b0] sm:$0xff]
        %v936 = vld [vmem:[%s1 + $0x1b8] sm:$0xff]
        %v937 = vld [vmem:[%s1 + $0x1c0] sm:$0xff]
        %v938 = vld [vmem:[%s1 + $0x1c8] sm:$0xff]
        %v939 = vld [vmem:[%s1 + $0x1d0] sm:$0xff]
        %v940 = vld [vmem:[%s1 + $0x1d8] sm:$0xff]
        %v941 = vld [vmem:[%s1 + $0x1e0] sm:$0xff]
        %v942 = vld [vmem:[%s1 + $0x1e8] sm:$0xff]
        %v943 = vld [vmem:[%s1 + $0x1f0] sm:$0xff]
        %v944 = vld [vmem:[%s1 + $0x1f8] sm:$0xff]
        %v945 = vld [vmem:[%s1 + $0x200] sm:$0xff]
        %v946 = vld [vmem:[%s1 + $0x208] sm:$0xff]
        %v947 = vld [vmem:[%s1 + $0x210] sm:$0xff]
        %v948 = vld [vmem:[%s1 + $0x218] sm:$0xff]
        %v949 = vld [vmem:[%s1 + $0x220] sm:$0xff]
        %v950 = vld [vmem:[%s1 + $0x228] sm:$0xff]
        %v951 = vld [vmem:[%s1 + $0x230] sm:$0xff]
        %v952 = vld [vmem:[%s1 + $0x238] sm:$0xff]
        %v953 = vld [vmem:[%s1 + $0x240] sm:$0xff]
        %v954 = vld [vmem:[%s1 + $0x248] sm:$0xff]
        %v955 = vld [vmem:[%s1 + $0x250] sm:$0xff]
        %v956 = vld [vmem:[%s1 + $0x258] sm:$0xff]
        %v957 = vld [vmem:[%s1 + $0x260] sm:$0xff]
        %v958 = vld [vmem:[%s1 + $0x268] sm:$0xff]
        %v959 = vld [vmem:[%s1 + $0x270] sm:$0xff]
        %v960 = vld [vmem:[%s1 + $0x278] sm:$0xff]
        %v961 = vld [vmem:[%s1 + $0x280] sm:$0xff]
        %v962 = vld [vmem:[%s1 + $0x288] sm:$0xff]
        %v963 = vld [vmem:[%s1 + $0x290] sm:$0xff]
        %v964 = vld [vmem:[%s1 + $0x298] sm:$0xff]
        %v965 = vld [vmem:[%s1 + $0x2a0] sm:$0xff]
        %v966 = vld [vmem:[%s1 + $0x2a8] sm:$0xff]
        %v967 = vld [vmem:[%s1 + $0x2b0] sm:$0xff]
        %v968 = vld [vmem:[%s1 + $0x2b8] sm:$0xff]
        %v969 = vld [vmem:[%s1 + $0x2c0] sm:$0xff]
        %v970 = vld [vmem:[%s1 + $0x2c8] sm:$0xff]
        %v971 = vld [vmem:[%s1 + $0x2d0] sm:$0xff]
        %v972 = vld [vmem:[%s1 + $0x2d8] sm:$0xff]
        %v973 = vld [vmem:[%s1 + $0x2e0] sm:$0xff]
        %v974 = vld [vmem:[%s1 + $0x2e8] sm:$0xff]
        %v975 = vld [vmem:[%s1 + $0x2f0] sm:$0xff]
        %v976 = vld [vmem:[%s1 + $0x2f8] sm:$0xff]
        %v977 = vld [vmem:[%s2] sm:$0xff]
        %v978 = vld [vmem:[%s2 + $0x8] sm:$0xff]
        %v979 = vld [vmem:[%s2 + $0x10] sm:$0xff]
        %v980 = vld [vmem:[%s2 + $0x18] sm:$0xff]
        %v981 = vld [vmem:[%s2 + $0x20] sm:$0xff]
        %v982 = vld [vmem:[%s2 + $0x28] sm:$0xff]
        %v983 = vld [vmem:[%s2 + $0x30] sm:$0xff]
        %v984 = vld [vmem:[%s2 + $0x38] sm:$0xff]
        %v985 = vld [vmem:[%s2 + $0x40] sm:$0xff]
        %v986 = vld [vmem:[%s2 + $0x48] sm:$0xff]
        %v987 = vld [vmem:[%s2 + $0x50] sm:$0xff]
        %v988 = vld [vmem:[%s2 + $0x58] sm:$0xff]
        %v1007 = vunpack.c.l.b16 %v863
        %v1008 = vunpack.c.h.b16 %v863
        %v1009 = vunpack.c.l.b16 %v864
        %v1010 = vunpack.c.h.b16 %v864
        %v1011 = vunpack.c.l.b16 %v865
        %v1012 = vunpack.c.h.b16 %v865
        %v1013 = vunpack.c.l.b16 %v866
        %v1014 = vunpack.c.h.b16 %v866
        %v1015 = vunpack.c.l.b16 %v867
        %v1016 = vunpack.c.h.b16 %v867
        %v1017 = vunpack.c.l.b16 %v868
        %v1018 = vunpack.c.h.b16 %v868
        %v1019 = vunpack.c.l.b16 %v869
        %v1020 = vunpack.c.h.b16 %v869
        %v1021 = vunpack.c.l.b16 %v870
        %v1022 = vunpack.c.h.b16 %v870
        %v1023 = vunpack.c.l.b16 %v871
        %v1024 = vunpack.c.h.b16 %v871
        %v1025 = vunpack.c.l.b16 %v872
        %v1026 = vunpack.c.h.b16 %v872
        %v1027 = vunpack.c.l.b16 %v873
        %v1028 = vunpack.c.h.b16 %v873
        %v1029 = vunpack.c.l.b16 %v874
        %v1030 = vunpack.c.h.b16 %v874
        %v1031 = vunpack.c.l.b16 %v875
        %v1032 = vunpack.c.h.b16 %v875
        %v1033 = vunpack.c.l.b16 %v876
        %v1034 = vunpack.c.h.b16 %v876
        %v1035 = vunpack.c.l.b16 %v877
        %v1036 = vunpack.c.h.b16 %v877
        %v1037 = vunpack.c.l.b16 %v878
        %v1038 = vunpack.c.h.b16 %v878
        %v1039 = vunpack.c.l.b16 %v879
        %v1040 = vunpack.c.h.b16 %v879
        %v1041 = vunpack.c.l.b16 %v880
        %v1042 = vunpack.c.h.b16 %v880
        %v1043 = vpack.c.b16 %v1013, %v1007
        %v1044 = vpack.c.b16 %v1014, %v1008
        %v1045 = vpack.c.b16 %v1015, %v1009
        %v1046 = vpack.c.b16 %v1016, %v1010
        %v1047 = vpack.c.b16 %v1017, %v1011
        %v1048 = vpack.c.b16 %v1018, %v1012
        %v1049 = vpack.c.b16 %v1025, %v1019
        %v1050 = vpack.c.b16 %v1026, %v1020
        %v1051 = vpack.c.b16 %v1027, %v1021
        %v1052 = vpack.c.b16 %v1028, %v1022
        %v1053 = vpack.c.b16 %v1029, %v1023
        %v1054 = vpack.c.b16 %v1030, %v1024
        %v1055 = vpack.c.b16 %v1037, %v1031
        %v1056 = vpack.c.b16 %v1038, %v1032
        %v1057 = vpack.c.b16 %v1039, %v1033
        %v1058 = vpack.c.b16 %v1040, %v1034
        %v1059 = vpack.c.b16 %v1041, %v1035
        %v1060 = vpack.c.b16 %v1042, %v1036
        %v1175 = vunpack.c.l.b16 %v881
        %v1176 = vunpack.c.h.b16 %v881
        %v1177 = vunpack.c.l.b16 %v882
        %v1178 = vunpack.c.h.b16 %v882
        %v1179 = vunpack.c.l.b16 %v883
        %v1180 = vunpack.c.h.b16 %v883
        %v1181 = vunpack.c.l.b16 %v884
        %v1182 = vunpack.c.h.b16 %v884
        %v1183 = vunpack.c.l.b16 %v885
        %v1184 = vunpack.c.h.b16 %v885
        %v1185 = vunpack.c.l.b16 %v886
        %v1186 = vunpack.c.h.b16 %v886
        %v1187 = vunpack.c.l.b16 %v887
        %v1188 = vunpack.c.h.b16 %v887
        %v1189 = vunpack.c.l.b16 %v888
        %v1190 = vunpack.c.h.b16 %v888
        %v1191 = vunpack.c.l.b16 %v889
        %v1192 = vunpack.c.h.b16 %v889
        %v1193 = vunpack.c.l.b16 %v890
        %v1194 = vunpack.c.h.b16 %v890
        %v1195 = vunpack.c.l.b16 %v891
        %v1196 = vunpack.c.h.b16 %v891
        %v1197 = vunpack.c.l.b16 %v892
        %v1198 = vunpack.c.h.b16 %v892
        %v1199 = vunpack.c.l.b16 %v893
        %v1200 = vunpack.c.h.b16 %v893
        %v1201 = vunpack.c.l.b16 %v894
        %v1202 = vunpack.c.h.b16 %v894
        %v1203 = vunpack.c.l.b16 %v895
        %v1204 = vunpack.c.h.b16 %v895
        %v1205 = vunpack.c.l.b16 %v896
        %v1206 = vunpack.c.h.b16 %v896
        %v1207 = vunpack.c.l.b16 %v897
        %v1208 = vunpack.c.h.b16 %v897
        %v1209 = vunpack.c.l.b16 %v898
        %v1210 = vunpack.c.h.b16 %v898
        %v1211 = vunpack.c.l.b16 %v899
        %v1212 = vunpack.c.h.b16 %v899
        %v1213 = vunpack.c.l.b16 %v900
        %v1214 = vunpack.c.h.b16 %v900
        %v1215 = vunpack.c.l.b16 %v901
        %v1216 = vunpack.c.h.b16 %v901
        %v1217 = vunpack.c.l.b16 %v902
        %v1218 = vunpack.c.h.b16 %v902
        %v1219 = vunpack.c.l.b16 %v903
        %v1220 = vunpack.c.h.b16 %v903
        %v1221 = vunpack.c.l.b16 %v904
        %v1222 = vunpack.c.h.b16 %v904
        %v1223 = vunpack.c.l.b16 %v905
        %v1224 = vunpack.c.h.b16 %v905
        %v1225 = vunpack.c.l.b16 %v906
        %v1226 = vunpack.c.h.b16 %v906
        %v1227 = vunpack.c.l.b16 %v907
        %v1228 = vunpack.c.h.b16 %v907
        %v1229 = vunpack.c.l.b16 %v908
        %v1230 = vunpack.c.h.b16 %v908
        %v1231 = vunpack.c.l.b16 %v909
        %v1232 = vunpack.c.h.b16 %v909
        %v1233 = vunpack.c.l.b16 %v910
        %v1234 = vunpack.c.h.b16 %v910
        %v1235 = vunpack.c.l.b16 %v911
        %v1236 = vunpack.c.h.b16 %v911
        %v1237 = vunpack.c.l.b16 %v912
        %v1238 = vunpack.c.h.b16 %v912
        %v1239 = vunpack.c.l.b16 %v913
        %v1240 = vunpack.c.h.b16 %v913
        %v1241 = vunpack.c.l.b16 %v914
        %v1242 = vunpack.c.h.b16 %v914
        %v1243 = vunpack.c.l.b16 %v915
        %v1244 = vunpack.c.h.b16 %v915
        %v1245 = vunpack.c.l.b16 %v916
        %v1246 = vunpack.c.h.b16 %v916
        %v1247 = vunpack.c.l.b16 %v917
        %v1248 = vunpack.c.h.b16 %v917
        %v1249 = vunpack.c.l.b16 %v918
        %v1250 = vunpack.c.h.b16 %v918
        %v1251 = vunpack.c.l.b16 %v919
        %v1252 = vunpack.c.h.b16 %v919
        %v1253 = vunpack.c.l.b16 %v920
        %v1254 = vunpack.c.h.b16 %v920
        %v1255 = vunpack.c.l.b16 %v921
        %v1256 = vunpack.c.h.b16 %v921
        %v1257 = vunpack.c.l.b16 %v922
        %v1258 = vunpack.c.h.b16 %v922
        %v1259 = vunpack.c.l.b16 %v923
        %v1260 = vunpack.c.h.b16 %v923
        %v1261 = vunpack.c.l.b16 %v924
        %v1262 = vunpack.c.h.b16 %v924
        %v1263 = vunpack.c.l.b16 %v925
        %v1264 = vunpack.c.h.b16 %v925
        %v1265 = vunpack.c.l.b16 %v926
        %v1266 = vunpack.c.h.b16 %v926
        %v1267 = vunpack.c.l.b16 %v927
        %v1268 = vunpack.c.h.b16 %v927
        %v1269 = vunpack.c.l.b16 %v928
        %v1270 = vunpack.c.h.b16 %v928
        %v1271 = vunpack.c.l.b16 %v929
        %v1272 = vunpack.c.h.b16 %v929
        %v1273 = vunpack.c.l.b16 %v930
        %v1274 = vunpack.c.h.b16 %v930
        %v1275 = vunpack.c.l.b16 %v931
        %v1276 = vunpack.c.h.b16 %v931
        %v1277 = vunpack.c.l.b16 %v932
        %v1278 = vunpack.c.h.b16 %v932
        %v1279 = vunpack.c.l.b16 %v933
        %v1280 = vunpack.c.h.b16 %v933
        %v1281 = vunpack.c.l.b16 %v934
        %v1282 = vunpack.c.h.b16 %v934
        %v1283 = vunpack.c.l.b16 %v935
        %v1284 = vunpack.c.h.b16 %v935
        %v1285 = vunpack.c.l.b16 %v936
        %v1286 = vunpack.c.h.b16 %v936
        %v1287 = vunpack.c.l.b16 %v937
        %v1288 = vunpack.c.h.b16 %v937
        %v1289 = vunpack.c.l.b16 %v938
        %v1290 = vunpack.c.h.b16 %v938
        %v1291 = vunpack.c.l.b16 %v939
        %v1292 = vunpack.c.h.b16 %v939
        %v1293 = vunpack.c.l.b16 %v940
        %v1294 = vunpack.c.h.b16 %v940
        %v1295 = vunpack.c.l.b16 %v941
        %v1296 = vunpack.c.h.b16 %v941
        %v1297 = vunpack.c.l.b16 %v942
        %v1298 = vunpack.c.h.b16 %v942
        %v1299 = vunpack.c.l.b16 %v943
        %v1300 = vunpack.c.h.b16 %v943
        %v1301 = vunpack.c.l.b16 %v944
        %v1302 = vunpack.c.h.b16 %v944
        %v1303 = vunpack.c.l.b16 %v945
        %v1304 = vunpack.c.h.b16 %v945
        %v1305 = vunpack.c.l.b16 %v946
        %v1306 = vunpack.c.h.b16 %v946
        %v1307 = vunpack.c.l.b16 %v947
        %v1308 = vunpack.c.h.b16 %v947
        %v1309 = vunpack.c.l.b16 %v948
        %v1310 = vunpack.c.h.b16 %v948
        %v1311 = vunpack.c.l.b16 %v949
        %v1312 = vunpack.c.h.b16 %v949
        %v1313 = vunpack.c.l.b16 %v950
        %v1314 = vunpack.c.h.b16 %v950
        %v1315 = vunpack.c.l.b16 %v951
        %v1316 = vunpack.c.h.b16 %v951
        %v1317 = vunpack.c.l.b16 %v952
        %v1318 = vunpack.c.h.b16 %v952
        %v1319 = vunpack.c.l.b16 %v953
        %v1320 = vunpack.c.h.b16 %v953
        %v1321 = vunpack.c.l.b16 %v954
        %v1322 = vunpack.c.h.b16 %v954
        %v1323 = vunpack.c.l.b16 %v955
        %v1324 = vunpack.c.h.b16 %v955
        %v1325 = vunpack.c.l.b16 %v956
        %v1326 = vunpack.c.h.b16 %v956
        %v1327 = vunpack.c.l.b16 %v957
        %v1328 = vunpack.c.h.b16 %v957
        %v1329 = vunpack.c.l.b16 %v958
        %v1330 = vunpack.c.h.b16 %v958
        %v1331 = vunpack.c.l.b16 %v959
        %v1332 = vunpack.c.h.b16 %v959
        %v1333 = vunpack.c.l.b16 %v960
        %v1334 = vunpack.c.h.b16 %v960
        %v1335 = vunpack.c.l.b16 %v961
        %v1336 = vunpack.c.h.b16 %v961
        %v1337 = vunpack.c.l.b16 %v962
        %v1338 = vunpack.c.h.b16 %v962
        %v1339 = vunpack.c.l.b16 %v963
        %v1340 = vunpack.c.h.b16 %v963
        %v1341 = vunpack.c.l.b16 %v964
        %v1342 = vunpack.c.h.b16 %v964
        %v1343 = vunpack.c.l.b16 %v965
        %v1344 = vunpack.c.h.b16 %v965
        %v1345 = vunpack.c.l.b16 %v966
        %v1346 = vunpack.c.h.b16 %v966
        %v1347 = vunpack.c.l.b16 %v967
        %v1348 = vunpack.c.h.b16 %v967
        %v1349 = vunpack.c.l.b16 %v968
        %v1350 = vunpack.c.h.b16 %v968
        %v1351 = vunpack.c.l.b16 %v969
        %v1352 = vunpack.c.h.b16 %v969
        %v1353 = vunpack.c.l.b16 %v970
        %v1354 = vunpack.c.h.b16 %v970
        %v1355 = vunpack.c.l.b16 %v971
        %v1356 = vunpack.c.h.b16 %v971
        %v1357 = vunpack.c.l.b16 %v972
        %v1358 = vunpack.c.h.b16 %v972
        %v1359 = vunpack.c.l.b16 %v973
        %v1360 = vunpack.c.h.b16 %v973
        %v1361 = vunpack.c.l.b16 %v974
        %v1362 = vunpack.c.h.b16 %v974
        %v1363 = vunpack.c.l.b16 %v975
        %v1364 = vunpack.c.h.b16 %v975
        %v1365 = vunpack.c.l.b16 %v976
        %v1366 = vunpack.c.h.b16 %v976
        %v1367 = vpack.c.b16 %v1177, %v1175
        %v1368 = vpack.c.b16 %v1178, %v1176
        %v1369 = vpack.c.b16 %v1181, %v1179
        %v1370 = vpack.c.b16 %v1182, %v1180
        %v1371 = vpack.c.b16 %v1185, %v1183
        %v1372 = vpack.c.b16 %v1186, %v1184
        %v1373 = vpack.c.b16 %v1189, %v1187
        %v1374 = vpack.c.b16 %v1190, %v1188
        %v1375 = vpack.c.b16 %v1193, %v1191
        %v1376 = vpack.c.b16 %v1194, %v1192
        %v1377 = vpack.c.b16 %v1197, %v1195
        %v1378 = vpack.c.b16 %v1198, %v1196
        %v1379 = vpack.c.b16 %v1201, %v1199
        %v1380 = vpack.c.b16 %v1202, %v1200
        %v1381 = vpack.c.b16 %v1205, %v1203
        %v1382 = vpack.c.b16 %v1206, %v1204
        %v1383 = vpack.c.b16 %v1209, %v1207
        %v1384 = vpack.c.b16 %v1210, %v1208
        %v1385 = vpack.c.b16 %v1213, %v1211
        %v1386 = vpack.c.b16 %v1214, %v1212
        %v1387 = vpack.c.b16 %v1217, %v1215
        %v1388 = vpack.c.b16 %v1218, %v1216
        %v1389 = vpack.c.b16 %v1221, %v1219
        %v1390 = vpack.c.b16 %v1222, %v1220
        %v1391 = vpack.c.b16 %v1225, %v1223
        %v1392 = vpack.c.b16 %v1226, %v1224
        %v1393 = vpack.c.b16 %v1229, %v1227
        %v1394 = vpack.c.b16 %v1230, %v1228
        %v1395 = vpack.c.b16 %v1233, %v1231
        %v1396 = vpack.c.b16 %v1234, %v1232
        %v1397 = vpack.c.b16 %v1237, %v1235
        %v1398 = vpack.c.b16 %v1238, %v1236
        %v1399 = vpack.c.b16 %v1241, %v1239
        %v1400 = vpack.c.b16 %v1242, %v1240
        %v1401 = vpack.c.b16 %v1245, %v1243
        %v1402 = vpack.c.b16 %v1246, %v1244
        %v1403 = vpack.c.b16 %v1249, %v1247
        %v1404 = vpack.c.b16 %v1250, %v1248
        %v1405 = vpack.c.b16 %v1253, %v1251
        %v1406 = vpack.c.b16 %v1254, %v1252
        %v1407 = vpack.c.b16 %v1257, %v1255
        %v1408 = vpack.c.b16 %v1258, %v1256
        %v1409 = vpack.c.b16 %v1261, %v1259
        %v1410 = vpack.c.b16 %v1262, %v1260
        %v1411 = vpack.c.b16 %v1265, %v1263
        %v1412 = vpack.c.b16 %v1266, %v1264
        %v1413 = vpack.c.b16 %v1269, %v1267
        %v1414 = vpack.c.b16 %v1270, %v1268
        %v1415 = vpack.c.b16 %v1273, %v1271
        %v1416 = vpack.c.b16 %v1274, %v1272
        %v1417 = vpack.c.b16 %v1277, %v1275
        %v1418 = vpack.c.b16 %v1278, %v1276
        %v1419 = vpack.c.b16 %v1281, %v1279
        %v1420 = vpack.c.b16 %v1282, %v1280
        %v1421 = vpack.c.b16 %v1285, %v1283
        %v1422 = vpack.c.b16 %v1286, %v1284
        %v1423 = vpack.c.b16 %v1289, %v1287
        %v1424 = vpack.c.b16 %v1290, %v1288
        %v1425 = vpack.c.b16 %v1293, %v1291
        %v1426 = vpack.c.b16 %v1294, %v1292
        %v1427 = vpack.c.b16 %v1297, %v1295
        %v1428 = vpack.c.b16 %v1298, %v1296
        %v1429 = vpack.c.b16 %v1301, %v1299
        %v1430 = vpack.c.b16 %v1302, %v1300
        %v1431 = vpack.c.b16 %v1305, %v1303
        %v1432 = vpack.c.b16 %v1306, %v1304
        %v1433 = vpack.c.b16 %v1309, %v1307
        %v1434 = vpack.c.b16 %v1310, %v1308
        %v1435 = vpack.c.b16 %v1313, %v1311
        %v1436 = vpack.c.b16 %v1314, %v1312
        %v1437 = vpack.c.b16 %v1317, %v1315
        %v1438 = vpack.c.b16 %v1318, %v1316
        %v1439 = vpack.c.b16 %v1321, %v1319
        %v1440 = vpack.c.b16 %v1322, %v1320
        %v1441 = vpack.c.b16 %v1325, %v1323
        %v1442 = vpack.c.b16 %v1326, %v1324
        %v1443 = vpack.c.b16 %v1329, %v1327
        %v1444 = vpack.c.b16 %v1330, %v1328
        %v1445 = vpack.c.b16 %v1333, %v1331
        %v1446 = vpack.c.b16 %v1334, %v1332
        %v1447 = vpack.c.b16 %v1337, %v1335
        %v1448 = vpack.c.b16 %v1338, %v1336
        %v1449 = vpack.c.b16 %v1341, %v1339
        %v1450 = vpack.c.b16 %v1342, %v1340
        %v1451 = vpack.c.b16 %v1345, %v1343
        %v1452 = vpack.c.b16 %v1346, %v1344
        %v1453 = vpack.c.b16 %v1349, %v1347
        %v1454 = vpack.c.b16 %v1350, %v1348
        %v1455 = vpack.c.b16 %v1353, %v1351
        %v1456 = vpack.c.b16 %v1354, %v1352
        %v1457 = vpack.c.b16 %v1357, %v1355
        %v1458 = vpack.c.b16 %v1358, %v1356
        %v1459 = vpack.c.b16 %v1361, %v1359
        %v1460 = vpack.c.b16 %v1362, %v1360
        %v1461 = vpack.c.b16 %v1365, %v1363
        %v1462 = vpack.c.b16 %v1366, %v1364
        %1559 = vmatpush.bf16.msra.mxu0 %v1381
        %1560 = vmatpush.bf16.msra.mxu0 %v1379
        %1561 = vmatpush.bf16.msra.mxu0 %v1377
        %1562 = vmatpush.bf16.msra.mxu0 %v1375
        %1563 = vmatpush.bf16.msra.mxu0 %v1373
        %1564 = vmatpush.bf16.msra.mxu0 %v1371
        %1565 = vmatpush.bf16.msra.mxu0 %v1369
        %1566 = vmatpush.bf16.msra.mxu0 %v1367
        %1567 = vmatmul.bf16.gmra.mxu0 %v1043
        %v1568 = vpop.f32.mrf.mxu0
        %v1569 = vadd.f32 %v977, %v1568
        %v1570 = vpop.f32.mrf.mxu0
        %v1571 = vadd.f32 %v979, %v1570
        %1572 = vmatmul.bf16.gmra.mxu0 %v1049
        %v1573 = vpop.f32.mrf.mxu0
        %v1574 = vadd.f32 %v981, %v1573
        %v1575 = vpop.f32.mrf.mxu0
        %v1576 = vadd.f32 %v983, %v1575
        %1577 = vmatmul.bf16.gmra.mxu0 %v1055
        %v1578 = vpop.f32.mrf.mxu0
        %v1579 = vadd.f32 %v985, %v1578
        %v1580 = vpop.f32.mrf.mxu0
        %v1581 = vadd.f32 %v987, %v1580
        %1582 = vdwg.mxu0
        %1583 = vmatpush.bf16.msra.mxu0 %v1397
        %1584 = vmatpush.bf16.msra.mxu0 %v1395
        %1585 = vmatpush.bf16.msra.mxu0 %v1393
        %1586 = vmatpush.bf16.msra.mxu0 %v1391
        %1587 = vmatpush.bf16.msra.mxu0 %v1389
        %1588 = vmatpush.bf16.msra.mxu0 %v1387
        %1589 = vmatpush.bf16.msra.mxu0 %v1385
        %1590 = vmatpush.bf16.msra.mxu0 %v1383
        %1591 = vmatmul.bf16.gmra.mxu0 %v1044
        %v1592 = vpop.f32.mrf.mxu0
        %v1593 = vadd.f32 %v1569, %v1592
        %v1594 = vpop.f32.mrf.mxu0
        %v1595 = vadd.f32 %v1571, %v1594
        %1596 = vmatmul.bf16.gmra.mxu0 %v1050
        %v1597 = vpop.f32.mrf.mxu0
        %v1598 = vadd.f32 %v1574, %v1597
        %v1599 = vpop.f32.mrf.mxu0
        %v1600 = vadd.f32 %v1576, %v1599
        %1601 = vmatmul.bf16.gmra.mxu0 %v1056
        %v1602 = vpop.f32.mrf.mxu0
        %v1603 = vadd.f32 %v1579, %v1602
        %v1604 = vpop.f32.mrf.mxu0
        %v1605 = vadd.f32 %v1581, %v1604
        %1606 = vdwg.mxu0
        %1607 = vmatpush.bf16.msra.mxu0 %v1413
        %1608 = vmatpush.bf16.msra.mxu0 %v1411
        %1609 = vmatpush.bf16.msra.mxu0 %v1409
        %1610 = vmatpush.bf16.msra.mxu0 %v1407
        %1611 = vmatpush.bf16.msra.mxu0 %v1405
        %1612 = vmatpush.bf16.msra.mxu0 %v1403
        %1613 = vmatpush.bf16.msra.mxu0 %v1401
        %1614 = vmatpush.bf16.msra.mxu0 %v1399
        %1615 = vmatmul.bf16.gmra.mxu0 %v1045
        %v1616 = vpop.f32.mrf.mxu0
        %v1617 = vadd.f32 %v1593, %v1616
        %v1618 = vpop.f32.mrf.mxu0
        %v1619 = vadd.f32 %v1595, %v1618
        %1620 = vmatmul.bf16.gmra.mxu0 %v1051
        %v1621 = vpop.f32.mrf.mxu0
        %v1622 = vadd.f32 %v1598, %v1621
        %v1623 = vpop.f32.mrf.mxu0
        %v1624 = vadd.f32 %v1600, %v1623
        %1625 = vmatmul.bf16.gmra.mxu0 %v1057
        %v1626 = vpop.f32.mrf.mxu0
        %v1627 = vadd.f32 %v1603, %v1626
        %v1628 = vpop.f32.mrf.mxu0
        %v1629 = vadd.f32 %v1605, %v1628
        %1630 = vdwg.mxu0
        %1631 = vmatpush.bf16.msra.mxu0 %v1429
        %1632 = vmatpush.bf16.msra.mxu0 %v1427
        %1633 = vmatpush.bf16.msra.mxu0 %v1425
        %1634 = vmatpush.bf16.msra.mxu0 %v1423
        %1635 = vmatpush.bf16.msra.mxu0 %v1421
        %1636 = vmatpush.bf16.msra.mxu0 %v1419
        %1637 = vmatpush.bf16.msra.mxu0 %v1417
        %1638 = vmatpush.bf16.msra.mxu0 %v1415
        %1639 = vmatmul.bf16.gmra.mxu0 %v1046
        %v1640 = vpop.f32.mrf.mxu0
        %v1641 = vadd.f32 %v1617, %v1640
        %v1642 = vpop.f32.mrf.mxu0
        %v1643 = vadd.f32 %v1619, %v1642
        %1644 = vmatmul.bf16.gmra.mxu0 %v1052
        %v1645 = vpop.f32.mrf.mxu0
        %v1646 = vadd.f32 %v1622, %v1645
        %v1647 = vpop.f32.mrf.mxu0
        %v1648 = vadd.f32 %v1624, %v1647
        %1649 = vmatmul.bf16.gmra.mxu0 %v1058
        %v1650 = vpop.f32.mrf.mxu0
        %v1651 = vadd.f32 %v1627, %v1650
        %v1652 = vpop.f32.mrf.mxu0
        %v1653 = vadd.f32 %v1629, %v1652
        %1654 = vdwg.mxu0
        %1655 = vmatpush.bf16.msra.mxu0 %v1445
        %1656 = vmatpush.bf16.msra.mxu0 %v1443
        %1657 = vmatpush.bf16.msra.mxu0 %v1441
        %1658 = vmatpush.bf16.msra.mxu0 %v1439
        %1659 = vmatpush.bf16.msra.mxu0 %v1437
        %1660 = vmatpush.bf16.msra.mxu0 %v1435
        %1661 = vmatpush.bf16.msra.mxu0 %v1433
        %1662 = vmatpush.bf16.msra.mxu0 %v1431
        %1663 = vmatmul.bf16.gmra.mxu0 %v1047
        %v1664 = vpop.f32.mrf.mxu0
        %v1665 = vadd.f32 %v1641, %v1664
        %v1666 = vpop.f32.mrf.mxu0
        %v1667 = vadd.f32 %v1643, %v1666
        %1668 = vmatmul.bf16.gmra.mxu0 %v1053
        %v1669 = vpop.f32.mrf.mxu0
        %v1670 = vadd.f32 %v1646, %v1669
        %v1671 = vpop.f32.mrf.mxu0
        %v1672 = vadd.f32 %v1648, %v1671
        %1673 = vmatmul.bf16.gmra.mxu0 %v1059
        %v1674 = vpop.f32.mrf.mxu0
        %v1675 = vadd.f32 %v1651, %v1674
        %v1676 = vpop.f32.mrf.mxu0
        %v1677 = vadd.f32 %v1653, %v1676
        %1678 = vdwg.mxu0
        %1679 = vmatpush.bf16.msra.mxu0 %v1461
        %1680 = vmatpush.bf16.msra.mxu0 %v1459
        %1681 = vmatpush.bf16.msra.mxu0 %v1457
        %1682 = vmatpush.bf16.msra.mxu0 %v1455
        %1683 = vmatpush.bf16.msra.mxu0 %v1453
        %1684 = vmatpush.bf16.msra.mxu0 %v1451
        %1685 = vmatpush.bf16.msra.mxu0 %v1449
        %1686 = vmatpush.bf16.msra.mxu0 %v1447
        %1687 = vmatmul.bf16.gmra.mxu0 %v1048
        %v1688 = vpop.f32.mrf.mxu0
        %v1689 = vadd.f32 %v1665, %v1688
        %v1690 = vpop.f32.mrf.mxu0
        %v1691 = vadd.f32 %v1667, %v1690
        %1692 = vmatmul.bf16.gmra.mxu0 %v1054
        %v1693 = vpop.f32.mrf.mxu0
        %v1694 = vadd.f32 %v1670, %v1693
        %v1695 = vpop.f32.mrf.mxu0
        %v1696 = vadd.f32 %v1672, %v1695
        %1697 = vmatmul.bf16.gmra.mxu0 %v1060
        %v1698 = vpop.f32.mrf.mxu0
        %v1699 = vadd.f32 %v1675, %v1698
        %v1700 = vpop.f32.mrf.mxu0
        %v1701 = vadd.f32 %v1677, %v1700
        %1702 = vdwg.mxu0
        %1703 = vmatpush.bf16.msra.mxu0 %v1382
        %1704 = vmatpush.bf16.msra.mxu0 %v1380
        %1705 = vmatpush.bf16.msra.mxu0 %v1378
        %1706 = vmatpush.bf16.msra.mxu0 %v1376
        %1707 = vmatpush.bf16.msra.mxu0 %v1374
        %1708 = vmatpush.bf16.msra.mxu0 %v1372
        %1709 = vmatpush.bf16.msra.mxu0 %v1370
        %1710 = vmatpush.bf16.msra.mxu0 %v1368
        %1711 = vmatmul.bf16.gmra.mxu0 %v1043
        %v1712 = vpop.f32.mrf.mxu0
        %v1713 = vadd.f32 %v978, %v1712
        %v1714 = vpop.f32.mrf.mxu0
        %v1715 = vadd.f32 %v980, %v1714
        %1716 = vmatmul.bf16.gmra.mxu0 %v1049
        %v1717 = vpop.f32.mrf.mxu0
        %v1718 = vadd.f32 %v982, %v1717
        %v1719 = vpop.f32.mrf.mxu0
        %v1720 = vadd.f32 %v984, %v1719
        %1721 = vmatmul.bf16.gmra.mxu0 %v1055
        %v1722 = vpop.f32.mrf.mxu0
        %v1723 = vadd.f32 %v986, %v1722
        %v1724 = vpop.f32.mrf.mxu0
        %v1725 = vadd.f32 %v988, %v1724
        %1726 = vdwg.mxu0
        %1727 = vmatpush.bf16.msra.mxu0 %v1398
        %1728 = vmatpush.bf16.msra.mxu0 %v1396
        %1729 = vmatpush.bf16.msra.mxu0 %v1394
        %1730 = vmatpush.bf16.msra.mxu0 %v1392
        %1731 = vmatpush.bf16.msra.mxu0 %v1390
        %1732 = vmatpush.bf16.msra.mxu0 %v1388
        %1733 = vmatpush.bf16.msra.mxu0 %v1386
        %1734 = vmatpush.bf16.msra.mxu0 %v1384
        %1735 = vmatmul.bf16.gmra.mxu0 %v1044
        %v1736 = vpop.f32.mrf.mxu0
        %v1737 = vadd.f32 %v1713, %v1736
        %v1738 = vpop.f32.mrf.mxu0
        %v1739 = vadd.f32 %v1715, %v1738
        %1740 = vmatmul.bf16.gmra.mxu0 %v1050
        %v1741 = vpop.f32.mrf.mxu0
        %v1742 = vadd.f32 %v1718, %v1741
        %v1743 = vpop.f32.mrf.mxu0
        %v1744 = vadd.f32 %v1720, %v1743
        %1745 = vmatmul.bf16.gmra.mxu0 %v1056
        %v1746 = vpop.f32.mrf.mxu0
        %v1747 = vadd.f32 %v1723, %v1746
        %v1748 = vpop.f32.mrf.mxu0
        %v1749 = vadd.f32 %v1725, %v1748
        %1750 = vdwg.mxu0
        %1751 = vmatpush.bf16.msra.mxu0 %v1414
        %1752 = vmatpush.bf16.msra.mxu0 %v1412
        %1753 = vmatpush.bf16.msra.mxu0 %v1410
        %1754 = vmatpush.bf16.msra.mxu0 %v1408
        %1755 = vmatpush.bf16.msra.mxu0 %v1406
        %1756 = vmatpush.bf16.msra.mxu0 %v1404
        %1757 = vmatpush.bf16.msra.mxu0 %v1402
        %1758 = vmatpush.bf16.msra.mxu0 %v1400
        %1759 = vmatmul.bf16.gmra.mxu0 %v1045
        %v1760 = vpop.f32.mrf.mxu0
        %v1761 = vadd.f32 %v1737, %v1760
        %v1762 = vpop.f32.mrf.mxu0
        %v1763 = vadd.f32 %v1739, %v1762
        %1764 = vmatmul.bf16.gmra.mxu0 %v1051
        %v1765 = vpop.f32.mrf.mxu0
        %v1766 = vadd.f32 %v1742, %v1765
        %v1767 = vpop.f32.mrf.mxu0
        %v1768 = vadd.f32 %v1744, %v1767
        %1769 = vmatmul.bf16.gmra.mxu0 %v1057
        %v1770 = vpop.f32.mrf.mxu0
        %v1771 = vadd.f32 %v1747, %v1770
        %v1772 = vpop.f32.mrf.mxu0
        %v1773 = vadd.f32 %v1749, %v1772
        %1774 = vdwg.mxu0
        %1775 = vmatpush.bf16.msra.mxu0 %v1430
        %1776 = vmatpush.bf16.msra.mxu0 %v1428
        %1777 = vmatpush.bf16.msra.mxu0 %v1426
        %1778 = vmatpush.bf16.msra.mxu0 %v1424
        %1779 = vmatpush.bf16.msra.mxu0 %v1422
        %1780 = vmatpush.bf16.msra.mxu0 %v1420
        %1781 = vmatpush.bf16.msra.mxu0 %v1418
        %1782 = vmatpush.bf16.msra.mxu0 %v1416
        %1783 = vmatmul.bf16.gmra.mxu0 %v1046
        %v1784 = vpop.f32.mrf.mxu0
        %v1785 = vadd.f32 %v1761, %v1784
        %v1786 = vpop.f32.mrf.mxu0
        %v1787 = vadd.f32 %v1763, %v1786
        %1788 = vmatmul.bf16.gmra.mxu0 %v1052
        %v1789 = vpop.f32.mrf.mxu0
        %v1790 = vadd.f32 %v1766, %v1789
        %v1791 = vpop.f32.mrf.mxu0
        %v1792 = vadd.f32 %v1768, %v1791
        %1793 = vmatmul.bf16.gmra.mxu0 %v1058
        %v1794 = vpop.f32.mrf.mxu0
        %v1795 = vadd.f32 %v1771, %v1794
        %v1796 = vpop.f32.mrf.mxu0
        %v1797 = vadd.f32 %v1773, %v1796
        %1798 = vdwg.mxu0
        %1799 = vmatpush.bf16.msra.mxu0 %v1446
        %1800 = vmatpush.bf16.msra.mxu0 %v1444
        %1801 = vmatpush.bf16.msra.mxu0 %v1442
        %1802 = vmatpush.bf16.msra.mxu0 %v1440
        %1803 = vmatpush.bf16.msra.mxu0 %v1438
        %1804 = vmatpush.bf16.msra.mxu0 %v1436
        %1805 = vmatpush.bf16.msra.mxu0 %v1434
        %1806 = vmatpush.bf16.msra.mxu0 %v1432
        %1807 = vmatmul.bf16.gmra.mxu0 %v1047
        %v1808 = vpop.f32.mrf.mxu0
        %v1809 = vadd.f32 %v1785, %v1808
        %v1810 = vpop.f32.mrf.mxu0
        %v1811 = vadd.f32 %v1787, %v1810
        %1812 = vmatmul.bf16.gmra.mxu0 %v1053
        %v1813 = vpop.f32.mrf.mxu0
        %v1814 = vadd.f32 %v1790, %v1813
        %v1815 = vpop.f32.mrf.mxu0
        %v1816 = vadd.f32 %v1792, %v1815
        %1817 = vmatmul.bf16.gmra.mxu0 %v1059
        %v1818 = vpop.f32.mrf.mxu0
        %v1819 = vadd.f32 %v1795, %v1818
        %v1820 = vpop.f32.mrf.mxu0
        %v1821 = vadd.f32 %v1797, %v1820
        %1822 = vdwg.mxu0
        %1823 = vmatpush.bf16.msra.mxu0 %v1462
        %1824 = vmatpush.bf16.msra.mxu0 %v1460
        %1825 = vmatpush.bf16.msra.mxu0 %v1458
        %1826 = vmatpush.bf16.msra.mxu0 %v1456
        %1827 = vmatpush.bf16.msra.mxu0 %v1454
        %1828 = vmatpush.bf16.msra.mxu0 %v1452
        %1829 = vmatpush.bf16.msra.mxu0 %v1450
        %1830 = vmatpush.bf16.msra.mxu0 %v1448
        %1831 = vmatmul.bf16.gmra.mxu0 %v1048
        %v1832 = vpop.f32.mrf.mxu0
        %v1833 = vadd.f32 %v1809, %v1832
        %v1834 = vpop.f32.mrf.mxu0
        %v1835 = vadd.f32 %v1811, %v1834
        %1836 = vmatmul.bf16.gmra.mxu0 %v1054
        %v1837 = vpop.f32.mrf.mxu0
        %v1838 = vadd.f32 %v1814, %v1837
        %v1839 = vpop.f32.mrf.mxu0
        %v1840 = vadd.f32 %v1816, %v1839
        %1841 = vmatmul.bf16.gmra.mxu0 %v1060
        %v1842 = vpop.f32.mrf.mxu0
        %v1843 = vadd.f32 %v1819, %v1842
        %v1844 = vpop.f32.mrf.mxu0
        %v1845 = vadd.f32 %v1821, %v1844
        %1846 = vdwg.mxu0
        %1847 = vst [vmem:[#allocation2] sm:$0xff] %v1689
        %1848 = vst [vmem:[#allocation2 + $0x8] sm:$0xff] %v1833
        %1849 = vst [vmem:[#allocation2 + $0x10] sm:$0xff] %v1691
        %1850 = vst [vmem:[#allocation2 + $0x18] sm:$0xff] %v1835
        %1851 = vst [vmem:[#allocation2 + $0x20] sm:$0xff] %v1694
        %1852 = vst [vmem:[#allocation2 + $0x28] sm:$0xff] %v1838
        %1853 = vst [vmem:[#allocation2 + $0x30] sm:$0xff] %v1696
        %1854 = vst [vmem:[#allocation2 + $0x38] sm:$0xff] %v1840
        %1855 = vst [vmem:[#allocation2 + $0x40] sm:$0xff] %v1699
        %1856 = vst [vmem:[#allocation2 + $0x48] sm:$0xff] %v1843
        %1857 = vst [vmem:[#allocation2 + $0x50] sm:$0xff] %v1701
        %1858 = vst [vmem:[#allocation2 + $0x58] sm:$0xff] %v1845
      $region104: #{vit_encoder_forward.1} parent=99 // pred_fallthru
        _
      %v1859 = vld [vmem:[#allocation2] sm:$0xff]
      %v1860 = vld [vmem:[#allocation2 + $0x8] sm:$0xff]
      %v1861 = vld [vmem:[#allocation2 + $0x10] sm:$0xff]
      %v1862 = vld [vmem:[#allocation2 + $0x18] sm:$0xff]
      %v1863 = vld [vmem:[#allocation2 + $0x20] sm:$0xff]
      %v1864 = vld [vmem:[#allocation2 + $0x28] sm:$0xff]
      %v1865 = vld [vmem:[#allocation2 + $0x30] sm:$0xff]
      %v1866 = vld [vmem:[#allocation2 + $0x38] sm:$0xff]
      %v1867 = vld [vmem:[#allocation2 + $0x40] sm:$0xff]
      %v1868 = vld [vmem:[#allocation2 + $0x48] sm:$0xff]
      %v1869 = vld [vmem:[#allocation2 + $0x50] sm:$0xff]
      %v1870 = vld [vmem:[#allocation2 + $0x58] sm:$0xff]
      %v1871 = vld [vmem:[%s804] sm:$0x3]
      %v1872 = vld [vmem:[%s808] sm:$0x3]
      %v1873 = vadd.f32 %v1859, %v1860
      %1874 = vadd.xlane.f32.xlu0 %v1873
      %v1875 = vpop.xlane.xlu0 %1874
      %v1876 = vadd.f32 %v1861, %v1862
      %1877 = vadd.xlane.f32.xlu0 %v1876
      %v1878 = vpop.xlane.xlu0 %1877
      %v1879 = vadd.f32 %v1863, %v1864
      %1880 = vadd.xlane.f32.xlu0 %v1879
      %v1881 = vpop.xlane.xlu0 %1880
      %v1882 = vadd.f32 %v1865, %v1866
      %1883 = vadd.xlane.f32.xlu0 %v1882
      %v1884 = vpop.xlane.xlu0 %1883
      %v1885 = vadd.f32 %v1867, %v1868
      %1886 = vadd.xlane.f32.xlu0 %v1885
      %v1887 = vpop.xlane.xlu0 %1886
      %v1888 = vadd.f32 %v1869, %v1870
      %1889 = vadd.xlane.f32.xlu0 %v1888
      %v1890 = vpop.xlane.xlu0 %1889
      %v1891 = vrcp.pop 256.0
      %v1892 = vmul.f32 256.0, %v1891
      %v1893 = vsub.f32 1.0, %v1892
      %v1894 = vmul.f32 %v1891, %v1893
      %v1895 = vadd.f32 %v1891, %v1894
      %vm1896 = vweird.f32 %v1891
      %v1897 = vsel %vm1896, %v1891, %v1895
      %v1898 = vmul.f32 %v1875, %v1897
      %v1899 = vmul.f32 %v1878, %v1897
      %v1900 = vmul.f32 %v1881, %v1897
      %v1901 = vmul.f32 %v1884, %v1897
      %v1902 = vmul.f32 %v1887, %v1897
      %v1903 = vmul.f32 %v1890, %v1897
      %v1904 = vsub.f32 %v1859, %v1898
      %v1905 = vsub.f32 %v1860, %v1898
      %v1906 = vsub.f32 %v1861, %v1899
      %v1907 = vsub.f32 %v1862, %v1899
      %v1908 = vsub.f32 %v1863, %v1900
      %v1909 = vsub.f32 %v1864, %v1900
      %v1910 = vsub.f32 %v1865, %v1901
      %v1911 = vsub.f32 %v1866, %v1901
      %v1912 = vsub.f32 %v1867, %v1902
      %v1913 = vsub.f32 %v1868, %v1902
      %v1914 = vsub.f32 %v1869, %v1903
      %v1915 = vsub.f32 %v1870, %v1903
      %v1916 = vmul.f32 %v1904, %v1904
      %v1917 = vmul.f32 %v1905, %v1905
      %v1918 = vmul.f32 %v1906, %v1906
      %v1919 = vmul.f32 %v1907, %v1907
      %v1920 = vmul.f32 %v1908, %v1908
      %v1921 = vmul.f32 %v1909, %v1909
      %v1922 = vmul.f32 %v1910, %v1910
      %v1923 = vmul.f32 %v1911, %v1911
      %v1924 = vmul.f32 %v1912, %v1912
      %v1925 = vmul.f32 %v1913, %v1913
      %v1926 = vmul.f32 %v1914, %v1914
      %v1927 = vmul.f32 %v1915, %v1915
      %v1928 = vadd.f32 %v1916, %v1917
      %1929 = vadd.xlane.f32.xlu0 %v1928
      %v1930 = vpop.xlane.xlu0 %1929
      %v1931 = vadd.f32 %v1918, %v1919
      %1932 = vadd.xlane.f32.xlu0 %v1931
      %v1933 = vpop.xlane.xlu0 %1932
      %v1934 = vadd.f32 %v1920, %v1921
      %1935 = vadd.xlane.f32.xlu0 %v1934
      %v1936 = vpop.xlane.xlu0 %1935
      %v1937 = vadd.f32 %v1922, %v1923
      %1938 = vadd.xlane.f32.xlu0 %v1937
      %v1939 = vpop.xlane.xlu0 %1938
      %v1940 = vadd.f32 %v1924, %v1925
      %1941 = vadd.xlane.f32.xlu0 %v1940
      %v1942 = vpop.xlane.xlu0 %1941
      %v1943 = vadd.f32 %v1926, %v1927
      %1944 = vadd.xlane.f32.xlu0 %v1943
      %v1945 = vpop.xlane.xlu0 %1944
      %v1946 = vmul.f32 %v1930, %v1897
      %v1947 = vmul.f32 %v1933, %v1897
      %v1948 = vmul.f32 %v1936, %v1897
      %v1949 = vmul.f32 %v1939, %v1897
      %v1950 = vmul.f32 %v1942, %v1897
      %v1951 = vmul.f32 %v1945, %v1897
      %v1952 = vadd.f32 %v1946, 1e-06
      %v1953 = vadd.f32 %v1947, 1e-06
      %v1954 = vadd.f32 %v1948, 1e-06
      %v1955 = vadd.f32 %v1949, 1e-06
      %v1956 = vadd.f32 %v1950, 1e-06
      %v1957 = vadd.f32 %v1951, 1e-06
      %v1958 = vrsqrt.pop %v1952
      %v1959 = vmul.f32 %v1958, %v1952
      %v1960 = vmul.f32 %v1959, %v1958
      %v1961 = vmul.f32 0.5, %v1960
      %v1962 = vsub.f32 1.5, %v1961
      %v1963 = vmul.f32 %v1958, %v1962
      %vm1964 = vweird.f32 %v1952
      %vm1965 = vweird.f32 %v1958
      %vm1966 = vmor %vm1964, %vm1965
      %v1967 = vsel %vm1966, %v1958, %v1963
      %v1968 = vrsqrt.pop %v1953
      %v1969 = vmul.f32 %v1968, %v1953
      %v1970 = vmul.f32 %v1969, %v1968
      %v1971 = vmul.f32 0.5, %v1970
      %v1972 = vsub.f32 1.5, %v1971
      %v1973 = vmul.f32 %v1968, %v1972
      %vm1974 = vweird.f32 %v1953
      %vm1975 = vweird.f32 %v1968
      %vm1976 = vmor %vm1974, %vm1975
      %v1977 = vsel %vm1976, %v1968, %v1973
      %v1978 = vrsqrt.pop %v1954
      %v1979 = vmul.f32 %v1978, %v1954
      %v1980 = vmul.f32 %v1979, %v1978
      %v1981 = vmul.f32 0.5, %v1980
      %v1982 = vsub.f32 1.5, %v1981
      %v1983 = vmul.f32 %v1978, %v1982
      %vm1984 = vweird.f32 %v1954
      %vm1985 = vweird.f32 %v1978
      %vm1986 = vmor %vm1984, %vm1985
      %v1987 = vsel %vm1986, %v1978, %v1983
      %v1988 = vrsqrt.pop %v1955
      %v1989 = vmul.f32 %v1988, %v1955
      %v1990 = vmul.f32 %v1989, %v1988
      %v1991 = vmul.f32 0.5, %v1990
      %v1992 = vsub.f32 1.5, %v1991
      %v1993 = vmul.f32 %v1988, %v1992
      %vm1994 = vweird.f32 %v1955
      %vm1995 = vweird.f32 %v1988
      %vm1996 = vmor %vm1994, %vm1995
      %v1997 = vsel %vm1996, %v1988, %v1993
      %v1998 = vrsqrt.pop %v1956
      %v1999 = vmul.f32 %v1998, %v1956
      %v2000 = vmul.f32 %v1999, %v1998
      %v2001 = vmul.f32 0.5, %v2000
      %v2002 = vsub.f32 1.5, %v2001
      %v2003 = vmul.f32 %v1998, %v2002
      %vm2004 = vweird.f32 %v1956
      %vm2005 = vweird.f32 %v1998
      %vm2006 = vmor %vm2004, %vm2005
      %v2007 = vsel %vm2006, %v1998, %v2003
      %v2008 = vrsqrt.pop %v1957
      %v2009 = vmul.f32 %v2008, %v1957
      %v2010 = vmul.f32 %v2009, %v2008
      %v2011 = vmul.f32 0.5, %v2010
      %v2012 = vsub.f32 1.5, %v2011
      %v2013 = vmul.f32 %v2008, %v2012
      %vm2014 = vweird.f32 %v1957
      %vm2015 = vweird.f32 %v2008
      %vm2016 = vmor %vm2014, %vm2015
      %v2017 = vsel %vm2016, %v2008, %v2013
      %v2018 = vmul.f32 %v1904, %v1967
      %v2019 = vmul.f32 %v1905, %v1967
      %v2020 = vmul.f32 %v1906, %v1977
      %v2021 = vmul.f32 %v1907, %v1977
      %v2022 = vmul.f32 %v1908, %v1987
      %v2023 = vmul.f32 %v1909, %v1987
      %v2024 = vmul.f32 %v1910, %v1997
      %v2025 = vmul.f32 %v1911, %v1997
      %v2026 = vmul.f32 %v1912, %v2007
      %v2027 = vmul.f32 %v1913, %v2007
      %v2028 = vmul.f32 %v1914, %v2017
      %v2029 = vmul.f32 %v1915, %v2017
      %v2031 = vperm.slane %v1871, 0
      %v2032 = vperm.slane %v1871, 1
      %v2035 = vmul.f32 %v2018, %v2031
      %v2036 = vmul.f32 %v2019, %v2032
      %v2037 = vmul.f32 %v2020, %v2031
      %v2038 = vmul.f32 %v2021, %v2032
      %v2039 = vmul.f32 %v2022, %v2031
      %v2040 = vmul.f32 %v2023, %v2032
      %v2041 = vmul.f32 %v2024, %v2031
      %v2042 = vmul.f32 %v2025, %v2032
      %v2043 = vmul.f32 %v2026, %v2031
      %v2044 = vmul.f32 %v2027, %v2032
      %v2045 = vmul.f32 %v2028, %v2031
      %v2046 = vmul.f32 %v2029, %v2032
      %v2048 = vperm.slane %v1872, 0
      %v2049 = vperm.slane %v1872, 1
      %v2052 = vadd.f32 %v2035, %v2048
      %v2053 = vadd.f32 %v2036, %v2049
      %v2054 = vadd.f32 %v2037, %v2048
      %v2055 = vadd.f32 %v2038, %v2049
      %v2056 = vadd.f32 %v2039, %v2048
      %v2057 = vadd.f32 %v2040, %v2049
      %v2058 = vadd.f32 %v2041, %v2048
      %v2059 = vadd.f32 %v2042, %v2049
      %v2060 = vadd.f32 %v2043, %v2048
      %v2061 = vadd.f32 %v2044, %v2049
      %v2062 = vadd.f32 %v2045, %v2048
      %v2063 = vadd.f32 %v2046, %v2049
      %v2064 = vpack.c.bf16 %v2054, %v2052
      %v2065 = vpack.c.bf16 %v2055, %v2053
      %v2066 = vpack.c.bf16 %v2058, %v2056
      %v2067 = vpack.c.bf16 %v2059, %v2057
      %v2068 = vpack.c.bf16 %v2062, %v2060
      %v2069 = vpack.c.bf16 %v2063, %v2061
      %v2070 = vld [vmem:[%s813] sm:$0xff]
      %v2071 = vld [vmem:[%s813 + $0x8] sm:$0xff]
      %v2072 = vld [vmem:[%s813 + $0x10] sm:$0xff]
      %v2073 = vld [vmem:[%s813 + $0x18] sm:$0xff]
      %v2074 = vld [vmem:[%s813 + $0x20] sm:$0xff]
      %v2075 = vld [vmem:[%s813 + $0x28] sm:$0xff]
      %v2076 = vld [vmem:[%s813 + $0x30] sm:$0xff]
      %v2077 = vld [vmem:[%s813 + $0x38] sm:$0xff]
      %v2078 = vld [vmem:[%s813 + $0x40] sm:$0xff]
      %v2079 = vld [vmem:[%s813 + $0x48] sm:$0xff]
      %v2080 = vld [vmem:[%s813 + $0x50] sm:$0xff]
      %v2081 = vld [vmem:[%s813 + $0x58] sm:$0xff]
      %v2082 = vld [vmem:[%s813 + $0x60] sm:$0xff]
      %v2083 = vld [vmem:[%s813 + $0x68] sm:$0xff]
      %v2084 = vld [vmem:[%s813 + $0x70] sm:$0xff]
      %v2085 = vld [vmem:[%s813 + $0x78] sm:$0xff]
      %v2086 = vld [vmem:[%s813 + $0x80] sm:$0xff]
      %v2087 = vld [vmem:[%s813 + $0x88] sm:$0xff]
      %v2088 = vld [vmem:[%s813 + $0x90] sm:$0xff]
      %v2089 = vld [vmem:[%s813 + $0x98] sm:$0xff]
      %v2090 = vld [vmem:[%s813 + $0xa0] sm:$0xff]
      %v2091 = vld [vmem:[%s813 + $0xa8] sm:$0xff]
      %v2092 = vld [vmem:[%s813 + $0xb0] sm:$0xff]
      %v2093 = vld [vmem:[%s813 + $0xb8] sm:$0xff]
      %v2094 = vld [vmem:[%s813 + $0xc0] sm:$0xff]
      %v2095 = vld [vmem:[%s813 + $0xc8] sm:$0xff]
      %v2096 = vld [vmem:[%s813 + $0xd0] sm:$0xff]
      %v2097 = vld [vmem:[%s813 + $0xd8] sm:$0xff]
      %v2098 = vld [vmem:[%s813 + $0xe0] sm:$0xff]
      %v2099 = vld [vmem:[%s813 + $0xe8] sm:$0xff]
      %v2100 = vld [vmem:[%s813 + $0xf0] sm:$0xff]
      %v2101 = vld [vmem:[%s813 + $0xf8] sm:$0xff]
      %v2102 = vld [vmem:[%s813 + $0x100] sm:$0xff]
      %v2103 = vld [vmem:[%s813 + $0x108] sm:$0xff]
      %v2104 = vld [vmem:[%s813 + $0x110] sm:$0xff]
      %v2105 = vld [vmem:[%s813 + $0x118] sm:$0xff]
      %v2106 = vld [vmem:[%s813 + $0x120] sm:$0xff]
      %v2107 = vld [vmem:[%s813 + $0x128] sm:$0xff]
      %v2108 = vld [vmem:[%s813 + $0x130] sm:$0xff]
      %v2109 = vld [vmem:[%s813 + $0x138] sm:$0xff]
      %v2110 = vld [vmem:[%s813 + $0x140] sm:$0xff]
      %v2111 = vld [vmem:[%s813 + $0x148] sm:$0xff]
      %v2112 = vld [vmem:[%s813 + $0x150] sm:$0xff]
      %v2113 = vld [vmem:[%s813 + $0x158] sm:$0xff]
      %v2114 = vld [vmem:[%s813 + $0x160] sm:$0xff]
      %v2115 = vld [vmem:[%s813 + $0x168] sm:$0xff]
      %v2116 = vld [vmem:[%s813 + $0x170] sm:$0xff]
      %v2117 = vld [vmem:[%s813 + $0x178] sm:$0xff]
      %v2118 = vld [vmem:[%s813 + $0x180] sm:$0xff]
      %v2119 = vld [vmem:[%s813 + $0x188] sm:$0xff]
      %v2120 = vld [vmem:[%s813 + $0x190] sm:$0xff]
      %v2121 = vld [vmem:[%s813 + $0x198] sm:$0xff]
      %v2122 = vld [vmem:[%s813 + $0x1a0] sm:$0xff]
      %v2123 = vld [vmem:[%s813 + $0x1a8] sm:$0xff]
      %v2124 = vld [vmem:[%s813 + $0x1b0] sm:$0xff]
      %v2125 = vld [vmem:[%s813 + $0x1b8] sm:$0xff]
      %v2126 = vld [vmem:[%s813 + $0x1c0] sm:$0xff]
      %v2127 = vld [vmem:[%s813 + $0x1c8] sm:$0xff]
      %v2128 = vld [vmem:[%s813 + $0x1d0] sm:$0xff]
      %v2129 = vld [vmem:[%s813 + $0x1d8] sm:$0xff]
      %v2130 = vld [vmem:[%s813 + $0x1e0] sm:$0xff]
      %v2131 = vld [vmem:[%s813 + $0x1e8] sm:$0xff]
      %v2132 = vld [vmem:[%s813 + $0x1f0] sm:$0xff]
      %v2133 = vld [vmem:[%s813 + $0x1f8] sm:$0xff]
      %v2134 = vld [vmem:[%s813 + $0x200] sm:$0xff]
      %v2135 = vld [vmem:[%s813 + $0x208] sm:$0xff]
      %v2136 = vld [vmem:[%s813 + $0x210] sm:$0xff]
      %v2137 = vld [vmem:[%s813 + $0x218] sm:$0xff]
      %v2138 = vld [vmem:[%s813 + $0x220] sm:$0xff]
      %v2139 = vld [vmem:[%s813 + $0x228] sm:$0xff]
      %v2140 = vld [vmem:[%s813 + $0x230] sm:$0xff]
      %v2141 = vld [vmem:[%s813 + $0x238] sm:$0xff]
      %v2142 = vld [vmem:[%s813 + $0x240] sm:$0xff]
      %v2143 = vld [vmem:[%s813 + $0x248] sm:$0xff]
      %v2144 = vld [vmem:[%s813 + $0x250] sm:$0xff]
      %v2145 = vld [vmem:[%s813 + $0x258] sm:$0xff]
      %v2146 = vld [vmem:[%s813 + $0x260] sm:$0xff]
      %v2147 = vld [vmem:[%s813 + $0x268] sm:$0xff]
      %v2148 = vld [vmem:[%s813 + $0x270] sm:$0xff]
      %v2149 = vld [vmem:[%s813 + $0x278] sm:$0xff]
      %v2150 = vld [vmem:[%s813 + $0x280] sm:$0xff]
      %v2151 = vld [vmem:[%s813 + $0x288] sm:$0xff]
      %v2152 = vld [vmem:[%s813 + $0x290] sm:$0xff]
      %v2153 = vld [vmem:[%s813 + $0x298] sm:$0xff]
      %v2154 = vld [vmem:[%s813 + $0x2a0] sm:$0xff]
      %v2155 = vld [vmem:[%s813 + $0x2a8] sm:$0xff]
      %v2156 = vld [vmem:[%s813 + $0x2b0] sm:$0xff]
      %v2157 = vld [vmem:[%s813 + $0x2b8] sm:$0xff]
      %v2158 = vld [vmem:[%s813 + $0x2c0] sm:$0xff]
      %v2159 = vld [vmem:[%s813 + $0x2c8] sm:$0xff]
      %v2160 = vld [vmem:[%s813 + $0x2d0] sm:$0xff]
      %v2161 = vld [vmem:[%s813 + $0x2d8] sm:$0xff]
      %v2162 = vld [vmem:[%s813 + $0x2e0] sm:$0xff]
      %v2163 = vld [vmem:[%s813 + $0x2e8] sm:$0xff]
      %v2164 = vld [vmem:[%s813 + $0x2f0] sm:$0xff]
      %v2165 = vld [vmem:[%s813 + $0x2f8] sm:$0xff]
      %v2166 = vld [vmem:[%s817] sm:$0x3f]
      %v2168 = vperm.slane %v2166, 0
      %v2169 = vperm.slane %v2166, 1
      %v2170 = vperm.slane %v2166, 2
      %v2171 = vperm.slane %v2166, 3
      %v2172 = vperm.slane %v2166, 4
      %v2173 = vperm.slane %v2166, 5
      %v2276 = vunpack.c.l.b16 %v2070
      %v2277 = vunpack.c.h.b16 %v2070
      %v2278 = vunpack.c.l.b16 %v2071
      %v2279 = vunpack.c.h.b16 %v2071
      %v2280 = vunpack.c.l.b16 %v2072
      %v2281 = vunpack.c.h.b16 %v2072
      %v2282 = vunpack.c.l.b16 %v2073
      %v2283 = vunpack.c.h.b16 %v2073
      %v2284 = vunpack.c.l.b16 %v2074
      %v2285 = vunpack.c.h.b16 %v2074
      %v2286 = vunpack.c.l.b16 %v2075
      %v2287 = vunpack.c.h.b16 %v2075
      %v2288 = vunpack.c.l.b16 %v2076
      %v2289 = vunpack.c.h.b16 %v2076
      %v2290 = vunpack.c.l.b16 %v2077
      %v2291 = vunpack.c.h.b16 %v2077
      %v2292 = vunpack.c.l.b16 %v2078
      %v2293 = vunpack.c.h.b16 %v2078
      %v2294 = vunpack.c.l.b16 %v2079
      %v2295 = vunpack.c.h.b16 %v2079
      %v2296 = vunpack.c.l.b16 %v2080
      %v2297 = vunpack.c.h.b16 %v2080
      %v2298 = vunpack.c.l.b16 %v2081
      %v2299 = vunpack.c.h.b16 %v2081
      %v2300 = vunpack.c.l.b16 %v2082
      %v2301 = vunpack.c.h.b16 %v2082
      %v2302 = vunpack.c.l.b16 %v2083
      %v2303 = vunpack.c.h.b16 %v2083
      %v2304 = vunpack.c.l.b16 %v2084
      %v2305 = vunpack.c.h.b16 %v2084
      %v2306 = vunpack.c.l.b16 %v2085
      %v2307 = vunpack.c.h.b16 %v2085
      %v2308 = vunpack.c.l.b16 %v2086
      %v2309 = vunpack.c.h.b16 %v2086
      %v2310 = vunpack.c.l.b16 %v2087
      %v2311 = vunpack.c.h.b16 %v2087
      %v2312 = vunpack.c.l.b16 %v2088
      %v2313 = vunpack.c.h.b16 %v2088
      %v2314 = vunpack.c.l.b16 %v2089
      %v2315 = vunpack.c.h.b16 %v2089
      %v2316 = vunpack.c.l.b16 %v2090
      %v2317 = vunpack.c.h.b16 %v2090
      %v2318 = vunpack.c.l.b16 %v2091
      %v2319 = vunpack.c.h.b16 %v2091
      %v2320 = vunpack.c.l.b16 %v2092
      %v2321 = vunpack.c.h.b16 %v2092
      %v2322 = vunpack.c.l.b16 %v2093
      %v2323 = vunpack.c.h.b16 %v2093
      %v2324 = vunpack.c.l.b16 %v2094
      %v2325 = vunpack.c.h.b16 %v2094
      %v2326 = vunpack.c.l.b16 %v2095
      %v2327 = vunpack.c.h.b16 %v2095
      %v2328 = vunpack.c.l.b16 %v2096
      %v2329 = vunpack.c.h.b16 %v2096
      %v2330 = vunpack.c.l.b16 %v2097
      %v2331 = vunpack.c.h.b16 %v2097
      %v2332 = vunpack.c.l.b16 %v2098
      %v2333 = vunpack.c.h.b16 %v2098
      %v2334 = vunpack.c.l.b16 %v2099
      %v2335 = vunpack.c.h.b16 %v2099
      %v2336 = vunpack.c.l.b16 %v2100
      %v2337 = vunpack.c.h.b16 %v2100
      %v2338 = vunpack.c.l.b16 %v2101
      %v2339 = vunpack.c.h.b16 %v2101
      %v2340 = vunpack.c.l.b16 %v2102
      %v2341 = vunpack.c.h.b16 %v2102
      %v2342 = vunpack.c.l.b16 %v2103
      %v2343 = vunpack.c.h.b16 %v2103
      %v2344 = vunpack.c.l.b16 %v2104
      %v2345 = vunpack.c.h.b16 %v2104
      %v2346 = vunpack.c.l.b16 %v2105
      %v2347 = vunpack.c.h.b16 %v2105
      %v2348 = vunpack.c.l.b16 %v2106
      %v2349 = vunpack.c.h.b16 %v2106
      %v2350 = vunpack.c.l.b16 %v2107
      %v2351 = vunpack.c.h.b16 %v2107
      %v2352 = vunpack.c.l.b16 %v2108
      %v2353 = vunpack.c.h.b16 %v2108
      %v2354 = vunpack.c.l.b16 %v2109
      %v2355 = vunpack.c.h.b16 %v2109
      %v2356 = vunpack.c.l.b16 %v2110
      %v2357 = vunpack.c.h.b16 %v2110
      %v2358 = vunpack.c.l.b16 %v2111
      %v2359 = vunpack.c.h.b16 %v2111
      %v2360 = vunpack.c.l.b16 %v2112
      %v2361 = vunpack.c.h.b16 %v2112
      %v2362 = vunpack.c.l.b16 %v2113
      %v2363 = vunpack.c.h.b16 %v2113
      %v2364 = vunpack.c.l.b16 %v2114
      %v2365 = vunpack.c.h.b16 %v2114
      %v2366 = vunpack.c.l.b16 %v2115
      %v2367 = vunpack.c.h.b16 %v2115
      %v2368 = vunpack.c.l.b16 %v2116
      %v2369 = vunpack.c.h.b16 %v2116
      %v2370 = vunpack.c.l.b16 %v2117
      %v2371 = vunpack.c.h.b16 %v2117
      %v2372 = vunpack.c.l.b16 %v2118
      %v2373 = vunpack.c.h.b16 %v2118
      %v2374 = vunpack.c.l.b16 %v2119
      %v2375 = vunpack.c.h.b16 %v2119
      %v2376 = vunpack.c.l.b16 %v2120
      %v2377 = vunpack.c.h.b16 %v2120
      %v2378 = vunpack.c.l.b16 %v2121
      %v2379 = vunpack.c.h.b16 %v2121
      %v2380 = vunpack.c.l.b16 %v2122
      %v2381 = vunpack.c.h.b16 %v2122
      %v2382 = vunpack.c.l.b16 %v2123
      %v2383 = vunpack.c.h.b16 %v2123
      %v2384 = vunpack.c.l.b16 %v2124
      %v2385 = vunpack.c.h.b16 %v2124
      %v2386 = vunpack.c.l.b16 %v2125
      %v2387 = vunpack.c.h.b16 %v2125
      %v2388 = vunpack.c.l.b16 %v2126
      %v2389 = vunpack.c.h.b16 %v2126
      %v2390 = vunpack.c.l.b16 %v2127
      %v2391 = vunpack.c.h.b16 %v2127
      %v2392 = vunpack.c.l.b16 %v2128
      %v2393 = vunpack.c.h.b16 %v2128
      %v2394 = vunpack.c.l.b16 %v2129
      %v2395 = vunpack.c.h.b16 %v2129
      %v2396 = vunpack.c.l.b16 %v2130
      %v2397 = vunpack.c.h.b16 %v2130
      %v2398 = vunpack.c.l.b16 %v2131
      %v2399 = vunpack.c.h.b16 %v2131
      %v2400 = vunpack.c.l.b16 %v2132
      %v2401 = vunpack.c.h.b16 %v2132
      %v2402 = vunpack.c.l.b16 %v2133
      %v2403 = vunpack.c.h.b16 %v2133
      %v2404 = vunpack.c.l.b16 %v2134
      %v2405 = vunpack.c.h.b16 %v2134
      %v2406 = vunpack.c.l.b16 %v2135
      %v2407 = vunpack.c.h.b16 %v2135
      %v2408 = vunpack.c.l.b16 %v2136
      %v2409 = vunpack.c.h.b16 %v2136
      %v2410 = vunpack.c.l.b16 %v2137
      %v2411 = vunpack.c.h.b16 %v2137
      %v2412 = vunpack.c.l.b16 %v2138
      %v2413 = vunpack.c.h.b16 %v2138
      %v2414 = vunpack.c.l.b16 %v2139
      %v2415 = vunpack.c.h.b16 %v2139
      %v2416 = vunpack.c.l.b16 %v2140
      %v2417 = vunpack.c.h.b16 %v2140
      %v2418 = vunpack.c.l.b16 %v2141
      %v2419 = vunpack.c.h.b16 %v2141
      %v2420 = vunpack.c.l.b16 %v2142
      %v2421 = vunpack.c.h.b16 %v2142
      %v2422 = vunpack.c.l.b16 %v2143
      %v2423 = vunpack.c.h.b16 %v2143
      %v2424 = vunpack.c.l.b16 %v2144
      %v2425 = vunpack.c.h.b16 %v2144
      %v2426 = vunpack.c.l.b16 %v2145
      %v2427 = vunpack.c.h.b16 %v2145
      %v2428 = vunpack.c.l.b16 %v2146
      %v2429 = vunpack.c.h.b16 %v2146
      %v2430 = vunpack.c.l.b16 %v2147
      %v2431 = vunpack.c.h.b16 %v2147
      %v2432 = vunpack.c.l.b16 %v2148
      %v2433 = vunpack.c.h.b16 %v2148
      %v2434 = vunpack.c.l.b16 %v2149
      %v2435 = vunpack.c.h.b16 %v2149
      %v2436 = vunpack.c.l.b16 %v2150
      %v2437 = vunpack.c.h.b16 %v2150
      %v2438 = vunpack.c.l.b16 %v2151
      %v2439 = vunpack.c.h.b16 %v2151
      %v2440 = vunpack.c.l.b16 %v2152
      %v2441 = vunpack.c.h.b16 %v2152
      %v2442 = vunpack.c.l.b16 %v2153
      %v2443 = vunpack.c.h.b16 %v2153
      %v2444 = vunpack.c.l.b16 %v2154
      %v2445 = vunpack.c.h.b16 %v2154
      %v2446 = vunpack.c.l.b16 %v2155
      %v2447 = vunpack.c.h.b16 %v2155
      %v2448 = vunpack.c.l.b16 %v2156
      %v2449 = vunpack.c.h.b16 %v2156
      %v2450 = vunpack.c.l.b16 %v2157
      %v2451 = vunpack.c.h.b16 %v2157
      %v2452 = vunpack.c.l.b16 %v2158
      %v2453 = vunpack.c.h.b16 %v2158
      %v2454 = vunpack.c.l.b16 %v2159
      %v2455 = vunpack.c.h.b16 %v2159
      %v2456 = vunpack.c.l.b16 %v2160
      %v2457 = vunpack.c.h.b16 %v2160
      %v2458 = vunpack.c.l.b16 %v2161
      %v2459 = vunpack.c.h.b16 %v2161
      %v2460 = vunpack.c.l.b16 %v2162
      %v2461 = vunpack.c.h.b16 %v2162
      %v2462 = vunpack.c.l.b16 %v2163
      %v2463 = vunpack.c.h.b16 %v2163
      %v2464 = vunpack.c.l.b16 %v2164
      %v2465 = vunpack.c.h.b16 %v2164
      %v2466 = vunpack.c.l.b16 %v2165
      %v2467 = vunpack.c.h.b16 %v2165
      %v2468 = vpack.c.b16 %v2282, %v2276
      %v2469 = vpack.c.b16 %v2283, %v2277
      %v2470 = vpack.c.b16 %v2284, %v2278
      %v2471 = vpack.c.b16 %v2285, %v2279
      %v2472 = vpack.c.b16 %v2286, %v2280
      %v2473 = vpack.c.b16 %v2287, %v2281
      %v2474 = vpack.c.b16 %v2294, %v2288
      %v2475 = vpack.c.b16 %v2295, %v2289
      %v2476 = vpack.c.b16 %v2296, %v2290
      %v2477 = vpack.c.b16 %v2297, %v2291
      %v2478 = vpack.c.b16 %v2298, %v2292
      %v2479 = vpack.c.b16 %v2299, %v2293
      %v2480 = vpack.c.b16 %v2306, %v2300
      %v2481 = vpack.c.b16 %v2307, %v2301
      %v2482 = vpack.c.b16 %v2308, %v2302
      %v2483 = vpack.c.b16 %v2309, %v2303
      %v2484 = vpack.c.b16 %v2310, %v2304
      %v2485 = vpack.c.b16 %v2311, %v2305
      %v2486 = vpack.c.b16 %v2318, %v2312
      %v2487 = vpack.c.b16 %v2319, %v2313
      %v2488 = vpack.c.b16 %v2320, %v2314
      %v2489 = vpack.c.b16 %v2321, %v2315
      %v2490 = vpack.c.b16 %v2322, %v2316
      %v2491 = vpack.c.b16 %v2323, %v2317
      %v2492 = vpack.c.b16 %v2330, %v2324
      %v2493 = vpack.c.b16 %v2331, %v2325
      %v2494 = vpack.c.b16 %v2332, %v2326
      %v2495 = vpack.c.b16 %v2333, %v2327
      %v2496 = vpack.c.b16 %v2334, %v2328
      %v2497 = vpack.c.b16 %v2335, %v2329
      %v2498 = vpack.c.b16 %v2342, %v2336
      %v2499 = vpack.c.b16 %v2343, %v2337
      %v2500 = vpack.c.b16 %v2344, %v2338
      %v2501 = vpack.c.b16 %v2345, %v2339
      %v2502 = vpack.c.b16 %v2346, %v2340
      %v2503 = vpack.c.b16 %v2347, %v2341
      %v2504 = vpack.c.b16 %v2354, %v2348
      %v2505 = vpack.c.b16 %v2355, %v2349
      %v2506 = vpack.c.b16 %v2356, %v2350
      %v2507 = vpack.c.b16 %v2357, %v2351
      %v2508 = vpack.c.b16 %v2358, %v2352
      %v2509 = vpack.c.b16 %v2359, %v2353
      %v2510 = vpack.c.b16 %v2366, %v2360
      %v2511 = vpack.c.b16 %v2367, %v2361
      %v2512 = vpack.c.b16 %v2368, %v2362
      %v2513 = vpack.c.b16 %v2369, %v2363
      %v2514 = vpack.c.b16 %v2370, %v2364
      %v2515 = vpack.c.b16 %v2371, %v2365
      %v2516 = vpack.c.b16 %v2378, %v2372
      %v2517 = vpack.c.b16 %v2379, %v2373
      %v2518 = vpack.c.b16 %v2380, %v2374
      %v2519 = vpack.c.b16 %v2381, %v2375
      %v2520 = vpack.c.b16 %v2382, %v2376
      %v2521 = vpack.c.b16 %v2383, %v2377
      %v2522 = vpack.c.b16 %v2390, %v2384
      %v2523 = vpack.c.b16 %v2391, %v2385
      %v2524 = vpack.c.b16 %v2392, %v2386
      %v2525 = vpack.c.b16 %v2393, %v2387
      %v2526 = vpack.c.b16 %v2394, %v2388
      %v2527 = vpack.c.b16 %v2395, %v2389
      %v2528 = vpack.c.b16 %v2402, %v2396
      %v2529 = vpack.c.b16 %v2403, %v2397
      %v2530 = vpack.c.b16 %v2404, %v2398
      %v2531 = vpack.c.b16 %v2405, %v2399
      %v2532 = vpack.c.b16 %v2406, %v2400
      %v2533 = vpack.c.b16 %v2407, %v2401
      %v2534 = vpack.c.b16 %v2414, %v2408
      %v2535 = vpack.c.b16 %v2415, %v2409
      %v2536 = vpack.c.b16 %v2416, %v2410
      %v2537 = vpack.c.b16 %v2417, %v2411
      %v2538 = vpack.c.b16 %v2418, %v2412
      %v2539 = vpack.c.b16 %v2419, %v2413
      %v2540 = vpack.c.b16 %v2426, %v2420
      %v2541 = vpack.c.b16 %v2427, %v2421
      %v2542 = vpack.c.b16 %v2428, %v2422
      %v2543 = vpack.c.b16 %v2429, %v2423
      %v2544 = vpack.c.b16 %v2430, %v2424
      %v2545 = vpack.c.b16 %v2431, %v2425
      %v2546 = vpack.c.b16 %v2438, %v2432
      %v2547 = vpack.c.b16 %v2439, %v2433
      %v2548 = vpack.c.b16 %v2440, %v2434
      %v2549 = vpack.c.b16 %v2441, %v2435
      %v2550 = vpack.c.b16 %v2442, %v2436
      %v2551 = vpack.c.b16 %v2443, %v2437
      %v2552 = vpack.c.b16 %v2450, %v2444
      %v2553 = vpack.c.b16 %v2451, %v2445
      %v2554 = vpack.c.b16 %v2452, %v2446
      %v2555 = vpack.c.b16 %v2453, %v2447
      %v2556 = vpack.c.b16 %v2454, %v2448
      %v2557 = vpack.c.b16 %v2455, %v2449
      %v2558 = vpack.c.b16 %v2462, %v2456
      %v2559 = vpack.c.b16 %v2463, %v2457
      %v2560 = vpack.c.b16 %v2464, %v2458
      %v2561 = vpack.c.b16 %v2465, %v2459
      %v2562 = vpack.c.b16 %v2466, %v2460
      %v2563 = vpack.c.b16 %v2467, %v2461
      %2660 = vmatpush.bf16.msra.mxu0 %v2510
      %2661 = vmatpush.bf16.msra.mxu0 %v2504
      %2662 = vmatpush.bf16.msra.mxu0 %v2498
      %2663 = vmatpush.bf16.msra.mxu0 %v2492
      %2664 = vmatpush.bf16.msra.mxu0 %v2486
      %2665 = vmatpush.bf16.msra.mxu0 %v2480
      %2666 = vmatpush.bf16.msra.mxu0 %v2474
      %2667 = vmatpush.bf16.msra.mxu0 %v2468
      %2668 = vmatmul.bf16.gmra.mxu0 %v2064
      %v2669 = vpop.f32.mrf.mxu0
      %v2670 = vadd.f32 %v2168, %v2669
      %v2671 = vpop.f32.mrf.mxu0
      %v2672 = vadd.f32 %v2168, %v2671
      %2673 = vmatmul.bf16.gmra.mxu0 %v2066
      %v2674 = vpop.f32.mrf.mxu0
      %v2675 = vadd.f32 %v2168, %v2674
      %v2676 = vpop.f32.mrf.mxu0
      %v2677 = vadd.f32 %v2168, %v2676
      %2678 = vmatmul.bf16.gmra.mxu0 %v2068
      %v2679 = vpop.f32.mrf.mxu0
      %v2680 = vadd.f32 %v2168, %v2679
      %v2681 = vpop.f32.mrf.mxu0
      %v2682 = vadd.f32 %v2168, %v2681
      %2683 = vdwg.mxu0
      %2684 = vmatpush.bf16.msra.mxu0 %v2558
      %2685 = vmatpush.bf16.msra.mxu0 %v2552
      %2686 = vmatpush.bf16.msra.mxu0 %v2546
      %2687 = vmatpush.bf16.msra.mxu0 %v2540
      %2688 = vmatpush.bf16.msra.mxu0 %v2534
      %2689 = vmatpush.bf16.msra.mxu0 %v2528
      %2690 = vmatpush.bf16.msra.mxu0 %v2522
      %2691 = vmatpush.bf16.msra.mxu0 %v2516
      %2692 = vmatmul.bf16.gmra.mxu0 %v2065
      %v2693 = vpop.f32.mrf.mxu0
      %v2694 = vadd.f32 %v2670, %v2693
      %v2695 = vpop.f32.mrf.mxu0
      %v2696 = vadd.f32 %v2672, %v2695
      %2697 = vmatmul.bf16.gmra.mxu0 %v2067
      %v2698 = vpop.f32.mrf.mxu0
      %v2699 = vadd.f32 %v2675, %v2698
      %v2700 = vpop.f32.mrf.mxu0
      %v2701 = vadd.f32 %v2677, %v2700
      %2702 = vmatmul.bf16.gmra.mxu0 %v2069
      %v2703 = vpop.f32.mrf.mxu0
      %v2704 = vadd.f32 %v2680, %v2703
      %v2705 = vpop.f32.mrf.mxu0
      %v2706 = vadd.f32 %v2682, %v2705
      %2707 = vdwg.mxu0
      %2708 = vmatpush.bf16.msra.mxu0 %v2511
      %2709 = vmatpush.bf16.msra.mxu0 %v2505
      %2710 = vmatpush.bf16.msra.mxu0 %v2499
      %2711 = vmatpush.bf16.msra.mxu0 %v2493
      %2712 = vmatpush.bf16.msra.mxu0 %v2487
      %2713 = vmatpush.bf16.msra.mxu0 %v2481
      %2714 = vmatpush.bf16.msra.mxu0 %v2475
      %2715 = vmatpush.bf16.msra.mxu0 %v2469
      %2716 = vmatmul.bf16.gmra.mxu0 %v2064
      %v2717 = vpop.f32.mrf.mxu0
      %v2718 = vadd.f32 %v2169, %v2717
      %v2719 = vpop.f32.mrf.mxu0
      %v2720 = vadd.f32 %v2169, %v2719
      %2721 = vmatmul.bf16.gmra.mxu0 %v2066
      %v2722 = vpop.f32.mrf.mxu0
      %v2723 = vadd.f32 %v2169, %v2722
      %v2724 = vpop.f32.mrf.mxu0
      %v2725 = vadd.f32 %v2169, %v2724
      %2726 = vmatmul.bf16.gmra.mxu0 %v2068
      %v2727 = vpop.f32.mrf.mxu0
      %v2728 = vadd.f32 %v2169, %v2727
      %v2729 = vpop.f32.mrf.mxu0
      %v2730 = vadd.f32 %v2169, %v2729
      %2731 = vdwg.mxu0
      %2732 = vmatpush.bf16.msra.mxu0 %v2559
      %2733 = vmatpush.bf16.msra.mxu0 %v2553
      %2734 = vmatpush.bf16.msra.mxu0 %v2547
      %2735 = vmatpush.bf16.msra.mxu0 %v2541
      %2736 = vmatpush.bf16.msra.mxu0 %v2535
      %2737 = vmatpush.bf16.msra.mxu0 %v2529
      %2738 = vmatpush.bf16.msra.mxu0 %v2523
      %2739 = vmatpush.bf16.msra.mxu0 %v2517
      %2740 = vmatmul.bf16.gmra.mxu0 %v2065
      %v2741 = vpop.f32.mrf.mxu0
      %v2742 = vadd.f32 %v2718, %v2741
      %v2743 = vpop.f32.mrf.mxu0
      %v2744 = vadd.f32 %v2720, %v2743
      %2745 = vmatmul.bf16.gmra.mxu0 %v2067
      %v2746 = vpop.f32.mrf.mxu0
      %v2747 = vadd.f32 %v2723, %v2746
      %v2748 = vpop.f32.mrf.mxu0
      %v2749 = vadd.f32 %v2725, %v2748
      %2750 = vmatmul.bf16.gmra.mxu0 %v2069
      %v2751 = vpop.f32.mrf.mxu0
      %v2752 = vadd.f32 %v2728, %v2751
      %v2753 = vpop.f32.mrf.mxu0
      %v2754 = vadd.f32 %v2730, %v2753
      %2755 = vdwg.mxu0
      %2756 = vmatpush.bf16.msra.mxu0 %v2512
      %2757 = vmatpush.bf16.msra.mxu0 %v2506
      %2758 = vmatpush.bf16.msra.mxu0 %v2500
      %2759 = vmatpush.bf16.msra.mxu0 %v2494
      %2760 = vmatpush.bf16.msra.mxu0 %v2488
      %2761 = vmatpush.bf16.msra.mxu0 %v2482
      %2762 = vmatpush.bf16.msra.mxu0 %v2476
      %2763 = vmatpush.bf16.msra.mxu0 %v2470
      %2764 = vmatmul.bf16.gmra.mxu0 %v2064
      %v2765 = vpop.f32.mrf.mxu0
      %v2766 = vadd.f32 %v2170, %v2765
      %v2767 = vpop.f32.mrf.mxu0
      %v2768 = vadd.f32 %v2170, %v2767
      %2769 = vmatmul.bf16.gmra.mxu0 %v2066
      %v2770 = vpop.f32.mrf.mxu0
      %v2771 = vadd.f32 %v2170, %v2770
      %v2772 = vpop.f32.mrf.mxu0
      %v2773 = vadd.f32 %v2170, %v2772
      %2774 = vmatmul.bf16.gmra.mxu0 %v2068
      %v2775 = vpop.f32.mrf.mxu0
      %v2776 = vadd.f32 %v2170, %v2775
      %v2777 = vpop.f32.mrf.mxu0
      %v2778 = vadd.f32 %v2170, %v2777
      %2779 = vdwg.mxu0
      %2780 = vmatpush.bf16.msra.mxu0 %v2560
      %2781 = vmatpush.bf16.msra.mxu0 %v2554
      %2782 = vmatpush.bf16.msra.mxu0 %v2548
      %2783 = vmatpush.bf16.msra.mxu0 %v2542
      %2784 = vmatpush.bf16.msra.mxu0 %v2536
      %2785 = vmatpush.bf16.msra.mxu0 %v2530
      %2786 = vmatpush.bf16.msra.mxu0 %v2524
      %2787 = vmatpush.bf16.msra.mxu0 %v2518
      %2788 = vmatmul.bf16.gmra.mxu0 %v2065
      %v2789 = vpop.f32.mrf.mxu0
      %v2790 = vadd.f32 %v2766, %v2789
      %v2791 = vpop.f32.mrf.mxu0
      %v2792 = vadd.f32 %v2768, %v2791
      %2793 = vmatmul.bf16.gmra.mxu0 %v2067
      %v2794 = vpop.f32.mrf.mxu0
      %v2795 = vadd.f32 %v2771, %v2794
      %v2796 = vpop.f32.mrf.mxu0
      %v2797 = vadd.f32 %v2773, %v2796
      %2798 = vmatmul.bf16.gmra.mxu0 %v2069
      %v2799 = vpop.f32.mrf.mxu0
      %v2800 = vadd.f32 %v2776, %v2799
      %v2801 = vpop.f32.mrf.mxu0
      %v2802 = vadd.f32 %v2778, %v2801
      %2803 = vdwg.mxu0
      %2804 = vmatpush.bf16.msra.mxu0 %v2513
      %2805 = vmatpush.bf16.msra.mxu0 %v2507
      %2806 = vmatpush.bf16.msra.mxu0 %v2501
      %2807 = vmatpush.bf16.msra.mxu0 %v2495
      %2808 = vmatpush.bf16.msra.mxu0 %v2489
      %2809 = vmatpush.bf16.msra.mxu0 %v2483
      %2810 = vmatpush.bf16.msra.mxu0 %v2477
      %2811 = vmatpush.bf16.msra.mxu0 %v2471
      %2812 = vmatmul.bf16.gmra.mxu0 %v2064
      %v2813 = vpop.f32.mrf.mxu0
      %v2814 = vadd.f32 %v2171, %v2813
      %v2815 = vpop.f32.mrf.mxu0
      %v2816 = vadd.f32 %v2171, %v2815
      %2817 = vmatmul.bf16.gmra.mxu0 %v2066
      %v2818 = vpop.f32.mrf.mxu0
      %v2819 = vadd.f32 %v2171, %v2818
      %v2820 = vpop.f32.mrf.mxu0
      %v2821 = vadd.f32 %v2171, %v2820
      %2822 = vmatmul.bf16.gmra.mxu0 %v2068
      %v2823 = vpop.f32.mrf.mxu0
      %v2824 = vadd.f32 %v2171, %v2823
      %v2825 = vpop.f32.mrf.mxu0
      %v2826 = vadd.f32 %v2171, %v2825
      %2827 = vdwg.mxu0
      %2828 = vmatpush.bf16.msra.mxu0 %v2561
      %2829 = vmatpush.bf16.msra.mxu0 %v2555
      %2830 = vmatpush.bf16.msra.mxu0 %v2549
      %2831 = vmatpush.bf16.msra.mxu0 %v2543
      %2832 = vmatpush.bf16.msra.mxu0 %v2537
      %2833 = vmatpush.bf16.msra.mxu0 %v2531
      %2834 = vmatpush.bf16.msra.mxu0 %v2525
      %2835 = vmatpush.bf16.msra.mxu0 %v2519
      %2836 = vmatmul.bf16.gmra.mxu0 %v2065
      %v2837 = vpop.f32.mrf.mxu0
      %v2838 = vadd.f32 %v2814, %v2837
      %v2839 = vpop.f32.mrf.mxu0
      %v2840 = vadd.f32 %v2816, %v2839
      %2841 = vmatmul.bf16.gmra.mxu0 %v2067
      %v2842 = vpop.f32.mrf.mxu0
      %v2843 = vadd.f32 %v2819, %v2842
      %v2844 = vpop.f32.mrf.mxu0
      %v2845 = vadd.f32 %v2821, %v2844
      %2846 = vmatmul.bf16.gmra.mxu0 %v2069
      %v2847 = vpop.f32.mrf.mxu0
      %v2848 = vadd.f32 %v2824, %v2847
      %v2849 = vpop.f32.mrf.mxu0
      %v2850 = vadd.f32 %v2826, %v2849
      %2851 = vdwg.mxu0
      %2852 = vmatpush.bf16.msra.mxu0 %v2514
      %2853 = vmatpush.bf16.msra.mxu0 %v2508
      %2854 = vmatpush.bf16.msra.mxu0 %v2502
      %2855 = vmatpush.bf16.msra.mxu0 %v2496
      %2856 = vmatpush.bf16.msra.mxu0 %v2490
      %2857 = vmatpush.bf16.msra.mxu0 %v2484
      %2858 = vmatpush.bf16.msra.mxu0 %v2478
      %2859 = vmatpush.bf16.msra.mxu0 %v2472
      %2860 = vmatmul.bf16.gmra.mxu0 %v2064
      %v2861 = vpop.f32.mrf.mxu0
      %v2862 = vadd.f32 %v2172, %v2861
      %v2863 = vpop.f32.mrf.mxu0
      %v2864 = vadd.f32 %v2172, %v2863
      %2865 = vmatmul.bf16.gmra.mxu0 %v2066
      %v2866 = vpop.f32.mrf.mxu0
      %v2867 = vadd.f32 %v2172, %v2866
      %v2868 = vpop.f32.mrf.mxu0
      %v2869 = vadd.f32 %v2172, %v2868
      %2870 = vmatmul.bf16.gmra.mxu0 %v2068
      %v2871 = vpop.f32.mrf.mxu0
      %v2872 = vadd.f32 %v2172, %v2871
      %v2873 = vpop.f32.mrf.mxu0
      %v2874 = vadd.f32 %v2172, %v2873
      %2875 = vdwg.mxu0
      %2876 = vmatpush.bf16.msra.mxu0 %v2562
      %2877 = vmatpush.bf16.msra.mxu0 %v2556
      %2878 = vmatpush.bf16.msra.mxu0 %v2550
      %2879 = vmatpush.bf16.msra.mxu0 %v2544
      %2880 = vmatpush.bf16.msra.mxu0 %v2538
      %2881 = vmatpush.bf16.msra.mxu0 %v2532
      %2882 = vmatpush.bf16.msra.mxu0 %v2526
      %2883 = vmatpush.bf16.msra.mxu0 %v2520
      %2884 = vmatmul.bf16.gmra.mxu0 %v2065
      %v2885 = vpop.f32.mrf.mxu0
      %v2886 = vadd.f32 %v2862, %v2885
      %v2887 = vpop.f32.mrf.mxu0
      %v2888 = vadd.f32 %v2864, %v2887
      %2889 = vmatmul.bf16.gmra.mxu0 %v2067
      %v2890 = vpop.f32.mrf.mxu0
      %v2891 = vadd.f32 %v2867, %v2890
      %v2892 = vpop.f32.mrf.mxu0
      %v2893 = vadd.f32 %v2869, %v2892
      %2894 = vmatmul.bf16.gmra.mxu0 %v2069
      %v2895 = vpop.f32.mrf.mxu0
      %v2896 = vadd.f32 %v2872, %v2895
      %v2897 = vpop.f32.mrf.mxu0
      %v2898 = vadd.f32 %v2874, %v2897
      %2899 = vdwg.mxu0
      %2900 = vmatpush.bf16.msra.mxu0 %v2515
      %2901 = vmatpush.bf16.msra.mxu0 %v2509
      %2902 = vmatpush.bf16.msra.mxu0 %v2503
      %2903 = vmatpush.bf16.msra.mxu0 %v2497
      %2904 = vmatpush.bf16.msra.mxu0 %v2491
      %2905 = vmatpush.bf16.msra.mxu0 %v2485
      %2906 = vmatpush.bf16.msra.mxu0 %v2479
      %2907 = vmatpush.bf16.msra.mxu0 %v2473
      %2908 = vmatmul.bf16.gmra.mxu0 %v2064
      %v2909 = vpop.f32.mrf.mxu0
      %v2910 = vadd.f32 %v2173, %v2909
      %v2911 = vpop.f32.mrf.mxu0
      %v2912 = vadd.f32 %v2173, %v2911
      %2913 = vmatmul.bf16.gmra.mxu0 %v2066
      %v2914 = vpop.f32.mrf.mxu0
      %v2915 = vadd.f32 %v2173, %v2914
      %v2916 = vpop.f32.mrf.mxu0
      %v2917 = vadd.f32 %v2173, %v2916
      %2918 = vmatmul.bf16.gmra.mxu0 %v2068
      %v2919 = vpop.f32.mrf.mxu0
      %v2920 = vadd.f32 %v2173, %v2919
      %v2921 = vpop.f32.mrf.mxu0
      %v2922 = vadd.f32 %v2173, %v2921
      %2923 = vdwg.mxu0
      %2924 = vmatpush.bf16.msra.mxu0 %v2563
      %2925 = vmatpush.bf16.msra.mxu0 %v2557
      %2926 = vmatpush.bf16.msra.mxu0 %v2551
      %2927 = vmatpush.bf16.msra.mxu0 %v2545
      %2928 = vmatpush.bf16.msra.mxu0 %v2539
      %2929 = vmatpush.bf16.msra.mxu0 %v2533
      %2930 = vmatpush.bf16.msra.mxu0 %v2527
      %2931 = vmatpush.bf16.msra.mxu0 %v2521
      %2932 = vmatmul.bf16.gmra.mxu0 %v2065
      %v2933 = vpop.f32.mrf.mxu0
      %v2934 = vadd.f32 %v2910, %v2933
      %v2935 = vpop.f32.mrf.mxu0
      %v2936 = vadd.f32 %v2912, %v2935
      %2937 = vmatmul.bf16.gmra.mxu0 %v2067
      %v2938 = vpop.f32.mrf.mxu0
      %v2939 = vadd.f32 %v2915, %v2938
      %v2940 = vpop.f32.mrf.mxu0
      %v2941 = vadd.f32 %v2917, %v2940
      %2942 = vmatmul.bf16.gmra.mxu0 %v2069
      %v2943 = vpop.f32.mrf.mxu0
      %v2944 = vadd.f32 %v2920, %v2943
      %v2945 = vpop.f32.mrf.mxu0
      %v2946 = vadd.f32 %v2922, %v2945
      %2947 = vdwg.mxu0
      %2948 = vst [vmem:[#allocation3] sm:$0xff] %v2694
      %2949 = vst [vmem:[#allocation3 + $0x8] sm:$0xff] %v2742
      %2950 = vst [vmem:[#allocation3 + $0x10] sm:$0xff] %v2790
      %2951 = vst [vmem:[#allocation3 + $0x18] sm:$0xff] %v2838
      %2952 = vst [vmem:[#allocation3 + $0x20] sm:$0xff] %v2886
      %2953 = vst [vmem:[#allocation3 + $0x28] sm:$0xff] %v2934
      %2954 = vst [vmem:[#allocation3 + $0x30] sm:$0xff] %v2696
      %2955 = vst [vmem:[#allocation3 + $0x38] sm:$0xff] %v2744
      %2956 = vst [vmem:[#allocation3 + $0x40] sm:$0xff] %v2792
      %2957 = vst [vmem:[#allocation3 + $0x48] sm:$0xff] %v2840
      %2958 = vst [vmem:[#allocation3 + $0x50] sm:$0xff] %v2888
      %2959 = vst [vmem:[#allocation3 + $0x58] sm:$0xff] %v2936
      %2960 = vst [vmem:[#allocation3 + $0x60] sm:$0xff] %v2699
      %2961 = vst [vmem:[#allocation3 + $0x68] sm:$0xff] %v2747
      %2962 = vst [vmem:[#allocation3 + $0x70] sm:$0xff] %v2795
      %2963 = vst [vmem:[#allocation3 + $0x78] sm:$0xff] %v2843
      %2964 = vst [vmem:[#allocation3 + $0x80] sm:$0xff] %v2891
      %2965 = vst [vmem:[#allocation3 + $0x88] sm:$0xff] %v2939
      %2966 = vst [vmem:[#allocation3 + $0x90] sm:$0xff] %v2701
      %2967 = vst [vmem:[#allocation3 + $0x98] sm:$0xff] %v2749
      %2968 = vst [vmem:[#allocation3 + $0xa0] sm:$0xff] %v2797
      %2969 = vst [vmem:[#allocation3 + $0xa8] sm:$0xff] %v2845
      %2970 = vst [vmem:[#allocation3 + $0xb0] sm:$0xff] %v2893
      %2971 = vst [vmem:[#allocation3 + $0xb8] sm:$0xff] %v2941
      %2972 = vst [vmem:[#allocation3 + $0xc0] sm:$0xff] %v2704
      %2973 = vst [vmem:[#allocation3 + $0xc8] sm:$0xff] %v2752
      %2974 = vst [vmem:[#allocation3 + $0xd0] sm:$0xff] %v2800
      %2975 = vst [vmem:[#allocation3 + $0xd8] sm:$0xff] %v2848
      %2976 = vst [vmem:[#allocation3 + $0xe0] sm:$0xff] %v2896
      %2977 = vst [vmem:[#allocation3 + $0xe8] sm:$0xff] %v2944
      %2978 = vst [vmem:[#allocation3 + $0xf0] sm:$0xff] %v2706
      %2979 = vst [vmem:[#allocation3 + $0xf8] sm:$0xff] %v2754
      %2980 = vst [vmem:[#allocation3 + $0x100] sm:$0xff] %v2802
      %2981 = vst [vmem:[#allocation3 + $0x108] sm:$0xff] %v2850
      %2982 = vst [vmem:[#allocation3 + $0x110] sm:$0xff] %v2898
      %2983 = vst [vmem:[#allocation3 + $0x118] sm:$0xff] %v2946
      %v2984 = vlaneseq
      %v2985 = vand.u32 %v2984, 127
      %vm2986 = vcmp.lt.s32.totalorder %v2985, 17
      %v2987 = vld [vmem:[#allocation3] sm:$0xff]
      %v2988 = vld [vmem:[#allocation3 + $0x30] sm:$0xff]
      %v2989 = vld [vmem:[#allocation3 + $0x60] sm:$0xff]
      %v2990 = vmul.f32 %v2987, 0.125
      %v2991 = vmul.f32 %v2988, 0.125
      %v2992 = vmul.f32 %v2989, 0.125
      %v2993 = vld [vmem:[#allocation3 + $0x10] sm:$0xff]
      %v2994 = vld [vmem:[#allocation3 + $0x40] sm:$0xff]
      %v2995 = vld [vmem:[#allocation3 + $0x70] sm:$0xff]
      %v2996 = vld [vmem:[#allocation3 + $0x20] sm:$0xff]
      %v2997 = vld [vmem:[#allocation3 + $0x50] sm:$0xff]
      %v2998 = vld [vmem:[#allocation3 + $0x80] sm:$0xff]
      %v2999 = vpack.c.bf16 %v2991, %v2990
      %v3000 = vpack.c.bf16 %v2992, %v2992
      %v3001 = vpack.c.bf16 %v2994, %v2993
      %v3002 = vpack.c.bf16 %v2995, %v2995
      %vm3003 = vcmask 523264
      %v3005 = vsel %vm3003, %v2999, 0
      %v3008 = vsel %vm3003, %v3000, 0
      %v3011 = vsel %vm3003, %v3001, 0
      %v3014 = vsel %vm3003, %v3002, 0
      %3016 = vmatpush.bf16.xpose.msra.mxu0 0
      %3017 = vmatpush.bf16.xpose.msra.mxu0 0
      %3018 = vmatpush.bf16.xpose.msra.mxu0 0
      %3019 = vmatpush.bf16.xpose.msra.mxu0 0
      %3020 = vmatpush.bf16.xpose.msra.mxu0 0
      %3021 = vmatpush.bf16.xpose.msra.mxu0 0
      %3022 = vmatpush.bf16.xpose.msra.mxu0 %v3014
      %3023 = vmatpush.bf16.xpose.msra.mxu0 %v3011
      %3024 = vmatmul.bf16.gmra.mxu0 %v3005
      %v3025 = vpop.f32.mrf.mxu0
      %v3026 = vadd.f32 0.0, %v3025
      %v3027 = vpop.f32.mrf.mxu0
      %v3028 = vadd.f32 0.0, %v3027
      %3029 = vmatmul.bf16.gmra.mxu0 %v3008
      %v3030 = vpop.f32.mrf.mxu0
      %v3031 = vadd.f32 0.0, %v3030
      %v3032 = vpop.f32.mrf.mxu0
      %3033 = vdwg.mxu0
      %v3034 = vsel %vm2986, %v3026, -1e+30
      %v3035 = vsel %vm2986, %v3028, -1e+30
      %v3036 = vsel %vm2986, %v3031, -1e+30
      %vm3037 = vcmask 195584
      %v3038 = vsel %vm3037, %v3034, -inf
      %3039 = vmax.xlane.f32.xlu0 %v3038
      %v3040 = vpop.xlane.xlu0 %3039
      %v3041 = vsel %vm3037, %v3035, -inf
      %3042 = vmax.xlane.f32.xlu0 %v3041
      %v3043 = vpop.xlane.xlu0 %3042
      %v3044 = vsel %vm3037, %v3036, -inf
      %3045 = vmax.xlane.f32.xlu0 %v3044
      %v3046 = vpop.xlane.xlu0 %3045
      %v3047 = vsub.f32 %v3034, %v3040
      %v3048 = vsub.f32 %v3035, %v3043
      %v3049 = vsub.f32 %v3036, %v3046
      %v3050 = vmul.f32 %v3047, 1.442695
      %v3051 = vpow.pop %v3050
      %v3052 = vmul.f32 %v3048, 1.442695
      %v3053 = vpow.pop %v3052
      %v3054 = vmul.f32 %v3049, 1.442695
      %v3055 = vpow.pop %v3054
      %v3056 = vsel %vm3037, %v3051, 0.0
      %3057 = vadd.xlane.f32.xlu0 %v3056
      %v3058 = vpop.xlane.xlu0 %3057
      %v3059 = vsel %vm3037, %v3053, 0.0
      %3060 = vadd.xlane.f32.xlu0 %v3059
      %v3061 = vpop.xlane.xlu0 %3060
      %v3062 = vsel %vm3037, %v3055, 0.0
      %3063 = vadd.xlane.f32.xlu0 %v3062
      %v3064 = vpop.xlane.xlu0 %3063
      %v3065 = vrcp.pop %v3058
      %v3066 = vrcp.pop %v3061
      %v3067 = vrcp.pop %v3064
      %v3068 = vmul.f32 %v3051, %v3065
      %v3069 = vmul.f32 %v3053, %v3066
      %v3070 = vmul.f32 %v3055, %v3067
      %v3071 = vpack.c.bf16 %v3069, %v3068
      %v3072 = vpack.c.bf16 %v3070, %v3070
      %v3073 = vpack.c.bf16 %v2997, %v2996
      %v3074 = vpack.c.bf16 %v2998, %v2998
      %v3076 = vsel %vm3037, %v3071, 0
      %v3079 = vsel %vm3037, %v3072, 0
      %vm3081 = vcmask 1043456
      %v3083 = vsel %vm3081, %v3074, 0
      %3085 = vmatpush.bf16.msra.mxu0 0
      %3086 = vmatpush.bf16.msra.mxu0 0
      %3087 = vmatpush.bf16.msra.mxu0 0
      %3088 = vmatpush.bf16.msra.mxu0 0
      %3089 = vmatpush.bf16.msra.mxu0 0
      %3090 = vmatpush.bf16.msra.mxu0 0
      %3091 = vmatpush.bf16.msra.mxu0 %v3083
      %3092 = vmatpush.bf16.msra.mxu0 %v3073
      %3093 = vmatmul.bf16.gmra.mxu0 %v3076
      %v3094 = vpop.f32.mrf.mxu0
      %v3095 = vadd.f32 0.0, %v3094
      %v3096 = vpop.f32.mrf.mxu0
      %v3097 = vadd.f32 0.0, %v3096
      %3098 = vmatmul.bf16.gmra.mxu0 %v3079
      %v3099 = vpop.f32.mrf.mxu0
      %v3100 = vadd.f32 0.0, %v3099
      %v3101 = vpop.f32.mrf.mxu0
      %3102 = vdwg.mxu0
      %v3103 = vld [vmem:[#allocation2] sm:$0xff]
      %v3104 = vld [vmem:[#allocation2 + $0x8] sm:$0xff]
      %v3105 = vld [vmem:[#allocation2 + $0x10] sm:$0xff]
      %v3106 = vld [vmem:[#allocation2 + $0x18] sm:$0xff]
      %v3107 = vld [vmem:[#allocation2 + $0x20] sm:$0xff]
      %v3108 = vld [vmem:[#allocation2 + $0x28] sm:$0xff]
      %v3109 = vpack.c.bf16 %v3097, %v3095
      %v3110 = vpack.c.bf16 %v3100, %v3100
      %v3111 = vld [vmem:[%s822] sm:$0xff]
      %v3112 = vld [vmem:[%s822 + $0x8] sm:$0xff]
      %v3113 = vld [vmem:[%s822 + $0x10] sm:$0xff]
      %v3114 = vld [vmem:[%s822 + $0x18] sm:$0xff]
      %v3115 = vld [vmem:[%s822 + $0x20] sm:$0xff]
      %v3116 = vld [vmem:[%s822 + $0x28] sm:$0xff]
      %v3117 = vld [vmem:[%s822 + $0x30] sm:$0xff]
      %v3118 = vld [vmem:[%s822 + $0x38] sm:$0xff]
      %v3127 = vunpack.c.l.b16 %v3111
      %v3128 = vunpack.c.h.b16 %v3111
      %v3129 = vunpack.c.l.b16 %v3112
      %v3130 = vunpack.c.h.b16 %v3112
      %v3131 = vunpack.c.l.b16 %v3113
      %v3132 = vunpack.c.h.b16 %v3113
      %v3133 = vunpack.c.l.b16 %v3114
      %v3134 = vunpack.c.h.b16 %v3114
      %v3135 = vunpack.c.l.b16 %v3115
      %v3136 = vunpack.c.h.b16 %v3115
      %v3137 = vunpack.c.l.b16 %v3116
      %v3138 = vunpack.c.h.b16 %v3116
      %v3139 = vunpack.c.l.b16 %v3117
      %v3140 = vunpack.c.h.b16 %v3117
      %v3141 = vunpack.c.l.b16 %v3118
      %v3142 = vunpack.c.h.b16 %v3118
      %v3143 = vpack.c.b16 %v3129, %v3127
      %v3144 = vpack.c.b16 %v3130, %v3128
      %v3145 = vpack.c.b16 %v3133, %v3131
      %v3146 = vpack.c.b16 %v3134, %v3132
      %v3147 = vpack.c.b16 %v3137, %v3135
      %v3148 = vpack.c.b16 %v3138, %v3136
      %v3149 = vpack.c.b16 %v3141, %v3139
      %v3150 = vpack.c.b16 %v3142, %v3140
      %v3160 = vsel %vm3003, %v3109, 0
      %v3163 = vsel %vm3003, %v3110, 0
      %3165 = vmatpush.bf16.msra.mxu0 0
      %3166 = vmatpush.bf16.msra.mxu0 0
      %3167 = vmatpush.bf16.msra.mxu0 0
      %3168 = vmatpush.bf16.msra.mxu0 0
      %3169 = vmatpush.bf16.msra.mxu0 %v3149
      %3170 = vmatpush.bf16.msra.mxu0 %v3147
      %3171 = vmatpush.bf16.msra.mxu0 %v3145
      %3172 = vmatpush.bf16.msra.mxu0 %v3143
      %3173 = vmatmul.bf16.gmra.mxu0 %v3160
      %v3174 = vpop.f32.mrf.mxu0
      %v3175 = vadd.f32 0.0, %v3174
      %v3176 = vpop.f32.mrf.mxu0
      %v3177 = vadd.f32 0.0, %v3176
      %3178 = vmatmul.bf16.gmra.mxu0 %v3163
      %v3179 = vpop.f32.mrf.mxu0
      %v3180 = vadd.f32 0.0, %v3179
      %v3181 = vpop.f32.mrf.mxu0
      %3182 = vdwg.mxu0
      %3183 = vmatpush.bf16.msra.mxu0 0
      %3184 = vmatpush.bf16.msra.mxu0 0
      %3185 = vmatpush.bf16.msra.mxu0 0
      %3186 = vmatpush.bf16.msra.mxu0 0
      %3187 = vmatpush.bf16.msra.mxu0 %v3150
      %3188 = vmatpush.bf16.msra.mxu0 %v3148
      %3189 = vmatpush.bf16.msra.mxu0 %v3146
      %3190 = vmatpush.bf16.msra.mxu0 %v3144
      %3191 = vmatmul.bf16.gmra.mxu0 %v3160
      %v3192 = vpop.f32.mrf.mxu0
      %v3193 = vadd.f32 0.0, %v3192
      %v3194 = vpop.f32.mrf.mxu0
      %v3195 = vadd.f32 0.0, %v3194
      %3196 = vmatmul.bf16.gmra.mxu0 %v3163
      %v3197 = vpop.f32.mrf.mxu0
      %v3198 = vadd.f32 0.0, %v3197
      %v3199 = vpop.f32.mrf.mxu0
      %3200 = vdwg.mxu0
      %v3201 = vadd.f32 %v3103, %v3175
      %v3202 = vadd.f32 %v3104, %v3193
      %v3203 = vadd.f32 %v3105, %v3177
      %v3204 = vadd.f32 %v3106, %v3195
      %v3205 = vadd.f32 %v3107, %v3180
      %v3206 = vadd.f32 %v3108, %v3198
      %3207 = vst [vmem:[#allocation2] sm:$0xff] %v3201
      %3208 = vst [vmem:[#allocation2 + $0x8] sm:$0xff] %v3202
      %3209 = vst [vmem:[#allocation2 + $0x10] sm:$0xff] %v3203
      %3210 = vst [vmem:[#allocation2 + $0x18] sm:$0xff] %v3204
      %3211 = vst [vmem:[#allocation2 + $0x20] sm:$0xff] %v3205
      %3212 = vst [vmem:[#allocation2 + $0x28] sm:$0xff] %v3206
      %v3213 = vld [vmem:[#allocation3] sm:$0xff]
      %v3214 = vld [vmem:[#allocation3 + $0x30] sm:$0xff]
      %v3215 = vld [vmem:[#allocation3 + $0x60] sm:$0xff]
      %v3216 = vmul.f32 %v3213, 0.125
      %v3217 = vmul.f32 %v3214, 0.125
      %v3218 = vmul.f32 %v3215, 0.125
      %v3219 = vld [vmem:[#allocation3 + $0x10] sm:$0xff]
      %v3220 = vld [vmem:[#allocation3 + $0x40] sm:$0xff]
      %v3221 = vld [vmem:[#allocation3 + $0x70] sm:$0xff]
      %v3222 = vld [vmem:[#allocation3 + $0x20] sm:$0xff]
      %v3223 = vld [vmem:[#allocation3 + $0x50] sm:$0xff]
      %v3224 = vld [vmem:[#allocation3 + $0x80] sm:$0xff]
      %v3225 = vpack.c.bf16 %v3217, %v3216
      %v3226 = vpack.c.bf16 %v3218, %v3218
      %v3227 = vpack.c.bf16 %v3220, %v3219
      %v3228 = vpack.c.bf16 %v3221, %v3221
      %3231 = vrot.lane.b32.xlu0 %v3225, 64
      %v3232 = vpop.permute.xlu0 %3231
      %3233 = vrot.lane.b32.xlu0 %v3226, 64
      %v3234 = vpop.permute.xlu0 %3233
      %3237 = vrot.lane.b32.xlu0 %v3227, 64
      %v3238 = vpop.permute.xlu0 %3237
      %3239 = vrot.lane.b32.xlu0 %v3228, 64
      %v3240 = vpop.permute.xlu0 %3239
      %v3242 = vsel %vm3003, %v3232, 0
      %v3245 = vsel %vm3003, %v3234, 0
      %v3248 = vsel %vm3003, %v3238, 0
      %v3251 = vsel %vm3003, %v3240, 0
      %3253 = vmatpush.bf16.xpose.msra.mxu0 0
      %3254 = vmatpush.bf16.xpose.msra.mxu0 0
      %3255 = vmatpush.bf16.xpose.msra.mxu0 0
      %3256 = vmatpush.bf16.xpose.msra.mxu0 0
      %3257 = vmatpush.bf16.xpose.msra.mxu0 0
      %3258 = vmatpush.bf16.xpose.msra.mxu0 0
      %3259 = vmatpush.bf16.xpose.msra.mxu0 %v3251
      %3260 = vmatpush.bf16.xpose.msra.mxu0 %v3248
      %3261 = vmatmul.bf16.gmra.mxu0 %v3242
      %v3262 = vpop.f32.mrf.mxu0
      %v3263 = vadd.f32 0.0, %v3262
      %v3264 = vpop.f32.mrf.mxu0
      %v3265 = vadd.f32 0.0, %v3264
      %3266 = vmatmul.bf16.gmra.mxu0 %v3245
      %v3267 = vpop.f32.mrf.mxu0
      %v3268 = vadd.f32 0.0, %v3267
      %v3269 = vpop.f32.mrf.mxu0
      %3270 = vdwg.mxu0
      %v3271 = vsel %vm2986, %v3263, -1e+30
      %v3272 = vsel %vm2986, %v3265, -1e+30
      %v3273 = vsel %vm2986, %v3268, -1e+30
      %v3274 = vsel %vm3037, %v3271, -inf
      %3275 = vmax.xlane.f32.xlu0 %v3274
      %v3276 = vpop.xlane.xlu0 %3275
      %v3277 = vsel %vm3037, %v3272, -inf
      %3278 = vmax.xlane.f32.xlu0 %v3277
      %v3279 = vpop.xlane.xlu0 %3278
      %v3280 = vsel %vm3037, %v3273, -inf
      %3281 = vmax.xlane.f32.xlu0 %v3280
      %v3282 = vpop.xlane.xlu0 %3281
      %v3283 = vsub.f32 %v3271, %v3276
      %v3284 = vsub.f32 %v3272, %v3279
      %v3285 = vsub.f32 %v3273, %v3282
      %v3286 = vmul.f32 %v3283, 1.442695
      %v3287 = vpow.pop %v3286
      %v3288 = vmul.f32 %v3284, 1.442695
      %v3289 = vpow.pop %v3288
      %v3290 = vmul.f32 %v3285, 1.442695
      %v3291 = vpow.pop %v3290
      %v3292 = vsel %vm3037, %v3287, 0.0
      %3293 = vadd.xlane.f32.xlu0 %v3292
      %v3294 = vpop.xlane.xlu0 %3293
      %v3295 = vsel %vm3037, %v3289, 0.0
      %3296 = vadd.xlane.f32.xlu0 %v3295
      %v3297 = vpop.xlane.xlu0 %3296
      %v3298 = vsel %vm3037, %v3291, 0.0
      %3299 = vadd.xlane.f32.xlu0 %v3298
      %v3300 = vpop.xlane.xlu0 %3299
      %v3301 = vrcp.pop %v3294
      %v3302 = vrcp.pop %v3297
      %v3303 = vrcp.pop %v3300
      %v3304 = vmul.f32 %v3287, %v3301
      %v3305 = vmul.f32 %v3289, %v3302
      %v3306 = vmul.f32 %v3291, %v3303
      %v3307 = vpack.c.bf16 %v3305, %v3304
      %v3308 = vpack.c.bf16 %v3306, %v3306
      %v3309 = vpack.c.bf16 %v3223, %v3222
      %v3310 = vpack.c.bf16 %v3224, %v3224
      %3313 = vrot.lane.b32.xlu0 %v3309, 64
      %v3314 = vpop.permute.xlu0 %3313
      %3315 = vrot.lane.b32.xlu0 %v3310, 64
      %v3316 = vpop.permute.xlu0 %3315
      %v3319 = vsel %vm3037, %v3307, 0
      %v3322 = vsel %vm3037, %v3308, 0
      %v3325 = vsel %vm3081, %v3316, 0
      %3327 = vmatpush.bf16.msra.mxu0 0
      %3328 = vmatpush.bf16.msra.mxu0 0
      %3329 = vmatpush.bf16.msra.mxu0 0
      %3330 = vmatpush.bf16.msra.mxu0 0
      %3331 = vmatpush.bf16.msra.mxu0 0
      %3332 = vmatpush.bf16.msra.mxu0 0
      %3333 = vmatpush.bf16.msra.mxu0 %v3325
      %3334 = vmatpush.bf16.msra.mxu0 %v3314
      %3335 = vmatmul.bf16.gmra.mxu0 %v3319
      %v3336 = vpop.f32.mrf.mxu0
      %v3337 = vadd.f32 0.0, %v3336
      %v3338 = vpop.f32.mrf.mxu0
      %v3339 = vadd.f32 0.0, %v3338
      %3340 = vmatmul.bf16.gmra.mxu0 %v3322
      %v3341 = vpop.f32.mrf.mxu0
      %v3342 = vadd.f32 0.0, %v3341
      %v3343 = vpop.f32.mrf.mxu0
      %3344 = vdwg.mxu0
      %v3345 = vld [vmem:[#allocation2] sm:$0xff]
      %v3346 = vld [vmem:[#allocation2 + $0x8] sm:$0xff]
      %v3347 = vld [vmem:[#allocation2 + $0x10] sm:$0xff]
      %v3348 = vld [vmem:[#allocation2 + $0x18] sm:$0xff]
      %v3349 = vld [vmem:[#allocation2 + $0x20] sm:$0xff]
      %v3350 = vld [vmem:[#allocation2 + $0x28] sm:$0xff]
      %v3351 = vpack.c.bf16 %v3339, %v3337
      %v3352 = vpack.c.bf16 %v3342, %v3342
      %v3353 = vld [vmem:[%s822 + $0x40] sm:$0xff]
      %v3354 = vld [vmem:[%s822 + $0x48] sm:$0xff]
      %v3355 = vld [vmem:[%s822 + $0x50] sm:$0xff]
      %v3356 = vld [vmem:[%s822 + $0x58] sm:$0xff]
      %v3357 = vld [vmem:[%s822 + $0x60] sm:$0xff]
      %v3358 = vld [vmem:[%s822 + $0x68] sm:$0xff]
      %v3359 = vld [vmem:[%s822 + $0x70] sm:$0xff]
      %v3360 = vld [vmem:[%s822 + $0x78] sm:$0xff]
      %v3369 = vunpack.c.l.b16 %v3353
      %v3370 = vunpack.c.h.b16 %v3353
      %v3371 = vunpack.c.l.b16 %v3354
      %v3372 = vunpack.c.h.b16 %v3354
      %v3373 = vunpack.c.l.b16 %v3355
      %v3374 = vunpack.c.h.b16 %v3355
      %v3375 = vunpack.c.l.b16 %v3356
      %v3376 = vunpack.c.h.b16 %v3356
      %v3377 = vunpack.c.l.b16 %v3357
      %v3378 = vunpack.c.h.b16 %v3357
      %v3379 = vunpack.c.l.b16 %v3358
      %v3380 = vunpack.c.h.b16 %v3358
      %v3381 = vunpack.c.l.b16 %v3359
      %v3382 = vunpack.c.h.b16 %v3359
      %v3383 = vunpack.c.l.b16 %v3360
      %v3384 = vunpack.c.h.b16 %v3360
      %v3385 = vpack.c.b16 %v3371, %v3369
      %v3386 = vpack.c.b16 %v3372, %v3370
      %v3387 = vpack.c.b16 %v3375, %v3373
      %v3388 = vpack.c.b16 %v3376, %v3374
      %v3389 = vpack.c.b16 %v3379, %v3377
      %v3390 = vpack.c.b16 %v3380, %v3378
      %v3391 = vpack.c.b16 %v3383, %v3381
      %v3392 = vpack.c.b16 %v3384, %v3382
      %v3402 = vsel %vm3003, %v3351, 0
      %v3405 = vsel %vm3003, %v3352, 0
      %3407 = vmatpush.bf16.msra.mxu0 0
      %3408 = vmatpush.bf16.msra.mxu0 0
      %3409 = vmatpush.bf16.msra.mxu0 0
      %3410 = vmatpush.bf16.msra.mxu0 0
      %3411 = vmatpush.bf16.msra.mxu0 %v3391
      %3412 = vmatpush.bf16.msra.mxu0 %v3389
      %3413 = vmatpush.bf16.msra.mxu0 %v3387
      %3414 = vmatpush.bf16.msra.mxu0 %v3385
      %3415 = vmatmul.bf16.gmra.mxu0 %v3402
      %v3416 = vpop.f32.mrf.mxu0
      %v3417 = vadd.f32 0.0, %v3416
      %v3418 = vpop.f32.mrf.mxu0
      %v3419 = vadd.f32 0.0, %v3418
      %3420 = vmatmul.bf16.gmra.mxu0 %v3405
      %v3421 = vpop.f32.mrf.mxu0
      %v3422 = vadd.f32 0.0, %v3421
      %v3423 = vpop.f32.mrf.mxu0
      %3424 = vdwg.mxu0
      %3425 = vmatpush.bf16.msra.mxu0 0
      %3426 = vmatpush.bf16.msra.mxu0 0
      %3427 = vmatpush.bf16.msra.mxu0 0
      %3428 = vmatpush.bf16.msra.mxu0 0
      %3429 = vmatpush.bf16.msra.mxu0 %v3392
      %3430 = vmatpush.bf16.msra.mxu0 %v3390
      %3431 = vmatpush.bf16.msra.mxu0 %v3388
      %3432 = vmatpush.bf16.msra.mxu0 %v3386
      %3433 = vmatmul.bf16.gmra.mxu0 %v3402
      %v3434 = vpop.f32.mrf.mxu0
      %v3435 = vadd.f32 0.0, %v3434
      %v3436 = vpop.f32.mrf.mxu0
      %v3437 = vadd.f32 0.0, %v3436
      %3438 = vmatmul.bf16.gmra.mxu0 %v3405
      %v3439 = vpop.f32.mrf.mxu0
      %v3440 = vadd.f32 0.0, %v3439
      %v3441 = vpop.f32.mrf.mxu0
      %3442 = vdwg.mxu0
      %v3443 = vadd.f32 %v3345, %v3417
      %v3444 = vadd.f32 %v3346, %v3435
      %v3445 = vadd.f32 %v3347, %v3419
      %v3446 = vadd.f32 %v3348, %v3437
      %v3447 = vadd.f32 %v3349, %v3422
      %v3448 = vadd.f32 %v3350, %v3440
      %3449 = vst [vmem:[#allocation2] sm:$0xff] %v3443
      %3450 = vst [vmem:[#allocation2 + $0x8] sm:$0xff] %v3444
      %3451 = vst [vmem:[#allocation2 + $0x10] sm:$0xff] %v3445
      %3452 = vst [vmem:[#allocation2 + $0x18] sm:$0xff] %v3446
      %3453 = vst [vmem:[#allocation2 + $0x20] sm:$0xff] %v3447
      %3454 = vst [vmem:[#allocation2 + $0x28] sm:$0xff] %v3448
      %v3455 = vld [vmem:[#allocation3 + $0x8] sm:$0xff]
      %v3456 = vld [vmem:[#allocation3 + $0x38] sm:$0xff]
      %v3457 = vld [vmem:[#allocation3 + $0x68] sm:$0xff]
      %v3458 = vmul.f32 %v3455, 0.125
      %v3459 = vmul.f32 %v3456, 0.125
      %v3460 = vmul.f32 %v3457, 0.125
      %v3461 = vld [vmem:[#allocation3 + $0x18] sm:$0xff]
      %v3462 = vld [vmem:[#allocation3 + $0x48] sm:$0xff]
      %v3463 = vld [vmem:[#allocation3 + $0x78] sm:$0xff]
      %v3464 = vld [vmem:[#allocation3 + $0x28] sm:$0xff]
      %v3465 = vld [vmem:[#allocation3 + $0x58] sm:$0xff]
      %v3466 = vld [vmem:[#allocation3 + $0x88] sm:$0xff]
      %v3467 = vpack.c.bf16 %v3459, %v3458
      %v3468 = vpack.c.bf16 %v3460, %v3460
      %v3469 = vpack.c.bf16 %v3462, %v3461
      %v3470 = vpack.c.bf16 %v3463, %v3463
      %v3472 = vsel %vm3003, %v3467, 0
      %v3475 = vsel %vm3003, %v3468, 0
      %v3478 = vsel %vm3003, %v3469, 0
      %v3481 = vsel %vm3003, %v3470, 0
      %3483 = vmatpush.bf16.xpose.msra.mxu0 0
      %3484 = vmatpush.bf16.xpose.msra.mxu0 0
      %3485 = vmatpush.bf16.xpose.msra.mxu0 0
      %3486 = vmatpush.bf16.xpose.msra.mxu0 0
      %3487 = vmatpush.bf16.xpose.msra.mxu0 0
      %3488 = vmatpush.bf16.xpose.msra.mxu0 0
      %3489 = vmatpush.bf16.xpose.msra.mxu0 %v3481
      %3490 = vmatpush.bf16.xpose.msra.mxu0 %v3478
      %3491 = vmatmul.bf16.gmra.mxu0 %v3472
      %v3492 = vpop.f32.mrf.mxu0
      %v3493 = vadd.f32 0.0, %v3492
      %v3494 = vpop.f32.mrf.mxu0
      %v3495 = vadd.f32 0.0, %v3494
      %3496 = vmatmul.bf16.gmra.mxu0 %v3475
      %v3497 = vpop.f32.mrf.mxu0
      %v3498 = vadd.f32 0.0, %v3497
      %v3499 = vpop.f32.mrf.mxu0
      %3500 = vdwg.mxu0
      %v3501 = vsel %vm2986, %v3493, -1e+30
      %v3502 = vsel %vm2986, %v3495, -1e+30
      %v3503 = vsel %vm2986, %v3498, -1e+30
      %v3504 = vsel %vm3037, %v3501, -inf
      %3505 = vmax.xlane.f32.xlu0 %v3504
      %v3506 = vpop.xlane.xlu0 %3505
      %v3507 = vsel %vm3037, %v3502, -inf
      %3508 = vmax.xlane.f32.xlu0 %v3507
      %v3509 = vpop.xlane.xlu0 %3508
      %v3510 = vsel %vm3037, %v3503, -inf
      %3511 = vmax.xlane.f32.xlu0 %v3510
      %v3512 = vpop.xlane.xlu0 %3511
      %v3513 = vsub.f32 %v3501, %v3506
      %v3514 = vsub.f32 %v3502, %v3509
      %v3515 = vsub.f32 %v3503, %v3512
      %v3516 = vmul.f32 %v3513, 1.442695
      %v3517 = vpow.pop %v3516
      %v3518 = vmul.f32 %v3514, 1.442695
      %v3519 = vpow.pop %v3518
      %v3520 = vmul.f32 %v3515, 1.442695
      %v3521 = vpow.pop %v3520
      %v3522 = vsel %vm3037, %v3517, 0.0
      %3523 = vadd.xlane.f32.xlu0 %v3522
      %v3524 = vpop.xlane.xlu0 %3523
      %v3525 = vsel %vm3037, %v3519, 0.0
      %3526 = vadd.xlane.f32.xlu0 %v3525
      %v3527 = vpop.xlane.xlu0 %3526
      %v3528 = vsel %vm3037, %v3521, 0.0
      %3529 = vadd.xlane.f32.xlu0 %v3528
      %v3530 = vpop.xlane.xlu0 %3529
      %v3531 = vrcp.pop %v3524
      %v3532 = vrcp.pop %v3527
      %v3533 = vrcp.pop %v3530
      %v3534 = vmul.f32 %v3517, %v3531
      %v3535 = vmul.f32 %v3519, %v3532
      %v3536 = vmul.f32 %v3521, %v3533
      %v3537 = vpack.c.bf16 %v3535, %v3534
      %v3538 = vpack.c.bf16 %v3536, %v3536
      %v3539 = vpack.c.bf16 %v3465, %v3464
      %v3540 = vpack.c.bf16 %v3466, %v3466
      %v3542 = vsel %vm3037, %v3537, 0
      %v3545 = vsel %vm3037, %v3538, 0
      %v3548 = vsel %vm3081, %v3540, 0
      %3550 = vmatpush.bf16.msra.mxu0 0
      %3551 = vmatpush.bf16.msra.mxu0 0
      %3552 = vmatpush.bf16.msra.mxu0 0
      %3553 = vmatpush.bf16.msra.mxu0 0
      %3554 = vmatpush.bf16.msra.mxu0 0
      %3555 = vmatpush.bf16.msra.mxu0 0
      %3556 = vmatpush.bf16.msra.mxu0 %v3548
      %3557 = vmatpush.bf16.msra.mxu0 %v3539
      %3558 = vmatmul.bf16.gmra.mxu0 %v3542
      %v3559 = vpop.f32.mrf.mxu0
      %v3560 = vadd.f32 0.0, %v3559
      %v3561 = vpop.f32.mrf.mxu0
      %v3562 = vadd.f32 0.0, %v3561
      %3563 = vmatmul.bf16.gmra.mxu0 %v3545
      %v3564 = vpop.f32.mrf.mxu0
      %v3565 = vadd.f32 0.0, %v3564
      %v3566 = vpop.f32.mrf.mxu0
      %3567 = vdwg.mxu0
      %v3568 = vld [vmem:[#allocation2] sm:$0xff]
      %v3569 = vld [vmem:[#allocation2 + $0x8] sm:$0xff]
      %v3570 = vld [vmem:[#allocation2 + $0x10] sm:$0xff]
      %v3571 = vld [vmem:[#allocation2 + $0x18] sm:$0xff]
      %v3572 = vld [vmem:[#allocation2 + $0x20] sm:$0xff]
      %v3573 = vld [vmem:[#allocation2 + $0x28] sm:$0xff]
      %v3574 = vpack.c.bf16 %v3562, %v3560
      %v3575 = vpack.c.bf16 %v3565, %v3565
      %v3576 = vld [vmem:[%s822 + $0x80] sm:$0xff]
      %v3577 = vld [vmem:[%s822 + $0x88] sm:$0xff]
      %v3578 = vld [vmem:[%s822 + $0x90] sm:$0xff]
      %v3579 = vld [vmem:[%s822 + $0x98] sm:$0xff]
      %v3580 = vld [vmem:[%s822 + $0xa0] sm:$0xff]
      %v3581 = vld [vmem:[%s822 + $0xa8] sm:$0xff]
      %v3582 = vld [vmem:[%s822 + $0xb0] sm:$0xff]
      %v3583 = vld [vmem:[%s822 + $0xb8] sm:$0xff]
      %v3592 = vunpack.c.l.b16 %v3576
      %v3593 = vunpack.c.h.b16 %v3576
      %v3594 = vunpack.c.l.b16 %v3577
      %v3595 = vunpack.c.h.b16 %v3577
      %v3596 = vunpack.c.l.b16 %v3578
      %v3597 = vunpack.c.h.b16 %v3578
      %v3598 = vunpack.c.l.b16 %v3579
      %v3599 = vunpack.c.h.b16 %v3579
      %v3600 = vunpack.c.l.b16 %v3580
      %v3601 = vunpack.c.h.b16 %v3580
      %v3602 = vunpack.c.l.b16 %v3581
      %v3603 = vunpack.c.h.b16 %v3581
      %v3604 = vunpack.c.l.b16 %v3582
      %v3605 = vunpack.c.h.b16 %v3582
      %v3606 = vunpack.c.l.b16 %v3583
      %v3607 = vunpack.c.h.b16 %v3583
      %v3608 = vpack.c.b16 %v3594, %v3592
      %v3609 = vpack.c.b16 %v3595, %v3593
      %v3610 = vpack.c.b16 %v3598, %v3596
      %v3611 = vpack.c.b16 %v3599, %v3597
      %v3612 = vpack.c.b16 %v3602, %v3600
      %v3613 = vpack.c.b16 %v3603, %v3601
      %v3614 = vpack.c.b16 %v3606, %v3604
      %v3615 = vpack.c.b16 %v3607, %v3605
      %v3625 = vsel %vm3003, %v3574, 0
      %v3628 = vsel %vm3003, %v3575, 0
      %3630 = vmatpush.bf16.msra.mxu0 0
      %3631 = vmatpush.bf16.msra.mxu0 0
      %3632 = vmatpush.bf16.msra.mxu0 0
      %3633 = vmatpush.bf16.msra.mxu0 0
      %3634 = vmatpush.bf16.msra.mxu0 %v3614
      %3635 = vmatpush.bf16.msra.mxu0 %v3612
      %3636 = vmatpush.bf16.msra.mxu0 %v3610
      %3637 = vmatpush.bf16.msra.mxu0 %v3608
      %3638 = vmatmul.bf16.gmra.mxu0 %v3625
      %v3639 = vpop.f32.mrf.mxu0
      %v3640 = vadd.f32 0.0, %v3639
      %v3641 = vpop.f32.mrf.mxu0
      %v3642 = vadd.f32 0.0, %v3641
      %3643 = vmatmul.bf16.gmra.mxu0 %v3628
      %v3644 = vpop.f32.mrf.mxu0
      %v3645 = vadd.f32 0.0, %v3644
      %v3646 = vpop.f32.mrf.mxu0
      %3647 = vdwg.mxu0
      %3648 = vmatpush.bf16.msra.mxu0 0
      %3649 = vmatpush.bf16.msra.mxu0 0
      %3650 = vmatpush.bf16.msra.mxu0 0
      %3651 = vmatpush.bf16.msra.mxu0 0
      %3652 = vmatpush.bf16.msra.mxu0 %v3615
      %3653 = vmatpush.bf16.msra.mxu0 %v3613
      %3654 = vmatpush.bf16.msra.mxu0 %v3611
      %3655 = vmatpush.bf16.msra.mxu0 %v3609
      %3656 = vmatmul.bf16.gmra.mxu0 %v3625
      %v3657 = vpop.f32.mrf.mxu0
      %v3658 = vadd.f32 0.0, %v3657
      %v3659 = vpop.f32.mrf.mxu0
      %v3660 = vadd.f32 0.0, %v3659
      %3661 = vmatmul.bf16.gmra.mxu0 %v3628
      %v3662 = vpop.f32.mrf.mxu0
      %v3663 = vadd.f32 0.0, %v3662
      %v3664 = vpop.f32.mrf.mxu0
      %3665 = vdwg.mxu0
      %v3666 = vadd.f32 %v3568, %v3640
      %v3667 = vadd.f32 %v3569, %v3658
      %v3668 = vadd.f32 %v3570, %v3642
      %v3669 = vadd.f32 %v3571, %v3660
      %v3670 = vadd.f32 %v3572, %v3645
      %v3671 = vadd.f32 %v3573, %v3663
      %3672 = vst [vmem:[#allocation2] sm:$0xff] %v3666
      %3673 = vst [vmem:[#allocation2 + $0x8] sm:$0xff] %v3667
      %3674 = vst [vmem:[#allocation2 + $0x10] sm:$0xff] %v3668
      %3675 = vst [vmem:[#allocation2 + $0x18] sm:$0xff] %v3669
      %3676 = vst [vmem:[#allocation2 + $0x20] sm:$0xff] %v3670
      %3677 = vst [vmem:[#allocation2 + $0x28] sm:$0xff] %v3671
      %v3678 = vld [vmem:[#allocation3 + $0x8] sm:$0xff]
      %v3679 = vld [vmem:[#allocation3 + $0x38] sm:$0xff]
      %v3680 = vld [vmem:[#allocation3 + $0x68] sm:$0xff]
      %v3681 = vmul.f32 %v3678, 0.125
      %v3682 = vmul.f32 %v3679, 0.125
      %v3683 = vmul.f32 %v3680, 0.125
      %v3684 = vld [vmem:[#allocation3 + $0x18] sm:$0xff]
      %v3685 = vld [vmem:[#allocation3 + $0x48] sm:$0xff]
      %v3686 = vld [vmem:[#allocation3 + $0x78] sm:$0xff]
      %v3687 = vld [vmem:[#allocation3 + $0x28] sm:$0xff]
      %v3688 = vld [vmem:[#allocation3 + $0x58] sm:$0xff]
      %v3689 = vld [vmem:[#allocation3 + $0x88] sm:$0xff]
      %v3690 = vpack.c.bf16 %v3682, %v3681
      %v3691 = vpack.c.bf16 %v3683, %v3683
      %v3692 = vpack.c.bf16 %v3685, %v3684
      %v3693 = vpack.c.bf16 %v3686, %v3686
      %3696 = vrot.lane.b32.xlu0 %v3690, 64
      %v3697 = vpop.permute.xlu0 %3696
      %3698 = vrot.lane.b32.xlu0 %v3691, 64
      %v3699 = vpop.permute.xlu0 %3698
      %3702 = vrot.lane.b32.xlu0 %v3692, 64
      %v3703 = vpop.permute.xlu0 %3702
      %3704 = vrot.lane.b32.xlu0 %v3693, 64
      %v3705 = vpop.permute.xlu0 %3704
      %v3707 = vsel %vm3003, %v3697, 0
      %v3710 = vsel %vm3003, %v3699, 0
      %v3713 = vsel %vm3003, %v3703, 0
      %v3716 = vsel %vm3003, %v3705, 0
      %3718 = vmatpush.bf16.xpose.msra.mxu0 0
      %3719 = vmatpush.bf16.xpose.msra.mxu0 0
      %3720 = vmatpush.bf16.xpose.msra.mxu0 0
      %3721 = vmatpush.bf16.xpose.msra.mxu0 0
      %3722 = vmatpush.bf16.xpose.msra.mxu0 0
      %3723 = vmatpush.bf16.xpose.msra.mxu0 0
      %3724 = vmatpush.bf16.xpose.msra.mxu0 %v3716
      %3725 = vmatpush.bf16.xpose.msra.mxu0 %v3713
      %3726 = vmatmul.bf16.gmra.mxu0 %v3707
      %v3727 = vpop.f32.mrf.mxu0
      %v3728 = vadd.f32 0.0, %v3727
      %v3729 = vpop.f32.mrf.mxu0
      %v3730 = vadd.f32 0.0, %v3729
      %3731 = vmatmul.bf16.gmra.mxu0 %v3710
      %v3732 = vpop.f32.mrf.mxu0
      %v3733 = vadd.f32 0.0, %v3732
      %v3734 = vpop.f32.mrf.mxu0
      %3735 = vdwg.mxu0
      %v3736 = vsel %vm2986, %v3728, -1e+30
      %v3737 = vsel %vm2986, %v3730, -1e+30
      %v3738 = vsel %vm2986, %v3733, -1e+30
      %v3739 = vsel %vm3037, %v3736, -inf
      %3740 = vmax.xlane.f32.xlu0 %v3739
      %v3741 = vpop.xlane.xlu0 %3740
      %v3742 = vsel %vm3037, %v3737, -inf
      %3743 = vmax.xlane.f32.xlu0 %v3742
      %v3744 = vpop.xlane.xlu0 %3743
      %v3745 = vsel %vm3037, %v3738, -inf
      %3746 = vmax.xlane.f32.xlu0 %v3745
      %v3747 = vpop.xlane.xlu0 %3746
      %v3748 = vsub.f32 %v3736, %v3741
      %v3749 = vsub.f32 %v3737, %v3744
      %v3750 = vsub.f32 %v3738, %v3747
      %v3751 = vmul.f32 %v3748, 1.442695
      %v3752 = vpow.pop %v3751
      %v3753 = vmul.f32 %v3749, 1.442695
      %v3754 = vpow.pop %v3753
      %v3755 = vmul.f32 %v3750, 1.442695
      %v3756 = vpow.pop %v3755
      %v3757 = vsel %vm3037, %v3752, 0.0
      %3758 = vadd.xlane.f32.xlu0 %v3757
      %v3759 = vpop.xlane.xlu0 %3758
      %v3760 = vsel %vm3037, %v3754, 0.0
      %3761 = vadd.xlane.f32.xlu0 %v3760
      %v3762 = vpop.xlane.xlu0 %3761
      %v3763 = vsel %vm3037, %v3756, 0.0
      %3764 = vadd.xlane.f32.xlu0 %v3763
      %v3765 = vpop.xlane.xlu0 %3764
      %v3766 = vrcp.pop %v3759
      %v3767 = vrcp.pop %v3762
      %v3768 = vrcp.pop %v3765
      %v3769 = vmul.f32 %v3752, %v3766
      %v3770 = vmul.f32 %v3754, %v3767
      %v3771 = vmul.f32 %v3756, %v3768
      %v3772 = vpack.c.bf16 %v3770, %v3769
      %v3773 = vpack.c.bf16 %v3771, %v3771
      %v3774 = vpack.c.bf16 %v3688, %v3687
      %v3775 = vpack.c.bf16 %v3689, %v3689
      %3778 = vrot.lane.b32.xlu0 %v3774, 64
      %v3779 = vpop.permute.xlu0 %3778
      %3780 = vrot.lane.b32.xlu0 %v3775, 64
      %v3781 = vpop.permute.xlu0 %3780
      %v3784 = vsel %vm3037, %v3772, 0
      %v3787 = vsel %vm3037, %v3773, 0
      %v3790 = vsel %vm3081, %v3781, 0
      %3792 = vmatpush.bf16.msra.mxu0 0
      %3793 = vmatpush.bf16.msra.mxu0 0
      %3794 = vmatpush.bf16.msra.mxu0 0
      %3795 = vmatpush.bf16.msra.mxu0 0
      %3796 = vmatpush.bf16.msra.mxu0 0
      %3797 = vmatpush.bf16.msra.mxu0 0
      %3798 = vmatpush.bf16.msra.mxu0 %v3790
      %3799 = vmatpush.bf16.msra.mxu0 %v3779
      %3800 = vmatmul.bf16.gmra.mxu0 %v3784
      %v3801 = vpop.f32.mrf.mxu0
      %v3802 = vadd.f32 0.0, %v3801
      %v3803 = vpop.f32.mrf.mxu0
      %v3804 = vadd.f32 0.0, %v3803
      %3805 = vmatmul.bf16.gmra.mxu0 %v3787
      %v3806 = vpop.f32.mrf.mxu0
      %v3807 = vadd.f32 0.0, %v3806
      %v3808 = vpop.f32.mrf.mxu0
      %3809 = vdwg.mxu0
      %v3810 = vld [vmem:[#allocation2] sm:$0xff]
      %v3811 = vld [vmem:[#allocation2 + $0x8] sm:$0xff]
      %v3812 = vld [vmem:[#allocation2 + $0x10] sm:$0xff]
      %v3813 = vld [vmem:[#allocation2 + $0x18] sm:$0xff]
      %v3814 = vld [vmem:[#allocation2 + $0x20] sm:$0xff]
      %v3815 = vld [vmem:[#allocation2 + $0x28] sm:$0xff]
      %v3816 = vpack.c.bf16 %v3804, %v3802
      %v3817 = vpack.c.bf16 %v3807, %v3807
      %v3818 = vld [vmem:[%s822 + $0xc0] sm:$0xff]
      %v3819 = vld [vmem:[%s822 + $0xc8] sm:$0xff]
      %v3820 = vld [vmem:[%s822 + $0xd0] sm:$0xff]
      %v3821 = vld [vmem:[%s822 + $0xd8] sm:$0xff]
      %v3822 = vld [vmem:[%s822 + $0xe0] sm:$0xff]
      %v3823 = vld [vmem:[%s822 + $0xe8] sm:$0xff]
      %v3824 = vld [vmem:[%s822 + $0xf0] sm:$0xff]
      %v3825 = vld [vmem:[%s822 + $0xf8] sm:$0xff]
      %v3834 = vunpack.c.l.b16 %v3818
      %v3835 = vunpack.c.h.b16 %v3818
      %v3836 = vunpack.c.l.b16 %v3819
      %v3837 = vunpack.c.h.b16 %v3819
      %v3838 = vunpack.c.l.b16 %v3820
      %v3839 = vunpack.c.h.b16 %v3820
      %v3840 = vunpack.c.l.b16 %v3821
      %v3841 = vunpack.c.h.b16 %v3821
      %v3842 = vunpack.c.l.b16 %v3822
      %v3843 = vunpack.c.h.b16 %v3822
      %v3844 = vunpack.c.l.b16 %v3823
      %v3845 = vunpack.c.h.b16 %v3823
      %v3846 = vunpack.c.l.b16 %v3824
      %v3847 = vunpack.c.h.b16 %v3824
      %v3848 = vunpack.c.l.b16 %v3825
      %v3849 = vunpack.c.h.b16 %v3825
      %v3850 = vpack.c.b16 %v3836, %v3834
      %v3851 = vpack.c.b16 %v3837, %v3835
      %v3852 = vpack.c.b16 %v3840, %v3838
      %v3853 = vpack.c.b16 %v3841, %v3839
      %v3854 = vpack.c.b16 %v3844, %v3842
      %v3855 = vpack.c.b16 %v3845, %v3843
      %v3856 = vpack.c.b16 %v3848, %v3846
      %v3857 = vpack.c.b16 %v3849, %v3847
      %v3867 = vsel %vm3003, %v3816, 0
      %v3870 = vsel %vm3003, %v3817, 0
      %3872 = vmatpush.bf16.msra.mxu0 0
      %3873 = vmatpush.bf16.msra.mxu0 0
      %3874 = vmatpush.bf16.msra.mxu0 0
      %3875 = vmatpush.bf16.msra.mxu0 0
      %3876 = vmatpush.bf16.msra.mxu0 %v3856
      %3877 = vmatpush.bf16.msra.mxu0 %v3854
      %3878 = vmatpush.bf16.msra.mxu0 %v3852
      %3879 = vmatpush.bf16.msra.mxu0 %v3850
      %3880 = vmatmul.bf16.gmra.mxu0 %v3867
      %v3881 = vpop.f32.mrf.mxu0
      %v3882 = vadd.f32 0.0, %v3881
      %v3883 = vpop.f32.mrf.mxu0
      %v3884 = vadd.f32 0.0, %v3883
      %3885 = vmatmul.bf16.gmra.mxu0 %v3870
      %v3886 = vpop.f32.mrf.mxu0
      %v3887 = vadd.f32 0.0, %v3886
      %v3888 = vpop.f32.mrf.mxu0
      %3889 = vdwg.mxu0
      %3890 = vmatpush.bf16.msra.mxu0 0
      %3891 = vmatpush.bf16.msra.mxu0 0
      %3892 = vmatpush.bf16.msra.mxu0 0
      %3893 = vmatpush.bf16.msra.mxu0 0
      %3894 = vmatpush.bf16.msra.mxu0 %v3857
      %3895 = vmatpush.bf16.msra.mxu0 %v3855
      %3896 = vmatpush.bf16.msra.mxu0 %v3853
      %3897 = vmatpush.bf16.msra.mxu0 %v3851
      %3898 = vmatmul.bf16.gmra.mxu0 %v3867
      %v3899 = vpop.f32.mrf.mxu0
      %v3900 = vadd.f32 0.0, %v3899
      %v3901 = vpop.f32.mrf.mxu0
      %v3902 = vadd.f32 0.0, %v3901
      %3903 = vmatmul.bf16.gmra.mxu0 %v3870
      %v3904 = vpop.f32.mrf.mxu0
      %v3905 = vadd.f32 0.0, %v3904
      %v3906 = vpop.f32.mrf.mxu0
      %3907 = vdwg.mxu0
      %v3908 = vadd.f32 %v3810, %v3882
      %v3909 = vadd.f32 %v3811, %v3900
      %v3910 = vadd.f32 %v3812, %v3884
      %v3911 = vadd.f32 %v3813, %v3902
      %v3912 = vadd.f32 %v3814, %v3887
      %v3913 = vadd.f32 %v3815, %v3905
      %3914 = vst [vmem:[#allocation2] sm:$0xff] %v3908
      %3915 = vst [vmem:[#allocation2 + $0x8] sm:$0xff] %v3909
      %3916 = vst [vmem:[#allocation2 + $0x10] sm:$0xff] %v3910
      %3917 = vst [vmem:[#allocation2 + $0x18] sm:$0xff] %v3911
      %3918 = vst [vmem:[#allocation2 + $0x20] sm:$0xff] %v3912
      %3919 = vst [vmem:[#allocation2 + $0x28] sm:$0xff] %v3913
      %v3920 = vld [vmem:[#allocation3 + $0x90] sm:$0xff]
      %v3921 = vld [vmem:[#allocation3 + $0xc0] sm:$0xff]
      %v3922 = vld [vmem:[#allocation3 + $0xf0] sm:$0xff]
      %v3923 = vmul.f32 %v3920, 0.125
      %v3924 = vmul.f32 %v3921, 0.125
      %v3925 = vmul.f32 %v3922, 0.125
      %v3926 = vld [vmem:[#allocation3 + $0xa0] sm:$0xff]
      %v3927 = vld [vmem:[#allocation3 + $0xd0] sm:$0xff]
      %v3928 = vld [vmem:[#allocation3 + $0x100] sm:$0xff]
      %v3929 = vld [vmem:[#allocation3 + $0xb0] sm:$0xff]
      %v3930 = vld [vmem:[#allocation3 + $0xe0] sm:$0xff]
      %v3931 = vld [vmem:[#allocation3 + $0x110] sm:$0xff]
      %v3932 = vpack.c.bf16 %v3924, %v3923
      %v3933 = vpack.c.bf16 %v3925, %v3925
      %v3934 = vpack.c.bf16 %v3927, %v3926
      %v3935 = vpack.c.bf16 %v3928, %v3928
      %v3937 = vsel %vm3003, %v3932, 0
      %v3940 = vsel %vm3003, %v3933, 0
      %v3943 = vsel %vm3003, %v3934, 0
      %v3946 = vsel %vm3003, %v3935, 0
      %3948 = vmatpush.bf16.xpose.msra.mxu0 0
      %3949 = vmatpush.bf16.xpose.msra.mxu0 0
      %3950 = vmatpush.bf16.xpose.msra.mxu0 0
      %3951 = vmatpush.bf16.xpose.msra.mxu0 0
      %3952 = vmatpush.bf16.xpose.msra.mxu0 0
      %3953 = vmatpush.bf16.xpose.msra.mxu0 0
      %3954 = vmatpush.bf16.xpose.msra.mxu0 %v3946
      %3955 = vmatpush.bf16.xpose.msra.mxu0 %v3943
      %3956 = vmatmul.bf16.gmra.mxu0 %v3937
      %v3957 = vpop.f32.mrf.mxu0
      %v3958 = vadd.f32 0.0, %v3957
      %v3959 = vpop.f32.mrf.mxu0
      %v3960 = vadd.f32 0.0, %v3959
      %3961 = vmatmul.bf16.gmra.mxu0 %v3940
      %v3962 = vpop.f32.mrf.mxu0
      %v3963 = vadd.f32 0.0, %v3962
      %v3964 = vpop.f32.mrf.mxu0
      %3965 = vdwg.mxu0
      %v3966 = vsel %vm2986, %v3958, -1e+30
      %v3967 = vsel %vm2986, %v3960, -1e+30
      %v3968 = vsel %vm2986, %v3963, -1e+30
      %v3969 = vsel %vm3037, %v3966, -inf
      %3970 = vmax.xlane.f32.xlu0 %v3969
      %v3971 = vpop.xlane.xlu0 %3970
      %v3972 = vsel %vm3037, %v3967, -inf
      %3973 = vmax.xlane.f32.xlu0 %v3972
      %v3974 = vpop.xlane.xlu0 %3973
      %v3975 = vsel %vm3037, %v3968, -inf
      %3976 = vmax.xlane.f32.xlu0 %v3975
      %v3977 = vpop.xlane.xlu0 %3976
      %v3978 = vsub.f32 %v3966, %v3971
      %v3979 = vsub.f32 %v3967, %v3974
      %v3980 = vsub.f32 %v3968, %v3977
      %v3981 = vmul.f32 %v3978, 1.442695
      %v3982 = vpow.pop %v3981
      %v3983 = vmul.f32 %v3979, 1.442695
      %v3984 = vpow.pop %v3983
      %v3985 = vmul.f32 %v3980, 1.442695
      %v3986 = vpow.pop %v3985
      %v3987 = vsel %vm3037, %v3982, 0.0
      %3988 = vadd.xlane.f32.xlu0 %v3987
      %v3989 = vpop.xlane.xlu0 %3988
      %v3990 = vsel %vm3037, %v3984, 0.0
      %3991 = vadd.xlane.f32.xlu0 %v3990
      %v3992 = vpop.xlane.xlu0 %3991
      %v3993 = vsel %vm3037, %v3986, 0.0
      %3994 = vadd.xlane.f32.xlu0 %v3993
      %v3995 = vpop.xlane.xlu0 %3994
      %v3996 = vrcp.pop %v3989
      %v3997 = vrcp.pop %v3992
      %v3998 = vrcp.pop %v3995
      %v3999 = vmul.f32 %v3982, %v3996
      %v4000 = vmul.f32 %v3984, %v3997
      %v4001 = vmul.f32 %v3986, %v3998
      %v4002 = vpack.c.bf16 %v4000, %v3999
      %v4003 = vpack.c.bf16 %v4001, %v4001
      %v4004 = vpack.c.bf16 %v3930, %v3929
      %v4005 = vpack.c.bf16 %v3931, %v3931
      %v4007 = vsel %vm3037, %v4002, 0
      %v4010 = vsel %vm3037, %v4003, 0
      %v4013 = vsel %vm3081, %v4005, 0
      %4015 = vmatpush.bf16.msra.mxu0 0
      %4016 = vmatpush.bf16.msra.mxu0 0
      %4017 = vmatpush.bf16.msra.mxu0 0
      %4018 = vmatpush.bf16.msra.mxu0 0
      %4019 = vmatpush.bf16.msra.mxu0 0
      %4020 = vmatpush.bf16.msra.mxu0 0
      %4021 = vmatpush.bf16.msra.mxu0 %v4013
      %4022 = vmatpush.bf16.msra.mxu0 %v4004
      %4023 = vmatmul.bf16.gmra.mxu0 %v4007
      %v4024 = vpop.f32.mrf.mxu0
      %v4025 = vadd.f32 0.0, %v4024
      %v4026 = vpop.f32.mrf.mxu0
      %v4027 = vadd.f32 0.0, %v4026
      %4028 = vmatmul.bf16.gmra.mxu0 %v4010
      %v4029 = vpop.f32.mrf.mxu0
      %v4030 = vadd.f32 0.0, %v4029
      %v4031 = vpop.f32.mrf.mxu0
      %4032 = vdwg.mxu0
      %v4033 = vld [vmem:[#allocation2 + $0x30] sm:$0xff]
      %v4034 = vld [vmem:[#allocation2 + $0x38] sm:$0xff]
      %v4035 = vld [vmem:[#allocation2 + $0x40] sm:$0xff]
      %v4036 = vld [vmem:[#allocation2 + $0x48] sm:$0xff]
      %v4037 = vld [vmem:[#allocation2 + $0x50] sm:$0xff]
      %v4038 = vld [vmem:[#allocation2 + $0x58] sm:$0xff]
      %v4039 = vpack.c.bf16 %v4027, %v4025
      %v4040 = vpack.c.bf16 %v4030, %v4030
      %v4041 = vld [vmem:[%s822] sm:$0xff]
      %v4042 = vld [vmem:[%s822 + $0x8] sm:$0xff]
      %v4043 = vld [vmem:[%s822 + $0x10] sm:$0xff]
      %v4044 = vld [vmem:[%s822 + $0x18] sm:$0xff]
      %v4045 = vld [vmem:[%s822 + $0x20] sm:$0xff]
      %v4046 = vld [vmem:[%s822 + $0x28] sm:$0xff]
      %v4047 = vld [vmem:[%s822 + $0x30] sm:$0xff]
      %v4048 = vld [vmem:[%s822 + $0x38] sm:$0xff]
      %v4057 = vunpack.c.l.b16 %v4041
      %v4058 = vunpack.c.h.b16 %v4041
      %v4059 = vunpack.c.l.b16 %v4042
      %v4060 = vunpack.c.h.b16 %v4042
      %v4061 = vunpack.c.l.b16 %v4043
      %v4062 = vunpack.c.h.b16 %v4043
      %v4063 = vunpack.c.l.b16 %v4044
      %v4064 = vunpack.c.h.b16 %v4044
      %v4065 = vunpack.c.l.b16 %v4045
      %v4066 = vunpack.c.h.b16 %v4045
      %v4067 = vunpack.c.l.b16 %v4046
      %v4068 = vunpack.c.h.b16 %v4046
      %v4069 = vunpack.c.l.b16 %v4047
      %v4070 = vunpack.c.h.b16 %v4047
      %v4071 = vunpack.c.l.b16 %v4048
      %v4072 = vunpack.c.h.b16 %v4048
      %v4073 = vpack.c.b16 %v4059, %v4057
      %v4074 = vpack.c.b16 %v4060, %v4058
      %v4075 = vpack.c.b16 %v4063, %v4061
      %v4076 = vpack.c.b16 %v4064, %v4062
      %v4077 = vpack.c.b16 %v4067, %v4065
      %v4078 = vpack.c.b16 %v4068, %v4066
      %v4079 = vpack.c.b16 %v4071, %v4069
      %v4080 = vpack.c.b16 %v4072, %v4070
      %v4090 = vsel %vm3003, %v4039, 0
      %v4093 = vsel %vm3003, %v4040, 0
      %4095 = vmatpush.bf16.msra.mxu0 0
      %4096 = vmatpush.bf16.msra.mxu0 0
      %4097 = vmatpush.bf16.msra.mxu0 0
      %4098 = vmatpush.bf16.msra.mxu0 0
      %4099 = vmatpush.bf16.msra.mxu0 %v4079
      %4100 = vmatpush.bf16.msra.mxu0 %v4077
      %4101 = vmatpush.bf16.msra.mxu0 %v4075
      %4102 = vmatpush.bf16.msra.mxu0 %v4073
      %4103 = vmatmul.bf16.gmra.mxu0 %v4090
      %v4104 = vpop.f32.mrf.mxu0
      %v4105 = vadd.f32 0.0, %v4104
      %v4106 = vpop.f32.mrf.mxu0
      %v4107 = vadd.f32 0.0, %v4106
      %4108 = vmatmul.bf16.gmra.mxu0 %v4093
      %v4109 = vpop.f32.mrf.mxu0
      %v4110 = vadd.f32 0.0, %v4109
      %v4111 = vpop.f32.mrf.mxu0
      %4112 = vdwg.mxu0
      %4113 = vmatpush.bf16.msra.mxu0 0
      %4114 = vmatpush.bf16.msra.mxu0 0
      %4115 = vmatpush.bf16.msra.mxu0 0
      %4116 = vmatpush.bf16.msra.mxu0 0
      %4117 = vmatpush.bf16.msra.mxu0 %v4080
      %4118 = vmatpush.bf16.msra.mxu0 %v4078
      %4119 = vmatpush.bf16.msra.mxu0 %v4076
      %4120 = vmatpush.bf16.msra.mxu0 %v4074
      %4121 = vmatmul.bf16.gmra.mxu0 %v4090
      %v4122 = vpop.f32.mrf.mxu0
      %v4123 = vadd.f32 0.0, %v4122
      %v4124 = vpop.f32.mrf.mxu0
      %v4125 = vadd.f32 0.0, %v4124
      %4126 = vmatmul.bf16.gmra.mxu0 %v4093
      %v4127 = vpop.f32.mrf.mxu0
      %v4128 = vadd.f32 0.0, %v4127
      %v4129 = vpop.f32.mrf.mxu0
      %4130 = vdwg.mxu0
      %v4131 = vadd.f32 %v4033, %v4105
      %v4132 = vadd.f32 %v4034, %v4123
      %v4133 = vadd.f32 %v4035, %v4107
      %v4134 = vadd.f32 %v4036, %v4125
      %v4135 = vadd.f32 %v4037, %v4110
      %v4136 = vadd.f32 %v4038, %v4128
      %4137 = vst [vmem:[#allocation2 + $0x30] sm:$0xff] %v4131
      %4138 = vst [vmem:[#allocation2 + $0x38] sm:$0xff] %v4132
      %4139 = vst [vmem:[#allocation2 + $0x40] sm:$0xff] %v4133
      %4140 = vst [vmem:[#allocation2 + $0x48] sm:$0xff] %v4134
      %4141 = vst [vmem:[#allocation2 + $0x50] sm:$0xff] %v4135
      %4142 = vst [vmem:[#allocation2 + $0x58] sm:$0xff] %v4136
      %v4143 = vld [vmem:[#allocation3 + $0x90] sm:$0xff]
      %v4144 = vld [vmem:[#allocation3 + $0xc0] sm:$0xff]
      %v4145 = vld [vmem:[#allocation3 + $0xf0] sm:$0xff]
      %v4146 = vmul.f32 %v4143, 0.125
      %v4147 = vmul.f32 %v4144, 0.125
      %v4148 = vmul.f32 %v4145, 0.125
      %v4149 = vld [vmem:[#allocation3 + $0xa0] sm:$0xff]
      %v4150 = vld [vmem:[#allocation3 + $0xd0] sm:$0xff]
      %v4151 = vld [vmem:[#allocation3 + $0x100] sm:$0xff]
      %v4152 = vld [vmem:[#allocation3 + $0xb0] sm:$0xff]
      %v4153 = vld [vmem:[#allocation3 + $0xe0] sm:$0xff]
      %v4154 = vld [vmem:[#allocation3 + $0x110] sm:$0xff]
      %v4155 = vpack.c.bf16 %v4147, %v4146
      %v4156 = vpack.c.bf16 %v4148, %v4148
      %v4157 = vpack.c.bf16 %v4150, %v4149
      %v4158 = vpack.c.bf16 %v4151, %v4151
      %4161 = vrot.lane.b32.xlu0 %v4155, 64
      %v4162 = vpop.permute.xlu0 %4161
      %4163 = vrot.lane.b32.xlu0 %v4156, 64
      %v4164 = vpop.permute.xlu0 %4163
      %4167 = vrot.lane.b32.xlu0 %v4157, 64
      %v4168 = vpop.permute.xlu0 %4167
      %4169 = vrot.lane.b32.xlu0 %v4158, 64
      %v4170 = vpop.permute.xlu0 %4169
      %v4172 = vsel %vm3003, %v4162, 0
      %v4175 = vsel %vm3003, %v4164, 0
      %v4178 = vsel %vm3003, %v4168, 0
      %v4181 = vsel %vm3003, %v4170, 0
      %4183 = vmatpush.bf16.xpose.msra.mxu0 0
      %4184 = vmatpush.bf16.xpose.msra.mxu0 0
      %4185 = vmatpush.bf16.xpose.msra.mxu0 0
      %4186 = vmatpush.bf16.xpose.msra.mxu0 0
      %4187 = vmatpush.bf16.xpose.msra.mxu0 0
      %4188 = vmatpush.bf16.xpose.msra.mxu0 0
      %4189 = vmatpush.bf16.xpose.msra.mxu0 %v4181
      %4190 = vmatpush.bf16.xpose.msra.mxu0 %v4178
      %4191 = vmatmul.bf16.gmra.mxu0 %v4172
      %v4192 = vpop.f32.mrf.mxu0
      %v4193 = vadd.f32 0.0, %v4192
      %v4194 = vpop.f32.mrf.mxu0
      %v4195 = vadd.f32 0.0, %v4194
      %4196 = vmatmul.bf16.gmra.mxu0 %v4175
      %v4197 = vpop.f32.mrf.mxu0
      %v4198 = vadd.f32 0.0, %v4197
      %v4199 = vpop.f32.mrf.mxu0
      %4200 = vdwg.mxu0
      %v4201 = vsel %vm2986, %v4193, -1e+30
      %v4202 = vsel %vm2986, %v4195, -1e+30
      %v4203 = vsel %vm2986, %v4198, -1e+30
      %v4204 = vsel %vm3037, %v4201, -inf
      %4205 = vmax.xlane.f32.xlu0 %v4204
      %v4206 = vpop.xlane.xlu0 %4205
      %v4207 = vsel %vm3037, %v4202, -inf
      %4208 = vmax.xlane.f32.xlu0 %v4207
      %v4209 = vpop.xlane.xlu0 %4208
      %v4210 = vsel %vm3037, %v4203, -inf
      %4211 = vmax.xlane.f32.xlu0 %v4210
      %v4212 = vpop.xlane.xlu0 %4211
      %v4213 = vsub.f32 %v4201, %v4206
      %v4214 = vsub.f32 %v4202, %v4209
      %v4215 = vsub.f32 %v4203, %v4212
      %v4216 = vmul.f32 %v4213, 1.442695
      %v4217 = vpow.pop %v4216
      %v4218 = vmul.f32 %v4214, 1.442695
      %v4219 = vpow.pop %v4218
      %v4220 = vmul.f32 %v4215, 1.442695
      %v4221 = vpow.pop %v4220
      %v4222 = vsel %vm3037, %v4217, 0.0
      %4223 = vadd.xlane.f32.xlu0 %v4222
      %v4224 = vpop.xlane.xlu0 %4223
      %v4225 = vsel %vm3037, %v4219, 0.0
      %4226 = vadd.xlane.f32.xlu0 %v4225
      %v4227 = vpop.xlane.xlu0 %4226
      %v4228 = vsel %vm3037, %v4221, 0.0
      %4229 = vadd.xlane.f32.xlu0 %v4228
      %v4230 = vpop.xlane.xlu0 %4229
      %v4231 = vrcp.pop %v4224
      %v4232 = vrcp.pop %v4227
      %v4233 = vrcp.pop %v4230
      %v4234 = vmul.f32 %v4217, %v4231
      %v4235 = vmul.f32 %v4219, %v4232
      %v4236 = vmul.f32 %v4221, %v4233
      %v4237 = vpack.c.bf16 %v4235, %v4234
      %v4238 = vpack.c.bf16 %v4236, %v4236
      %v4239 = vpack.c.bf16 %v4153, %v4152
      %v4240 = vpack.c.bf16 %v4154, %v4154
      %4243 = vrot.lane.b32.xlu0 %v4239, 64
      %v4244 = vpop.permute.xlu0 %4243
      %4245 = vrot.lane.b32.xlu0 %v4240, 64
      %v4246 = vpop.permute.xlu0 %4245
      %v4249 = vsel %vm3037, %v4237, 0
      %v4252 = vsel %vm3037, %v4238, 0
      %v4255 = vsel %vm3081, %v4246, 0
      %4257 = vmatpush.bf16.msra.mxu0 0
      %4258 = vmatpush.bf16.msra.mxu0 0
      %4259 = vmatpush.bf16.msra.mxu0 0
      %4260 = vmatpush.bf16.msra.mxu0 0
      %4261 = vmatpush.bf16.msra.mxu0 0
      %4262 = vmatpush.bf16.msra.mxu0 0
      %4263 = vmatpush.bf16.msra.mxu0 %v4255
      %4264 = vmatpush.bf16.msra.mxu0 %v4244
      %4265 = vmatmul.bf16.gmra.mxu0 %v4249
      %v4266 = vpop.f32.mrf.mxu0
      %v4267 = vadd.f32 0.0, %v4266
      %v4268 = vpop.f32.mrf.mxu0
      %v4269 = vadd.f32 0.0, %v4268
      %4270 = vmatmul.bf16.gmra.mxu0 %v4252
      %v4271 = vpop.f32.mrf.mxu0
      %v4272 = vadd.f32 0.0, %v4271
      %v4273 = vpop.f32.mrf.mxu0
      %4274 = vdwg.mxu0
      %v4275 = vld [vmem:[#allocation2 + $0x30] sm:$0xff]
      %v4276 = vld [vmem:[#allocation2 + $0x38] sm:$0xff]
      %v4277 = vld [vmem:[#allocation2 + $0x40] sm:$0xff]
      %v4278 = vld [vmem:[#allocation2 + $0x48] sm:$0xff]
      %v4279 = vld [vmem:[#allocation2 + $0x50] sm:$0xff]
      %v4280 = vld [vmem:[#allocation2 + $0x58] sm:$0xff]
      %v4281 = vpack.c.bf16 %v4269, %v4267
      %v4282 = vpack.c.bf16 %v4272, %v4272
      %v4283 = vld [vmem:[%s822 + $0x40] sm:$0xff]
      %v4284 = vld [vmem:[%s822 + $0x48] sm:$0xff]
      %v4285 = vld [vmem:[%s822 + $0x50] sm:$0xff]
      %v4286 = vld [vmem:[%s822 + $0x58] sm:$0xff]
      %v4287 = vld [vmem:[%s822 + $0x60] sm:$0xff]
      %v4288 = vld [vmem:[%s822 + $0x68] sm:$0xff]
      %v4289 = vld [vmem:[%s822 + $0x70] sm:$0xff]
      %v4290 = vld [vmem:[%s822 + $0x78] sm:$0xff]
      %v4299 = vunpack.c.l.b16 %v4283
      %v4300 = vunpack.c.h.b16 %v4283
      %v4301 = vunpack.c.l.b16 %v4284
      %v4302 = vunpack.c.h.b16 %v4284
      %v4303 = vunpack.c.l.b16 %v4285
      %v4304 = vunpack.c.h.b16 %v4285
      %v4305 = vunpack.c.l.b16 %v4286
      %v4306 = vunpack.c.h.b16 %v4286
      %v4307 = vunpack.c.l.b16 %v4287
      %v4308 = vunpack.c.h.b16 %v4287
      %v4309 = vunpack.c.l.b16 %v4288
      %v4310 = vunpack.c.h.b16 %v4288
      %v4311 = vunpack.c.l.b16 %v4289
      %v4312 = vunpack.c.h.b16 %v4289
      %v4313 = vunpack.c.l.b16 %v4290
      %v4314 = vunpack.c.h.b16 %v4290
      %v4315 = vpack.c.b16 %v4301, %v4299
      %v4316 = vpack.c.b16 %v4302, %v4300
      %v4317 = vpack.c.b16 %v4305, %v4303
      %v4318 = vpack.c.b16 %v4306, %v4304
      %v4319 = vpack.c.b16 %v4309, %v4307
      %v4320 = vpack.c.b16 %v4310, %v4308
      %v4321 = vpack.c.b16 %v4313, %v4311
      %v4322 = vpack.c.b16 %v4314, %v4312
      %v4332 = vsel %vm3003, %v4281, 0
      %v4335 = vsel %vm3003, %v4282, 0
      %4337 = vmatpush.bf16.msra.mxu0 0
      %4338 = vmatpush.bf16.msra.mxu0 0
      %4339 = vmatpush.bf16.msra.mxu0 0
      %4340 = vmatpush.bf16.msra.mxu0 0
      %4341 = vmatpush.bf16.msra.mxu0 %v4321
      %4342 = vmatpush.bf16.msra.mxu0 %v4319
      %4343 = vmatpush.bf16.msra.mxu0 %v4317
      %4344 = vmatpush.bf16.msra.mxu0 %v4315
      %4345 = vmatmul.bf16.gmra.mxu0 %v4332
      %v4346 = vpop.f32.mrf.mxu0
      %v4347 = vadd.f32 0.0, %v4346
      %v4348 = vpop.f32.mrf.mxu0
      %v4349 = vadd.f32 0.0, %v4348
      %4350 = vmatmul.bf16.gmra.mxu0 %v4335
      %v4351 = vpop.f32.mrf.mxu0
      %v4352 = vadd.f32 0.0, %v4351
      %v4353 = vpop.f32.mrf.mxu0
      %4354 = vdwg.mxu0
      %4355 = vmatpush.bf16.msra.mxu0 0
      %4356 = vmatpush.bf16.msra.mxu0 0
      %4357 = vmatpush.bf16.msra.mxu0 0
      %4358 = vmatpush.bf16.msra.mxu0 0
      %4359 = vmatpush.bf16.msra.mxu0 %v4322
      %4360 = vmatpush.bf16.msra.mxu0 %v4320
      %4361 = vmatpush.bf16.msra.mxu0 %v4318
      %4362 = vmatpush.bf16.msra.mxu0 %v4316
      %4363 = vmatmul.bf16.gmra.mxu0 %v4332
      %v4364 = vpop.f32.mrf.mxu0
      %v4365 = vadd.f32 0.0, %v4364
      %v4366 = vpop.f32.mrf.mxu0
      %v4367 = vadd.f32 0.0, %v4366
      %4368 = vmatmul.bf16.gmra.mxu0 %v4335
      %v4369 = vpop.f32.mrf.mxu0
      %v4370 = vadd.f32 0.0, %v4369
      %v4371 = vpop.f32.mrf.mxu0
      %4372 = vdwg.mxu0
      %v4373 = vadd.f32 %v4275, %v4347
      %v4374 = vadd.f32 %v4276, %v4365
      %v4375 = vadd.f32 %v4277, %v4349
      %v4376 = vadd.f32 %v4278, %v4367
      %v4377 = vadd.f32 %v4279, %v4352
      %v4378 = vadd.f32 %v4280, %v4370
      %4379 = vst [vmem:[#allocation2 + $0x30] sm:$0xff] %v4373
      %4380 = vst [vmem:[#allocation2 + $0x38] sm:$0xff] %v4374
      %4381 = vst [vmem:[#allocation2 + $0x40] sm:$0xff] %v4375
      %4382 = vst [vmem:[#allocation2 + $0x48] sm:$0xff] %v4376
      %4383 = vst [vmem:[#allocation2 + $0x50] sm:$0xff] %v4377
      %4384 = vst [vmem:[#allocation2 + $0x58] sm:$0xff] %v4378
      %v4385 = vld [vmem:[#allocation3 + $0x98] sm:$0xff]
      %v4386 = vld [vmem:[#allocation3 + $0xc8] sm:$0xff]
      %v4387 = vld [vmem:[#allocation3 + $0xf8] sm:$0xff]
      %v4388 = vmul.f32 %v4385, 0.125
      %v4389 = vmul.f32 %v4386, 0.125
      %v4390 = vmul.f32 %v4387, 0.125
      %v4391 = vld [vmem:[#allocation3 + $0xa8] sm:$0xff]
      %v4392 = vld [vmem:[#allocation3 + $0xd8] sm:$0xff]
      %v4393 = vld [vmem:[#allocation3 + $0x108] sm:$0xff]
      %v4394 = vld [vmem:[#allocation3 + $0xb8] sm:$0xff]
      %v4395 = vld [vmem:[#allocation3 + $0xe8] sm:$0xff]
      %v4396 = vld [vmem:[#allocation3 + $0x118] sm:$0xff]
      %v4397 = vpack.c.bf16 %v4389, %v4388
      %v4398 = vpack.c.bf16 %v4390, %v4390
      %v4399 = vpack.c.bf16 %v4392, %v4391
      %v4400 = vpack.c.bf16 %v4393, %v4393
      %v4402 = vsel %vm3003, %v4397, 0
      %v4405 = vsel %vm3003, %v4398, 0
      %v4408 = vsel %vm3003, %v4399, 0
      %v4411 = vsel %vm3003, %v4400, 0
      %4413 = vmatpush.bf16.xpose.msra.mxu0 0
      %4414 = vmatpush.bf16.xpose.msra.mxu0 0
      %4415 = vmatpush.bf16.xpose.msra.mxu0 0
      %4416 = vmatpush.bf16.xpose.msra.mxu0 0
      %4417 = vmatpush.bf16.xpose.msra.mxu0 0
      %4418 = vmatpush.bf16.xpose.msra.mxu0 0
      %4419 = vmatpush.bf16.xpose.msra.mxu0 %v4411
      %4420 = vmatpush.bf16.xpose.msra.mxu0 %v4408
      %4421 = vmatmul.bf16.gmra.mxu0 %v4402
      %v4422 = vpop.f32.mrf.mxu0
      %v4423 = vadd.f32 0.0, %v4422
      %v4424 = vpop.f32.mrf.mxu0
      %v4425 = vadd.f32 0.0, %v4424
      %4426 = vmatmul.bf16.gmra.mxu0 %v4405
      %v4427 = vpop.f32.mrf.mxu0
      %v4428 = vadd.f32 0.0, %v4427
      %v4429 = vpop.f32.mrf.mxu0
      %4430 = vdwg.mxu0
      %v4431 = vsel %vm2986, %v4423, -1e+30
      %v4432 = vsel %vm2986, %v4425, -1e+30
      %v4433 = vsel %vm2986, %v4428, -1e+30
      %v4434 = vsel %vm3037, %v4431, -inf
      %4435 = vmax.xlane.f32.xlu0 %v4434
      %v4436 = vpop.xlane.xlu0 %4435
      %v4437 = vsel %vm3037, %v4432, -inf
      %4438 = vmax.xlane.f32.xlu0 %v4437
      %v4439 = vpop.xlane.xlu0 %4438
      %v4440 = vsel %vm3037, %v4433, -inf
      %4441 = vmax.xlane.f32.xlu0 %v4440
      %v4442 = vpop.xlane.xlu0 %4441
      %v4443 = vsub.f32 %v4431, %v4436
      %v4444 = vsub.f32 %v4432, %v4439
      %v4445 = vsub.f32 %v4433, %v4442
      %v4446 = vmul.f32 %v4443, 1.442695
      %v4447 = vpow.pop %v4446
      %v4448 = vmul.f32 %v4444, 1.442695
      %v4449 = vpow.pop %v4448
      %v4450 = vmul.f32 %v4445, 1.442695
      %v4451 = vpow.pop %v4450
      %v4452 = vsel %vm3037, %v4447, 0.0
      %4453 = vadd.xlane.f32.xlu0 %v4452
      %v4454 = vpop.xlane.xlu0 %4453
      %v4455 = vsel %vm3037, %v4449, 0.0
      %4456 = vadd.xlane.f32.xlu0 %v4455
      %v4457 = vpop.xlane.xlu0 %4456
      %v4458 = vsel %vm3037, %v4451, 0.0
      %4459 = vadd.xlane.f32.xlu0 %v4458
      %v4460 = vpop.xlane.xlu0 %4459
      %v4461 = vrcp.pop %v4454
      %v4462 = vrcp.pop %v4457
      %v4463 = vrcp.pop %v4460
      %v4464 = vmul.f32 %v4447, %v4461
      %v4465 = vmul.f32 %v4449, %v4462
      %v4466 = vmul.f32 %v4451, %v4463
      %v4467 = vpack.c.bf16 %v4465, %v4464
      %v4468 = vpack.c.bf16 %v4466, %v4466
      %v4469 = vpack.c.bf16 %v4395, %v4394
      %v4470 = vpack.c.bf16 %v4396, %v4396
      %v4472 = vsel %vm3037, %v4467, 0
      %v4475 = vsel %vm3037, %v4468, 0
      %v4478 = vsel %vm3081, %v4470, 0
      %4480 = vmatpush.bf16.msra.mxu0 0
      %4481 = vmatpush.bf16.msra.mxu0 0
      %4482 = vmatpush.bf16.msra.mxu0 0
      %4483 = vmatpush.bf16.msra.mxu0 0
      %4484 = vmatpush.bf16.msra.mxu0 0
      %4485 = vmatpush.bf16.msra.mxu0 0
      %4486 = vmatpush.bf16.msra.mxu0 %v4478
      %4487 = vmatpush.bf16.msra.mxu0 %v4469
      %4488 = vmatmul.bf16.gmra.mxu0 %v4472
      %v4489 = vpop.f32.mrf.mxu0
      %v4490 = vadd.f32 0.0, %v4489
      %v4491 = vpop.f32.mrf.mxu0
      %v4492 = vadd.f32 0.0, %v4491
      %4493 = vmatmul.bf16.gmra.mxu0 %v4475
      %v4494 = vpop.f32.mrf.mxu0
      %v4495 = vadd.f32 0.0, %v4494
      %v4496 = vpop.f32.mrf.mxu0
      %4497 = vdwg.mxu0
      %v4498 = vld [vmem:[#allocation2 + $0x30] sm:$0xff]
      %v4499 = vld [vmem:[#allocation2 + $0x38] sm:$0xff]
      %v4500 = vld [vmem:[#allocation2 + $0x40] sm:$0xff]
      %v4501 = vld [vmem:[#allocation2 + $0x48] sm:$0xff]
      %v4502 = vld [vmem:[#allocation2 + $0x50] sm:$0xff]
      %v4503 = vld [vmem:[#allocation2 + $0x58] sm:$0xff]
      %v4504 = vpack.c.bf16 %v4492, %v4490
      %v4505 = vpack.c.bf16 %v4495, %v4495
      %v4506 = vld [vmem:[%s822 + $0x80] sm:$0xff]
      %v4507 = vld [vmem:[%s822 + $0x88] sm:$0xff]
      %v4508 = vld [vmem:[%s822 + $0x90] sm:$0xff]
      %v4509 = vld [vmem:[%s822 + $0x98] sm:$0xff]
      %v4510 = vld [vmem:[%s822 + $0xa0] sm:$0xff]
      %v4511 = vld [vmem:[%s822 + $0xa8] sm:$0xff]
      %v4512 = vld [vmem:[%s822 + $0xb0] sm:$0xff]
      %v4513 = vld [vmem:[%s822 + $0xb8] sm:$0xff]
      %v4522 = vunpack.c.l.b16 %v4506
      %v4523 = vunpack.c.h.b16 %v4506
      %v4524 = vunpack.c.l.b16 %v4507
      %v4525 = vunpack.c.h.b16 %v4507
      %v4526 = vunpack.c.l.b16 %v4508
      %v4527 = vunpack.c.h.b16 %v4508
      %v4528 = vunpack.c.l.b16 %v4509
      %v4529 = vunpack.c.h.b16 %v4509
      %v4530 = vunpack.c.l.b16 %v4510
      %v4531 = vunpack.c.h.b16 %v4510
      %v4532 = vunpack.c.l.b16 %v4511
      %v4533 = vunpack.c.h.b16 %v4511
      %v4534 = vunpack.c.l.b16 %v4512
      %v4535 = vunpack.c.h.b16 %v4512
      %v4536 = vunpack.c.l.b16 %v4513
      %v4537 = vunpack.c.h.b16 %v4513
      %v4538 = vpack.c.b16 %v4524, %v4522
      %v4539 = vpack.c.b16 %v4525, %v4523
      %v4540 = vpack.c.b16 %v4528, %v4526
      %v4541 = vpack.c.b16 %v4529, %v4527
      %v4542 = vpack.c.b16 %v4532, %v4530
      %v4543 = vpack.c.b16 %v4533, %v4531
      %v4544 = vpack.c.b16 %v4536, %v4534
      %v4545 = vpack.c.b16 %v4537, %v4535
      %v4555 = vsel %vm3003, %v4504, 0
      %v4558 = vsel %vm3003, %v4505, 0
      %4560 = vmatpush.bf16.msra.mxu0 0
      %4561 = vmatpush.bf16.msra.mxu0 0
      %4562 = vmatpush.bf16.msra.mxu0 0
      %4563 = vmatpush.bf16.msra.mxu0 0
      %4564 = vmatpush.bf16.msra.mxu0 %v4544
      %4565 = vmatpush.bf16.msra.mxu0 %v4542
      %4566 = vmatpush.bf16.msra.mxu0 %v4540
      %4567 = vmatpush.bf16.msra.mxu0 %v4538
      %4568 = vmatmul.bf16.gmra.mxu0 %v4555
      %v4569 = vpop.f32.mrf.mxu0
      %v4570 = vadd.f32 0.0, %v4569
      %v4571 = vpop.f32.mrf.mxu0
      %v4572 = vadd.f32 0.0, %v4571
      %4573 = vmatmul.bf16.gmra.mxu0 %v4558
      %v4574 = vpop.f32.mrf.mxu0
      %v4575 = vadd.f32 0.0, %v4574
      %v4576 = vpop.f32.mrf.mxu0
      %4577 = vdwg.mxu0
      %4578 = vmatpush.bf16.msra.mxu0 0
      %4579 = vmatpush.bf16.msra.mxu0 0
      %4580 = vmatpush.bf16.msra.mxu0 0
      %4581 = vmatpush.bf16.msra.mxu0 0
      %4582 = vmatpush.bf16.msra.mxu0 %v4545
      %4583 = vmatpush.bf16.msra.mxu0 %v4543
      %4584 = vmatpush.bf16.msra.mxu0 %v4541
      %4585 = vmatpush.bf16.msra.mxu0 %v4539
      %4586 = vmatmul.bf16.gmra.mxu0 %v4555
      %v4587 = vpop.f32.mrf.mxu0
      %v4588 = vadd.f32 0.0, %v4587
      %v4589 = vpop.f32.mrf.mxu0
      %v4590 = vadd.f32 0.0, %v4589
      %4591 = vmatmul.bf16.gmra.mxu0 %v4558
      %v4592 = vpop.f32.mrf.mxu0
      %v4593 = vadd.f32 0.0, %v4592
      %v4594 = vpop.f32.mrf.mxu0
      %4595 = vdwg.mxu0
      %v4596 = vadd.f32 %v4498, %v4570
      %v4597 = vadd.f32 %v4499, %v4588
      %v4598 = vadd.f32 %v4500, %v4572
      %v4599 = vadd.f32 %v4501, %v4590
      %v4600 = vadd.f32 %v4502, %v4575
      %v4601 = vadd.f32 %v4503, %v4593
      %4602 = vst [vmem:[#allocation2 + $0x30] sm:$0xff] %v4596
      %4603 = vst [vmem:[#allocation2 + $0x38] sm:$0xff] %v4597
      %4604 = vst [vmem:[#allocation2 + $0x40] sm:$0xff] %v4598
      %4605 = vst [vmem:[#allocation2 + $0x48] sm:$0xff] %v4599
      %4606 = vst [vmem:[#allocation2 + $0x50] sm:$0xff] %v4600
      %4607 = vst [vmem:[#allocation2 + $0x58] sm:$0xff] %v4601
      %v4608 = vld [vmem:[#allocation3 + $0x98] sm:$0xff]
      %v4609 = vld [vmem:[#allocation3 + $0xc8] sm:$0xff]
      %v4610 = vld [vmem:[#allocation3 + $0xf8] sm:$0xff]
      %v4611 = vmul.f32 %v4608, 0.125
      %v4612 = vmul.f32 %v4609, 0.125
      %v4613 = vmul.f32 %v4610, 0.125
      %v4614 = vld [vmem:[#allocation3 + $0xa8] sm:$0xff]
      %v4615 = vld [vmem:[#allocation3 + $0xd8] sm:$0xff]
      %v4616 = vld [vmem:[#allocation3 + $0x108] sm:$0xff]
      %v4617 = vld [vmem:[#allocation3 + $0xb8] sm:$0xff]
      %v4618 = vld [vmem:[#allocation3 + $0xe8] sm:$0xff]
      %v4619 = vld [vmem:[#allocation3 + $0x118] sm:$0xff]
      %v4620 = vpack.c.bf16 %v4612, %v4611
      %v4621 = vpack.c.bf16 %v4613, %v4613
      %v4622 = vpack.c.bf16 %v4615, %v4614
      %v4623 = vpack.c.bf16 %v4616, %v4616
      %4626 = vrot.lane.b32.xlu0 %v4620, 64
      %v4627 = vpop.permute.xlu0 %4626
      %4628 = vrot.lane.b32.xlu0 %v4621, 64
      %v4629 = vpop.permute.xlu0 %4628
      %4632 = vrot.lane.b32.xlu0 %v4622, 64
      %v4633 = vpop.permute.xlu0 %4632
      %4634 = vrot.lane.b32.xlu0 %v4623, 64
      %v4635 = vpop.permute.xlu0 %4634
      %v4637 = vsel %vm3003, %v4627, 0
      %v4640 = vsel %vm3003, %v4629, 0
      %v4643 = vsel %vm3003, %v4633, 0
      %v4646 = vsel %vm3003, %v4635, 0
      %4648 = vmatpush.bf16.xpose.msra.mxu0 0
      %4649 = vmatpush.bf16.xpose.msra.mxu0 0
      %4650 = vmatpush.bf16.xpose.msra.mxu0 0
      %4651 = vmatpush.bf16.xpose.msra.mxu0 0
      %4652 = vmatpush.bf16.xpose.msra.mxu0 0
      %4653 = vmatpush.bf16.xpose.msra.mxu0 0
      %4654 = vmatpush.bf16.xpose.msra.mxu0 %v4646
      %4655 = vmatpush.bf16.xpose.msra.mxu0 %v4643
      %4656 = vmatmul.bf16.gmra.mxu0 %v4637
      %v4657 = vpop.f32.mrf.mxu0
      %v4658 = vadd.f32 0.0, %v4657
      %v4659 = vpop.f32.mrf.mxu0
      %v4660 = vadd.f32 0.0, %v4659
      %4661 = vmatmul.bf16.gmra.mxu0 %v4640
      %v4662 = vpop.f32.mrf.mxu0
      %v4663 = vadd.f32 0.0, %v4662
      %v4664 = vpop.f32.mrf.mxu0
      %4665 = vdwg.mxu0
      %v4666 = vsel %vm2986, %v4658, -1e+30
      %v4667 = vsel %vm2986, %v4660, -1e+30
      %v4668 = vsel %vm2986, %v4663, -1e+30
      %v4669 = vsel %vm3037, %v4666, -inf
      %4670 = vmax.xlane.f32.xlu0 %v4669
      %v4671 = vpop.xlane.xlu0 %4670
      %v4672 = vsel %vm3037, %v4667, -inf
      %4673 = vmax.xlane.f32.xlu0 %v4672
      %v4674 = vpop.xlane.xlu0 %4673
      %v4675 = vsel %vm3037, %v4668, -inf
      %4676 = vmax.xlane.f32.xlu0 %v4675
      %v4677 = vpop.xlane.xlu0 %4676
      %v4678 = vsub.f32 %v4666, %v4671
      %v4679 = vsub.f32 %v4667, %v4674
      %v4680 = vsub.f32 %v4668, %v4677
      %v4681 = vmul.f32 %v4678, 1.442695
      %v4682 = vpow.pop %v4681
      %v4683 = vmul.f32 %v4679, 1.442695
      %v4684 = vpow.pop %v4683
      %v4685 = vmul.f32 %v4680, 1.442695
      %v4686 = vpow.pop %v4685
      %v4687 = vsel %vm3037, %v4682, 0.0
      %4688 = vadd.xlane.f32.xlu0 %v4687
      %v4689 = vpop.xlane.xlu0 %4688
      %v4690 = vsel %vm3037, %v4684, 0.0
      %4691 = vadd.xlane.f32.xlu0 %v4690
      %v4692 = vpop.xlane.xlu0 %4691
      %v4693 = vsel %vm3037, %v4686, 0.0
      %4694 = vadd.xlane.f32.xlu0 %v4693
      %v4695 = vpop.xlane.xlu0 %4694
      %v4696 = vrcp.pop %v4689
      %v4697 = vrcp.pop %v4692
      %v4698 = vrcp.pop %v4695
      %v4699 = vmul.f32 %v4682, %v4696
      %v4700 = vmul.f32 %v4684, %v4697
      %v4701 = vmul.f32 %v4686, %v4698
      %v4702 = vpack.c.bf16 %v4700, %v4699
      %v4703 = vpack.c.bf16 %v4701, %v4701
      %v4704 = vpack.c.bf16 %v4618, %v4617
      %v4705 = vpack.c.bf16 %v4619, %v4619
      %4708 = vrot.lane.b32.xlu0 %v4704, 64
      %v4709 = vpop.permute.xlu0 %4708
      %4710 = vrot.lane.b32.xlu0 %v4705, 64
      %v4711 = vpop.permute.xlu0 %4710
      %v4714 = vsel %vm3037, %v4702, 0
      %v4717 = vsel %vm3037, %v4703, 0
      %v4720 = vsel %vm3081, %v4711, 0
      %4722 = vmatpush.bf16.msra.mxu0 0
      %4723 = vmatpush.bf16.msra.mxu0 0
      %4724 = vmatpush.bf16.msra.mxu0 0
      %4725 = vmatpush.bf16.msra.mxu0 0
      %4726 = vmatpush.bf16.msra.mxu0 0
      %4727 = vmatpush.bf16.msra.mxu0 0
      %4728 = vmatpush.bf16.msra.mxu0 %v4720
      %4729 = vmatpush.bf16.msra.mxu0 %v4709
      %4730 = vmatmul.bf16.gmra.mxu0 %v4714
      %v4731 = vpop.f32.mrf.mxu0
      %v4732 = vadd.f32 0.0, %v4731
      %v4733 = vpop.f32.mrf.mxu0
      %v4734 = vadd.f32 0.0, %v4733
      %4735 = vmatmul.bf16.gmra.mxu0 %v4717
      %v4736 = vpop.f32.mrf.mxu0
      %v4737 = vadd.f32 0.0, %v4736
      %v4738 = vpop.f32.mrf.mxu0
      %4739 = vdwg.mxu0
      %v4740 = vld [vmem:[#allocation2 + $0x30] sm:$0xff]
      %v4741 = vld [vmem:[#allocation2 + $0x38] sm:$0xff]
      %v4742 = vld [vmem:[#allocation2 + $0x40] sm:$0xff]
      %v4743 = vld [vmem:[#allocation2 + $0x48] sm:$0xff]
      %v4744 = vld [vmem:[#allocation2 + $0x50] sm:$0xff]
      %v4745 = vld [vmem:[#allocation2 + $0x58] sm:$0xff]
      %v4746 = vpack.c.bf16 %v4734, %v4732
      %v4747 = vpack.c.bf16 %v4737, %v4737
      %v4748 = vld [vmem:[%s822 + $0xc0] sm:$0xff]
      %v4749 = vld [vmem:[%s822 + $0xc8] sm:$0xff]
      %v4750 = vld [vmem:[%s822 + $0xd0] sm:$0xff]
      %v4751 = vld [vmem:[%s822 + $0xd8] sm:$0xff]
      %v4752 = vld [vmem:[%s822 + $0xe0] sm:$0xff]
      %v4753 = vld [vmem:[%s822 + $0xe8] sm:$0xff]
      %v4754 = vld [vmem:[%s822 + $0xf0] sm:$0xff]
      %v4755 = vld [vmem:[%s822 + $0xf8] sm:$0xff]
      %v4764 = vunpack.c.l.b16 %v4748
      %v4765 = vunpack.c.h.b16 %v4748
      %v4766 = vunpack.c.l.b16 %v4749
      %v4767 = vunpack.c.h.b16 %v4749
      %v4768 = vunpack.c.l.b16 %v4750
      %v4769 = vunpack.c.h.b16 %v4750
      %v4770 = vunpack.c.l.b16 %v4751
      %v4771 = vunpack.c.h.b16 %v4751
      %v4772 = vunpack.c.l.b16 %v4752
      %v4773 = vunpack.c.h.b16 %v4752
      %v4774 = vunpack.c.l.b16 %v4753
      %v4775 = vunpack.c.h.b16 %v4753
      %v4776 = vunpack.c.l.b16 %v4754
      %v4777 = vunpack.c.h.b16 %v4754
      %v4778 = vunpack.c.l.b16 %v4755
      %v4779 = vunpack.c.h.b16 %v4755
      %v4780 = vpack.c.b16 %v4766, %v4764
      %v4781 = vpack.c.b16 %v4767, %v4765
      %v4782 = vpack.c.b16 %v4770, %v4768
      %v4783 = vpack.c.b16 %v4771, %v4769
      %v4784 = vpack.c.b16 %v4774, %v4772
      %v4785 = vpack.c.b16 %v4775, %v4773
      %v4786 = vpack.c.b16 %v4778, %v4776
      %v4787 = vpack.c.b16 %v4779, %v4777
      %v4797 = vsel %vm3003, %v4746, 0
      %v4800 = vsel %vm3003, %v4747, 0
      %4802 = vmatpush.bf16.msra.mxu0 0
      %4803 = vmatpush.bf16.msra.mxu0 0
      %4804 = vmatpush.bf16.msra.mxu0 0
      %4805 = vmatpush.bf16.msra.mxu0 0
      %4806 = vmatpush.bf16.msra.mxu0 %v4786
      %4807 = vmatpush.bf16.msra.mxu0 %v4784
      %4808 = vmatpush.bf16.msra.mxu0 %v4782
      %4809 = vmatpush.bf16.msra.mxu0 %v4780
      %4810 = vmatmul.bf16.gmra.mxu0 %v4797
      %v4811 = vpop.f32.mrf.mxu0
      %v4812 = vadd.f32 0.0, %v4811
      %v4813 = vpop.f32.mrf.mxu0
      %v4814 = vadd.f32 0.0, %v4813
      %4815 = vmatmul.bf16.gmra.mxu0 %v4800
      %v4816 = vpop.f32.mrf.mxu0
      %v4817 = vadd.f32 0.0, %v4816
      %v4818 = vpop.f32.mrf.mxu0
      %4819 = vdwg.mxu0
      %4820 = vmatpush.bf16.msra.mxu0 0
      %4821 = vmatpush.bf16.msra.mxu0 0
      %4822 = vmatpush.bf16.msra.mxu0 0
      %4823 = vmatpush.bf16.msra.mxu0 0
      %4824 = vmatpush.bf16.msra.mxu0 %v4787
      %4825 = vmatpush.bf16.msra.mxu0 %v4785
      %4826 = vmatpush.bf16.msra.mxu0 %v4783
      %4827 = vmatpush.bf16.msra.mxu0 %v4781
      %4828 = vmatmul.bf16.gmra.mxu0 %v4797
      %v4829 = vpop.f32.mrf.mxu0
      %v4830 = vadd.f32 0.0, %v4829
      %v4831 = vpop.f32.mrf.mxu0
      %v4832 = vadd.f32 0.0, %v4831
      %4833 = vmatmul.bf16.gmra.mxu0 %v4800
      %v4834 = vpop.f32.mrf.mxu0
      %v4835 = vadd.f32 0.0, %v4834
      %v4836 = vpop.f32.mrf.mxu0
      %4837 = vdwg.mxu0
      %v4838 = vadd.f32 %v4740, %v4812
      %v4839 = vadd.f32 %v4741, %v4830
      %v4840 = vadd.f32 %v4742, %v4814
      %v4841 = vadd.f32 %v4743, %v4832
      %v4842 = vadd.f32 %v4744, %v4817
      %v4843 = vadd.f32 %v4745, %v4835
      %4844 = vst [vmem:[#allocation2 + $0x30] sm:$0xff] %v4838
      %4845 = vst [vmem:[#allocation2 + $0x38] sm:$0xff] %v4839
      %4846 = vst [vmem:[#allocation2 + $0x40] sm:$0xff] %v4840
      %4847 = vst [vmem:[#allocation2 + $0x48] sm:$0xff] %v4841
      %4848 = vst [vmem:[#allocation2 + $0x50] sm:$0xff] %v4842
      %4849 = vst [vmem:[#allocation2 + $0x58] sm:$0xff] %v4843
      %v4850 = vld [vmem:[#allocation2] sm:$0xff]
      %v4851 = vld [vmem:[#allocation2 + $0x8] sm:$0xff]
      %v4852 = vld [vmem:[#allocation2 + $0x10] sm:$0xff]
      %v4853 = vld [vmem:[#allocation2 + $0x18] sm:$0xff]
      %v4854 = vld [vmem:[#allocation2 + $0x20] sm:$0xff]
      %v4855 = vld [vmem:[#allocation2 + $0x28] sm:$0xff]
      %v4856 = vld [vmem:[#allocation2 + $0x30] sm:$0xff]
      %v4857 = vld [vmem:[#allocation2 + $0x38] sm:$0xff]
      %v4858 = vld [vmem:[#allocation2 + $0x40] sm:$0xff]
      %v4859 = vld [vmem:[#allocation2 + $0x48] sm:$0xff]
      %v4860 = vld [vmem:[#allocation2 + $0x50] sm:$0xff]
      %v4861 = vld [vmem:[#allocation2 + $0x58] sm:$0xff]
      %v4862 = vld [vmem:[%s826] sm:$0x3]
      %v4864 = vperm.slane %v4862, 0
      %v4865 = vperm.slane %v4862, 1
      %v4868 = vadd.f32 %v4850, %v4864
      %v4869 = vadd.f32 %v4851, %v4865
      %v4870 = vadd.f32 %v4852, %v4864
      %v4871 = vadd.f32 %v4853, %v4865
      %v4872 = vadd.f32 %v4854, %v4864
      %v4873 = vadd.f32 %v4855, %v4865
      %v4874 = vadd.f32 %v4856, %v4864
      %v4875 = vadd.f32 %v4857, %v4865
      %v4876 = vadd.f32 %v4858, %v4864
      %v4877 = vadd.f32 %v4859, %v4865
      %v4878 = vadd.f32 %v4860, %v4864
      %v4879 = vadd.f32 %v4861, %v4865
      %4880 = vst [vmem:[#allocation2] sm:$0xff] %v4868
      %4881 = vst [vmem:[#allocation2 + $0x8] sm:$0xff] %v4869
      %4882 = vst [vmem:[#allocation2 + $0x10] sm:$0xff] %v4870
      %4883 = vst [vmem:[#allocation2 + $0x18] sm:$0xff] %v4871
      %4884 = vst [vmem:[#allocation2 + $0x20] sm:$0xff] %v4872
      %4885 = vst [vmem:[#allocation2 + $0x28] sm:$0xff] %v4873
      %4886 = vst [vmem:[#allocation2 + $0x30] sm:$0xff] %v4874
      %4887 = vst [vmem:[#allocation2 + $0x38] sm:$0xff] %v4875
      %4888 = vst [vmem:[#allocation2 + $0x40] sm:$0xff] %v4876
      %4889 = vst [vmem:[#allocation2 + $0x48] sm:$0xff] %v4877
      %4890 = vst [vmem:[#allocation2 + $0x50] sm:$0xff] %v4878
      %4891 = vst [vmem:[#allocation2 + $0x58] sm:$0xff] %v4879
      %v4892 = vld [vmem:[%s830] sm:$0x3]
      %v4893 = vld [vmem:[%s834] sm:$0x3]
      %v4894 = vadd.f32 %v4868, %v4869
      %4895 = vadd.xlane.f32.xlu0 %v4894
      %v4896 = vpop.xlane.xlu0 %4895
      %v4897 = vadd.f32 %v4870, %v4871
      %4898 = vadd.xlane.f32.xlu0 %v4897
      %v4899 = vpop.xlane.xlu0 %4898
      %v4900 = vadd.f32 %v4872, %v4873
      %4901 = vadd.xlane.f32.xlu0 %v4900
      %v4902 = vpop.xlane.xlu0 %4901
      %v4903 = vadd.f32 %v4874, %v4875
      %4904 = vadd.xlane.f32.xlu0 %v4903
      %v4905 = vpop.xlane.xlu0 %4904
      %v4906 = vadd.f32 %v4876, %v4877
      %4907 = vadd.xlane.f32.xlu0 %v4906
      %v4908 = vpop.xlane.xlu0 %4907
      %v4909 = vadd.f32 %v4878, %v4879
      %4910 = vadd.xlane.f32.xlu0 %v4909
      %v4911 = vpop.xlane.xlu0 %4910
      %v4912 = vmul.f32 %v4896, %v1897
      %v4913 = vmul.f32 %v4899, %v1897
      %v4914 = vmul.f32 %v4902, %v1897
      %v4915 = vmul.f32 %v4905, %v1897
      %v4916 = vmul.f32 %v4908, %v1897
      %v4917 = vmul.f32 %v4911, %v1897
      %v4918 = vsub.f32 %v4868, %v4912
      %v4919 = vsub.f32 %v4869, %v4912
      %v4920 = vsub.f32 %v4870, %v4913
      %v4921 = vsub.f32 %v4871, %v4913
      %v4922 = vsub.f32 %v4872, %v4914
      %v4923 = vsub.f32 %v4873, %v4914
      %v4924 = vsub.f32 %v4874, %v4915
      %v4925 = vsub.f32 %v4875, %v4915
      %v4926 = vsub.f32 %v4876, %v4916
      %v4927 = vsub.f32 %v4877, %v4916
      %v4928 = vsub.f32 %v4878, %v4917
      %v4929 = vsub.f32 %v4879, %v4917
      %v4930 = vmul.f32 %v4918, %v4918
      %v4931 = vmul.f32 %v4919, %v4919
      %v4932 = vmul.f32 %v4920, %v4920
      %v4933 = vmul.f32 %v4921, %v4921
      %v4934 = vmul.f32 %v4922, %v4922
      %v4935 = vmul.f32 %v4923, %v4923
      %v4936 = vmul.f32 %v4924, %v4924
      %v4937 = vmul.f32 %v4925, %v4925
      %v4938 = vmul.f32 %v4926, %v4926
      %v4939 = vmul.f32 %v4927, %v4927
      %v4940 = vmul.f32 %v4928, %v4928
      %v4941 = vmul.f32 %v4929, %v4929
      %v4942 = vadd.f32 %v4930, %v4931
      %4943 = vadd.xlane.f32.xlu0 %v4942
      %v4944 = vpop.xlane.xlu0 %4943
      %v4945 = vadd.f32 %v4932, %v4933
      %4946 = vadd.xlane.f32.xlu0 %v4945
      %v4947 = vpop.xlane.xlu0 %4946
      %v4948 = vadd.f32 %v4934, %v4935
      %4949 = vadd.xlane.f32.xlu0 %v4948
      %v4950 = vpop.xlane.xlu0 %4949
      %v4951 = vadd.f32 %v4936, %v4937
      %4952 = vadd.xlane.f32.xlu0 %v4951
      %v4953 = vpop.xlane.xlu0 %4952
      %v4954 = vadd.f32 %v4938, %v4939
      %4955 = vadd.xlane.f32.xlu0 %v4954
      %v4956 = vpop.xlane.xlu0 %4955
      %v4957 = vadd.f32 %v4940, %v4941
      %4958 = vadd.xlane.f32.xlu0 %v4957
      %v4959 = vpop.xlane.xlu0 %4958
      %v4960 = vmul.f32 %v4944, %v1897
      %v4961 = vmul.f32 %v4947, %v1897
      %v4962 = vmul.f32 %v4950, %v1897
      %v4963 = vmul.f32 %v4953, %v1897
      %v4964 = vmul.f32 %v4956, %v1897
      %v4965 = vmul.f32 %v4959, %v1897
      %v4966 = vadd.f32 %v4960, 1e-06
      %v4967 = vadd.f32 %v4961, 1e-06
      %v4968 = vadd.f32 %v4962, 1e-06
      %v4969 = vadd.f32 %v4963, 1e-06
      %v4970 = vadd.f32 %v4964, 1e-06
      %v4971 = vadd.f32 %v4965, 1e-06
      %v4972 = vrsqrt.pop %v4966
      %v4973 = vmul.f32 %v4972, %v4966
      %v4974 = vmul.f32 %v4973, %v4972
      %v4975 = vmul.f32 0.5, %v4974
      %v4976 = vsub.f32 1.5, %v4975
      %v4977 = vmul.f32 %v4972, %v4976
      %vm4978 = vweird.f32 %v4966
      %vm4979 = vweird.f32 %v4972
      %vm4980 = vmor %vm4978, %vm4979
      %v4981 = vsel %vm4980, %v4972, %v4977
      %v4982 = vrsqrt.pop %v4967
      %v4983 = vmul.f32 %v4982, %v4967
      %v4984 = vmul.f32 %v4983, %v4982
      %v4985 = vmul.f32 0.5, %v4984
      %v4986 = vsub.f32 1.5, %v4985
      %v4987 = vmul.f32 %v4982, %v4986
      %vm4988 = vweird.f32 %v4967
      %vm4989 = vweird.f32 %v4982
      %vm4990 = vmor %vm4988, %vm4989
      %v4991 = vsel %vm4990, %v4982, %v4987
      %v4992 = vrsqrt.pop %v4968
      %v4993 = vmul.f32 %v4992, %v4968
      %v4994 = vmul.f32 %v4993, %v4992
      %v4995 = vmul.f32 0.5, %v4994
      %v4996 = vsub.f32 1.5, %v4995
      %v4997 = vmul.f32 %v4992, %v4996
      %vm4998 = vweird.f32 %v4968
      %vm4999 = vweird.f32 %v4992
      %vm5000 = vmor %vm4998, %vm4999
      %v5001 = vsel %vm5000, %v4992, %v4997
      %v5002 = vrsqrt.pop %v4969
      %v5003 = vmul.f32 %v5002, %v4969
      %v5004 = vmul.f32 %v5003, %v5002
      %v5005 = vmul.f32 0.5, %v5004
      %v5006 = vsub.f32 1.5, %v5005
      %v5007 = vmul.f32 %v5002, %v5006
      %vm5008 = vweird.f32 %v4969
      %vm5009 = vweird.f32 %v5002
      %vm5010 = vmor %vm5008, %vm5009
      %v5011 = vsel %vm5010, %v5002, %v5007
      %v5012 = vrsqrt.pop %v4970
      %v5013 = vmul.f32 %v5012, %v4970
      %v5014 = vmul.f32 %v5013, %v5012
      %v5015 = vmul.f32 0.5, %v5014
      %v5016 = vsub.f32 1.5, %v5015
      %v5017 = vmul.f32 %v5012, %v5016
      %vm5018 = vweird.f32 %v4970
      %vm5019 = vweird.f32 %v5012
      %vm5020 = vmor %vm5018, %vm5019
      %v5021 = vsel %vm5020, %v5012, %v5017
      %v5022 = vrsqrt.pop %v4971
      %v5023 = vmul.f32 %v5022, %v4971
      %v5024 = vmul.f32 %v5023, %v5022
      %v5025 = vmul.f32 0.5, %v5024
      %v5026 = vsub.f32 1.5, %v5025
      %v5027 = vmul.f32 %v5022, %v5026
      %vm5028 = vweird.f32 %v4971
      %vm5029 = vweird.f32 %v5022
      %vm5030 = vmor %vm5028, %vm5029
      %v5031 = vsel %vm5030, %v5022, %v5027
      %v5032 = vmul.f32 %v4918, %v4981
      %v5033 = vmul.f32 %v4919, %v4981
      %v5034 = vmul.f32 %v4920, %v4991
      %v5035 = vmul.f32 %v4921, %v4991
      %v5036 = vmul.f32 %v4922, %v5001
      %v5037 = vmul.f32 %v4923, %v5001
      %v5038 = vmul.f32 %v4924, %v5011
      %v5039 = vmul.f32 %v4925, %v5011
      %v5040 = vmul.f32 %v4926, %v5021
      %v5041 = vmul.f32 %v4927, %v5021
      %v5042 = vmul.f32 %v4928, %v5031
      %v5043 = vmul.f32 %v4929, %v5031
      %v5045 = vperm.slane %v4892, 0
      %v5046 = vperm.slane %v4892, 1
      %v5049 = vmul.f32 %v5032, %v5045
      %v5050 = vmul.f32 %v5033, %v5046
      %v5051 = vmul.f32 %v5034, %v5045
      %v5052 = vmul.f32 %v5035, %v5046
      %v5053 = vmul.f32 %v5036, %v5045
      %v5054 = vmul.f32 %v5037, %v5046
      %v5055 = vmul.f32 %v5038, %v5045
      %v5056 = vmul.f32 %v5039, %v5046
      %v5057 = vmul.f32 %v5040, %v5045
      %v5058 = vmul.f32 %v5041, %v5046
      %v5059 = vmul.f32 %v5042, %v5045
      %v5060 = vmul.f32 %v5043, %v5046
      %v5062 = vperm.slane %v4893, 0
      %v5063 = vperm.slane %v4893, 1
      %v5066 = vadd.f32 %v5049, %v5062
      %v5067 = vadd.f32 %v5050, %v5063
      %v5068 = vadd.f32 %v5051, %v5062
      %v5069 = vadd.f32 %v5052, %v5063
      %v5070 = vadd.f32 %v5053, %v5062
      %v5071 = vadd.f32 %v5054, %v5063
      %v5072 = vadd.f32 %v5055, %v5062
      %v5073 = vadd.f32 %v5056, %v5063
      %v5074 = vadd.f32 %v5057, %v5062
      %v5075 = vadd.f32 %v5058, %v5063
      %v5076 = vadd.f32 %v5059, %v5062
      %v5077 = vadd.f32 %v5060, %v5063
      %v5078 = vpack.c.bf16 %v5068, %v5066
      %v5079 = vpack.c.bf16 %v5069, %v5067
      %v5080 = vpack.c.bf16 %v5072, %v5070
      %v5081 = vpack.c.bf16 %v5073, %v5071
      %v5082 = vpack.c.bf16 %v5076, %v5074
      %v5083 = vpack.c.bf16 %v5077, %v5075
      %v5084 = vld [vmem:[%s839] sm:$0xff]
      %v5085 = vld [vmem:[%s839 + $0x8] sm:$0xff]
      %v5086 = vld [vmem:[%s839 + $0x10] sm:$0xff]
      %v5087 = vld [vmem:[%s839 + $0x18] sm:$0xff]
      %v5088 = vld [vmem:[%s839 + $0x20] sm:$0xff]
      %v5089 = vld [vmem:[%s839 + $0x28] sm:$0xff]
      %v5090 = vld [vmem:[%s839 + $0x30] sm:$0xff]
      %v5091 = vld [vmem:[%s839 + $0x38] sm:$0xff]
      %v5092 = vld [vmem:[%s839 + $0x40] sm:$0xff]
      %v5093 = vld [vmem:[%s839 + $0x48] sm:$0xff]
      %v5094 = vld [vmem:[%s839 + $0x50] sm:$0xff]
      %v5095 = vld [vmem:[%s839 + $0x58] sm:$0xff]
      %v5096 = vld [vmem:[%s839 + $0x60] sm:$0xff]
      %v5097 = vld [vmem:[%s839 + $0x68] sm:$0xff]
      %v5098 = vld [vmem:[%s839 + $0x70] sm:$0xff]
      %v5099 = vld [vmem:[%s839 + $0x78] sm:$0xff]
      %v5100 = vld [vmem:[%s839 + $0x80] sm:$0xff]
      %v5101 = vld [vmem:[%s839 + $0x88] sm:$0xff]
      %v5102 = vld [vmem:[%s839 + $0x90] sm:$0xff]
      %v5103 = vld [vmem:[%s839 + $0x98] sm:$0xff]
      %v5104 = vld [vmem:[%s839 + $0xa0] sm:$0xff]
      %v5105 = vld [vmem:[%s839 + $0xa8] sm:$0xff]
      %v5106 = vld [vmem:[%s839 + $0xb0] sm:$0xff]
      %v5107 = vld [vmem:[%s839 + $0xb8] sm:$0xff]
      %v5108 = vld [vmem:[%s839 + $0xc0] sm:$0xff]
      %v5109 = vld [vmem:[%s839 + $0xc8] sm:$0xff]
      %v5110 = vld [vmem:[%s839 + $0xd0] sm:$0xff]
      %v5111 = vld [vmem:[%s839 + $0xd8] sm:$0xff]
      %v5112 = vld [vmem:[%s839 + $0xe0] sm:$0xff]
      %v5113 = vld [vmem:[%s839 + $0xe8] sm:$0xff]
      %v5114 = vld [vmem:[%s839 + $0xf0] sm:$0xff]
      %v5115 = vld [vmem:[%s839 + $0xf8] sm:$0xff]
      %v5116 = vld [vmem:[%s839 + $0x100] sm:$0xff]
      %v5117 = vld [vmem:[%s839 + $0x108] sm:$0xff]
      %v5118 = vld [vmem:[%s839 + $0x110] sm:$0xff]
      %v5119 = vld [vmem:[%s839 + $0x118] sm:$0xff]
      %v5120 = vld [vmem:[%s839 + $0x120] sm:$0xff]
      %v5121 = vld [vmem:[%s839 + $0x128] sm:$0xff]
      %v5122 = vld [vmem:[%s839 + $0x130] sm:$0xff]
      %v5123 = vld [vmem:[%s839 + $0x138] sm:$0xff]
      %v5124 = vld [vmem:[%s839 + $0x140] sm:$0xff]
      %v5125 = vld [vmem:[%s839 + $0x148] sm:$0xff]
      %v5126 = vld [vmem:[%s839 + $0x150] sm:$0xff]
      %v5127 = vld [vmem:[%s839 + $0x158] sm:$0xff]
      %v5128 = vld [vmem:[%s839 + $0x160] sm:$0xff]
      %v5129 = vld [vmem:[%s839 + $0x168] sm:$0xff]
      %v5130 = vld [vmem:[%s839 + $0x170] sm:$0xff]
      %v5131 = vld [vmem:[%s839 + $0x178] sm:$0xff]
      %v5132 = vld [vmem:[%s839 + $0x180] sm:$0xff]
      %v5133 = vld [vmem:[%s839 + $0x188] sm:$0xff]
      %v5134 = vld [vmem:[%s839 + $0x190] sm:$0xff]
      %v5135 = vld [vmem:[%s839 + $0x198] sm:$0xff]
      %v5136 = vld [vmem:[%s839 + $0x1a0] sm:$0xff]
      %v5137 = vld [vmem:[%s839 + $0x1a8] sm:$0xff]
      %v5138 = vld [vmem:[%s839 + $0x1b0] sm:$0xff]
      %v5139 = vld [vmem:[%s839 + $0x1b8] sm:$0xff]
      %v5140 = vld [vmem:[%s839 + $0x1c0] sm:$0xff]
      %v5141 = vld [vmem:[%s839 + $0x1c8] sm:$0xff]
      %v5142 = vld [vmem:[%s839 + $0x1d0] sm:$0xff]
      %v5143 = vld [vmem:[%s839 + $0x1d8] sm:$0xff]
      %v5144 = vld [vmem:[%s839 + $0x1e0] sm:$0xff]
      %v5145 = vld [vmem:[%s839 + $0x1e8] sm:$0xff]
      %v5146 = vld [vmem:[%s839 + $0x1f0] sm:$0xff]
      %v5147 = vld [vmem:[%s839 + $0x1f8] sm:$0xff]
      %v5148 = vld [vmem:[%s843] sm:$0xf]
      %v5150 = vperm.slane %v5148, 0
      %v5151 = vperm.slane %v5148, 1
      %v5152 = vperm.slane %v5148, 2
      %v5153 = vperm.slane %v5148, 3
      %v5222 = vunpack.c.l.b16 %v5084
      %v5223 = vunpack.c.h.b16 %v5084
      %v5224 = vunpack.c.l.b16 %v5085
      %v5225 = vunpack.c.h.b16 %v5085
      %v5226 = vunpack.c.l.b16 %v5086
      %v5227 = vunpack.c.h.b16 %v5086
      %v5228 = vunpack.c.l.b16 %v5087
      %v5229 = vunpack.c.h.b16 %v5087
      %v5230 = vunpack.c.l.b16 %v5088
      %v5231 = vunpack.c.h.b16 %v5088
      %v5232 = vunpack.c.l.b16 %v5089
      %v5233 = vunpack.c.h.b16 %v5089
      %v5234 = vunpack.c.l.b16 %v5090
      %v5235 = vunpack.c.h.b16 %v5090
      %v5236 = vunpack.c.l.b16 %v5091
      %v5237 = vunpack.c.h.b16 %v5091
      %v5238 = vunpack.c.l.b16 %v5092
      %v5239 = vunpack.c.h.b16 %v5092
      %v5240 = vunpack.c.l.b16 %v5093
      %v5241 = vunpack.c.h.b16 %v5093
      %v5242 = vunpack.c.l.b16 %v5094
      %v5243 = vunpack.c.h.b16 %v5094
      %v5244 = vunpack.c.l.b16 %v5095
      %v5245 = vunpack.c.h.b16 %v5095
      %v5246 = vunpack.c.l.b16 %v5096
      %v5247 = vunpack.c.h.b16 %v5096
      %v5248 = vunpack.c.l.b16 %v5097
      %v5249 = vunpack.c.h.b16 %v5097
      %v5250 = vunpack.c.l.b16 %v5098
      %v5251 = vunpack.c.h.b16 %v5098
      %v5252 = vunpack.c.l.b16 %v5099
      %v5253 = vunpack.c.h.b16 %v5099
      %v5254 = vunpack.c.l.b16 %v5100
      %v5255 = vunpack.c.h.b16 %v5100
      %v5256 = vunpack.c.l.b16 %v5101
      %v5257 = vunpack.c.h.b16 %v5101
      %v5258 = vunpack.c.l.b16 %v5102
      %v5259 = vunpack.c.h.b16 %v5102
      %v5260 = vunpack.c.l.b16 %v5103
      %v5261 = vunpack.c.h.b16 %v5103
      %v5262 = vunpack.c.l.b16 %v5104
      %v5263 = vunpack.c.h.b16 %v5104
      %v5264 = vunpack.c.l.b16 %v5105
      %v5265 = vunpack.c.h.b16 %v5105
      %v5266 = vunpack.c.l.b16 %v5106
      %v5267 = vunpack.c.h.b16 %v5106
      %v5268 = vunpack.c.l.b16 %v5107
      %v5269 = vunpack.c.h.b16 %v5107
      %v5270 = vunpack.c.l.b16 %v5108
      %v5271 = vunpack.c.h.b16 %v5108
      %v5272 = vunpack.c.l.b16 %v5109
      %v5273 = vunpack.c.h.b16 %v5109
      %v5274 = vunpack.c.l.b16 %v5110
      %v5275 = vunpack.c.h.b16 %v5110
      %v5276 = vunpack.c.l.b16 %v5111
      %v5277 = vunpack.c.h.b16 %v5111
      %v5278 = vunpack.c.l.b16 %v5112
      %v5279 = vunpack.c.h.b16 %v5112
      %v5280 = vunpack.c.l.b16 %v5113
      %v5281 = vunpack.c.h.b16 %v5113
      %v5282 = vunpack.c.l.b16 %v5114
      %v5283 = vunpack.c.h.b16 %v5114
      %v5284 = vunpack.c.l.b16 %v5115
      %v5285 = vunpack.c.h.b16 %v5115
      %v5286 = vunpack.c.l.b16 %v5116
      %v5287 = vunpack.c.h.b16 %v5116
      %v5288 = vunpack.c.l.b16 %v5117
      %v5289 = vunpack.c.h.b16 %v5117
      %v5290 = vunpack.c.l.b16 %v5118
      %v5291 = vunpack.c.h.b16 %v5118
      %v5292 = vunpack.c.l.b16 %v5119
      %v5293 = vunpack.c.h.b16 %v5119
      %v5294 = vunpack.c.l.b16 %v5120
      %v5295 = vunpack.c.h.b16 %v5120
      %v5296 = vunpack.c.l.b16 %v5121
      %v5297 = vunpack.c.h.b16 %v5121
      %v5298 = vunpack.c.l.b16 %v5122
      %v5299 = vunpack.c.h.b16 %v5122
      %v5300 = vunpack.c.l.b16 %v5123
      %v5301 = vunpack.c.h.b16 %v5123
      %v5302 = vunpack.c.l.b16 %v5124
      %v5303 = vunpack.c.h.b16 %v5124
      %v5304 = vunpack.c.l.b16 %v5125
      %v5305 = vunpack.c.h.b16 %v5125
      %v5306 = vunpack.c.l.b16 %v5126
      %v5307 = vunpack.c.h.b16 %v5126
      %v5308 = vunpack.c.l.b16 %v5127
      %v5309 = vunpack.c.h.b16 %v5127
      %v5310 = vunpack.c.l.b16 %v5128
      %v5311 = vunpack.c.h.b16 %v5128
      %v5312 = vunpack.c.l.b16 %v5129
      %v5313 = vunpack.c.h.b16 %v5129
      %v5314 = vunpack.c.l.b16 %v5130
      %v5315 = vunpack.c.h.b16 %v5130
      %v5316 = vunpack.c.l.b16 %v5131
      %v5317 = vunpack.c.h.b16 %v5131
      %v5318 = vunpack.c.l.b16 %v5132
      %v5319 = vunpack.c.h.b16 %v5132
      %v5320 = vunpack.c.l.b16 %v5133
      %v5321 = vunpack.c.h.b16 %v5133
      %v5322 = vunpack.c.l.b16 %v5134
      %v5323 = vunpack.c.h.b16 %v5134
      %v5324 = vunpack.c.l.b16 %v5135
      %v5325 = vunpack.c.h.b16 %v5135
      %v5326 = vunpack.c.l.b16 %v5136
      %v5327 = vunpack.c.h.b16 %v5136
      %v5328 = vunpack.c.l.b16 %v5137
      %v5329 = vunpack.c.h.b16 %v5137
      %v5330 = vunpack.c.l.b16 %v5138
      %v5331 = vunpack.c.h.b16 %v5138
      %v5332 = vunpack.c.l.b16 %v5139
      %v5333 = vunpack.c.h.b16 %v5139
      %v5334 = vunpack.c.l.b16 %v5140
      %v5335 = vunpack.c.h.b16 %v5140
      %v5336 = vunpack.c.l.b16 %v5141
      %v5337 = vunpack.c.h.b16 %v5141
      %v5338 = vunpack.c.l.b16 %v5142
      %v5339 = vunpack.c.h.b16 %v5142
      %v5340 = vunpack.c.l.b16 %v5143
      %v5341 = vunpack.c.h.b16 %v5143
      %v5342 = vunpack.c.l.b16 %v5144
      %v5343 = vunpack.c.h.b16 %v5144
      %v5344 = vunpack.c.l.b16 %v5145
      %v5345 = vunpack.c.h.b16 %v5145
      %v5346 = vunpack.c.l.b16 %v5146
      %v5347 = vunpack.c.h.b16 %v5146
      %v5348 = vunpack.c.l.b16 %v5147
      %v5349 = vunpack.c.h.b16 %v5147
      %v5350 = vpack.c.b16 %v5226, %v5222
      %v5351 = vpack.c.b16 %v5227, %v5223
      %v5352 = vpack.c.b16 %v5228, %v5224
      %v5353 = vpack.c.b16 %v5229, %v5225
      %v5354 = vpack.c.b16 %v5234, %v5230
      %v5355 = vpack.c.b16 %v5235, %v5231
      %v5356 = vpack.c.b16 %v5236, %v5232
      %v5357 = vpack.c.b16 %v5237, %v5233
      %v5358 = vpack.c.b16 %v5242, %v5238
      %v5359 = vpack.c.b16 %v5243, %v5239
      %v5360 = vpack.c.b16 %v5244, %v5240
      %v5361 = vpack.c.b16 %v5245, %v5241
      %v5362 = vpack.c.b16 %v5250, %v5246
      %v5363 = vpack.c.b16 %v5251, %v5247
      %v5364 = vpack.c.b16 %v5252, %v5248
      %v5365 = vpack.c.b16 %v5253, %v5249
      %v5366 = vpack.c.b16 %v5258, %v5254
      %v5367 = vpack.c.b16 %v5259, %v5255
      %v5368 = vpack.c.b16 %v5260, %v5256
      %v5369 = vpack.c.b16 %v5261, %v5257
      %v5370 = vpack.c.b16 %v5266, %v5262
      %v5371 = vpack.c.b16 %v5267, %v5263
      %v5372 = vpack.c.b16 %v5268, %v5264
      %v5373 = vpack.c.b16 %v5269, %v5265
      %v5374 = vpack.c.b16 %v5274, %v5270
      %v5375 = vpack.c.b16 %v5275, %v5271
      %v5376 = vpack.c.b16 %v5276, %v5272
      %v5377 = vpack.c.b16 %v5277, %v5273
      %v5378 = vpack.c.b16 %v5282, %v5278
      %v5379 = vpack.c.b16 %v5283, %v5279
      %v5380 = vpack.c.b16 %v5284, %v5280
      %v5381 = vpack.c.b16 %v5285, %v5281
      %v5382 = vpack.c.b16 %v5290, %v5286
      %v5383 = vpack.c.b16 %v5291, %v5287
      %v5384 = vpack.c.b16 %v5292, %v5288
      %v5385 = vpack.c.b16 %v5293, %v5289
      %v5386 = vpack.c.b16 %v5298, %v5294
      %v5387 = vpack.c.b16 %v5299, %v5295
      %v5388 = vpack.c.b16 %v5300, %v5296
      %v5389 = vpack.c.b16 %v5301, %v5297
      %v5390 = vpack.c.b16 %v5306, %v5302
      %v5391 = vpack.c.b16 %v5307, %v5303
      %v5392 = vpack.c.b16 %v5308, %v5304
      %v5393 = vpack.c.b16 %v5309, %v5305
      %v5394 = vpack.c.b16 %v5314, %v5310
      %v5395 = vpack.c.b16 %v5315, %v5311
      %v5396 = vpack.c.b16 %v5316, %v5312
      %v5397 = vpack.c.b16 %v5317, %v5313
      %v5398 = vpack.c.b16 %v5322, %v5318
      %v5399 = vpack.c.b16 %v5323, %v5319
      %v5400 = vpack.c.b16 %v5324, %v5320
      %v5401 = vpack.c.b16 %v5325, %v5321
      %v5402 = vpack.c.b16 %v5330, %v5326
      %v5403 = vpack.c.b16 %v5331, %v5327
      %v5404 = vpack.c.b16 %v5332, %v5328
      %v5405 = vpack.c.b16 %v5333, %v5329
      %v5406 = vpack.c.b16 %v5338, %v5334
      %v5407 = vpack.c.b16 %v5339, %v5335
      %v5408 = vpack.c.b16 %v5340, %v5336
      %v5409 = vpack.c.b16 %v5341, %v5337
      %v5410 = vpack.c.b16 %v5346, %v5342
      %v5411 = vpack.c.b16 %v5347, %v5343
      %v5412 = vpack.c.b16 %v5348, %v5344
      %v5413 = vpack.c.b16 %v5349, %v5345
      %5478 = vmatpush.bf16.msra.mxu0 %v5378
      %5479 = vmatpush.bf16.msra.mxu0 %v5374
      %5480 = vmatpush.bf16.msra.mxu0 %v5370
      %5481 = vmatpush.bf16.msra.mxu0 %v5366
      %5482 = vmatpush.bf16.msra.mxu0 %v5362
      %5483 = vmatpush.bf16.msra.mxu0 %v5358
      %5484 = vmatpush.bf16.msra.mxu0 %v5354
      %5485 = vmatpush.bf16.msra.mxu0 %v5350
      %5486 = vmatmul.bf16.gmra.mxu0 %v5078
      %v5487 = vpop.f32.mrf.mxu0
      %v5488 = vadd.f32 %v5150, %v5487
      %v5489 = vpop.f32.mrf.mxu0
      %v5490 = vadd.f32 %v5150, %v5489
      %5491 = vmatmul.bf16.gmra.mxu0 %v5080
      %v5492 = vpop.f32.mrf.mxu0
      %v5493 = vadd.f32 %v5150, %v5492
      %v5494 = vpop.f32.mrf.mxu0
      %v5495 = vadd.f32 %v5150, %v5494
      %5496 = vmatmul.bf16.gmra.mxu0 %v5082
      %v5497 = vpop.f32.mrf.mxu0
      %v5498 = vadd.f32 %v5150, %v5497
      %v5499 = vpop.f32.mrf.mxu0
      %v5500 = vadd.f32 %v5150, %v5499
      %5501 = vdwg.mxu0
      %5502 = vmatpush.bf16.msra.mxu0 %v5410
      %5503 = vmatpush.bf16.msra.mxu0 %v5406
      %5504 = vmatpush.bf16.msra.mxu0 %v5402
      %5505 = vmatpush.bf16.msra.mxu0 %v5398
      %5506 = vmatpush.bf16.msra.mxu0 %v5394
      %5507 = vmatpush.bf16.msra.mxu0 %v5390
      %5508 = vmatpush.bf16.msra.mxu0 %v5386
      %5509 = vmatpush.bf16.msra.mxu0 %v5382
      %5510 = vmatmul.bf16.gmra.mxu0 %v5079
      %v5511 = vpop.f32.mrf.mxu0
      %v5512 = vadd.f32 %v5488, %v5511
      %v5513 = vpop.f32.mrf.mxu0
      %v5514 = vadd.f32 %v5490, %v5513
      %5515 = vmatmul.bf16.gmra.mxu0 %v5081
      %v5516 = vpop.f32.mrf.mxu0
      %v5517 = vadd.f32 %v5493, %v5516
      %v5518 = vpop.f32.mrf.mxu0
      %v5519 = vadd.f32 %v5495, %v5518
      %5520 = vmatmul.bf16.gmra.mxu0 %v5083
      %v5521 = vpop.f32.mrf.mxu0
      %v5522 = vadd.f32 %v5498, %v5521
      %v5523 = vpop.f32.mrf.mxu0
      %v5524 = vadd.f32 %v5500, %v5523
      %5525 = vdwg.mxu0
      %5526 = vmatpush.bf16.msra.mxu0 %v5379
      %5527 = vmatpush.bf16.msra.mxu0 %v5375
      %5528 = vmatpush.bf16.msra.mxu0 %v5371
      %5529 = vmatpush.bf16.msra.mxu0 %v5367
      %5530 = vmatpush.bf16.msra.mxu0 %v5363
      %5531 = vmatpush.bf16.msra.mxu0 %v5359
      %5532 = vmatpush.bf16.msra.mxu0 %v5355
      %5533 = vmatpush.bf16.msra.mxu0 %v5351
      %5534 = vmatmul.bf16.gmra.mxu0 %v5078
      %v5535 = vpop.f32.mrf.mxu0
      %v5536 = vadd.f32 %v5151, %v5535
      %v5537 = vpop.f32.mrf.mxu0
      %v5538 = vadd.f32 %v5151, %v5537
      %5539 = vmatmul.bf16.gmra.mxu0 %v5080
      %v5540 = vpop.f32.mrf.mxu0
      %v5541 = vadd.f32 %v5151, %v5540
      %v5542 = vpop.f32.mrf.mxu0
      %v5543 = vadd.f32 %v5151, %v5542
      %5544 = vmatmul.bf16.gmra.mxu0 %v5082
      %v5545 = vpop.f32.mrf.mxu0
      %v5546 = vadd.f32 %v5151, %v5545
      %v5547 = vpop.f32.mrf.mxu0
      %v5548 = vadd.f32 %v5151, %v5547
      %5549 = vdwg.mxu0
      %5550 = vmatpush.bf16.msra.mxu0 %v5411
      %5551 = vmatpush.bf16.msra.mxu0 %v5407
      %5552 = vmatpush.bf16.msra.mxu0 %v5403
      %5553 = vmatpush.bf16.msra.mxu0 %v5399
      %5554 = vmatpush.bf16.msra.mxu0 %v5395
      %5555 = vmatpush.bf16.msra.mxu0 %v5391
      %5556 = vmatpush.bf16.msra.mxu0 %v5387
      %5557 = vmatpush.bf16.msra.mxu0 %v5383
      %5558 = vmatmul.bf16.gmra.mxu0 %v5079
      %v5559 = vpop.f32.mrf.mxu0
      %v5560 = vadd.f32 %v5536, %v5559
      %v5561 = vpop.f32.mrf.mxu0
      %v5562 = vadd.f32 %v5538, %v5561
      %5563 = vmatmul.bf16.gmra.mxu0 %v5081
      %v5564 = vpop.f32.mrf.mxu0
      %v5565 = vadd.f32 %v5541, %v5564
      %v5566 = vpop.f32.mrf.mxu0
      %v5567 = vadd.f32 %v5543, %v5566
      %5568 = vmatmul.bf16.gmra.mxu0 %v5083
      %v5569 = vpop.f32.mrf.mxu0
      %v5570 = vadd.f32 %v5546, %v5569
      %v5571 = vpop.f32.mrf.mxu0
      %v5572 = vadd.f32 %v5548, %v5571
      %5573 = vdwg.mxu0
      %5574 = vmatpush.bf16.msra.mxu0 %v5380
      %5575 = vmatpush.bf16.msra.mxu0 %v5376
      %5576 = vmatpush.bf16.msra.mxu0 %v5372
      %5577 = vmatpush.bf16.msra.mxu0 %v5368
      %5578 = vmatpush.bf16.msra.mxu0 %v5364
      %5579 = vmatpush.bf16.msra.mxu0 %v5360
      %5580 = vmatpush.bf16.msra.mxu0 %v5356
      %5581 = vmatpush.bf16.msra.mxu0 %v5352
      %5582 = vmatmul.bf16.gmra.mxu0 %v5078
      %v5583 = vpop.f32.mrf.mxu0
      %v5584 = vadd.f32 %v5152, %v5583
      %v5585 = vpop.f32.mrf.mxu0
      %v5586 = vadd.f32 %v5152, %v5585
      %5587 = vmatmul.bf16.gmra.mxu0 %v5080
      %v5588 = vpop.f32.mrf.mxu0
      %v5589 = vadd.f32 %v5152, %v5588
      %v5590 = vpop.f32.mrf.mxu0
      %v5591 = vadd.f32 %v5152, %v5590
      %5592 = vmatmul.bf16.gmra.mxu0 %v5082
      %v5593 = vpop.f32.mrf.mxu0
      %v5594 = vadd.f32 %v5152, %v5593
      %v5595 = vpop.f32.mrf.mxu0
      %v5596 = vadd.f32 %v5152, %v5595
      %5597 = vdwg.mxu0
      %5598 = vmatpush.bf16.msra.mxu0 %v5412
      %5599 = vmatpush.bf16.msra.mxu0 %v5408
      %5600 = vmatpush.bf16.msra.mxu0 %v5404
      %5601 = vmatpush.bf16.msra.mxu0 %v5400
      %5602 = vmatpush.bf16.msra.mxu0 %v5396
      %5603 = vmatpush.bf16.msra.mxu0 %v5392
      %5604 = vmatpush.bf16.msra.mxu0 %v5388
      %5605 = vmatpush.bf16.msra.mxu0 %v5384
      %5606 = vmatmul.bf16.gmra.mxu0 %v5079
      %v5607 = vpop.f32.mrf.mxu0
      %v5608 = vadd.f32 %v5584, %v5607
      %v5609 = vpop.f32.mrf.mxu0
      %v5610 = vadd.f32 %v5586, %v5609
      %5611 = vmatmul.bf16.gmra.mxu0 %v5081
      %v5612 = vpop.f32.mrf.mxu0
      %v5613 = vadd.f32 %v5589, %v5612
      %v5614 = vpop.f32.mrf.mxu0
      %v5615 = vadd.f32 %v5591, %v5614
      %5616 = vmatmul.bf16.gmra.mxu0 %v5083
      %v5617 = vpop.f32.mrf.mxu0
      %v5618 = vadd.f32 %v5594, %v5617
      %v5619 = vpop.f32.mrf.mxu0
      %v5620 = vadd.f32 %v5596, %v5619
      %5621 = vdwg.mxu0
      %5622 = vmatpush.bf16.msra.mxu0 %v5381
      %5623 = vmatpush.bf16.msra.mxu0 %v5377
      %5624 = vmatpush.bf16.msra.mxu0 %v5373
      %5625 = vmatpush.bf16.msra.mxu0 %v5369
      %5626 = vmatpush.bf16.msra.mxu0 %v5365
      %5627 = vmatpush.bf16.msra.mxu0 %v5361
      %5628 = vmatpush.bf16.msra.mxu0 %v5357
      %5629 = vmatpush.bf16.msra.mxu0 %v5353
      %5630 = vmatmul.bf16.gmra.mxu0 %v5078
      %v5631 = vpop.f32.mrf.mxu0
      %v5632 = vadd.f32 %v5153, %v5631
      %v5633 = vpop.f32.mrf.mxu0
      %v5634 = vadd.f32 %v5153, %v5633
      %5635 = vmatmul.bf16.gmra.mxu0 %v5080
      %v5636 = vpop.f32.mrf.mxu0
      %v5637 = vadd.f32 %v5153, %v5636
      %v5638 = vpop.f32.mrf.mxu0
      %v5639 = vadd.f32 %v5153, %v5638
      %5640 = vmatmul.bf16.gmra.mxu0 %v5082
      %v5641 = vpop.f32.mrf.mxu0
      %v5642 = vadd.f32 %v5153, %v5641
      %v5643 = vpop.f32.mrf.mxu0
      %v5644 = vadd.f32 %v5153, %v5643
      %5645 = vdwg.mxu0
      %5646 = vmatpush.bf16.msra.mxu0 %v5413
      %5647 = vmatpush.bf16.msra.mxu0 %v5409
      %5648 = vmatpush.bf16.msra.mxu0 %v5405
      %5649 = vmatpush.bf16.msra.mxu0 %v5401
      %5650 = vmatpush.bf16.msra.mxu0 %v5397
      %5651 = vmatpush.bf16.msra.mxu0 %v5393
      %5652 = vmatpush.bf16.msra.mxu0 %v5389
      %5653 = vmatpush.bf16.msra.mxu0 %v5385
      %5654 = vmatmul.bf16.gmra.mxu0 %v5079
      %v5655 = vpop.f32.mrf.mxu0
      %v5656 = vadd.f32 %v5632, %v5655
      %v5657 = vpop.f32.mrf.mxu0
      %v5658 = vadd.f32 %v5634, %v5657
      %5659 = vmatmul.bf16.gmra.mxu0 %v5081
      %v5660 = vpop.f32.mrf.mxu0
      %v5661 = vadd.f32 %v5637, %v5660
      %v5662 = vpop.f32.mrf.mxu0
      %v5663 = vadd.f32 %v5639, %v5662
      %5664 = vmatmul.bf16.gmra.mxu0 %v5083
      %v5665 = vpop.f32.mrf.mxu0
      %v5666 = vadd.f32 %v5642, %v5665
      %v5667 = vpop.f32.mrf.mxu0
      %v5668 = vadd.f32 %v5644, %v5667
      %5669 = vdwg.mxu0
      %v5670 = vmul.f32 %v5512, %v5512
      %v5671 = vmul.f32 %v5560, %v5560
      %v5672 = vmul.f32 %v5608, %v5608
      %v5673 = vmul.f32 %v5656, %v5656
      %v5674 = vmul.f32 %v5514, %v5514
      %v5675 = vmul.f32 %v5562, %v5562
      %v5676 = vmul.f32 %v5610, %v5610
      %v5677 = vmul.f32 %v5658, %v5658
      %v5678 = vmul.f32 %v5517, %v5517
      %v5679 = vmul.f32 %v5565, %v5565
      %v5680 = vmul.f32 %v5613, %v5613
      %v5681 = vmul.f32 %v5661, %v5661
      %v5682 = vmul.f32 %v5519, %v5519
      %v5683 = vmul.f32 %v5567, %v5567
      %v5684 = vmul.f32 %v5615, %v5615
      %v5685 = vmul.f32 %v5663, %v5663
      %v5686 = vmul.f32 %v5522, %v5522
      %v5687 = vmul.f32 %v5570, %v5570
      %v5688 = vmul.f32 %v5618, %v5618
      %v5689 = vmul.f32 %v5666, %v5666
      %v5690 = vmul.f32 %v5524, %v5524
      %v5691 = vmul.f32 %v5572, %v5572
      %v5692 = vmul.f32 %v5620, %v5620
      %v5693 = vmul.f32 %v5668, %v5668
      %v5694 = vmul.f32 %v5512, %v5670
      %v5695 = vmul.f32 %v5560, %v5671
      %v5696 = vmul.f32 %v5608, %v5672
      %v5697 = vmul.f32 %v5656, %v5673
      %v5698 = vmul.f32 %v5514, %v5674
      %v5699 = vmul.f32 %v5562, %v5675
      %v5700 = vmul.f32 %v5610, %v5676
      %v5701 = vmul.f32 %v5658, %v5677
      %v5702 = vmul.f32 %v5517, %v5678
      %v5703 = vmul.f32 %v5565, %v5679
      %v5704 = vmul.f32 %v5613, %v5680
      %v5705 = vmul.f32 %v5661, %v5681
      %v5706 = vmul.f32 %v5519, %v5682
      %v5707 = vmul.f32 %v5567, %v5683
      %v5708 = vmul.f32 %v5615, %v5684
      %v5709 = vmul.f32 %v5663, %v5685
      %v5710 = vmul.f32 %v5522, %v5686
      %v5711 = vmul.f32 %v5570, %v5687
      %v5712 = vmul.f32 %v5618, %v5688
      %v5713 = vmul.f32 %v5666, %v5689
      %v5714 = vmul.f32 %v5524, %v5690
      %v5715 = vmul.f32 %v5572, %v5691
      %v5716 = vmul.f32 %v5620, %v5692
      %v5717 = vmul.f32 %v5668, %v5693
      %v5718 = vmul.f32 %v5694, 0.044715
      %v5719 = vmul.f32 %v5695, 0.044715
      %v5720 = vmul.f32 %v5696, 0.044715
      %v5721 = vmul.f32 %v5697, 0.044715
      %v5722 = vmul.f32 %v5698, 0.044715
      %v5723 = vmul.f32 %v5699, 0.044715
      %v5724 = vmul.f32 %v5700, 0.044715
      %v5725 = vmul.f32 %v5701, 0.044715
      %v5726 = vmul.f32 %v5702, 0.044715
      %v5727 = vmul.f32 %v5703, 0.044715
      %v5728 = vmul.f32 %v5704, 0.044715
      %v5729 = vmul.f32 %v5705, 0.044715
      %v5730 = vmul.f32 %v5706, 0.044715
      %v5731 = vmul.f32 %v5707, 0.044715
      %v5732 = vmul.f32 %v5708, 0.044715
      %v5733 = vmul.f32 %v5709, 0.044715
      %v5734 = vmul.f32 %v5710, 0.044715
      %v5735 = vmul.f32 %v5711, 0.044715
      %v5736 = vmul.f32 %v5712, 0.044715
      %v5737 = vmul.f32 %v5713, 0.044715
      %v5738 = vmul.f32 %v5714, 0.044715
      %v5739 = vmul.f32 %v5715, 0.044715
      %v5740 = vmul.f32 %v5716, 0.044715
      %v5741 = vmul.f32 %v5717, 0.044715
      %v5742 = vadd.f32 %v5512, %v5718
      %v5743 = vadd.f32 %v5560, %v5719
      %v5744 = vadd.f32 %v5608, %v5720
      %v5745 = vadd.f32 %v5656, %v5721
      %v5746 = vadd.f32 %v5514, %v5722
      %v5747 = vadd.f32 %v5562, %v5723
      %v5748 = vadd.f32 %v5610, %v5724
      %v5749 = vadd.f32 %v5658, %v5725
      %v5750 = vadd.f32 %v5517, %v5726
      %v5751 = vadd.f32 %v5565, %v5727
      %v5752 = vadd.f32 %v5613, %v5728
      %v5753 = vadd.f32 %v5661, %v5729
      %v5754 = vadd.f32 %v5519, %v5730
      %v5755 = vadd.f32 %v5567, %v5731
      %v5756 = vadd.f32 %v5615, %v5732
      %v5757 = vadd.f32 %v5663, %v5733
      %v5758 = vadd.f32 %v5522, %v5734
      %v5759 = vadd.f32 %v5570, %v5735
      %v5760 = vadd.f32 %v5618, %v5736
      %v5761 = vadd.f32 %v5666, %v5737
      %v5762 = vadd.f32 %v5524, %v5738
      %v5763 = vadd.f32 %v5572, %v5739
      %v5764 = vadd.f32 %v5620, %v5740
      %v5765 = vadd.f32 %v5668, %v5741
      %v5766 = vmul.f32 %v5742, 0.7978846
      %v5767 = vmul.f32 %v5743, 0.7978846
      %v5768 = vmul.f32 %v5744, 0.7978846
      %v5769 = vmul.f32 %v5745, 0.7978846
      %v5770 = vmul.f32 %v5746, 0.7978846
      %v5771 = vmul.f32 %v5747, 0.7978846
      %v5772 = vmul.f32 %v5748, 0.7978846
      %v5773 = vmul.f32 %v5749, 0.7978846
      %v5774 = vmul.f32 %v5750, 0.7978846
      %v5775 = vmul.f32 %v5751, 0.7978846
      %v5776 = vmul.f32 %v5752, 0.7978846
      %v5777 = vmul.f32 %v5753, 0.7978846
      %v5778 = vmul.f32 %v5754, 0.7978846
      %v5779 = vmul.f32 %v5755, 0.7978846
      %v5780 = vmul.f32 %v5756, 0.7978846
      %v5781 = vmul.f32 %v5757, 0.7978846
      %v5782 = vmul.f32 %v5758, 0.7978846
      %v5783 = vmul.f32 %v5759, 0.7978846
      %v5784 = vmul.f32 %v5760, 0.7978846
      %v5785 = vmul.f32 %v5761, 0.7978846
      %v5786 = vmul.f32 %v5762, 0.7978846
      %v5787 = vmul.f32 %v5763, 0.7978846
      %v5788 = vmul.f32 %v5764, 0.7978846
      %v5789 = vmul.f32 %v5765, 0.7978846
      %v5790 = vtanh.pop %v5766
      %v5791 = vtanh.pop %v5767
      %v5792 = vtanh.pop %v5768
      %v5793 = vtanh.pop %v5769
      %v5794 = vtanh.pop %v5770
      %v5795 = vtanh.pop %v5771
      %v5796 = vtanh.pop %v5772
      %v5797 = vtanh.pop %v5773
      %v5798 = vtanh.pop %v5774
      %v5799 = vtanh.pop %v5775
      %v5800 = vtanh.pop %v5776
      %v5801 = vtanh.pop %v5777
      %v5802 = vtanh.pop %v5778
      %v5803 = vtanh.pop %v5779
      %v5804 = vtanh.pop %v5780
      %v5805 = vtanh.pop %v5781
      %v5806 = vtanh.pop %v5782
      %v5807 = vtanh.pop %v5783
      %v5808 = vtanh.pop %v5784
      %v5809 = vtanh.pop %v5785
      %v5810 = vtanh.pop %v5786
      %v5811 = vtanh.pop %v5787
      %v5812 = vtanh.pop %v5788
      %v5813 = vtanh.pop %v5789
      %v5814 = vadd.f32 %v5790, 1.0
      %v5815 = vadd.f32 %v5791, 1.0
      %v5816 = vadd.f32 %v5792, 1.0
      %v5817 = vadd.f32 %v5793, 1.0
      %v5818 = vadd.f32 %v5794, 1.0
      %v5819 = vadd.f32 %v5795, 1.0
      %v5820 = vadd.f32 %v5796, 1.0
      %v5821 = vadd.f32 %v5797, 1.0
      %v5822 = vadd.f32 %v5798, 1.0
      %v5823 = vadd.f32 %v5799, 1.0
      %v5824 = vadd.f32 %v5800, 1.0
      %v5825 = vadd.f32 %v5801, 1.0
      %v5826 = vadd.f32 %v5802, 1.0
      %v5827 = vadd.f32 %v5803, 1.0
      %v5828 = vadd.f32 %v5804, 1.0
      %v5829 = vadd.f32 %v5805, 1.0
      %v5830 = vadd.f32 %v5806, 1.0
      %v5831 = vadd.f32 %v5807, 1.0
      %v5832 = vadd.f32 %v5808, 1.0
      %v5833 = vadd.f32 %v5809, 1.0
      %v5834 = vadd.f32 %v5810, 1.0
      %v5835 = vadd.f32 %v5811, 1.0
      %v5836 = vadd.f32 %v5812, 1.0
      %v5837 = vadd.f32 %v5813, 1.0
      %v5838 = vmul.f32 %v5814, 0.5
      %v5839 = vmul.f32 %v5815, 0.5
      %v5840 = vmul.f32 %v5816, 0.5
      %v5841 = vmul.f32 %v5817, 0.5
      %v5842 = vmul.f32 %v5818, 0.5
      %v5843 = vmul.f32 %v5819, 0.5
      %v5844 = vmul.f32 %v5820, 0.5
      %v5845 = vmul.f32 %v5821, 0.5
      %v5846 = vmul.f32 %v5822, 0.5
      %v5847 = vmul.f32 %v5823, 0.5
      %v5848 = vmul.f32 %v5824, 0.5
      %v5849 = vmul.f32 %v5825, 0.5
      %v5850 = vmul.f32 %v5826, 0.5
      %v5851 = vmul.f32 %v5827, 0.5
      %v5852 = vmul.f32 %v5828, 0.5
      %v5853 = vmul.f32 %v5829, 0.5
      %v5854 = vmul.f32 %v5830, 0.5
      %v5855 = vmul.f32 %v5831, 0.5
      %v5856 = vmul.f32 %v5832, 0.5
      %v5857 = vmul.f32 %v5833, 0.5
      %v5858 = vmul.f32 %v5834, 0.5
      %v5859 = vmul.f32 %v5835, 0.5
      %v5860 = vmul.f32 %v5836, 0.5
      %v5861 = vmul.f32 %v5837, 0.5
      %v5862 = vmul.f32 %v5512, %v5838
      %v5863 = vmul.f32 %v5560, %v5839
      %v5864 = vmul.f32 %v5608, %v5840
      %v5865 = vmul.f32 %v5656, %v5841
      %v5866 = vmul.f32 %v5514, %v5842
      %v5867 = vmul.f32 %v5562, %v5843
      %v5868 = vmul.f32 %v5610, %v5844
      %v5869 = vmul.f32 %v5658, %v5845
      %v5870 = vmul.f32 %v5517, %v5846
      %v5871 = vmul.f32 %v5565, %v5847
      %v5872 = vmul.f32 %v5613, %v5848
      %v5873 = vmul.f32 %v5661, %v5849
      %v5874 = vmul.f32 %v5519, %v5850
      %v5875 = vmul.f32 %v5567, %v5851
      %v5876 = vmul.f32 %v5615, %v5852
      %v5877 = vmul.f32 %v5663, %v5853
      %v5878 = vmul.f32 %v5522, %v5854
      %v5879 = vmul.f32 %v5570, %v5855
      %v5880 = vmul.f32 %v5618, %v5856
      %v5881 = vmul.f32 %v5666, %v5857
      %v5882 = vmul.f32 %v5524, %v5858
      %v5883 = vmul.f32 %v5572, %v5859
      %v5884 = vmul.f32 %v5620, %v5860
      %v5885 = vmul.f32 %v5668, %v5861
      %v5886 = vpack.c.bf16 %v5866, %v5862
      %v5887 = vpack.c.bf16 %v5867, %v5863
      %v5888 = vpack.c.bf16 %v5868, %v5864
      %v5889 = vpack.c.bf16 %v5869, %v5865
      %v5890 = vpack.c.bf16 %v5874, %v5870
      %v5891 = vpack.c.bf16 %v5875, %v5871
      %v5892 = vpack.c.bf16 %v5876, %v5872
      %v5893 = vpack.c.bf16 %v5877, %v5873
      %v5894 = vpack.c.bf16 %v5882, %v5878
      %v5895 = vpack.c.bf16 %v5883, %v5879
      %v5896 = vpack.c.bf16 %v5884, %v5880
      %v5897 = vpack.c.bf16 %v5885, %v5881
      %v5898 = vld [vmem:[%s848] sm:$0xff]
      %v5899 = vld [vmem:[%s848 + $0x8] sm:$0xff]
      %v5900 = vld [vmem:[%s848 + $0x10] sm:$0xff]
      %v5901 = vld [vmem:[%s848 + $0x18] sm:$0xff]
      %v5902 = vld [vmem:[%s848 + $0x20] sm:$0xff]
      %v5903 = vld [vmem:[%s848 + $0x28] sm:$0xff]
      %v5904 = vld [vmem:[%s848 + $0x30] sm:$0xff]
      %v5905 = vld [vmem:[%s848 + $0x38] sm:$0xff]
      %v5906 = vld [vmem:[%s848 + $0x40] sm:$0xff]
      %v5907 = vld [vmem:[%s848 + $0x48] sm:$0xff]
      %v5908 = vld [vmem:[%s848 + $0x50] sm:$0xff]
      %v5909 = vld [vmem:[%s848 + $0x58] sm:$0xff]
      %v5910 = vld [vmem:[%s848 + $0x60] sm:$0xff]
      %v5911 = vld [vmem:[%s848 + $0x68] sm:$0xff]
      %v5912 = vld [vmem:[%s848 + $0x70] sm:$0xff]
      %v5913 = vld [vmem:[%s848 + $0x78] sm:$0xff]
      %v5914 = vld [vmem:[%s848 + $0x80] sm:$0xff]
      %v5915 = vld [vmem:[%s848 + $0x88] sm:$0xff]
      %v5916 = vld [vmem:[%s848 + $0x90] sm:$0xff]
      %v5917 = vld [vmem:[%s848 + $0x98] sm:$0xff]
      %v5918 = vld [vmem:[%s848 + $0xa0] sm:$0xff]
      %v5919 = vld [vmem:[%s848 + $0xa8] sm:$0xff]
      %v5920 = vld [vmem:[%s848 + $0xb0] sm:$0xff]
      %v5921 = vld [vmem:[%s848 + $0xb8] sm:$0xff]
      %v5922 = vld [vmem:[%s848 + $0xc0] sm:$0xff]
      %v5923 = vld [vmem:[%s848 + $0xc8] sm:$0xff]
      %v5924 = vld [vmem:[%s848 + $0xd0] sm:$0xff]
      %v5925 = vld [vmem:[%s848 + $0xd8] sm:$0xff]
      %v5926 = vld [vmem:[%s848 + $0xe0] sm:$0xff]
      %v5927 = vld [vmem:[%s848 + $0xe8] sm:$0xff]
      %v5928 = vld [vmem:[%s848 + $0xf0] sm:$0xff]
      %v5929 = vld [vmem:[%s848 + $0xf8] sm:$0xff]
      %v5930 = vld [vmem:[%s848 + $0x100] sm:$0xff]
      %v5931 = vld [vmem:[%s848 + $0x108] sm:$0xff]
      %v5932 = vld [vmem:[%s848 + $0x110] sm:$0xff]
      %v5933 = vld [vmem:[%s848 + $0x118] sm:$0xff]
      %v5934 = vld [vmem:[%s848 + $0x120] sm:$0xff]
      %v5935 = vld [vmem:[%s848 + $0x128] sm:$0xff]
      %v5936 = vld [vmem:[%s848 + $0x130] sm:$0xff]
      %v5937 = vld [vmem:[%s848 + $0x138] sm:$0xff]
      %v5938 = vld [vmem:[%s848 + $0x140] sm:$0xff]
      %v5939 = vld [vmem:[%s848 + $0x148] sm:$0xff]
      %v5940 = vld [vmem:[%s848 + $0x150] sm:$0xff]
      %v5941 = vld [vmem:[%s848 + $0x158] sm:$0xff]
      %v5942 = vld [vmem:[%s848 + $0x160] sm:$0xff]
      %v5943 = vld [vmem:[%s848 + $0x168] sm:$0xff]
      %v5944 = vld [vmem:[%s848 + $0x170] sm:$0xff]
      %v5945 = vld [vmem:[%s848 + $0x178] sm:$0xff]
      %v5946 = vld [vmem:[%s848 + $0x180] sm:$0xff]
      %v5947 = vld [vmem:[%s848 + $0x188] sm:$0xff]
      %v5948 = vld [vmem:[%s848 + $0x190] sm:$0xff]
      %v5949 = vld [vmem:[%s848 + $0x198] sm:$0xff]
      %v5950 = vld [vmem:[%s848 + $0x1a0] sm:$0xff]
      %v5951 = vld [vmem:[%s848 + $0x1a8] sm:$0xff]
      %v5952 = vld [vmem:[%s848 + $0x1b0] sm:$0xff]
      %v5953 = vld [vmem:[%s848 + $0x1b8] sm:$0xff]
      %v5954 = vld [vmem:[%s848 + $0x1c0] sm:$0xff]
      %v5955 = vld [vmem:[%s848 + $0x1c8] sm:$0xff]
      %v5956 = vld [vmem:[%s848 + $0x1d0] sm:$0xff]
      %v5957 = vld [vmem:[%s848 + $0x1d8] sm:$0xff]
      %v5958 = vld [vmem:[%s848 + $0x1e0] sm:$0xff]
      %v5959 = vld [vmem:[%s848 + $0x1e8] sm:$0xff]
      %v5960 = vld [vmem:[%s848 + $0x1f0] sm:$0xff]
      %v5961 = vld [vmem:[%s848 + $0x1f8] sm:$0xff]
      %v6026 = vunpack.c.l.b16 %v5898
      %v6027 = vunpack.c.h.b16 %v5898
      %v6028 = vunpack.c.l.b16 %v5899
      %v6029 = vunpack.c.h.b16 %v5899
      %v6030 = vunpack.c.l.b16 %v5900
      %v6031 = vunpack.c.h.b16 %v5900
      %v6032 = vunpack.c.l.b16 %v5901
      %v6033 = vunpack.c.h.b16 %v5901
      %v6034 = vunpack.c.l.b16 %v5902
      %v6035 = vunpack.c.h.b16 %v5902
      %v6036 = vunpack.c.l.b16 %v5903
      %v6037 = vunpack.c.h.b16 %v5903
      %v6038 = vunpack.c.l.b16 %v5904
      %v6039 = vunpack.c.h.b16 %v5904
      %v6040 = vunpack.c.l.b16 %v5905
      %v6041 = vunpack.c.h.b16 %v5905
      %v6042 = vunpack.c.l.b16 %v5906
      %v6043 = vunpack.c.h.b16 %v5906
      %v6044 = vunpack.c.l.b16 %v5907
      %v6045 = vunpack.c.h.b16 %v5907
      %v6046 = vunpack.c.l.b16 %v5908
      %v6047 = vunpack.c.h.b16 %v5908
      %v6048 = vunpack.c.l.b16 %v5909
      %v6049 = vunpack.c.h.b16 %v5909
      %v6050 = vunpack.c.l.b16 %v5910
      %v6051 = vunpack.c.h.b16 %v5910
      %v6052 = vunpack.c.l.b16 %v5911
      %v6053 = vunpack.c.h.b16 %v5911
      %v6054 = vunpack.c.l.b16 %v5912
      %v6055 = vunpack.c.h.b16 %v5912
      %v6056 = vunpack.c.l.b16 %v5913
      %v6057 = vunpack.c.h.b16 %v5913
      %v6058 = vunpack.c.l.b16 %v5914
      %v6059 = vunpack.c.h.b16 %v5914
      %v6060 = vunpack.c.l.b16 %v5915
      %v6061 = vunpack.c.h.b16 %v5915
      %v6062 = vunpack.c.l.b16 %v5916
      %v6063 = vunpack.c.h.b16 %v5916
      %v6064 = vunpack.c.l.b16 %v5917
      %v6065 = vunpack.c.h.b16 %v5917
      %v6066 = vunpack.c.l.b16 %v5918
      %v6067 = vunpack.c.h.b16 %v5918
      %v6068 = vunpack.c.l.b16 %v5919
      %v6069 = vunpack.c.h.b16 %v5919
      %v6070 = vunpack.c.l.b16 %v5920
      %v6071 = vunpack.c.h.b16 %v5920
      %v6072 = vunpack.c.l.b16 %v5921
      %v6073 = vunpack.c.h.b16 %v5921
      %v6074 = vunpack.c.l.b16 %v5922
      %v6075 = vunpack.c.h.b16 %v5922
      %v6076 = vunpack.c.l.b16 %v5923
      %v6077 = vunpack.c.h.b16 %v5923
      %v6078 = vunpack.c.l.b16 %v5924
      %v6079 = vunpack.c.h.b16 %v5924
      %v6080 = vunpack.c.l.b16 %v5925
      %v6081 = vunpack.c.h.b16 %v5925
      %v6082 = vunpack.c.l.b16 %v5926
      %v6083 = vunpack.c.h.b16 %v5926
      %v6084 = vunpack.c.l.b16 %v5927
      %v6085 = vunpack.c.h.b16 %v5927
      %v6086 = vunpack.c.l.b16 %v5928
      %v6087 = vunpack.c.h.b16 %v5928
      %v6088 = vunpack.c.l.b16 %v5929
      %v6089 = vunpack.c.h.b16 %v5929
      %v6090 = vunpack.c.l.b16 %v5930
      %v6091 = vunpack.c.h.b16 %v5930
      %v6092 = vunpack.c.l.b16 %v5931
      %v6093 = vunpack.c.h.b16 %v5931
      %v6094 = vunpack.c.l.b16 %v5932
      %v6095 = vunpack.c.h.b16 %v5932
      %v6096 = vunpack.c.l.b16 %v5933
      %v6097 = vunpack.c.h.b16 %v5933
      %v6098 = vunpack.c.l.b16 %v5934
      %v6099 = vunpack.c.h.b16 %v5934
      %v6100 = vunpack.c.l.b16 %v5935
      %v6101 = vunpack.c.h.b16 %v5935
      %v6102 = vunpack.c.l.b16 %v5936
      %v6103 = vunpack.c.h.b16 %v5936
      %v6104 = vunpack.c.l.b16 %v5937
      %v6105 = vunpack.c.h.b16 %v5937
      %v6106 = vunpack.c.l.b16 %v5938
      %v6107 = vunpack.c.h.b16 %v5938
      %v6108 = vunpack.c.l.b16 %v5939
      %v6109 = vunpack.c.h.b16 %v5939
      %v6110 = vunpack.c.l.b16 %v5940
      %v6111 = vunpack.c.h.b16 %v5940
      %v6112 = vunpack.c.l.b16 %v5941
      %v6113 = vunpack.c.h.b16 %v5941
      %v6114 = vunpack.c.l.b16 %v5942
      %v6115 = vunpack.c.h.b16 %v5942
      %v6116 = vunpack.c.l.b16 %v5943
      %v6117 = vunpack.c.h.b16 %v5943
      %v6118 = vunpack.c.l.b16 %v5944
      %v6119 = vunpack.c.h.b16 %v5944
      %v6120 = vunpack.c.l.b16 %v5945
      %v6121 = vunpack.c.h.b16 %v5945
      %v6122 = vunpack.c.l.b16 %v5946
      %v6123 = vunpack.c.h.b16 %v5946
      %v6124 = vunpack.c.l.b16 %v5947
      %v6125 = vunpack.c.h.b16 %v5947
      %v6126 = vunpack.c.l.b16 %v5948
      %v6127 = vunpack.c.h.b16 %v5948
      %v6128 = vunpack.c.l.b16 %v5949
      %v6129 = vunpack.c.h.b16 %v5949
      %v6130 = vunpack.c.l.b16 %v5950
      %v6131 = vunpack.c.h.b16 %v5950
      %v6132 = vunpack.c.l.b16 %v5951
      %v6133 = vunpack.c.h.b16 %v5951
      %v6134 = vunpack.c.l.b16 %v5952
      %v6135 = vunpack.c.h.b16 %v5952
      %v6136 = vunpack.c.l.b16 %v5953
      %v6137 = vunpack.c.h.b16 %v5953
      %v6138 = vunpack.c.l.b16 %v5954
      %v6139 = vunpack.c.h.b16 %v5954
      %v6140 = vunpack.c.l.b16 %v5955
      %v6141 = vunpack.c.h.b16 %v5955
      %v6142 = vunpack.c.l.b16 %v5956
      %v6143 = vunpack.c.h.b16 %v5956
      %v6144 = vunpack.c.l.b16 %v5957
      %v6145 = vunpack.c.h.b16 %v5957
      %v6146 = vunpack.c.l.b16 %v5958
      %v6147 = vunpack.c.h.b16 %v5958
      %v6148 = vunpack.c.l.b16 %v5959
      %v6149 = vunpack.c.h.b16 %v5959
      %v6150 = vunpack.c.l.b16 %v5960
      %v6151 = vunpack.c.h.b16 %v5960
      %v6152 = vunpack.c.l.b16 %v5961
      %v6153 = vunpack.c.h.b16 %v5961
      %v6154 = vpack.c.b16 %v6028, %v6026
      %v6155 = vpack.c.b16 %v6029, %v6027
      %v6156 = vpack.c.b16 %v6032, %v6030
      %v6157 = vpack.c.b16 %v6033, %v6031
      %v6158 = vpack.c.b16 %v6036, %v6034
      %v6159 = vpack.c.b16 %v6037, %v6035
      %v6160 = vpack.c.b16 %v6040, %v6038
      %v6161 = vpack.c.b16 %v6041, %v6039
      %v6162 = vpack.c.b16 %v6044, %v6042
      %v6163 = vpack.c.b16 %v6045, %v6043
      %v6164 = vpack.c.b16 %v6048, %v6046
      %v6165 = vpack.c.b16 %v6049, %v6047
      %v6166 = vpack.c.b16 %v6052, %v6050
      %v6167 = vpack.c.b16 %v6053, %v6051
      %v6168 = vpack.c.b16 %v6056, %v6054
      %v6169 = vpack.c.b16 %v6057, %v6055
      %v6170 = vpack.c.b16 %v6060, %v6058
      %v6171 = vpack.c.b16 %v6061, %v6059
      %v6172 = vpack.c.b16 %v6064, %v6062
      %v6173 = vpack.c.b16 %v6065, %v6063
      %v6174 = vpack.c.b16 %v6068, %v6066
      %v6175 = vpack.c.b16 %v6069, %v6067
      %v6176 = vpack.c.b16 %v6072, %v6070
      %v6177 = vpack.c.b16 %v6073, %v6071
      %v6178 = vpack.c.b16 %v6076, %v6074
      %v6179 = vpack.c.b16 %v6077, %v6075
      %v6180 = vpack.c.b16 %v6080, %v6078
      %v6181 = vpack.c.b16 %v6081, %v6079
      %v6182 = vpack.c.b16 %v6084, %v6082
      %v6183 = vpack.c.b16 %v6085, %v6083
      %v6184 = vpack.c.b16 %v6088, %v6086
      %v6185 = vpack.c.b16 %v6089, %v6087
      %v6186 = vpack.c.b16 %v6092, %v6090
      %v6187 = vpack.c.b16 %v6093, %v6091
      %v6188 = vpack.c.b16 %v6096, %v6094
      %v6189 = vpack.c.b16 %v6097, %v6095
      %v6190 = vpack.c.b16 %v6100, %v6098
      %v6191 = vpack.c.b16 %v6101, %v6099
      %v6192 = vpack.c.b16 %v6104, %v6102
      %v6193 = vpack.c.b16 %v6105, %v6103
      %v6194 = vpack.c.b16 %v6108, %v6106
      %v6195 = vpack.c.b16 %v6109, %v6107
      %v6196 = vpack.c.b16 %v6112, %v6110
      %v6197 = vpack.c.b16 %v6113, %v6111
      %v6198 = vpack.c.b16 %v6116, %v6114
      %v6199 = vpack.c.b16 %v6117, %v6115
      %v6200 = vpack.c.b16 %v6120, %v6118
      %v6201 = vpack.c.b16 %v6121, %v6119
      %v6202 = vpack.c.b16 %v6124, %v6122
      %v6203 = vpack.c.b16 %v6125, %v6123
      %v6204 = vpack.c.b16 %v6128, %v6126
      %v6205 = vpack.c.b16 %v6129, %v6127
      %v6206 = vpack.c.b16 %v6132, %v6130
      %v6207 = vpack.c.b16 %v6133, %v6131
      %v6208 = vpack.c.b16 %v6136, %v6134
      %v6209 = vpack.c.b16 %v6137, %v6135
      %v6210 = vpack.c.b16 %v6140, %v6138
      %v6211 = vpack.c.b16 %v6141, %v6139
      %v6212 = vpack.c.b16 %v6144, %v6142
      %v6213 = vpack.c.b16 %v6145, %v6143
      %v6214 = vpack.c.b16 %v6148, %v6146
      %v6215 = vpack.c.b16 %v6149, %v6147
      %v6216 = vpack.c.b16 %v6152, %v6150
      %v6217 = vpack.c.b16 %v6153, %v6151
      %6282 = vmatpush.bf16.msra.mxu0 %v6168
      %6283 = vmatpush.bf16.msra.mxu0 %v6166
      %6284 = vmatpush.bf16.msra.mxu0 %v6164
      %6285 = vmatpush.bf16.msra.mxu0 %v6162
      %6286 = vmatpush.bf16.msra.mxu0 %v6160
      %6287 = vmatpush.bf16.msra.mxu0 %v6158
      %6288 = vmatpush.bf16.msra.mxu0 %v6156
      %6289 = vmatpush.bf16.msra.mxu0 %v6154
      %6290 = vmatmul.bf16.gmra.mxu0 %v5886
      %v6291 = vpop.f32.mrf.mxu0
      %v6292 = vadd.f32 0.0, %v6291
      %v6293 = vpop.f32.mrf.mxu0
      %v6294 = vadd.f32 0.0, %v6293
      %6295 = vmatmul.bf16.gmra.mxu0 %v5890
      %v6296 = vpop.f32.mrf.mxu0
      %v6297 = vadd.f32 0.0, %v6296
      %v6298 = vpop.f32.mrf.mxu0
      %v6299 = vadd.f32 0.0, %v6298
      %6300 = vmatmul.bf16.gmra.mxu0 %v5894
      %v6301 = vpop.f32.mrf.mxu0
      %v6302 = vadd.f32 0.0, %v6301
      %v6303 = vpop.f32.mrf.mxu0
      %v6304 = vadd.f32 0.0, %v6303
      %6305 = vdwg.mxu0
      %6306 = vmatpush.bf16.msra.mxu0 %v6184
      %6307 = vmatpush.bf16.msra.mxu0 %v6182
      %6308 = vmatpush.bf16.msra.mxu0 %v6180
      %6309 = vmatpush.bf16.msra.mxu0 %v6178
      %6310 = vmatpush.bf16.msra.mxu0 %v6176
      %6311 = vmatpush.bf16.msra.mxu0 %v6174
      %6312 = vmatpush.bf16.msra.mxu0 %v6172
      %6313 = vmatpush.bf16.msra.mxu0 %v6170
      %6314 = vmatmul.bf16.gmra.mxu0 %v5887
      %v6315 = vpop.f32.mrf.mxu0
      %v6316 = vadd.f32 %v6292, %v6315
      %v6317 = vpop.f32.mrf.mxu0
      %v6318 = vadd.f32 %v6294, %v6317
      %6319 = vmatmul.bf16.gmra.mxu0 %v5891
      %v6320 = vpop.f32.mrf.mxu0
      %v6321 = vadd.f32 %v6297, %v6320
      %v6322 = vpop.f32.mrf.mxu0
      %v6323 = vadd.f32 %v6299, %v6322
      %6324 = vmatmul.bf16.gmra.mxu0 %v5895
      %v6325 = vpop.f32.mrf.mxu0
      %v6326 = vadd.f32 %v6302, %v6325
      %v6327 = vpop.f32.mrf.mxu0
      %v6328 = vadd.f32 %v6304, %v6327
      %6329 = vdwg.mxu0
      %6330 = vmatpush.bf16.msra.mxu0 %v6200
      %6331 = vmatpush.bf16.msra.mxu0 %v6198
      %6332 = vmatpush.bf16.msra.mxu0 %v6196
      %6333 = vmatpush.bf16.msra.mxu0 %v6194
      %6334 = vmatpush.bf16.msra.mxu0 %v6192
      %6335 = vmatpush.bf16.msra.mxu0 %v6190
      %6336 = vmatpush.bf16.msra.mxu0 %v6188
      %6337 = vmatpush.bf16.msra.mxu0 %v6186
      %6338 = vmatmul.bf16.gmra.mxu0 %v5888
      %v6339 = vpop.f32.mrf.mxu0
      %v6340 = vadd.f32 %v6316, %v6339
      %v6341 = vpop.f32.mrf.mxu0
      %v6342 = vadd.f32 %v6318, %v6341
      %6343 = vmatmul.bf16.gmra.mxu0 %v5892
      %v6344 = vpop.f32.mrf.mxu0
      %v6345 = vadd.f32 %v6321, %v6344
      %v6346 = vpop.f32.mrf.mxu0
      %v6347 = vadd.f32 %v6323, %v6346
      %6348 = vmatmul.bf16.gmra.mxu0 %v5896
      %v6349 = vpop.f32.mrf.mxu0
      %v6350 = vadd.f32 %v6326, %v6349
      %v6351 = vpop.f32.mrf.mxu0
      %v6352 = vadd.f32 %v6328, %v6351
      %6353 = vdwg.mxu0
      %6354 = vmatpush.bf16.msra.mxu0 %v6216
      %6355 = vmatpush.bf16.msra.mxu0 %v6214
      %6356 = vmatpush.bf16.msra.mxu0 %v6212
      %6357 = vmatpush.bf16.msra.mxu0 %v6210
      %6358 = vmatpush.bf16.msra.mxu0 %v6208
      %6359 = vmatpush.bf16.msra.mxu0 %v6206
      %6360 = vmatpush.bf16.msra.mxu0 %v6204
      %6361 = vmatpush.bf16.msra.mxu0 %v6202
      %6362 = vmatmul.bf16.gmra.mxu0 %v5889
      %v6363 = vpop.f32.mrf.mxu0
      %v6364 = vadd.f32 %v6340, %v6363
      %v6365 = vpop.f32.mrf.mxu0
      %v6366 = vadd.f32 %v6342, %v6365
      %6367 = vmatmul.bf16.gmra.mxu0 %v5893
      %v6368 = vpop.f32.mrf.mxu0
      %v6369 = vadd.f32 %v6345, %v6368
      %v6370 = vpop.f32.mrf.mxu0
      %v6371 = vadd.f32 %v6347, %v6370
      %6372 = vmatmul.bf16.gmra.mxu0 %v5897
      %v6373 = vpop.f32.mrf.mxu0
      %v6374 = vadd.f32 %v6350, %v6373
      %v6375 = vpop.f32.mrf.mxu0
      %v6376 = vadd.f32 %v6352, %v6375
      %6377 = vdwg.mxu0
      %6378 = vmatpush.bf16.msra.mxu0 %v6169
      %6379 = vmatpush.bf16.msra.mxu0 %v6167
      %6380 = vmatpush.bf16.msra.mxu0 %v6165
      %6381 = vmatpush.bf16.msra.mxu0 %v6163
      %6382 = vmatpush.bf16.msra.mxu0 %v6161
      %6383 = vmatpush.bf16.msra.mxu0 %v6159
      %6384 = vmatpush.bf16.msra.mxu0 %v6157
      %6385 = vmatpush.bf16.msra.mxu0 %v6155
      %6386 = vmatmul.bf16.gmra.mxu0 %v5886
      %v6387 = vpop.f32.mrf.mxu0
      %v6388 = vadd.f32 0.0, %v6387
      %v6389 = vpop.f32.mrf.mxu0
      %v6390 = vadd.f32 0.0, %v6389
      %6391 = vmatmul.bf16.gmra.mxu0 %v5890
      %v6392 = vpop.f32.mrf.mxu0
      %v6393 = vadd.f32 0.0, %v6392
      %v6394 = vpop.f32.mrf.mxu0
      %v6395 = vadd.f32 0.0, %v6394
      %6396 = vmatmul.bf16.gmra.mxu0 %v5894
      %v6397 = vpop.f32.mrf.mxu0
      %v6398 = vadd.f32 0.0, %v6397
      %v6399 = vpop.f32.mrf.mxu0
      %v6400 = vadd.f32 0.0, %v6399
      %6401 = vdwg.mxu0
      %6402 = vmatpush.bf16.msra.mxu0 %v6185
      %6403 = vmatpush.bf16.msra.mxu0 %v6183
      %6404 = vmatpush.bf16.msra.mxu0 %v6181
      %6405 = vmatpush.bf16.msra.mxu0 %v6179
      %6406 = vmatpush.bf16.msra.mxu0 %v6177
      %6407 = vmatpush.bf16.msra.mxu0 %v6175
      %6408 = vmatpush.bf16.msra.mxu0 %v6173
      %6409 = vmatpush.bf16.msra.mxu0 %v6171
      %6410 = vmatmul.bf16.gmra.mxu0 %v5887
      %v6411 = vpop.f32.mrf.mxu0
      %v6412 = vadd.f32 %v6388, %v6411
      %v6413 = vpop.f32.mrf.mxu0
      %v6414 = vadd.f32 %v6390, %v6413
      %6415 = vmatmul.bf16.gmra.mxu0 %v5891
      %v6416 = vpop.f32.mrf.mxu0
      %v6417 = vadd.f32 %v6393, %v6416
      %v6418 = vpop.f32.mrf.mxu0
      %v6419 = vadd.f32 %v6395, %v6418
      %6420 = vmatmul.bf16.gmra.mxu0 %v5895
      %v6421 = vpop.f32.mrf.mxu0
      %v6422 = vadd.f32 %v6398, %v6421
      %v6423 = vpop.f32.mrf.mxu0
      %v6424 = vadd.f32 %v6400, %v6423
      %6425 = vdwg.mxu0
      %6426 = vmatpush.bf16.msra.mxu0 %v6201
      %6427 = vmatpush.bf16.msra.mxu0 %v6199
      %6428 = vmatpush.bf16.msra.mxu0 %v6197
      %6429 = vmatpush.bf16.msra.mxu0 %v6195
      %6430 = vmatpush.bf16.msra.mxu0 %v6193
      %6431 = vmatpush.bf16.msra.mxu0 %v6191
      %6432 = vmatpush.bf16.msra.mxu0 %v6189
      %6433 = vmatpush.bf16.msra.mxu0 %v6187
      %6434 = vmatmul.bf16.gmra.mxu0 %v5888
      %v6435 = vpop.f32.mrf.mxu0
      %v6436 = vadd.f32 %v6412, %v6435
      %v6437 = vpop.f32.mrf.mxu0
      %v6438 = vadd.f32 %v6414, %v6437
      %6439 = vmatmul.bf16.gmra.mxu0 %v5892
      %v6440 = vpop.f32.mrf.mxu0
      %v6441 = vadd.f32 %v6417, %v6440
      %v6442 = vpop.f32.mrf.mxu0
      %v6443 = vadd.f32 %v6419, %v6442
      %6444 = vmatmul.bf16.gmra.mxu0 %v5896
      %v6445 = vpop.f32.mrf.mxu0
      %v6446 = vadd.f32 %v6422, %v6445
      %v6447 = vpop.f32.mrf.mxu0
      %v6448 = vadd.f32 %v6424, %v6447
      %6449 = vdwg.mxu0
      %6450 = vmatpush.bf16.msra.mxu0 %v6217
      %6451 = vmatpush.bf16.msra.mxu0 %v6215
      %6452 = vmatpush.bf16.msra.mxu0 %v6213
      %6453 = vmatpush.bf16.msra.mxu0 %v6211
      %6454 = vmatpush.bf16.msra.mxu0 %v6209
      %6455 = vmatpush.bf16.msra.mxu0 %v6207
      %6456 = vmatpush.bf16.msra.mxu0 %v6205
      %6457 = vmatpush.bf16.msra.mxu0 %v6203
      %6458 = vmatmul.bf16.gmra.mxu0 %v5889
      %v6459 = vpop.f32.mrf.mxu0
      %v6460 = vadd.f32 %v6436, %v6459
      %v6461 = vpop.f32.mrf.mxu0
      %v6462 = vadd.f32 %v6438, %v6461
      %6463 = vmatmul.bf16.gmra.mxu0 %v5893
      %v6464 = vpop.f32.mrf.mxu0
      %v6465 = vadd.f32 %v6441, %v6464
      %v6466 = vpop.f32.mrf.mxu0
      %v6467 = vadd.f32 %v6443, %v6466
      %6468 = vmatmul.bf16.gmra.mxu0 %v5897
      %v6469 = vpop.f32.mrf.mxu0
      %v6470 = vadd.f32 %v6446, %v6469
      %v6471 = vpop.f32.mrf.mxu0
      %v6472 = vadd.f32 %v6448, %v6471
      %6473 = vdwg.mxu0
      %v6474 = vadd.f32 %v4868, %v6364
      %v6475 = vadd.f32 %v4869, %v6460
      %v6476 = vadd.f32 %v4870, %v6366
      %v6477 = vadd.f32 %v4871, %v6462
      %v6478 = vadd.f32 %v4872, %v6369
      %v6479 = vadd.f32 %v4873, %v6465
      %v6480 = vadd.f32 %v4874, %v6371
      %v6481 = vadd.f32 %v4875, %v6467
      %v6482 = vadd.f32 %v4876, %v6374
      %v6483 = vadd.f32 %v4877, %v6470
      %v6484 = vadd.f32 %v4878, %v6376
      %v6485 = vadd.f32 %v4879, %v6472
      %v6486 = vld [vmem:[%s852] sm:$0x3]
      %v6488 = vperm.slane %v6486, 0
      %v6489 = vperm.slane %v6486, 1
      %v6492 = vadd.f32 %v6474, %v6488
      %v6493 = vadd.f32 %v6475, %v6489
      %v6494 = vadd.f32 %v6476, %v6488
      %v6495 = vadd.f32 %v6477, %v6489
      %v6496 = vadd.f32 %v6478, %v6488
      %v6497 = vadd.f32 %v6479, %v6489
      %v6498 = vadd.f32 %v6480, %v6488
      %v6499 = vadd.f32 %v6481, %v6489
      %v6500 = vadd.f32 %v6482, %v6488
      %v6501 = vadd.f32 %v6483, %v6489
      %v6502 = vadd.f32 %v6484, %v6488
      %v6503 = vadd.f32 %v6485, %v6489
      %6504 = vst [vmem:[#allocation2] sm:$0xff] %v6492
      %6505 = vst [vmem:[#allocation2 + $0x8] sm:$0xff] %v6493
      %6506 = vst [vmem:[#allocation2 + $0x10] sm:$0xff] %v6494
      %6507 = vst [vmem:[#allocation2 + $0x18] sm:$0xff] %v6495
      %6508 = vst [vmem:[#allocation2 + $0x20] sm:$0xff] %v6496
      %6509 = vst [vmem:[#allocation2 + $0x28] sm:$0xff] %v6497
      %6510 = vst [vmem:[#allocation2 + $0x30] sm:$0xff] %v6498
      %6511 = vst [vmem:[#allocation2 + $0x38] sm:$0xff] %v6499
      %6512 = vst [vmem:[#allocation2 + $0x40] sm:$0xff] %v6500
      %6513 = vst [vmem:[#allocation2 + $0x48] sm:$0xff] %v6501
      %6514 = vst [vmem:[#allocation2 + $0x50] sm:$0xff] %v6502
      %6515 = vst [vmem:[#allocation2 + $0x58] sm:$0xff] %v6503
      %p6516 = scmp.eq.s32.totalorder %s36, 1
      // Predicated region
      $region105: #{vit_encoder_forward.1} parent=99 // pred_check
        %p6517 = pneg %p6516
      $region106: #{vit_encoder_forward.1} parent=99 // pred_check_branch
        %6519 = sbr.rel (%p6517) target = $region108
      $region107: #{vit_encoder_forward.1} parent=99 // pred_region
        %v6520 = vld [vmem:[%s15] sm:$0x3]
        %v6521 = vld [vmem:[%s16] sm:$0x3]
        %v6522 = vadd.f32 %v6492, %v6493
        %6523 = vadd.xlane.f32.xlu0 %v6522
        %v6524 = vpop.xlane.xlu0 %6523
        %v6525 = vadd.f32 %v6494, %v6495
        %6526 = vadd.xlane.f32.xlu0 %v6525
        %v6527 = vpop.xlane.xlu0 %6526
        %v6528 = vadd.f32 %v6496, %v6497
        %6529 = vadd.xlane.f32.xlu0 %v6528
        %v6530 = vpop.xlane.xlu0 %6529
        %v6531 = vadd.f32 %v6498, %v6499
        %6532 = vadd.xlane.f32.xlu0 %v6531
        %v6533 = vpop.xlane.xlu0 %6532
        %v6534 = vadd.f32 %v6500, %v6501
        %6535 = vadd.xlane.f32.xlu0 %v6534
        %v6536 = vpop.xlane.xlu0 %6535
        %v6537 = vadd.f32 %v6502, %v6503
        %6538 = vadd.xlane.f32.xlu0 %v6537
        %v6539 = vpop.xlane.xlu0 %6538
        %v6540 = vmul.f32 %v6524, %v1897
        %v6541 = vmul.f32 %v6527, %v1897
        %v6542 = vmul.f32 %v6530, %v1897
        %v6543 = vmul.f32 %v6533, %v1897
        %v6544 = vmul.f32 %v6536, %v1897
        %v6545 = vmul.f32 %v6539, %v1897
        %v6546 = vsub.f32 %v6492, %v6540
        %v6547 = vsub.f32 %v6493, %v6540
        %v6548 = vsub.f32 %v6494, %v6541
        %v6549 = vsub.f32 %v6495, %v6541
        %v6550 = vsub.f32 %v6496, %v6542
        %v6551 = vsub.f32 %v6497, %v6542
        %v6552 = vsub.f32 %v6498, %v6543
        %v6553 = vsub.f32 %v6499, %v6543
        %v6554 = vsub.f32 %v6500, %v6544
        %v6555 = vsub.f32 %v6501, %v6544
        %v6556 = vsub.f32 %v6502, %v6545
        %v6557 = vsub.f32 %v6503, %v6545
        %v6558 = vmul.f32 %v6546, %v6546
        %v6559 = vmul.f32 %v6547, %v6547
        %v6560 = vmul.f32 %v6548, %v6548
        %v6561 = vmul.f32 %v6549, %v6549
        %v6562 = vmul.f32 %v6550, %v6550
        %v6563 = vmul.f32 %v6551, %v6551
        %v6564 = vmul.f32 %v6552, %v6552
        %v6565 = vmul.f32 %v6553, %v6553
        %v6566 = vmul.f32 %v6554, %v6554
        %v6567 = vmul.f32 %v6555, %v6555
        %v6568 = vmul.f32 %v6556, %v6556
        %v6569 = vmul.f32 %v6557, %v6557
        %v6570 = vadd.f32 %v6558, %v6559
        %6571 = vadd.xlane.f32.xlu0 %v6570
        %v6572 = vpop.xlane.xlu0 %6571
        %v6573 = vadd.f32 %v6560, %v6561
        %6574 = vadd.xlane.f32.xlu0 %v6573
        %v6575 = vpop.xlane.xlu0 %6574
        %v6576 = vadd.f32 %v6562, %v6563
        %6577 = vadd.xlane.f32.xlu0 %v6576
        %v6578 = vpop.xlane.xlu0 %6577
        %v6579 = vadd.f32 %v6564, %v6565
        %6580 = vadd.xlane.f32.xlu0 %v6579
        %v6581 = vpop.xlane.xlu0 %6580
        %v6582 = vadd.f32 %v6566, %v6567
        %6583 = vadd.xlane.f32.xlu0 %v6582
        %v6584 = vpop.xlane.xlu0 %6583
        %v6585 = vadd.f32 %v6568, %v6569
        %6586 = vadd.xlane.f32.xlu0 %v6585
        %v6587 = vpop.xlane.xlu0 %6586
        %v6588 = vmul.f32 %v6572, %v1897
        %v6589 = vmul.f32 %v6575, %v1897
        %v6590 = vmul.f32 %v6578, %v1897
        %v6591 = vmul.f32 %v6581, %v1897
        %v6592 = vmul.f32 %v6584, %v1897
        %v6593 = vmul.f32 %v6587, %v1897
        %v6594 = vadd.f32 %v6588, 1e-06
        %v6595 = vadd.f32 %v6589, 1e-06
        %v6596 = vadd.f32 %v6590, 1e-06
        %v6597 = vadd.f32 %v6591, 1e-06
        %v6598 = vadd.f32 %v6592, 1e-06
        %v6599 = vadd.f32 %v6593, 1e-06
        %v6600 = vrsqrt.pop %v6594
        %v6601 = vmul.f32 %v6600, %v6594
        %v6602 = vmul.f32 %v6601, %v6600
        %v6603 = vmul.f32 0.5, %v6602
        %v6604 = vsub.f32 1.5, %v6603
        %v6605 = vmul.f32 %v6600, %v6604
        %vm6606 = vweird.f32 %v6594
        %vm6607 = vweird.f32 %v6600
        %vm6608 = vmor %vm6606, %vm6607
        %v6609 = vsel %vm6608, %v6600, %v6605
        %v6610 = vrsqrt.pop %v6595
        %v6611 = vmul.f32 %v6610, %v6595
        %v6612 = vmul.f32 %v6611, %v6610
        %v6613 = vmul.f32 0.5, %v6612
        %v6614 = vsub.f32 1.5, %v6613
        %v6615 = vmul.f32 %v6610, %v6614
        %vm6616 = vweird.f32 %v6595
        %vm6617 = vweird.f32 %v6610
        %vm6618 = vmor %vm6616, %vm6617
        %v6619 = vsel %vm6618, %v6610, %v6615
        %v6620 = vrsqrt.pop %v6596
        %v6621 = vmul.f32 %v6620, %v6596
        %v6622 = vmul.f32 %v6621, %v6620
        %v6623 = vmul.f32 0.5, %v6622
        %v6624 = vsub.f32 1.5, %v6623
        %v6625 = vmul.f32 %v6620, %v6624
        %vm6626 = vweird.f32 %v6596
        %vm6627 = vweird.f32 %v6620
        %vm6628 = vmor %vm6626, %vm6627
        %v6629 = vsel %vm6628, %v6620, %v6625
        %v6630 = vrsqrt.pop %v6597
        %v6631 = vmul.f32 %v6630, %v6597
        %v6632 = vmul.f32 %v6631, %v6630
        %v6633 = vmul.f32 0.5, %v6632
        %v6634 = vsub.f32 1.5, %v6633
        %v6635 = vmul.f32 %v6630, %v6634
        %vm6636 = vweird.f32 %v6597
        %vm6637 = vweird.f32 %v6630
        %vm6638 = vmor %vm6636, %vm6637
        %v6639 = vsel %vm6638, %v6630, %v6635
        %v6640 = vrsqrt.pop %v6598
        %v6641 = vmul.f32 %v6640, %v6598
        %v6642 = vmul.f32 %v6641, %v6640
        %v6643 = vmul.f32 0.5, %v6642
        %v6644 = vsub.f32 1.5, %v6643
        %v6645 = vmul.f32 %v6640, %v6644
        %vm6646 = vweird.f32 %v6598
        %vm6647 = vweird.f32 %v6640
        %vm6648 = vmor %vm6646, %vm6647
        %v6649 = vsel %vm6648, %v6640, %v6645
        %v6650 = vrsqrt.pop %v6599
        %v6651 = vmul.f32 %v6650, %v6599
        %v6652 = vmul.f32 %v6651, %v6650
        %v6653 = vmul.f32 0.5, %v6652
        %v6654 = vsub.f32 1.5, %v6653
        %v6655 = vmul.f32 %v6650, %v6654
        %vm6656 = vweird.f32 %v6599
        %vm6657 = vweird.f32 %v6650
        %vm6658 = vmor %vm6656, %vm6657
        %v6659 = vsel %vm6658, %v6650, %v6655
        %v6660 = vmul.f32 %v6546, %v6609
        %v6661 = vmul.f32 %v6547, %v6609
        %v6662 = vmul.f32 %v6548, %v6619
        %v6663 = vmul.f32 %v6549, %v6619
        %v6664 = vmul.f32 %v6550, %v6629
        %v6665 = vmul.f32 %v6551, %v6629
        %v6666 = vmul.f32 %v6552, %v6639
        %v6667 = vmul.f32 %v6553, %v6639
        %v6668 = vmul.f32 %v6554, %v6649
        %v6669 = vmul.f32 %v6555, %v6649
        %v6670 = vmul.f32 %v6556, %v6659
        %v6671 = vmul.f32 %v6557, %v6659
        %v6673 = vperm.slane %v6520, 0
        %v6674 = vperm.slane %v6520, 1
        %v6677 = vmul.f32 %v6660, %v6673
        %v6678 = vmul.f32 %v6661, %v6674
        %v6679 = vmul.f32 %v6662, %v6673
        %v6680 = vmul.f32 %v6663, %v6674
        %v6681 = vmul.f32 %v6664, %v6673
        %v6682 = vmul.f32 %v6665, %v6674
        %v6683 = vmul.f32 %v6666, %v6673
        %v6684 = vmul.f32 %v6667, %v6674
        %v6685 = vmul.f32 %v6668, %v6673
        %v6686 = vmul.f32 %v6669, %v6674
        %v6687 = vmul.f32 %v6670, %v6673
        %v6688 = vmul.f32 %v6671, %v6674
        %v6690 = vperm.slane %v6521, 0
        %v6691 = vperm.slane %v6521, 1
        %v6694 = vadd.f32 %v6677, %v6690
        %v6695 = vadd.f32 %v6678, %v6691
        %v6696 = vadd.f32 %v6679, %v6690
        %v6697 = vadd.f32 %v6680, %v6691
        %v6698 = vadd.f32 %v6681, %v6690
        %v6699 = vadd.f32 %v6682, %v6691
        %v6700 = vadd.f32 %v6683, %v6690
        %v6701 = vadd.f32 %v6684, %v6691
        %v6702 = vadd.f32 %v6685, %v6690
        %v6703 = vadd.f32 %v6686, %v6691
        %v6704 = vadd.f32 %v6687, %v6690
        %v6705 = vadd.f32 %v6688, %v6691
        %v6706 = vld [vmem:[%s17] sm:$0xff]
        %v6707 = vld [vmem:[%s17 + $0x8] sm:$0x3]
        %vm6708 = vcmask 392192
        %v6710 = vsel %vm6708, %v6706, 0
        %v6713 = vsel %vm6708, %v6707, 0
        %6715 = vmatpush.msra.mxu0 0.0
        %6716 = vmatpush.msra.mxu0 0.0
        %6717 = vmatpush.msra.mxu0 0.0
        %6718 = vmatpush.msra.mxu0 0.0
        %6719 = vmatpush.msra.mxu0 0.0
        %6720 = vmatpush.msra.mxu0 0.0
        %6721 = vmatpush.msra.mxu0 0.0
        %6722 = vmatpush.msra.mxu0 0.0
        %6723 = vmatpush.msra.mxu0 0.0
        %6724 = vmatpush.msra.mxu0 0.0
        %6725 = vmatpush.msra.mxu0 %v6704
        %6726 = vmatpush.msra.mxu0 %v6702
        %6727 = vmatpush.msra.mxu0 %v6700
        %6728 = vmatpush.msra.mxu0 %v6698
        %6729 = vmatpush.msra.mxu0 %v6696
        %6730 = vmatpush.msra.mxu0 %v6694
        %6731 = vmatmul.f32.gmra.mxu0 %v6710
        %v6732 = vpop.f32.mrf.mxu0
        %v6733 = vadd.f32 0.0, %v6732
        %6734 = vmatmul.f32.gmra.mxu0 %v6713
        %v6735 = vpop.f32.mrf.mxu0
        %v6736 = vadd.f32 0.0, %v6735
        %6737 = vdwg.mxu0
        %6738 = vmatpush.msra.mxu0 0.0
        %6739 = vmatpush.msra.mxu0 0.0
        %6740 = vmatpush.msra.mxu0 0.0
        %6741 = vmatpush.msra.mxu0 0.0
        %6742 = vmatpush.msra.mxu0 0.0
        %6743 = vmatpush.msra.mxu0 0.0
        %6744 = vmatpush.msra.mxu0 0.0
        %6745 = vmatpush.msra.mxu0 0.0
        %6746 = vmatpush.msra.mxu0 0.0
        %6747 = vmatpush.msra.mxu0 0.0
        %6748 = vmatpush.msra.mxu0 %v6705
        %6749 = vmatpush.msra.mxu0 %v6703
        %6750 = vmatpush.msra.mxu0 %v6701
        %6751 = vmatpush.msra.mxu0 %v6699
        %6752 = vmatpush.msra.mxu0 %v6697
        %6753 = vmatpush.msra.mxu0 %v6695
        %6754 = vmatmul.f32.gmra.mxu0 %v6710
        %v6755 = vpop.f32.mrf.mxu0
        %v6756 = vadd.f32 0.0, %v6755
        %6757 = vmatmul.f32.gmra.mxu0 %v6713
        %v6758 = vpop.f32.mrf.mxu0
        %v6759 = vadd.f32 0.0, %v6758
        %6760 = vdwg.mxu0
        %v6761 = vpack.c.bf16 %v6736, %v6733
        %v6762 = vpack.c.bf16 %v6759, %v6756
        %v6763 = vld [vmem:[%s18] sm:$0xff]
        %v6764 = vld [vmem:[%s18 + $0x8] sm:$0xff]
        %v6765 = vld [vmem:[%s18 + $0x10] sm:$0xff]
        %v6766 = vld [vmem:[%s18 + $0x18] sm:$0xff]
        %v6767 = vld [vmem:[%s18 + $0x20] sm:$0xff]
        %v6768 = vld [vmem:[%s18 + $0x28] sm:$0xff]
        %v6769 = vld [vmem:[%s18 + $0x30] sm:$0xff]
        %v6770 = vld [vmem:[%s18 + $0x38] sm:$0xff]
        %v6771 = vld [vmem:[%s18 + $0x40] sm:$0xff]
        %v6772 = vld [vmem:[%s18 + $0x48] sm:$0xff]
        %v6773 = vld [vmem:[%s18 + $0x50] sm:$0xff]
        %v6774 = vld [vmem:[%s18 + $0x58] sm:$0xff]
        %v6775 = vld [vmem:[%s18 + $0x60] sm:$0xff]
        %v6776 = vld [vmem:[%s18 + $0x68] sm:$0xff]
        %v6777 = vld [vmem:[%s18 + $0x70] sm:$0xff]
        %v6778 = vld [vmem:[%s18 + $0x78] sm:$0xff]
        %v6779 = vld [vmem:[%s18 + $0x80] sm:$0xff]
        %v6780 = vld [vmem:[%s18 + $0x88] sm:$0xff]
        %v6781 = vld [vmem:[%s18 + $0x90] sm:$0xff]
        %v6782 = vld [vmem:[%s18 + $0x98] sm:$0xff]
        %v6783 = vld [vmem:[%s18 + $0xa0] sm:$0xff]
        %v6784 = vld [vmem:[%s18 + $0xa8] sm:$0xff]
        %v6785 = vld [vmem:[%s18 + $0xb0] sm:$0xff]
        %v6786 = vld [vmem:[%s18 + $0xb8] sm:$0xff]
        %v6787 = vld [vmem:[%s18 + $0xc0] sm:$0xff]
        %v6788 = vld [vmem:[%s18 + $0xc8] sm:$0xff]
        %v6789 = vld [vmem:[%s18 + $0xd0] sm:$0xff]
        %v6790 = vld [vmem:[%s18 + $0xd8] sm:$0xff]
        %v6791 = vld [vmem:[%s18 + $0xe0] sm:$0xff]
        %v6792 = vld [vmem:[%s18 + $0xe8] sm:$0xff]
        %v6793 = vld [vmem:[%s18 + $0xf0] sm:$0xff]
        %v6794 = vld [vmem:[%s18 + $0xf8] sm:$0xff]
        %v6795 = vld [vmem:[%s18 + $0x100] sm:$0xff]
        %v6796 = vld [vmem:[%s18 + $0x108] sm:$0xff]
        %v6797 = vld [vmem:[%s18 + $0x110] sm:$0xff]
        %v6798 = vld [vmem:[%s18 + $0x118] sm:$0xff]
        %v6799 = vld [vmem:[%s18 + $0x120] sm:$0xff]
        %v6800 = vld [vmem:[%s18 + $0x128] sm:$0xff]
        %v6801 = vld [vmem:[%s18 + $0x130] sm:$0xff]
        %v6802 = vld [vmem:[%s18 + $0x138] sm:$0xff]
        %v6803 = vld [vmem:[%s18 + $0x140] sm:$0xff]
        %v6804 = vld [vmem:[%s18 + $0x148] sm:$0xff]
        %v6805 = vld [vmem:[%s18 + $0x150] sm:$0xff]
        %v6806 = vld [vmem:[%s18 + $0x158] sm:$0xff]
        %v6807 = vld [vmem:[%s18 + $0x160] sm:$0xff]
        %v6808 = vld [vmem:[%s18 + $0x168] sm:$0xff]
        %v6809 = vld [vmem:[%s18 + $0x170] sm:$0xff]
        %v6810 = vld [vmem:[%s18 + $0x178] sm:$0xff]
        %v6811 = vld [vmem:[%s18 + $0x180] sm:$0xff]
        %v6812 = vld [vmem:[%s18 + $0x188] sm:$0xff]
        %v6813 = vld [vmem:[%s18 + $0x190] sm:$0xff]
        %v6814 = vld [vmem:[%s18 + $0x198] sm:$0xff]
        %v6815 = vld [vmem:[%s18 + $0x1a0] sm:$0xff]
        %v6816 = vld [vmem:[%s18 + $0x1a8] sm:$0xff]
        %v6817 = vld [vmem:[%s18 + $0x1b0] sm:$0xff]
        %v6818 = vld [vmem:[%s18 + $0x1b8] sm:$0xff]
        %v6819 = vld [vmem:[%s18 + $0x1c0] sm:$0xff]
        %v6820 = vld [vmem:[%s18 + $0x1c8] sm:$0xff]
        %v6821 = vld [vmem:[%s18 + $0x1d0] sm:$0xff]
        %v6822 = vld [vmem:[%s18 + $0x1d8] sm:$0xff]
        %v6823 = vld [vmem:[%s18 + $0x1e0] sm:$0xff]
        %v6824 = vld [vmem:[%s18 + $0x1e8] sm:$0xff]
        %v6825 = vld [vmem:[%s18 + $0x1f0] sm:$0xff]
        %v6826 = vld [vmem:[%s18 + $0x1f8] sm:$0xff]
        %v6827 = vld [vmem:[%s19] sm:$0xf]
        %v6829 = vperm.slane %v6827, 0
        %v6830 = vperm.slane %v6827, 1
        %v6831 = vperm.slane %v6827, 2
        %v6832 = vperm.slane %v6827, 3
        %v6901 = vunpack.c.l.b16 %v6763
        %v6902 = vunpack.c.h.b16 %v6763
        %v6903 = vunpack.c.l.b16 %v6764
        %v6904 = vunpack.c.h.b16 %v6764
        %v6905 = vunpack.c.l.b16 %v6765
        %v6906 = vunpack.c.h.b16 %v6765
        %v6907 = vunpack.c.l.b16 %v6766
        %v6908 = vunpack.c.h.b16 %v6766
        %v6909 = vunpack.c.l.b16 %v6767
        %v6910 = vunpack.c.h.b16 %v6767
        %v6911 = vunpack.c.l.b16 %v6768
        %v6912 = vunpack.c.h.b16 %v6768
        %v6913 = vunpack.c.l.b16 %v6769
        %v6914 = vunpack.c.h.b16 %v6769
        %v6915 = vunpack.c.l.b16 %v6770
        %v6916 = vunpack.c.h.b16 %v6770
        %v6917 = vunpack.c.l.b16 %v6771
        %v6918 = vunpack.c.h.b16 %v6771
        %v6919 = vunpack.c.l.b16 %v6772
        %v6920 = vunpack.c.h.b16 %v6772
        %v6921 = vunpack.c.l.b16 %v6773
        %v6922 = vunpack.c.h.b16 %v6773
        %v6923 = vunpack.c.l.b16 %v6774
        %v6924 = vunpack.c.h.b16 %v6774
        %v6925 = vunpack.c.l.b16 %v6775
        %v6926 = vunpack.c.h.b16 %v6775
        %v6927 = vunpack.c.l.b16 %v6776
        %v6928 = vunpack.c.h.b16 %v6776
        %v6929 = vunpack.c.l.b16 %v6777
        %v6930 = vunpack.c.h.b16 %v6777
        %v6931 = vunpack.c.l.b16 %v6778
        %v6932 = vunpack.c.h.b16 %v6778
        %v6933 = vunpack.c.l.b16 %v6779
        %v6934 = vunpack.c.h.b16 %v6779
        %v6935 = vunpack.c.l.b16 %v6780
        %v6936 = vunpack.c.h.b16 %v6780
        %v6937 = vunpack.c.l.b16 %v6781
        %v6938 = vunpack.c.h.b16 %v6781
        %v6939 = vunpack.c.l.b16 %v6782
        %v6940 = vunpack.c.h.b16 %v6782
        %v6941 = vunpack.c.l.b16 %v6783
        %v6942 = vunpack.c.h.b16 %v6783
        %v6943 = vunpack.c.l.b16 %v6784
        %v6944 = vunpack.c.h.b16 %v6784
        %v6945 = vunpack.c.l.b16 %v6785
        %v6946 = vunpack.c.h.b16 %v6785
        %v6947 = vunpack.c.l.b16 %v6786
        %v6948 = vunpack.c.h.b16 %v6786
        %v6949 = vunpack.c.l.b16 %v6787
        %v6950 = vunpack.c.h.b16 %v6787
        %v6951 = vunpack.c.l.b16 %v6788
        %v6952 = vunpack.c.h.b16 %v6788
        %v6953 = vunpack.c.l.b16 %v6789
        %v6954 = vunpack.c.h.b16 %v6789
        %v6955 = vunpack.c.l.b16 %v6790
        %v6956 = vunpack.c.h.b16 %v6790
        %v6957 = vunpack.c.l.b16 %v6791
        %v6958 = vunpack.c.h.b16 %v6791
        %v6959 = vunpack.c.l.b16 %v6792
        %v6960 = vunpack.c.h.b16 %v6792
        %v6961 = vunpack.c.l.b16 %v6793
        %v6962 = vunpack.c.h.b16 %v6793
        %v6963 = vunpack.c.l.b16 %v6794
        %v6964 = vunpack.c.h.b16 %v6794
        %v6965 = vunpack.c.l.b16 %v6795
        %v6966 = vunpack.c.h.b16 %v6795
        %v6967 = vunpack.c.l.b16 %v6796
        %v6968 = vunpack.c.h.b16 %v6796
        %v6969 = vunpack.c.l.b16 %v6797
        %v6970 = vunpack.c.h.b16 %v6797
        %v6971 = vunpack.c.l.b16 %v6798
        %v6972 = vunpack.c.h.b16 %v6798
        %v6973 = vunpack.c.l.b16 %v6799
        %v6974 = vunpack.c.h.b16 %v6799
        %v6975 = vunpack.c.l.b16 %v6800
        %v6976 = vunpack.c.h.b16 %v6800
        %v6977 = vunpack.c.l.b16 %v6801
        %v6978 = vunpack.c.h.b16 %v6801
        %v6979 = vunpack.c.l.b16 %v6802
        %v6980 = vunpack.c.h.b16 %v6802
        %v6981 = vunpack.c.l.b16 %v6803
        %v6982 = vunpack.c.h.b16 %v6803
        %v6983 = vunpack.c.l.b16 %v6804
        %v6984 = vunpack.c.h.b16 %v6804
        %v6985 = vunpack.c.l.b16 %v6805
        %v6986 = vunpack.c.h.b16 %v6805
        %v6987 = vunpack.c.l.b16 %v6806
        %v6988 = vunpack.c.h.b16 %v6806
        %v6989 = vunpack.c.l.b16 %v6807
        %v6990 = vunpack.c.h.b16 %v6807
        %v6991 = vunpack.c.l.b16 %v6808
        %v6992 = vunpack.c.h.b16 %v6808
        %v6993 = vunpack.c.l.b16 %v6809
        %v6994 = vunpack.c.h.b16 %v6809
        %v6995 = vunpack.c.l.b16 %v6810
        %v6996 = vunpack.c.h.b16 %v6810
        %v6997 = vunpack.c.l.b16 %v6811
        %v6998 = vunpack.c.h.b16 %v6811
        %v6999 = vunpack.c.l.b16 %v6812
        %v7000 = vunpack.c.h.b16 %v6812
        %v7001 = vunpack.c.l.b16 %v6813
        %v7002 = vunpack.c.h.b16 %v6813
        %v7003 = vunpack.c.l.b16 %v6814
        %v7004 = vunpack.c.h.b16 %v6814
        %v7005 = vunpack.c.l.b16 %v6815
        %v7006 = vunpack.c.h.b16 %v6815
        %v7007 = vunpack.c.l.b16 %v6816
        %v7008 = vunpack.c.h.b16 %v6816
        %v7009 = vunpack.c.l.b16 %v6817
        %v7010 = vunpack.c.h.b16 %v6817
        %v7011 = vunpack.c.l.b16 %v6818
        %v7012 = vunpack.c.h.b16 %v6818
        %v7013 = vunpack.c.l.b16 %v6819
        %v7014 = vunpack.c.h.b16 %v6819
        %v7015 = vunpack.c.l.b16 %v6820
        %v7016 = vunpack.c.h.b16 %v6820
        %v7017 = vunpack.c.l.b16 %v6821
        %v7018 = vunpack.c.h.b16 %v6821
        %v7019 = vunpack.c.l.b16 %v6822
        %v7020 = vunpack.c.h.b16 %v6822
        %v7021 = vunpack.c.l.b16 %v6823
        %v7022 = vunpack.c.h.b16 %v6823
        %v7023 = vunpack.c.l.b16 %v6824
        %v7024 = vunpack.c.h.b16 %v6824
        %v7025 = vunpack.c.l.b16 %v6825
        %v7026 = vunpack.c.h.b16 %v6825
        %v7027 = vunpack.c.l.b16 %v6826
        %v7028 = vunpack.c.h.b16 %v6826
        %v7029 = vpack.c.b16 %v6905, %v6901
        %v7030 = vpack.c.b16 %v6906, %v6902
        %v7031 = vpack.c.b16 %v6907, %v6903
        %v7032 = vpack.c.b16 %v6908, %v6904
        %v7033 = vpack.c.b16 %v6913, %v6909
        %v7034 = vpack.c.b16 %v6914, %v6910
        %v7035 = vpack.c.b16 %v6915, %v6911
        %v7036 = vpack.c.b16 %v6916, %v6912
        %v7037 = vpack.c.b16 %v6921, %v6917
        %v7038 = vpack.c.b16 %v6922, %v6918
        %v7039 = vpack.c.b16 %v6923, %v6919
        %v7040 = vpack.c.b16 %v6924, %v6920
        %v7041 = vpack.c.b16 %v6929, %v6925
        %v7042 = vpack.c.b16 %v6930, %v6926
        %v7043 = vpack.c.b16 %v6931, %v6927
        %v7044 = vpack.c.b16 %v6932, %v6928
        %v7045 = vpack.c.b16 %v6937, %v6933
        %v7046 = vpack.c.b16 %v6938, %v6934
        %v7047 = vpack.c.b16 %v6939, %v6935
        %v7048 = vpack.c.b16 %v6940, %v6936
        %v7049 = vpack.c.b16 %v6945, %v6941
        %v7050 = vpack.c.b16 %v6946, %v6942
        %v7051 = vpack.c.b16 %v6947, %v6943
        %v7052 = vpack.c.b16 %v6948, %v6944
        %v7053 = vpack.c.b16 %v6953, %v6949
        %v7054 = vpack.c.b16 %v6954, %v6950
        %v7055 = vpack.c.b16 %v6955, %v6951
        %v7056 = vpack.c.b16 %v6956, %v6952
        %v7057 = vpack.c.b16 %v6961, %v6957
        %v7058 = vpack.c.b16 %v6962, %v6958
        %v7059 = vpack.c.b16 %v6963, %v6959
        %v7060 = vpack.c.b16 %v6964, %v6960
        %v7061 = vpack.c.b16 %v6969, %v6965
        %v7062 = vpack.c.b16 %v6970, %v6966
        %v7063 = vpack.c.b16 %v6971, %v6967
        %v7064 = vpack.c.b16 %v6972, %v6968
        %v7065 = vpack.c.b16 %v6977, %v6973
        %v7066 = vpack.c.b16 %v6978, %v6974
        %v7067 = vpack.c.b16 %v6979, %v6975
        %v7068 = vpack.c.b16 %v6980, %v6976
        %v7069 = vpack.c.b16 %v6985, %v6981
        %v7070 = vpack.c.b16 %v6986, %v6982
        %v7071 = vpack.c.b16 %v6987, %v6983
        %v7072 = vpack.c.b16 %v6988, %v6984
        %v7073 = vpack.c.b16 %v6993, %v6989
        %v7074 = vpack.c.b16 %v6994, %v6990
        %v7075 = vpack.c.b16 %v6995, %v6991
        %v7076 = vpack.c.b16 %v6996, %v6992
        %v7077 = vpack.c.b16 %v7001, %v6997
        %v7078 = vpack.c.b16 %v7002, %v6998
        %v7079 = vpack.c.b16 %v7003, %v6999
        %v7080 = vpack.c.b16 %v7004, %v7000
        %v7081 = vpack.c.b16 %v7009, %v7005
        %v7082 = vpack.c.b16 %v7010, %v7006
        %v7083 = vpack.c.b16 %v7011, %v7007
        %v7084 = vpack.c.b16 %v7012, %v7008
        %v7085 = vpack.c.b16 %v7017, %v7013
        %v7086 = vpack.c.b16 %v7018, %v7014
        %v7087 = vpack.c.b16 %v7019, %v7015
        %v7088 = vpack.c.b16 %v7020, %v7016
        %v7089 = vpack.c.b16 %v7025, %v7021
        %v7090 = vpack.c.b16 %v7026, %v7022
        %v7091 = vpack.c.b16 %v7027, %v7023
        %v7092 = vpack.c.b16 %v7028, %v7024
        %7157 = vmatpush.bf16.msra.mxu0 %v7057
        %7158 = vmatpush.bf16.msra.mxu0 %v7053
        %7159 = vmatpush.bf16.msra.mxu0 %v7049
        %7160 = vmatpush.bf16.msra.mxu0 %v7045
        %7161 = vmatpush.bf16.msra.mxu0 %v7041
        %7162 = vmatpush.bf16.msra.mxu0 %v7037
        %7163 = vmatpush.bf16.msra.mxu0 %v7033
        %7164 = vmatpush.bf16.msra.mxu0 %v7029
        %7165 = vmatmul.bf16.gmra.mxu0 %v6761
        %v7166 = vpop.f32.mrf.mxu0
        %v7167 = vadd.f32 %v6829, %v7166
        %v7168 = vpop.f32.mrf.mxu0
        %v7169 = vadd.f32 %v6829, %v7168
        %7170 = vdwg.mxu0
        %7171 = vmatpush.bf16.msra.mxu0 %v7089
        %7172 = vmatpush.bf16.msra.mxu0 %v7085
        %7173 = vmatpush.bf16.msra.mxu0 %v7081
        %7174 = vmatpush.bf16.msra.mxu0 %v7077
        %7175 = vmatpush.bf16.msra.mxu0 %v7073
        %7176 = vmatpush.bf16.msra.mxu0 %v7069
        %7177 = vmatpush.bf16.msra.mxu0 %v7065
        %7178 = vmatpush.bf16.msra.mxu0 %v7061
        %7179 = vmatmul.bf16.gmra.mxu0 %v6762
        %v7180 = vpop.f32.mrf.mxu0
        %v7181 = vadd.f32 %v7167, %v7180
        %v7182 = vpop.f32.mrf.mxu0
        %v7183 = vadd.f32 %v7169, %v7182
        %7184 = vdwg.mxu0
        %7185 = vmatpush.bf16.msra.mxu0 %v7058
        %7186 = vmatpush.bf16.msra.mxu0 %v7054
        %7187 = vmatpush.bf16.msra.mxu0 %v7050
        %7188 = vmatpush.bf16.msra.mxu0 %v7046
        %7189 = vmatpush.bf16.msra.mxu0 %v7042
        %7190 = vmatpush.bf16.msra.mxu0 %v7038
        %7191 = vmatpush.bf16.msra.mxu0 %v7034
        %7192 = vmatpush.bf16.msra.mxu0 %v7030
        %7193 = vmatmul.bf16.gmra.mxu0 %v6761
        %v7194 = vpop.f32.mrf.mxu0
        %v7195 = vadd.f32 %v6830, %v7194
        %v7196 = vpop.f32.mrf.mxu0
        %v7197 = vadd.f32 %v6830, %v7196
        %7198 = vdwg.mxu0
        %7199 = vmatpush.bf16.msra.mxu0 %v7090
        %7200 = vmatpush.bf16.msra.mxu0 %v7086
        %7201 = vmatpush.bf16.msra.mxu0 %v7082
        %7202 = vmatpush.bf16.msra.mxu0 %v7078
        %7203 = vmatpush.bf16.msra.mxu0 %v7074
        %7204 = vmatpush.bf16.msra.mxu0 %v7070
        %7205 = vmatpush.bf16.msra.mxu0 %v7066
        %7206 = vmatpush.bf16.msra.mxu0 %v7062
        %7207 = vmatmul.bf16.gmra.mxu0 %v6762
        %v7208 = vpop.f32.mrf.mxu0
        %v7209 = vadd.f32 %v7195, %v7208
        %v7210 = vpop.f32.mrf.mxu0
        %v7211 = vadd.f32 %v7197, %v7210
        %7212 = vdwg.mxu0
        %7213 = vmatpush.bf16.msra.mxu0 %v7059
        %7214 = vmatpush.bf16.msra.mxu0 %v7055
        %7215 = vmatpush.bf16.msra.mxu0 %v7051
        %7216 = vmatpush.bf16.msra.mxu0 %v7047
        %7217 = vmatpush.bf16.msra.mxu0 %v7043
        %7218 = vmatpush.bf16.msra.mxu0 %v7039
        %7219 = vmatpush.bf16.msra.mxu0 %v7035
        %7220 = vmatpush.bf16.msra.mxu0 %v7031
        %7221 = vmatmul.bf16.gmra.mxu0 %v6761
        %v7222 = vpop.f32.mrf.mxu0
        %v7223 = vadd.f32 %v6831, %v7222
        %v7224 = vpop.f32.mrf.mxu0
        %v7225 = vadd.f32 %v6831, %v7224
        %7226 = vdwg.mxu0
        %7227 = vmatpush.bf16.msra.mxu0 %v7091
        %7228 = vmatpush.bf16.msra.mxu0 %v7087
        %7229 = vmatpush.bf16.msra.mxu0 %v7083
        %7230 = vmatpush.bf16.msra.mxu0 %v7079
        %7231 = vmatpush.bf16.msra.mxu0 %v7075
        %7232 = vmatpush.bf16.msra.mxu0 %v7071
        %7233 = vmatpush.bf16.msra.mxu0 %v7067
        %7234 = vmatpush.bf16.msra.mxu0 %v7063
        %7235 = vmatmul.bf16.gmra.mxu0 %v6762
        %v7236 = vpop.f32.mrf.mxu0
        %v7237 = vadd.f32 %v7223, %v7236
        %v7238 = vpop.f32.mrf.mxu0
        %v7239 = vadd.f32 %v7225, %v7238
        %7240 = vdwg.mxu0
        %7241 = vmatpush.bf16.msra.mxu0 %v7060
        %7242 = vmatpush.bf16.msra.mxu0 %v7056
        %7243 = vmatpush.bf16.msra.mxu0 %v7052
        %7244 = vmatpush.bf16.msra.mxu0 %v7048
        %7245 = vmatpush.bf16.msra.mxu0 %v7044
        %7246 = vmatpush.bf16.msra.mxu0 %v7040
        %7247 = vmatpush.bf16.msra.mxu0 %v7036
        %7248 = vmatpush.bf16.msra.mxu0 %v7032
        %7249 = vmatmul.bf16.gmra.mxu0 %v6761
        %v7250 = vpop.f32.mrf.mxu0
        %v7251 = vadd.f32 %v6832, %v7250
        %v7252 = vpop.f32.mrf.mxu0
        %v7253 = vadd.f32 %v6832, %v7252
        %7254 = vdwg.mxu0
        %7255 = vmatpush.bf16.msra.mxu0 %v7092
        %7256 = vmatpush.bf16.msra.mxu0 %v7088
        %7257 = vmatpush.bf16.msra.mxu0 %v7084
        %7258 = vmatpush.bf16.msra.mxu0 %v7080
        %7259 = vmatpush.bf16.msra.mxu0 %v7076
        %7260 = vmatpush.bf16.msra.mxu0 %v7072
        %7261 = vmatpush.bf16.msra.mxu0 %v7068
        %7262 = vmatpush.bf16.msra.mxu0 %v7064
        %7263 = vmatmul.bf16.gmra.mxu0 %v6762
        %v7264 = vpop.f32.mrf.mxu0
        %v7265 = vadd.f32 %v7251, %v7264
        %v7266 = vpop.f32.mrf.mxu0
        %v7267 = vadd.f32 %v7253, %v7266
        %7268 = vdwg.mxu0
        %7269 = vst [vmem:[%s857] sm:$0xff] %v7181
        %7270 = vst [vmem:[%s857 + $0x8] sm:$0xff] %v7209
        %7271 = vst [vmem:[%s857 + $0x10] sm:$0xff] %v7237
        %7272 = vst [vmem:[%s857 + $0x18] sm:$0xff] %v7265
        %7273 = vst [vmem:[%s857 + $0x20] sm:$0x3] %v7183
        %7274 = vst [vmem:[%s857 + $0x28] sm:$0x3] %v7211
        %7275 = vst [vmem:[%s857 + $0x30] sm:$0x3] %v7239
        %7276 = vst [vmem:[%s857 + $0x38] sm:$0x3] %v7267
      $region108: #{vit_encoder_forward.1} parent=99 // pred_fallthru
        _
      %p7277 = scmp.lt.s32.totalorder %s35, 1
      %s7278 = scalar_select %p7277, %s35, 1
      %s7279 = smul.addr %s7278, 8
      %s7280 = smul.addr %s7279, 8
      %s7281 = scalar_lea.vmem %s20, %s7280
      // Predicated region
      $region109: #{vit_encoder_forward.1} parent=99 // pred_check
        %p7282 = pneg %p546
      $region110: #{vit_encoder_forward.1} parent=99 // pred_check_branch
        %7284 = sbr.rel (%p7282) target = $region112
      $region111: #{vit_encoder_forward.1} parent=99 // pred_region
        _
      $region112: #{vit_encoder_forward.1} parent=99 // pred_fallthru
        _
    $region100: #{vit_encoder_forward.1} parent=5 // pred_fallthru
      _
    %p7285 = scmp.le.s32.totalorder 2, %s26
    // Predicated region
    $region113: #{vit_encoder_forward.1} parent=5 // pred_check
      %p7286 = pneg %p7285
    $region114: #{vit_encoder_forward.1} parent=5 // pred_check_branch
      %7288 = sbr.rel (%p7286) target = $region116
    $region115: #{vit_encoder_forward.1} parent=5 // pred_region
      %s7289 = ssub.s32 %s26, 2
      // Predicated region
      $region117: #{vit_encoder_forward.1} parent=115 // pred_check
        %p7290 = pneg %p552
      $region118: #{vit_encoder_forward.1} parent=115 // pred_check_branch
        %7292 = sbr.rel (%p7290) target = $region120
      $region119: #{vit_encoder_forward.1} parent=115 // pred_region
        %p7293 = scmp.lt.s32.totalorder %s37, 1
        %s7294 = scalar_select %p7293, %s37, 1
        %s7295 = smul.addr %s7294, 8
        %s7296 = smul.addr %s7295, 8
        %s7297 = scalar_lea.vmem %s20, %s7296
      $region120: #{vit_encoder_forward.1} parent=115 // pred_fallthru
        _
    $region116: #{vit_encoder_forward.1} parent=5 // pred_fallthru
      _
  $region6: #{vit_encoder_forward.1} parent=0 // loop_footer
    %s30 = sadd.s32 1, %s26
  $region7: #{vit_encoder_forward.1} parent=0 // loop_footer_branch
    %25 = sbr.rel target = $region3
  $region8: #{vit_encoder_forward.1} parent=0 // loop_exit
    _

</llo_original>
